<compile_context>
chip_gen: v7x
topology: tpu7x:2x2x1
jax: 0.10.0
libtpu: 0.0.40
codegen_flags: <defaults>
</compile_context>

<pallas_src>
import functools

import jax
import jax.numpy as jnp
from jax.experimental import pallas as pl
from jax.experimental.pallas import tpu as pltpu


def _round_up(v, m):
    return (v + m - 1) // m * m


# ---------------------------------------------------------------------------
# Fused DBlock kernel (one grid step = one batch sample).
#
# Layout:
#   x_ref    : (CinP,  Lflat) bf16.  Padded volume (D+6, H+4, W+4) flattened on
#              lanes; original voxel (d,h,w) at flat (d+3)*HpWp + (h+2)*Wp + (w+2).
#   h1 window: padded-flat range [base, base+l1p), base = 2*HpWp - Wp - 1.
#   out_ref  : (CoutP, lop) f32; output position m <-> padded flat 3*HpWp + m,
#              i.e. valid voxels at m = d*HpWp + (h+2)*Wp + (w+2).
#
# A shift by (kd,kh,kw) is a single flat offset (kd-1)*HpWp + (kh-1)*Wp + (kw-1),
# so each conv tap is one contiguous-lane slice; the 27 slices are stacked along
# sublanes into a scratch and contracted with the K-stacked weights in ONE dot.
# ---------------------------------------------------------------------------
def _dblock_kernel(x_ref, mask_ref, w1s_ref, b1_ref, w2sc_ref, bsum_ref,
                   out_ref, h1_ref, xstk_ref, hstk_ref, *, hpwp, wp, lane_chunk):
    cinp = x_ref.shape[0]
    hidp = h1_ref.shape[0]
    l1p = h1_ref.shape[1]
    lop = out_ref.shape[1]
    s = hpwp + wp + 1                       # flat offset of a (+1,+1,+1) shift
    base = 2 * hpwp - wp - 1                # padded-flat start of the h1 window
    offs = [(a - 1) * hpwp + (b - 1) * wp + (c - 1)
            for a in range(3) for b in range(3) for c in range(3)]

    # Hoist small operands out of the chunk loops.
    w1s = w1s_ref[...]                      # (hidp, 27*cinp)        bf16
    w2sc = w2sc_ref[...]                    # (coutp, 27*hidp+cinp)  bf16
    b1 = b1_ref[...]                        # (hidp, 1)   f32
    bsum = bsum_ref[...]                    # (coutp, 1)  f32

    # ---- conv1 (+bias, ReLU, halo mask): one K-stacked dot per lane chunk ----
    for c0 in range(0, l1p, lane_chunk):
        lc = min(lane_chunk, l1p - c0)
        for k, off in enumerate(offs):      # in-VMEM im2col (each tap copied once)
            xstk_ref[k * cinp:(k + 1) * cinp, :lc] = (
                x_ref[:, base + off + c0: base + off + c0 + lc])
        acc = jnp.dot(w1s, xstk_ref[:, :lc], preferred_element_type=jnp.float32)
        h1 = jnp.maximum(acc + b1, 0.0)
        # mask zeroes the halo ring (= conv2's zero padding of h1)
        h1_ref[:, c0:c0 + lc] = (mask_ref[:, c0:c0 + lc] * h1).astype(h1_ref.dtype)

    # ---- conv2 + fused 1x1 shortcut + (b2 + bsc): one dot per lane chunk -----
    for c0 in range(0, lop, lane_chunk):
        lc = min(lane_chunk, lop - c0)
        for k, off in enumerate(offs):
            hstk_ref[k * hidp:(k + 1) * hidp, :lc] = (
                h1_ref[:, s + off + c0: s + off + c0 + lc])
        # shortcut operand appended as extra K rows of the same GEMM
        hstk_ref[27 * hidp:27 * hidp + cinp, :lc] = (
            x_ref[:, base + s + c0: base + s + c0 + lc])
        acc = jnp.dot(w2sc, hstk_ref[:, :lc], preferred_element_type=jnp.float32)
        out_ref[:, c0:c0 + lc] = acc + bsum


# ---------------------------------------------------------------------------
# Wrapper: layout prep (padding / flattening / K-stacked weights) + pallas_call.
# ---------------------------------------------------------------------------
def dblock_forward(x_ncdhw, params, compute_dtype=jnp.bfloat16, lane_chunk=1024):
    n, cin, d, h, w = x_ncdhw.shape
    hid = params["w1"].shape[0]
    cout = params["w2"].shape[0]
    cinp = _round_up(cin, 16)       # bf16 operands: 16 sublanes per packed vreg
    hidp = _round_up(hid, 16)
    coutp = _round_up(cout, 8)      # f32 output sublanes

    hp, wp = h + 4, w + 4
    hpwp = hp * wp
    s = hpwp + wp + 1
    base = 2 * hpwp - wp - 1
    lo = d * hpwp                                   # output lane window
    lop = _round_up(lo, 128)                        # lane-dense output
    l1p = _round_up(lop + 2 * s, 128)               # h1 window (1-voxel halo)
    lflat = (d + 6) * hpwp
    lflat_pad = _round_up(max(lflat, base + s + l1p), 128)
    lane_chunk = min(_round_up(lane_chunk, 128), l1p)

    # Activations: bf16 first, then pad channels to 16, D by 3 and H/W by 2
    # (double-conv halo + flat-shift slack), flatten padded spatial onto lanes.
    xpad = jnp.pad(x_ncdhw.astype(compute_dtype),
                   ((0, 0), (0, cinp - cin), (3, 3), (2, 2), (2, 2)))
    xflat = jnp.pad(xpad.reshape(n, cinp, lflat),
                    ((0, 0), (0, 0), (0, lflat_pad - lflat)))

    # Validity mask over the h1 lane window (1.0 exactly on original voxels).
    mask_full = jnp.pad(jnp.ones((d, h, w), jnp.float32),
                        ((3, 3), (2, 2), (2, 2))).reshape(-1)
    mask_full = jnp.pad(mask_full, (0, lflat_pad - lflat))
    mask_h1 = mask_full[base:base + l1p].reshape(1, l1p).astype(compute_dtype)

    def stack_taps(wt, op, ip):  # (O, I, 3, 3, 3) -> (op, 27*ip), tap-major K
        o, i = wt.shape[:2]
        wt = jnp.pad(wt, ((0, op - o), (0, ip - i), (0, 0), (0, 0), (0, 0)))
        return jnp.transpose(wt, (2, 3, 4, 1, 0)).reshape(27 * ip, op).T

    w1s = stack_taps(params["w1"], hidp, cinp).astype(compute_dtype)
    w2s = stack_taps(params["w2"], coutp, hidp)
    wsc = jnp.pad(params["wsc"].reshape(cout, cin),
                  ((0, coutp - cout), (0, cinp - cin)))
    w2sc = jnp.concatenate([w2s, wsc], axis=1).astype(compute_dtype)   # merged GEMM

    b1 = jnp.pad(params["b1"], (0, hidp - hid)).astype(jnp.float32).reshape(hidp, 1)
    bsum = jnp.pad(params["b2"] + params["bsc"],
                   (0, coutp - cout)).astype(jnp.float32).reshape(coutp, 1)

    # Right-sized VMEM budget (double-buffered I/O + scratch) with headroom.
    est = (2 * cinp * lflat_pad * 2                    # x slab (bf16)
           + 2 * coutp * lop * 4                       # output (f32)
           + 2 * (l1p + hidp * 27 * cinp + coutp * (27 * hidp + cinp)) * 2
           + hidp * l1p * 2                            # h1 scratch
           + 27 * cinp * lane_chunk * 2                # conv1 K-stack scratch
           + (27 * hidp + cinp) * lane_chunk * 2)      # conv2 K-stack scratch
    vmem_limit = int(min(max(2 * est, 16 * 1024 * 1024), 96 * 1024 * 1024))

    kernel = functools.partial(_dblock_kernel, hpwp=hpwp, wp=wp,
                               lane_chunk=lane_chunk)

    out_flat = pl.pallas_call(
        kernel,
        out_shape=jax.ShapeDtypeStruct((n, coutp, lop), jnp.float32),
        grid_spec=pltpu.PrefetchScalarGridSpec(
            num_scalar_prefetch=0,
            grid=(n,),
            in_specs=[
                pl.BlockSpec((None, cinp, lflat_pad), lambda i: (i, 0, 0)),  # x slab
                pl.BlockSpec((1, l1p), lambda i: (0, 0)),                    # mask
                pl.BlockSpec((hidp, 27 * cinp), lambda i: (0, 0)),           # w1 (K-stacked)
                pl.BlockSpec((hidp, 1), lambda i: (0, 0)),                   # b1
                pl.BlockSpec((coutp, 27 * hidp + cinp), lambda i: (0, 0)),   # w2 | w_sc
                pl.BlockSpec((coutp, 1), lambda i: (0, 0)),                  # b2 + bsc
            ],
            out_specs=pl.BlockSpec((None, coutp, lop), lambda i: (i, 0, 0)),
            scratch_shapes=[
                pltpu.VMEM((hidp, l1p), compute_dtype),                       # h1 (bf16)
                pltpu.VMEM((27 * cinp, lane_chunk), compute_dtype),           # conv1 K-stack
                pltpu.VMEM((27 * hidp + cinp, lane_chunk), compute_dtype),    # conv2 K-stack
            ],
        ),
        compiler_params=pltpu.CompilerParams(
            dimension_semantics=("parallel",),
            vmem_limit_bytes=vmem_limit,
        ),
    )(xflat, mask_h1, w1s, b1, w2sc, bsum)

    # (N, CoutP, lop) -> NCDHW, stripping channel / lane / spatial padding.
    out = out_flat[:, :cout, :lo].reshape(n, cout, d, hp, wp)[:, :, :, 2:h + 2, 2:w + 2]
    return out


# ---------------------------------------------------------------------------
# Parameter init + spectral norm glue (plain JAX, matches torch init scheme).
# ---------------------------------------------------------------------------
def _spectral_normalize(wt, key, n_power_iterations=1, eps=1e-12):
    cout = wt.shape[0]
    w2d = wt.reshape(cout, -1)
    u = jax.random.normal(key, (cout,), dtype=wt.dtype)
    u = u / (jnp.linalg.norm(u) + eps)
    v = u
    for _ in range(n_power_iterations):
        v = w2d.T @ u
        v = v / (jnp.linalg.norm(v) + eps)
        u = w2d @ v
        u = u / (jnp.linalg.norm(u) + eps)
    sigma = u @ (w2d @ v)
    return wt / sigma


def init_dblock_params(key, in_channels, out_channels, wide=True):
    hidden = out_channels if wide else in_channels
    ks = jax.random.split(key, 9)

    def conv_init(kw, kb, co, ci, ksz):
        fan_in = ci * ksz ** 3
        bound = 1.0 / jnp.sqrt(fan_in)
        wt = jax.random.uniform(kw, (co, ci, ksz, ksz, ksz), jnp.float32, -bound, bound)
        b = jax.random.uniform(kb, (co,), jnp.float32, -bound, bound)
        return wt, b

    w1, b1 = conv_init(ks[0], ks[1], hidden, in_channels, 3)
    w2, b2 = conv_init(ks[2], ks[3], out_channels, hidden, 3)
    wsc, bsc = conv_init(ks[4], ks[5], out_channels, in_channels, 1)

    w1 = _spectral_normalize(w1, ks[6])
    w2 = _spectral_normalize(w2, ks[7])
    wsc = _spectral_normalize(wsc, ks[8])

    return {"w1": w1, "b1": b1, "w2": w2, "b2": b2, "wsc": wsc, "bsc": bsc}


# ---------------------------------------------------------------------------
# Reference (lax conv) with the same bf16 quantization points as the kernel.
# ---------------------------------------------------------------------------
def _ref_dblock(x, p, compute_dtype=jnp.bfloat16):
    def conv(inp, wt, b, pad):
        y = jax.lax.conv_general_dilated(
            inp.astype(compute_dtype), wt.astype(compute_dtype),
            window_strides=(1, 1, 1), padding=[(pad, pad)] * 3,
            dimension_numbers=("NCDHW", "OIDHW", "NCDHW"),
            preferred_element_type=jnp.float32)
        return y + b.reshape(1, -1, 1, 1, 1)

    hh = jnp.maximum(conv(x, p["w1"], p["b1"], 1), 0.0)
    hh = conv(hh, p["w2"], p["b2"], 1)
    sc = conv(x, p["wsc"], p["bsc"], 0)
    return hh + sc


# ---------------------------------------------------------------------------
if __name__ == "__main__":
    key = jax.random.PRNGKey(0)
    k_param, k_x = jax.random.split(key)

    N, C_IN, C_OUT = 2, 4, 8
    D = H = W = 8

    params = init_dblock_params(k_param, C_IN, C_OUT, wide=True)
    x = jax.random.normal(k_x, (N, C_IN, D, H, W), dtype=jnp.float32)

    fwd = jax.jit(dblock_forward)
    out = jax.block_until_ready(fwd(x, params))

    ref = _ref_dblock(x, params)
    assert out.shape == (N, C_OUT, D, H, W), out.shape
    max_err = float(jnp.max(jnp.abs(out - ref)))
    assert jnp.allclose(out, ref, atol=5e-3, rtol=5e-3), max_err

    print("KERNEL_OK")
</pallas_src>

<mosaic_0001>
module attributes {stable_mosaic.version = 11 : i64} {
  func.func @_dblock_kernel(%arg0: i32, %arg1: memref<1x16x2048xbf16, #tpu.memory_space<vmem>>, %arg2: memref<1x1536xbf16, #tpu.memory_space<vmem>>, %arg3: memref<16x432xbf16, #tpu.memory_space<vmem>>, %arg4: memref<16x1xf32, #tpu.memory_space<vmem>>, %arg5: memref<8x448xbf16, #tpu.memory_space<vmem>>, %arg6: memref<8x1xf32, #tpu.memory_space<vmem>>, %arg7: memref<1x8x1152xf32, #tpu.memory_space<vmem>>, %arg8: memref<16x1536xbf16, #tpu.memory_space<vmem>>, %arg9: memref<432x1024xbf16, #tpu.memory_space<vmem>>, %arg10: memref<448x1024xbf16, #tpu.memory_space<vmem>>) attributes {dimension_semantics = [#tpu.dimension_semantics<parallel>], iteration_bounds = array<i64: 2>, scalar_prefetch = 0 : i64, scratch_operands = 3 : i64, tpu.core_type = #tpu.core_type<tc>, window_params = [{transform_indices = @transform_0, window_bounds = array<i64: 1, 16, 2048>}, {pipeline_mode = #tpu.pipeline_mode<synchronous>, transform_indices = @transform_1, window_bounds = array<i64: 1, 1536>}, {pipeline_mode = #tpu.pipeline_mode<synchronous>, transform_indices = @transform_2, window_bounds = array<i64: 16, 432>}, {pipeline_mode = #tpu.pipeline_mode<synchronous>, transform_indices = @transform_3, window_bounds = array<i64: 16, 1>}, {pipeline_mode = #tpu.pipeline_mode<synchronous>, transform_indices = @transform_4, window_bounds = array<i64: 8, 448>}, {pipeline_mode = #tpu.pipeline_mode<synchronous>, transform_indices = @transform_5, window_bounds = array<i64: 8, 1>}, {transform_indices = @transform_6, window_bounds = array<i64: 1, 8, 1152>}]} {
    %c0 = arith.constant 0 : index
    %c0_0 = arith.constant 0 : index
    %0 = vector.load %arg3[%c0, %c0_0] : memref<16x432xbf16, #tpu.memory_space<vmem>>, vector<16x432xbf16>
    %c0_1 = arith.constant 0 : index
    %c0_2 = arith.constant 0 : index
    %1 = vector.load %arg5[%c0_1, %c0_2] : memref<8x448xbf16, #tpu.memory_space<vmem>>, vector<8x448xbf16>
    %c0_3 = arith.constant 0 : index
    %c0_4 = arith.constant 0 : index
    %2 = vector.load %arg4[%c0_3, %c0_4] : memref<16x1xf32, #tpu.memory_space<vmem>>, vector<16x1xf32>
    %c0_5 = arith.constant 0 : index
    %c0_6 = arith.constant 0 : index
    %3 = vector.load %arg6[%c0_5, %c0_6] : memref<8x1xf32, #tpu.memory_space<vmem>>, vector<8x1xf32>
    %c0_7 = arith.constant 0 : index
    %c0_8 = arith.constant 0 : index
    %c118 = arith.constant 118 : index
    %4 = vector.load %arg1[%c0_7, %c0_8, %c118] : memref<1x16x2048xbf16, #tpu.memory_space<vmem>>, vector<1x16x1024xbf16>
    %5 = vector.shape_cast %4 : vector<1x16x1024xbf16> to vector<16x1024xbf16>
    %c0_9 = arith.constant 0 : index
    %c0_10 = arith.constant 0 : index
    %6 = vector.load %arg9[%c0_9, %c0_10] : memref<432x1024xbf16, #tpu.memory_space<vmem>>, vector<16x1024xbf16>
    tpu.vector_store %arg9[%c0_9, %c0_10], %5 {strides = array<i32>} : memref<432x1024xbf16, #tpu.memory_space<vmem>>, vector<16x1024xbf16>,
    %c0_11 = arith.constant 0 : index
    %c0_12 = arith.constant 0 : index
    %c119 = arith.constant 119 : index
    %7 = vector.load %arg1[%c0_11, %c0_12, %c119] : memref<1x16x2048xbf16, #tpu.memory_space<vmem>>, vector<1x16x1024xbf16>
    %8 = vector.shape_cast %7 : vector<1x16x1024xbf16> to vector<16x1024xbf16>
    %c16 = arith.constant 16 : index
    %c0_13 = arith.constant 0 : index
    %9 = vector.load %arg9[%c16, %c0_13] : memref<432x1024xbf16, #tpu.memory_space<vmem>>, vector<16x1024xbf16>
    tpu.vector_store %arg9[%c16, %c0_13], %8 {strides = array<i32>} : memref<432x1024xbf16, #tpu.memory_space<vmem>>, vector<16x1024xbf16>,
    %c0_14 = arith.constant 0 : index
    %c0_15 = arith.constant 0 : index
    %c120 = arith.constant 120 : index
    %10 = vector.load %arg1[%c0_14, %c0_15, %c120] : memref<1x16x2048xbf16, #tpu.memory_space<vmem>>, vector<1x16x1024xbf16>
    %11 = vector.shape_cast %10 : vector<1x16x1024xbf16> to vector<16x1024xbf16>
    %c32 = arith.constant 32 : index
    %c0_16 = arith.constant 0 : index
    %12 = vector.load %arg9[%c32, %c0_16] : memref<432x1024xbf16, #tpu.memory_space<vmem>>, vector<16x1024xbf16>
    tpu.vector_store %arg9[%c32, %c0_16], %11 {strides = array<i32>} : memref<432x1024xbf16, #tpu.memory_space<vmem>>, vector<16x1024xbf16>,
    %c0_17 = arith.constant 0 : index
    %c0_18 = arith.constant 0 : index
    %c130 = arith.constant 130 : index
    %13 = vector.load %arg1[%c0_17, %c0_18, %c130] : memref<1x16x2048xbf16, #tpu.memory_space<vmem>>, vector<1x16x1024xbf16>
    %14 = vector.shape_cast %13 : vector<1x16x1024xbf16> to vector<16x1024xbf16>
    %c48 = arith.constant 48 : index
    %c0_19 = arith.constant 0 : index
    %15 = vector.load %arg9[%c48, %c0_19] : memref<432x1024xbf16, #tpu.memory_space<vmem>>, vector<16x1024xbf16>
    tpu.vector_store %arg9[%c48, %c0_19], %14 {strides = array<i32>} : memref<432x1024xbf16, #tpu.memory_space<vmem>>, vector<16x1024xbf16>,
    %c0_20 = arith.constant 0 : index
    %c0_21 = arith.constant 0 : index
    %c131 = arith.constant 131 : index
    %16 = vector.load %arg1[%c0_20, %c0_21, %c131] : memref<1x16x2048xbf16, #tpu.memory_space<vmem>>, vector<1x16x1024xbf16>
    %17 = vector.shape_cast %16 : vector<1x16x1024xbf16> to vector<16x1024xbf16>
    %c64 = arith.constant 64 : index
    %c0_22 = arith.constant 0 : index
    %18 = vector.load %arg9[%c64, %c0_22] : memref<432x1024xbf16, #tpu.memory_space<vmem>>, vector<16x1024xbf16>
    tpu.vector_store %arg9[%c64, %c0_22], %17 {strides = array<i32>} : memref<432x1024xbf16, #tpu.memory_space<vmem>>, vector<16x1024xbf16>,
    %c0_23 = arith.constant 0 : index
    %c0_24 = arith.constant 0 : index
    %c132 = arith.constant 132 : index
    %19 = vector.load %arg1[%c0_23, %c0_24, %c132] : memref<1x16x2048xbf16, #tpu.memory_space<vmem>>, vector<1x16x1024xbf16>
    %20 = vector.shape_cast %19 : vector<1x16x1024xbf16> to vector<16x1024xbf16>
    %c80 = arith.constant 80 : index
    %c0_25 = arith.constant 0 : index
    %21 = vector.load %arg9[%c80, %c0_25] : memref<432x1024xbf16, #tpu.memory_space<vmem>>, vector<16x1024xbf16>
    tpu.vector_store %arg9[%c80, %c0_25], %20 {strides = array<i32>} : memref<432x1024xbf16, #tpu.memory_space<vmem>>, vector<16x1024xbf16>,
    %c0_26 = arith.constant 0 : index
    %c0_27 = arith.constant 0 : index
    %c142 = arith.constant 142 : index
    %22 = vector.load %arg1[%c0_26, %c0_27, %c142] : memref<1x16x2048xbf16, #tpu.memory_space<vmem>>, vector<1x16x1024xbf16>
    %23 = vector.shape_cast %22 : vector<1x16x1024xbf16> to vector<16x1024xbf16>
    %c96 = arith.constant 96 : index
    %c0_28 = arith.constant 0 : index
    %24 = vector.load %arg9[%c96, %c0_28] : memref<432x1024xbf16, #tpu.memory_space<vmem>>, vector<16x1024xbf16>
    tpu.vector_store %arg9[%c96, %c0_28], %23 {strides = array<i32>} : memref<432x1024xbf16, #tpu.memory_space<vmem>>, vector<16x1024xbf16>,
    %c0_29 = arith.constant 0 : index
    %c0_30 = arith.constant 0 : index
    %c143 = arith.constant 143 : index
    %25 = vector.load %arg1[%c0_29, %c0_30, %c143] : memref<1x16x2048xbf16, #tpu.memory_space<vmem>>, vector<1x16x1024xbf16>
    %26 = vector.shape_cast %25 : vector<1x16x1024xbf16> to vector<16x1024xbf16>
    %c112 = arith.constant 112 : index
    %c0_31 = arith.constant 0 : index
    %27 = vector.load %arg9[%c112, %c0_31] : memref<432x1024xbf16, #tpu.memory_space<vmem>>, vector<16x1024xbf16>
    tpu.vector_store %arg9[%c112, %c0_31], %26 {strides = array<i32>} : memref<432x1024xbf16, #tpu.memory_space<vmem>>, vector<16x1024xbf16>,
    %c0_32 = arith.constant 0 : index
    %c0_33 = arith.constant 0 : index
    %c144 = arith.constant 144 : index
    %28 = vector.load %arg1[%c0_32, %c0_33, %c144] : memref<1x16x2048xbf16, #tpu.memory_space<vmem>>, vector<1x16x1024xbf16>
    %29 = vector.shape_cast %28 : vector<1x16x1024xbf16> to vector<16x1024xbf16>
    %c128 = arith.constant 128 : index
    %c0_34 = arith.constant 0 : index
    %30 = vector.load %arg9[%c128, %c0_34] : memref<432x1024xbf16, #tpu.memory_space<vmem>>, vector<16x1024xbf16>
    tpu.vector_store %arg9[%c128, %c0_34], %29 {strides = array<i32>} : memref<432x1024xbf16, #tpu.memory_space<vmem>>, vector<16x1024xbf16>,
    %c0_35 = arith.constant 0 : index
    %c0_36 = arith.constant 0 : index
    %c262 = arith.constant 262 : index
    %31 = vector.load %arg1[%c0_35, %c0_36, %c262] : memref<1x16x2048xbf16, #tpu.memory_space<vmem>>, vector<1x16x1024xbf16>
    %32 = vector.shape_cast %31 : vector<1x16x1024xbf16> to vector<16x1024xbf16>
    %c144_37 = arith.constant 144 : index
    %c0_38 = arith.constant 0 : index
    %33 = vector.load %arg9[%c144_37, %c0_38] : memref<432x1024xbf16, #tpu.memory_space<vmem>>, vector<16x1024xbf16>
    tpu.vector_store %arg9[%c144_37, %c0_38], %32 {strides = array<i32>} : memref<432x1024xbf16, #tpu.memory_space<vmem>>, vector<16x1024xbf16>,
    %c0_39 = arith.constant 0 : index
    %c0_40 = arith.constant 0 : index
    %c263 = arith.constant 263 : index
    %34 = vector.load %arg1[%c0_39, %c0_40, %c263] : memref<1x16x2048xbf16, #tpu.memory_space<vmem>>, vector<1x16x1024xbf16>
    %35 = vector.shape_cast %34 : vector<1x16x1024xbf16> to vector<16x1024xbf16>
    %c160 = arith.constant 160 : index
    %c0_41 = arith.constant 0 : index
    %36 = vector.load %arg9[%c160, %c0_41] : memref<432x1024xbf16, #tpu.memory_space<vmem>>, vector<16x1024xbf16>
    tpu.vector_store %arg9[%c160, %c0_41], %35 {strides = array<i32>} : memref<432x1024xbf16, #tpu.memory_space<vmem>>, vector<16x1024xbf16>,
    %c0_42 = arith.constant 0 : index
    %c0_43 = arith.constant 0 : index
    %c264 = arith.constant 264 : index
    %37 = vector.load %arg1[%c0_42, %c0_43, %c264] : memref<1x16x2048xbf16, #tpu.memory_space<vmem>>, vector<1x16x1024xbf16>
    %38 = vector.shape_cast %37 : vector<1x16x1024xbf16> to vector<16x1024xbf16>
    %c176 = arith.constant 176 : index
    %c0_44 = arith.constant 0 : index
    %39 = vector.load %arg9[%c176, %c0_44] : memref<432x1024xbf16, #tpu.memory_space<vmem>>, vector<16x1024xbf16>
    tpu.vector_store %arg9[%c176, %c0_44], %38 {strides = array<i32>} : memref<432x1024xbf16, #tpu.memory_space<vmem>>, vector<16x1024xbf16>,
    %c0_45 = arith.constant 0 : index
    %c0_46 = arith.constant 0 : index
    %c274 = arith.constant 274 : index
    %40 = vector.load %arg1[%c0_45, %c0_46, %c274] : memref<1x16x2048xbf16, #tpu.memory_space<vmem>>, vector<1x16x1024xbf16>
    %41 = vector.shape_cast %40 : vector<1x16x1024xbf16> to vector<16x1024xbf16>
    %c192 = arith.constant 192 : index
    %c0_47 = arith.constant 0 : index
    %42 = vector.load %arg9[%c192, %c0_47] : memref<432x1024xbf16, #tpu.memory_space<vmem>>, vector<16x1024xbf16>
    tpu.vector_store %arg9[%c192, %c0_47], %41 {strides = array<i32>} : memref<432x1024xbf16, #tpu.memory_space<vmem>>, vector<16x1024xbf16>,
    %c0_48 = arith.constant 0 : index
    %c0_49 = arith.constant 0 : index
    %c275 = arith.constant 275 : index
    %43 = vector.load %arg1[%c0_48, %c0_49, %c275] : memref<1x16x2048xbf16, #tpu.memory_space<vmem>>, vector<1x16x1024xbf16>
    %44 = vector.shape_cast %43 : vector<1x16x1024xbf16> to vector<16x1024xbf16>
    %c208 = arith.constant 208 : index
    %c0_50 = arith.constant 0 : index
    %45 = vector.load %arg9[%c208, %c0_50] : memref<432x1024xbf16, #tpu.memory_space<vmem>>, vector<16x1024xbf16>
    tpu.vector_store %arg9[%c208, %c0_50], %44 {strides = array<i32>} : memref<432x1024xbf16, #tpu.memory_space<vmem>>, vector<16x1024xbf16>,
    %c0_51 = arith.constant 0 : index
    %c0_52 = arith.constant 0 : index
    %c276 = arith.constant 276 : index
    %46 = vector.load %arg1[%c0_51, %c0_52, %c276] : memref<1x16x2048xbf16, #tpu.memory_space<vmem>>, vector<1x16x1024xbf16>
    %47 = vector.shape_cast %46 : vector<1x16x1024xbf16> to vector<16x1024xbf16>
    %c224 = arith.constant 224 : index
    %c0_53 = arith.constant 0 : index
    %48 = vector.load %arg9[%c224, %c0_53] : memref<432x1024xbf16, #tpu.memory_space<vmem>>, vector<16x1024xbf16>
    tpu.vector_store %arg9[%c224, %c0_53], %47 {strides = array<i32>} : memref<432x1024xbf16, #tpu.memory_space<vmem>>, vector<16x1024xbf16>,
    %c0_54 = arith.constant 0 : index
    %c0_55 = arith.constant 0 : index
    %c286 = arith.constant 286 : index
    %49 = vector.load %arg1[%c0_54, %c0_55, %c286] : memref<1x16x2048xbf16, #tpu.memory_space<vmem>>, vector<1x16x1024xbf16>
    %50 = vector.shape_cast %49 : vector<1x16x1024xbf16> to vector<16x1024xbf16>
    %c240 = arith.constant 240 : index
    %c0_56 = arith.constant 0 : index
    %51 = vector.load %arg9[%c240, %c0_56] : memref<432x1024xbf16, #tpu.memory_space<vmem>>, vector<16x1024xbf16>
    tpu.vector_store %arg9[%c240, %c0_56], %50 {strides = array<i32>} : memref<432x1024xbf16, #tpu.memory_space<vmem>>, vector<16x1024xbf16>,
    %c0_57 = arith.constant 0 : index
    %c0_58 = arith.constant 0 : index
    %c287 = arith.constant 287 : index
    %52 = vector.load %arg1[%c0_57, %c0_58, %c287] : memref<1x16x2048xbf16, #tpu.memory_space<vmem>>, vector<1x16x1024xbf16>
    %53 = vector.shape_cast %52 : vector<1x16x1024xbf16> to vector<16x1024xbf16>
    %c256 = arith.constant 256 : index
    %c0_59 = arith.constant 0 : index
    %54 = vector.load %arg9[%c256, %c0_59] : memref<432x1024xbf16, #tpu.memory_space<vmem>>, vector<16x1024xbf16>
    tpu.vector_store %arg9[%c256, %c0_59], %53 {strides = array<i32>} : memref<432x1024xbf16, #tpu.memory_space<vmem>>, vector<16x1024xbf16>,
    %c0_60 = arith.constant 0 : index
    %c0_61 = arith.constant 0 : index
    %c288 = arith.constant 288 : index
    %55 = vector.load %arg1[%c0_60, %c0_61, %c288] : memref<1x16x2048xbf16, #tpu.memory_space<vmem>>, vector<1x16x1024xbf16>
    %56 = vector.shape_cast %55 : vector<1x16x1024xbf16> to vector<16x1024xbf16>
    %c272 = arith.constant 272 : index
    %c0_62 = arith.constant 0 : index
    %57 = vector.load %arg9[%c272, %c0_62] : memref<432x1024xbf16, #tpu.memory_space<vmem>>, vector<16x1024xbf16>
    tpu.vector_store %arg9[%c272, %c0_62], %56 {strides = array<i32>} : memref<432x1024xbf16, #tpu.memory_space<vmem>>, vector<16x1024xbf16>,
    %c0_63 = arith.constant 0 : index
    %c0_64 = arith.constant 0 : index
    %c406 = arith.constant 406 : index
    %58 = vector.load %arg1[%c0_63, %c0_64, %c406] : memref<1x16x2048xbf16, #tpu.memory_space<vmem>>, vector<1x16x1024xbf16>
    %59 = vector.shape_cast %58 : vector<1x16x1024xbf16> to vector<16x1024xbf16>
    %c288_65 = arith.constant 288 : index
    %c0_66 = arith.constant 0 : index
    %60 = vector.load %arg9[%c288_65, %c0_66] : memref<432x1024xbf16, #tpu.memory_space<vmem>>, vector<16x1024xbf16>
    tpu.vector_store %arg9[%c288_65, %c0_66], %59 {strides = array<i32>} : memref<432x1024xbf16, #tpu.memory_space<vmem>>, vector<16x1024xbf16>,
    %c0_67 = arith.constant 0 : index
    %c0_68 = arith.constant 0 : index
    %c407 = arith.constant 407 : index
    %61 = vector.load %arg1[%c0_67, %c0_68, %c407] : memref<1x16x2048xbf16, #tpu.memory_space<vmem>>, vector<1x16x1024xbf16>
    %62 = vector.shape_cast %61 : vector<1x16x1024xbf16> to vector<16x1024xbf16>
    %c304 = arith.constant 304 : index
    %c0_69 = arith.constant 0 : index
    %63 = vector.load %arg9[%c304, %c0_69] : memref<432x1024xbf16, #tpu.memory_space<vmem>>, vector<16x1024xbf16>
    tpu.vector_store %arg9[%c304, %c0_69], %62 {strides = array<i32>} : memref<432x1024xbf16, #tpu.memory_space<vmem>>, vector<16x1024xbf16>,
    %c0_70 = arith.constant 0 : index
    %c0_71 = arith.constant 0 : index
    %c408 = arith.constant 408 : index
    %64 = vector.load %arg1[%c0_70, %c0_71, %c408] : memref<1x16x2048xbf16, #tpu.memory_space<vmem>>, vector<1x16x1024xbf16>
    %65 = vector.shape_cast %64 : vector<1x16x1024xbf16> to vector<16x1024xbf16>
    %c320 = arith.constant 320 : index
    %c0_72 = arith.constant 0 : index
    %66 = vector.load %arg9[%c320, %c0_72] : memref<432x1024xbf16, #tpu.memory_space<vmem>>, vector<16x1024xbf16>
    tpu.vector_store %arg9[%c320, %c0_72], %65 {strides = array<i32>} : memref<432x1024xbf16, #tpu.memory_space<vmem>>, vector<16x1024xbf16>,
    %c0_73 = arith.constant 0 : index
    %c0_74 = arith.constant 0 : index
    %c418 = arith.constant 418 : index
    %67 = vector.load %arg1[%c0_73, %c0_74, %c418] : memref<1x16x2048xbf16, #tpu.memory_space<vmem>>, vector<1x16x1024xbf16>
    %68 = vector.shape_cast %67 : vector<1x16x1024xbf16> to vector<16x1024xbf16>
    %c336 = arith.constant 336 : index
    %c0_75 = arith.constant 0 : index
    %69 = vector.load %arg9[%c336, %c0_75] : memref<432x1024xbf16, #tpu.memory_space<vmem>>, vector<16x1024xbf16>
    tpu.vector_store %arg9[%c336, %c0_75], %68 {strides = array<i32>} : memref<432x1024xbf16, #tpu.memory_space<vmem>>, vector<16x1024xbf16>,
    %c0_76 = arith.constant 0 : index
    %c0_77 = arith.constant 0 : index
    %c419 = arith.constant 419 : index
    %70 = vector.load %arg1[%c0_76, %c0_77, %c419] : memref<1x16x2048xbf16, #tpu.memory_space<vmem>>, vector<1x16x1024xbf16>
    %71 = vector.shape_cast %70 : vector<1x16x1024xbf16> to vector<16x1024xbf16>
    %c352 = arith.constant 352 : index
    %c0_78 = arith.constant 0 : index
    %72 = vector.load %arg9[%c352, %c0_78] : memref<432x1024xbf16, #tpu.memory_space<vmem>>, vector<16x1024xbf16>
    tpu.vector_store %arg9[%c352, %c0_78], %71 {strides = array<i32>} : memref<432x1024xbf16, #tpu.memory_space<vmem>>, vector<16x1024xbf16>,
    %c0_79 = arith.constant 0 : index
    %c0_80 = arith.constant 0 : index
    %c420 = arith.constant 420 : index
    %73 = vector.load %arg1[%c0_79, %c0_80, %c420] : memref<1x16x2048xbf16, #tpu.memory_space<vmem>>, vector<1x16x1024xbf16>
    %74 = vector.shape_cast %73 : vector<1x16x1024xbf16> to vector<16x1024xbf16>
    %c368 = arith.constant 368 : index
    %c0_81 = arith.constant 0 : index
    %75 = vector.load %arg9[%c368, %c0_81] : memref<432x1024xbf16, #tpu.memory_space<vmem>>, vector<16x1024xbf16>
    tpu.vector_store %arg9[%c368, %c0_81], %74 {strides = array<i32>} : memref<432x1024xbf16, #tpu.memory_space<vmem>>, vector<16x1024xbf16>,
    %c0_82 = arith.constant 0 : index
    %c0_83 = arith.constant 0 : index
    %c430 = arith.constant 430 : index
    %76 = vector.load %arg1[%c0_82, %c0_83, %c430] : memref<1x16x2048xbf16, #tpu.memory_space<vmem>>, vector<1x16x1024xbf16>
    %77 = vector.shape_cast %76 : vector<1x16x1024xbf16> to vector<16x1024xbf16>
    %c384 = arith.constant 384 : index
    %c0_84 = arith.constant 0 : index
    %78 = vector.load %arg9[%c384, %c0_84] : memref<432x1024xbf16, #tpu.memory_space<vmem>>, vector<16x1024xbf16>
    tpu.vector_store %arg9[%c384, %c0_84], %77 {strides = array<i32>} : memref<432x1024xbf16, #tpu.memory_space<vmem>>, vector<16x1024xbf16>,
    %c0_85 = arith.constant 0 : index
    %c0_86 = arith.constant 0 : index
    %c431 = arith.constant 431 : index
    %79 = vector.load %arg1[%c0_85, %c0_86, %c431] : memref<1x16x2048xbf16, #tpu.memory_space<vmem>>, vector<1x16x1024xbf16>
    %80 = vector.shape_cast %79 : vector<1x16x1024xbf16> to vector<16x1024xbf16>
    %c400 = arith.constant 400 : index
    %c0_87 = arith.constant 0 : index
    %81 = vector.load %arg9[%c400, %c0_87] : memref<432x1024xbf16, #tpu.memory_space<vmem>>, vector<16x1024xbf16>
    tpu.vector_store %arg9[%c400, %c0_87], %80 {strides = array<i32>} : memref<432x1024xbf16, #tpu.memory_space<vmem>>, vector<16x1024xbf16>,
    %c0_88 = arith.constant 0 : index
    %c0_89 = arith.constant 0 : index
    %c432 = arith.constant 432 : index
    %82 = vector.load %arg1[%c0_88, %c0_89, %c432] : memref<1x16x2048xbf16, #tpu.memory_space<vmem>>, vector<1x16x1024xbf16>
    %83 = vector.shape_cast %82 : vector<1x16x1024xbf16> to vector<16x1024xbf16>
    %c416 = arith.constant 416 : index
    %c0_90 = arith.constant 0 : index
    %84 = vector.load %arg9[%c416, %c0_90] : memref<432x1024xbf16, #tpu.memory_space<vmem>>, vector<16x1024xbf16>
    tpu.vector_store %arg9[%c416, %c0_90], %83 {strides = array<i32>} : memref<432x1024xbf16, #tpu.memory_space<vmem>>, vector<16x1024xbf16>,
    %c0_91 = arith.constant 0 : index
    %c0_92 = arith.constant 0 : index
    %85 = vector.load %arg9[%c0_91, %c0_92] : memref<432x1024xbf16, #tpu.memory_space<vmem>>, vector<432x1024xbf16>
    %cst = arith.constant dense<0.000000e+00> : vector<16x1024xf32>
    %86 = tpu.matmul %0, %85, %cst {dimension_numbers = #tpu.dot_dimension_numbers<[1], [0], [0], [1], [0, 0, 1, 1], [], []>} : vector<16x432xbf16>, vector<432x1024xbf16>, vector<16x1024xf32> -> vector<16x1024xf32>
    %87 = vector.broadcast %2 : vector<16x1xf32> to vector<16x1024xf32>
    %88 = arith.addf %86, %87 : vector<16x1024xf32>
    %cst_93 = arith.constant 0.000000e+00 : f32
    %89 = vector.broadcast %cst_93 : f32 to vector<16x1024xf32>
    %90 = arith.maximumf %88, %89 : vector<16x1024xf32>
    %c0_94 = arith.constant 0 : index
    %c0_95 = arith.constant 0 : index
    %91 = vector.load %arg2[%c0_94, %c0_95] : memref<1x1536xbf16, #tpu.memory_space<vmem>>, vector<1x1024xbf16>
    %92 = arith.extf %91 : vector<1x1024xbf16> to vector<1x1024xf32>
    %93 = vector.broadcast %92 : vector<1x1024xf32> to vector<16x1024xf32>
    %94 = arith.mulf %93, %90 : vector<16x1024xf32>
    %95 = arith.truncf %94 : vector<16x1024xf32> to vector<16x1024xbf16>
    %c0_96 = arith.constant 0 : index
    %c0_97 = arith.constant 0 : index
    %96 = vector.load %arg8[%c0_96, %c0_97] : memref<16x1536xbf16, #tpu.memory_space<vmem>>, vector<16x1024xbf16>
    tpu.vector_store %arg8[%c0_96, %c0_97], %95 {strides = array<i32>} : memref<16x1536xbf16, #tpu.memory_space<vmem>>, vector<16x1024xbf16>,
    %c0_98 = arith.constant 0 : index
    %c0_99 = arith.constant 0 : index
    %c1142 = arith.constant 1142 : index
    %97 = vector.load %arg1[%c0_98, %c0_99, %c1142] : memref<1x16x2048xbf16, #tpu.memory_space<vmem>>, vector<1x16x512xbf16>
    %98 = vector.shape_cast %97 : vector<1x16x512xbf16> to vector<16x512xbf16>
    %c0_100 = arith.constant 0 : index
    %c0_101 = arith.constant 0 : index
    %99 = vector.load %arg9[%c0_100, %c0_101] : memref<432x1024xbf16, #tpu.memory_space<vmem>>, vector<16x512xbf16>
    tpu.vector_store %arg9[%c0_100, %c0_101], %98 {strides = array<i32>} : memref<432x1024xbf16, #tpu.memory_space<vmem>>, vector<16x512xbf16>,
    %c0_102 = arith.constant 0 : index
    %c0_103 = arith.constant 0 : index
    %c1143 = arith.constant 1143 : index
    %100 = vector.load %arg1[%c0_102, %c0_103, %c1143] : memref<1x16x2048xbf16, #tpu.memory_space<vmem>>, vector<1x16x512xbf16>
    %101 = vector.shape_cast %100 : vector<1x16x512xbf16> to vector<16x512xbf16>
    %c16_104 = arith.constant 16 : index
    %c0_105 = arith.constant 0 : index
    %102 = vector.load %arg9[%c16_104, %c0_105] : memref<432x1024xbf16, #tpu.memory_space<vmem>>, vector<16x512xbf16>
    tpu.vector_store %arg9[%c16_104, %c0_105], %101 {strides = array<i32>} : memref<432x1024xbf16, #tpu.memory_space<vmem>>, vector<16x512xbf16>,
    %c0_106 = arith.constant 0 : index
    %c0_107 = arith.constant 0 : index
    %c1144 = arith.constant 1144 : index
    %103 = vector.load %arg1[%c0_106, %c0_107, %c1144] : memref<1x16x2048xbf16, #tpu.memory_space<vmem>>, vector<1x16x512xbf16>
    %104 = vector.shape_cast %103 : vector<1x16x512xbf16> to vector<16x512xbf16>
    %c32_108 = arith.constant 32 : index
    %c0_109 = arith.constant 0 : index
    %105 = vector.load %arg9[%c32_108, %c0_109] : memref<432x1024xbf16, #tpu.memory_space<vmem>>, vector<16x512xbf16>
    tpu.vector_store %arg9[%c32_108, %c0_109], %104 {strides = array<i32>} : memref<432x1024xbf16, #tpu.memory_space<vmem>>, vector<16x512xbf16>,
    %c0_110 = arith.constant 0 : index
    %c0_111 = arith.constant 0 : index
    %c1154 = arith.constant 1154 : index
    %106 = vector.load %arg1[%c0_110, %c0_111, %c1154] : memref<1x16x2048xbf16, #tpu.memory_space<vmem>>, vector<1x16x512xbf16>
    %107 = vector.shape_cast %106 : vector<1x16x512xbf16> to vector<16x512xbf16>
    %c48_112 = arith.constant 48 : index
    %c0_113 = arith.constant 0 : index
    %108 = vector.load %arg9[%c48_112, %c0_113] : memref<432x1024xbf16, #tpu.memory_space<vmem>>, vector<16x512xbf16>
    tpu.vector_store %arg9[%c48_112, %c0_113], %107 {strides = array<i32>} : memref<432x1024xbf16, #tpu.memory_space<vmem>>, vector<16x512xbf16>,
    %c0_114 = arith.constant 0 : index
    %c0_115 = arith.constant 0 : index
    %c1155 = arith.constant 1155 : index
    %109 = vector.load %arg1[%c0_114, %c0_115, %c1155] : memref<1x16x2048xbf16, #tpu.memory_space<vmem>>, vector<1x16x512xbf16>
    %110 = vector.shape_cast %109 : vector<1x16x512xbf16> to vector<16x512xbf16>
    %c64_116 = arith.constant 64 : index
    %c0_117 = arith.constant 0 : index
    %111 = vector.load %arg9[%c64_116, %c0_117] : memref<432x1024xbf16, #tpu.memory_space<vmem>>, vector<16x512xbf16>
    tpu.vector_store %arg9[%c64_116, %c0_117], %110 {strides = array<i32>} : memref<432x1024xbf16, #tpu.memory_space<vmem>>, vector<16x512xbf16>,
    %c0_118 = arith.constant 0 : index
    %c0_119 = arith.constant 0 : index
    %c1156 = arith.constant 1156 : index
    %112 = vector.load %arg1[%c0_118, %c0_119, %c1156] : memref<1x16x2048xbf16, #tpu.memory_space<vmem>>, vector<1x16x512xbf16>
    %113 = vector.shape_cast %112 : vector<1x16x512xbf16> to vector<16x512xbf16>
    %c80_120 = arith.constant 80 : index
    %c0_121 = arith.constant 0 : index
    %114 = vector.load %arg9[%c80_120, %c0_121] : memref<432x1024xbf16, #tpu.memory_space<vmem>>, vector<16x512xbf16>
    tpu.vector_store %arg9[%c80_120, %c0_121], %113 {strides = array<i32>} : memref<432x1024xbf16, #tpu.memory_space<vmem>>, vector<16x512xbf16>,
    %c0_122 = arith.constant 0 : index
    %c0_123 = arith.constant 0 : index
    %c1166 = arith.constant 1166 : index
    %115 = vector.load %arg1[%c0_122, %c0_123, %c1166] : memref<1x16x2048xbf16, #tpu.memory_space<vmem>>, vector<1x16x512xbf16>
    %116 = vector.shape_cast %115 : vector<1x16x512xbf16> to vector<16x512xbf16>
    %c96_124 = arith.constant 96 : index
    %c0_125 = arith.constant 0 : index
    %117 = vector.load %arg9[%c96_124, %c0_125] : memref<432x1024xbf16, #tpu.memory_space<vmem>>, vector<16x512xbf16>
    tpu.vector_store %arg9[%c96_124, %c0_125], %116 {strides = array<i32>} : memref<432x1024xbf16, #tpu.memory_space<vmem>>, vector<16x512xbf16>,
    %c0_126 = arith.constant 0 : index
    %c0_127 = arith.constant 0 : index
    %c1167 = arith.constant 1167 : index
    %118 = vector.load %arg1[%c0_126, %c0_127, %c1167] : memref<1x16x2048xbf16, #tpu.memory_space<vmem>>, vector<1x16x512xbf16>
    %119 = vector.shape_cast %118 : vector<1x16x512xbf16> to vector<16x512xbf16>
    %c112_128 = arith.constant 112 : index
    %c0_129 = arith.constant 0 : index
    %120 = vector.load %arg9[%c112_128, %c0_129] : memref<432x1024xbf16, #tpu.memory_space<vmem>>, vector<16x512xbf16>
    tpu.vector_store %arg9[%c112_128, %c0_129], %119 {strides = array<i32>} : memref<432x1024xbf16, #tpu.memory_space<vmem>>, vector<16x512xbf16>,
    %c0_130 = arith.constant 0 : index
    %c0_131 = arith.constant 0 : index
    %c1168 = arith.constant 1168 : index
    %121 = vector.load %arg1[%c0_130, %c0_131, %c1168] : memref<1x16x2048xbf16, #tpu.memory_space<vmem>>, vector<1x16x512xbf16>
    %122 = vector.shape_cast %121 : vector<1x16x512xbf16> to vector<16x512xbf16>
    %c128_132 = arith.constant 128 : index
    %c0_133 = arith.constant 0 : index
    %123 = vector.load %arg9[%c128_132, %c0_133] : memref<432x1024xbf16, #tpu.memory_space<vmem>>, vector<16x512xbf16>
    tpu.vector_store %arg9[%c128_132, %c0_133], %122 {strides = array<i32>} : memref<432x1024xbf16, #tpu.memory_space<vmem>>, vector<16x512xbf16>,
    %c0_134 = arith.constant 0 : index
    %c0_135 = arith.constant 0 : index
    %c1286 = arith.constant 1286 : index
    %124 = vector.load %arg1[%c0_134, %c0_135, %c1286] : memref<1x16x2048xbf16, #tpu.memory_space<vmem>>, vector<1x16x512xbf16>
    %125 = vector.shape_cast %124 : vector<1x16x512xbf16> to vector<16x512xbf16>
    %c144_136 = arith.constant 144 : index
    %c0_137 = arith.constant 0 : index
    %126 = vector.load %arg9[%c144_136, %c0_137] : memref<432x1024xbf16, #tpu.memory_space<vmem>>, vector<16x512xbf16>
    tpu.vector_store %arg9[%c144_136, %c0_137], %125 {strides = array<i32>} : memref<432x1024xbf16, #tpu.memory_space<vmem>>, vector<16x512xbf16>,
    %c0_138 = arith.constant 0 : index
    %c0_139 = arith.constant 0 : index
    %c1287 = arith.constant 1287 : index
    %127 = vector.load %arg1[%c0_138, %c0_139, %c1287] : memref<1x16x2048xbf16, #tpu.memory_space<vmem>>, vector<1x16x512xbf16>
    %128 = vector.shape_cast %127 : vector<1x16x512xbf16> to vector<16x512xbf16>
    %c160_140 = arith.constant 160 : index
    %c0_141 = arith.constant 0 : index
    %129 = vector.load %arg9[%c160_140, %c0_141] : memref<432x1024xbf16, #tpu.memory_space<vmem>>, vector<16x512xbf16>
    tpu.vector_store %arg9[%c160_140, %c0_141], %128 {strides = array<i32>} : memref<432x1024xbf16, #tpu.memory_space<vmem>>, vector<16x512xbf16>,
    %c0_142 = arith.constant 0 : index
    %c0_143 = arith.constant 0 : index
    %c1288 = arith.constant 1288 : index
    %130 = vector.load %arg1[%c0_142, %c0_143, %c1288] : memref<1x16x2048xbf16, #tpu.memory_space<vmem>>, vector<1x16x512xbf16>
    %131 = vector.shape_cast %130 : vector<1x16x512xbf16> to vector<16x512xbf16>
    %c176_144 = arith.constant 176 : index
    %c0_145 = arith.constant 0 : index
    %132 = vector.load %arg9[%c176_144, %c0_145] : memref<432x1024xbf16, #tpu.memory_space<vmem>>, vector<16x512xbf16>
    tpu.vector_store %arg9[%c176_144, %c0_145], %131 {strides = array<i32>} : memref<432x1024xbf16, #tpu.memory_space<vmem>>, vector<16x512xbf16>,
    %c0_146 = arith.constant 0 : index
    %c0_147 = arith.constant 0 : index
    %c1298 = arith.constant 1298 : index
    %133 = vector.load %arg1[%c0_146, %c0_147, %c1298] : memref<1x16x2048xbf16, #tpu.memory_space<vmem>>, vector<1x16x512xbf16>
    %134 = vector.shape_cast %133 : vector<1x16x512xbf16> to vector<16x512xbf16>
    %c192_148 = arith.constant 192 : index
    %c0_149 = arith.constant 0 : index
    %135 = vector.load %arg9[%c192_148, %c0_149] : memref<432x1024xbf16, #tpu.memory_space<vmem>>, vector<16x512xbf16>
    tpu.vector_store %arg9[%c192_148, %c0_149], %134 {strides = array<i32>} : memref<432x1024xbf16, #tpu.memory_space<vmem>>, vector<16x512xbf16>,
    %c0_150 = arith.constant 0 : index
    %c0_151 = arith.constant 0 : index
    %c1299 = arith.constant 1299 : index
    %136 = vector.load %arg1[%c0_150, %c0_151, %c1299] : memref<1x16x2048xbf16, #tpu.memory_space<vmem>>, vector<1x16x512xbf16>
    %137 = vector.shape_cast %136 : vector<1x16x512xbf16> to vector<16x512xbf16>
    %c208_152 = arith.constant 208 : index
    %c0_153 = arith.constant 0 : index
    %138 = vector.load %arg9[%c208_152, %c0_153] : memref<432x1024xbf16, #tpu.memory_space<vmem>>, vector<16x512xbf16>
    tpu.vector_store %arg9[%c208_152, %c0_153], %137 {strides = array<i32>} : memref<432x1024xbf16, #tpu.memory_space<vmem>>, vector<16x512xbf16>,
    %c0_154 = arith.constant 0 : index
    %c0_155 = arith.constant 0 : index
    %c1300 = arith.constant 1300 : index
    %139 = vector.load %arg1[%c0_154, %c0_155, %c1300] : memref<1x16x2048xbf16, #tpu.memory_space<vmem>>, vector<1x16x512xbf16>
    %140 = vector.shape_cast %139 : vector<1x16x512xbf16> to vector<16x512xbf16>
    %c224_156 = arith.constant 224 : index
    %c0_157 = arith.constant 0 : index
    %141 = vector.load %arg9[%c224_156, %c0_157] : memref<432x1024xbf16, #tpu.memory_space<vmem>>, vector<16x512xbf16>
    tpu.vector_store %arg9[%c224_156, %c0_157], %140 {strides = array<i32>} : memref<432x1024xbf16, #tpu.memory_space<vmem>>, vector<16x512xbf16>,
    %c0_158 = arith.constant 0 : index
    %c0_159 = arith.constant 0 : index
    %c1310 = arith.constant 1310 : index
    %142 = vector.load %arg1[%c0_158, %c0_159, %c1310] : memref<1x16x2048xbf16, #tpu.memory_space<vmem>>, vector<1x16x512xbf16>
    %143 = vector.shape_cast %142 : vector<1x16x512xbf16> to vector<16x512xbf16>
    %c240_160 = arith.constant 240 : index
    %c0_161 = arith.constant 0 : index
    %144 = vector.load %arg9[%c240_160, %c0_161] : memref<432x1024xbf16, #tpu.memory_space<vmem>>, vector<16x512xbf16>
    tpu.vector_store %arg9[%c240_160, %c0_161], %143 {strides = array<i32>} : memref<432x1024xbf16, #tpu.memory_space<vmem>>, vector<16x512xbf16>,
    %c0_162 = arith.constant 0 : index
    %c0_163 = arith.constant 0 : index
    %c1311 = arith.constant 1311 : index
    %145 = vector.load %arg1[%c0_162, %c0_163, %c1311] : memref<1x16x2048xbf16, #tpu.memory_space<vmem>>, vector<1x16x512xbf16>
    %146 = vector.shape_cast %145 : vector<1x16x512xbf16> to vector<16x512xbf16>
    %c256_164 = arith.constant 256 : index
    %c0_165 = arith.constant 0 : index
    %147 = vector.load %arg9[%c256_164, %c0_165] : memref<432x1024xbf16, #tpu.memory_space<vmem>>, vector<16x512xbf16>
    tpu.vector_store %arg9[%c256_164, %c0_165], %146 {strides = array<i32>} : memref<432x1024xbf16, #tpu.memory_space<vmem>>, vector<16x512xbf16>,
    %c0_166 = arith.constant 0 : index
    %c0_167 = arith.constant 0 : index
    %c1312 = arith.constant 1312 : index
    %148 = vector.load %arg1[%c0_166, %c0_167, %c1312] : memref<1x16x2048xbf16, #tpu.memory_space<vmem>>, vector<1x16x512xbf16>
    %149 = vector.shape_cast %148 : vector<1x16x512xbf16> to vector<16x512xbf16>
    %c272_168 = arith.constant 272 : index
    %c0_169 = arith.constant 0 : index
    %150 = vector.load %arg9[%c272_168, %c0_169] : memref<432x1024xbf16, #tpu.memory_space<vmem>>, vector<16x512xbf16>
    tpu.vector_store %arg9[%c272_168, %c0_169], %149 {strides = array<i32>} : memref<432x1024xbf16, #tpu.memory_space<vmem>>, vector<16x512xbf16>,
    %c0_170 = arith.constant 0 : index
    %c0_171 = arith.constant 0 : index
    %c1430 = arith.constant 1430 : index
    %151 = vector.load %arg1[%c0_170, %c0_171, %c1430] : memref<1x16x2048xbf16, #tpu.memory_space<vmem>>, vector<1x16x512xbf16>
    %152 = vector.shape_cast %151 : vector<1x16x512xbf16> to vector<16x512xbf16>
    %c288_172 = arith.constant 288 : index
    %c0_173 = arith.constant 0 : index
    %153 = vector.load %arg9[%c288_172, %c0_173] : memref<432x1024xbf16, #tpu.memory_space<vmem>>, vector<16x512xbf16>
    tpu.vector_store %arg9[%c288_172, %c0_173], %152 {strides = array<i32>} : memref<432x1024xbf16, #tpu.memory_space<vmem>>, vector<16x512xbf16>,
    %c0_174 = arith.constant 0 : index
    %c0_175 = arith.constant 0 : index
    %c1431 = arith.constant 1431 : index
    %154 = vector.load %arg1[%c0_174, %c0_175, %c1431] : memref<1x16x2048xbf16, #tpu.memory_space<vmem>>, vector<1x16x512xbf16>
    %155 = vector.shape_cast %154 : vector<1x16x512xbf16> to vector<16x512xbf16>
    %c304_176 = arith.constant 304 : index
    %c0_177 = arith.constant 0 : index
    %156 = vector.load %arg9[%c304_176, %c0_177] : memref<432x1024xbf16, #tpu.memory_space<vmem>>, vector<16x512xbf16>
    tpu.vector_store %arg9[%c304_176, %c0_177], %155 {strides = array<i32>} : memref<432x1024xbf16, #tpu.memory_space<vmem>>, vector<16x512xbf16>,
    %c0_178 = arith.constant 0 : index
    %c0_179 = arith.constant 0 : index
    %c1432 = arith.constant 1432 : index
    %157 = vector.load %arg1[%c0_178, %c0_179, %c1432] : memref<1x16x2048xbf16, #tpu.memory_space<vmem>>, vector<1x16x512xbf16>
    %158 = vector.shape_cast %157 : vector<1x16x512xbf16> to vector<16x512xbf16>
    %c320_180 = arith.constant 320 : index
    %c0_181 = arith.constant 0 : index
    %159 = vector.load %arg9[%c320_180, %c0_181] : memref<432x1024xbf16, #tpu.memory_space<vmem>>, vector<16x512xbf16>
    tpu.vector_store %arg9[%c320_180, %c0_181], %158 {strides = array<i32>} : memref<432x1024xbf16, #tpu.memory_space<vmem>>, vector<16x512xbf16>,
    %c0_182 = arith.constant 0 : index
    %c0_183 = arith.constant 0 : index
    %c1442 = arith.constant 1442 : index
    %160 = vector.load %arg1[%c0_182, %c0_183, %c1442] : memref<1x16x2048xbf16, #tpu.memory_space<vmem>>, vector<1x16x512xbf16>
    %161 = vector.shape_cast %160 : vector<1x16x512xbf16> to vector<16x512xbf16>
    %c336_184 = arith.constant 336 : index
    %c0_185 = arith.constant 0 : index
    %162 = vector.load %arg9[%c336_184, %c0_185] : memref<432x1024xbf16, #tpu.memory_space<vmem>>, vector<16x512xbf16>
    tpu.vector_store %arg9[%c336_184, %c0_185], %161 {strides = array<i32>} : memref<432x1024xbf16, #tpu.memory_space<vmem>>, vector<16x512xbf16>,
    %c0_186 = arith.constant 0 : index
    %c0_187 = arith.constant 0 : index
    %c1443 = arith.constant 1443 : index
    %163 = vector.load %arg1[%c0_186, %c0_187, %c1443] : memref<1x16x2048xbf16, #tpu.memory_space<vmem>>, vector<1x16x512xbf16>
    %164 = vector.shape_cast %163 : vector<1x16x512xbf16> to vector<16x512xbf16>
    %c352_188 = arith.constant 352 : index
    %c0_189 = arith.constant 0 : index
    %165 = vector.load %arg9[%c352_188, %c0_189] : memref<432x1024xbf16, #tpu.memory_space<vmem>>, vector<16x512xbf16>
    tpu.vector_store %arg9[%c352_188, %c0_189], %164 {strides = array<i32>} : memref<432x1024xbf16, #tpu.memory_space<vmem>>, vector<16x512xbf16>,
    %c0_190 = arith.constant 0 : index
    %c0_191 = arith.constant 0 : index
    %c1444 = arith.constant 1444 : index
    %166 = vector.load %arg1[%c0_190, %c0_191, %c1444] : memref<1x16x2048xbf16, #tpu.memory_space<vmem>>, vector<1x16x512xbf16>
    %167 = vector.shape_cast %166 : vector<1x16x512xbf16> to vector<16x512xbf16>
    %c368_192 = arith.constant 368 : index
    %c0_193 = arith.constant 0 : index
    %168 = vector.load %arg9[%c368_192, %c0_193] : memref<432x1024xbf16, #tpu.memory_space<vmem>>, vector<16x512xbf16>
    tpu.vector_store %arg9[%c368_192, %c0_193], %167 {strides = array<i32>} : memref<432x1024xbf16, #tpu.memory_space<vmem>>, vector<16x512xbf16>,
    %c0_194 = arith.constant 0 : index
    %c0_195 = arith.constant 0 : index
    %c1454 = arith.constant 1454 : index
    %169 = vector.load %arg1[%c0_194, %c0_195, %c1454] : memref<1x16x2048xbf16, #tpu.memory_space<vmem>>, vector<1x16x512xbf16>
    %170 = vector.shape_cast %169 : vector<1x16x512xbf16> to vector<16x512xbf16>
    %c384_196 = arith.constant 384 : index
    %c0_197 = arith.constant 0 : index
    %171 = vector.load %arg9[%c384_196, %c0_197] : memref<432x1024xbf16, #tpu.memory_space<vmem>>, vector<16x512xbf16>
    tpu.vector_store %arg9[%c384_196, %c0_197], %170 {strides = array<i32>} : memref<432x1024xbf16, #tpu.memory_space<vmem>>, vector<16x512xbf16>,
    %c0_198 = arith.constant 0 : index
    %c0_199 = arith.constant 0 : index
    %c1455 = arith.constant 1455 : index
    %172 = vector.load %arg1[%c0_198, %c0_199, %c1455] : memref<1x16x2048xbf16, #tpu.memory_space<vmem>>, vector<1x16x512xbf16>
    %173 = vector.shape_cast %172 : vector<1x16x512xbf16> to vector<16x512xbf16>
    %c400_200 = arith.constant 400 : index
    %c0_201 = arith.constant 0 : index
    %174 = vector.load %arg9[%c400_200, %c0_201] : memref<432x1024xbf16, #tpu.memory_space<vmem>>, vector<16x512xbf16>
    tpu.vector_store %arg9[%c400_200, %c0_201], %173 {strides = array<i32>} : memref<432x1024xbf16, #tpu.memory_space<vmem>>, vector<16x512xbf16>,
    %c0_202 = arith.constant 0 : index
    %c0_203 = arith.constant 0 : index
    %c1456 = arith.constant 1456 : index
    %175 = vector.load %arg1[%c0_202, %c0_203, %c1456] : memref<1x16x2048xbf16, #tpu.memory_space<vmem>>, vector<1x16x512xbf16>
    %176 = vector.shape_cast %175 : vector<1x16x512xbf16> to vector<16x512xbf16>
    %c416_204 = arith.constant 416 : index
    %c0_205 = arith.constant 0 : index
    %177 = vector.load %arg9[%c416_204, %c0_205] : memref<432x1024xbf16, #tpu.memory_space<vmem>>, vector<16x512xbf16>
    tpu.vector_store %arg9[%c416_204, %c0_205], %176 {strides = array<i32>} : memref<432x1024xbf16, #tpu.memory_space<vmem>>, vector<16x512xbf16>,
    %c0_206 = arith.constant 0 : index
    %c0_207 = arith.constant 0 : index
    %178 = vector.load %arg9[%c0_206, %c0_207] : memref<432x1024xbf16, #tpu.memory_space<vmem>>, vector<432x512xbf16>
    %cst_208 = arith.constant dense<0.000000e+00> : vector<16x512xf32>
    %179 = tpu.matmul %0, %178, %cst_208 {dimension_numbers = #tpu.dot_dimension_numbers<[1], [0], [0], [1], [0, 0, 1, 1], [], []>} : vector<16x432xbf16>, vector<432x512xbf16>, vector<16x512xf32> -> vector<16x512xf32>
    %180 = vector.broadcast %2 : vector<16x1xf32> to vector<16x512xf32>
    %181 = arith.addf %179, %180 : vector<16x512xf32>
    %cst_209 = arith.constant 0.000000e+00 : f32
    %182 = vector.broadcast %cst_209 : f32 to vector<16x512xf32>
    %183 = arith.maximumf %181, %182 : vector<16x512xf32>
    %c0_210 = arith.constant 0 : index
    %c1024 = arith.constant 1024 : index
    %184 = vector.load %arg2[%c0_210, %c1024] : memref<1x1536xbf16, #tpu.memory_space<vmem>>, vector<1x512xbf16>
    %185 = arith.extf %184 : vector<1x512xbf16> to vector<1x512xf32>
    %186 = vector.broadcast %185 : vector<1x512xf32> to vector<16x512xf32>
    %187 = arith.mulf %186, %183 : vector<16x512xf32>
    %188 = arith.truncf %187 : vector<16x512xf32> to vector<16x512xbf16>
    %c0_211 = arith.constant 0 : index
    %c1024_212 = arith.constant 1024 : index
    %189 = vector.load %arg8[%c0_211, %c1024_212] : memref<16x1536xbf16, #tpu.memory_space<vmem>>, vector<16x512xbf16>
    tpu.vector_store %arg8[%c0_211, %c1024_212], %188 {strides = array<i32>} : memref<16x1536xbf16, #tpu.memory_space<vmem>>, vector<16x512xbf16>,
    %c0_213 = arith.constant 0 : index
    %c0_214 = arith.constant 0 : index
    %190 = vector.load %arg8[%c0_213, %c0_214] : memref<16x1536xbf16, #tpu.memory_space<vmem>>, vector<16x1024xbf16>
    %c0_215 = arith.constant 0 : index
    %c0_216 = arith.constant 0 : index
    %191 = vector.load %arg10[%c0_215, %c0_216] : memref<448x1024xbf16, #tpu.memory_space<vmem>>, vector<16x1024xbf16>
    tpu.vector_store %arg10[%c0_215, %c0_216], %190 {strides = array<i32>} : memref<448x1024xbf16, #tpu.memory_space<vmem>>, vector<16x1024xbf16>,
    %c0_217 = arith.constant 0 : index
    %c1 = arith.constant 1 : index
    %192 = vector.load %arg8[%c0_217, %c1] : memref<16x1536xbf16, #tpu.memory_space<vmem>>, vector<16x1024xbf16>
    %c16_218 = arith.constant 16 : index
    %c0_219 = arith.constant 0 : index
    %193 = vector.load %arg10[%c16_218, %c0_219] : memref<448x1024xbf16, #tpu.memory_space<vmem>>, vector<16x1024xbf16>
    tpu.vector_store %arg10[%c16_218, %c0_219], %192 {strides = array<i32>} : memref<448x1024xbf16, #tpu.memory_space<vmem>>, vector<16x1024xbf16>,
    %c0_220 = arith.constant 0 : index
    %c2 = arith.constant 2 : index
    %194 = vector.load %arg8[%c0_220, %c2] : memref<16x1536xbf16, #tpu.memory_space<vmem>>, vector<16x1024xbf16>
    %c32_221 = arith.constant 32 : index
    %c0_222 = arith.constant 0 : index
    %195 = vector.load %arg10[%c32_221, %c0_222] : memref<448x1024xbf16, #tpu.memory_space<vmem>>, vector<16x1024xbf16>
    tpu.vector_store %arg10[%c32_221, %c0_222], %194 {strides = array<i32>} : memref<448x1024xbf16, #tpu.memory_space<vmem>>, vector<16x1024xbf16>,
    %c0_223 = arith.constant 0 : index
    %c12 = arith.constant 12 : index
    %196 = vector.load %arg8[%c0_223, %c12] : memref<16x1536xbf16, #tpu.memory_space<vmem>>, vector<16x1024xbf16>
    %c48_224 = arith.constant 48 : index
    %c0_225 = arith.constant 0 : index
    %197 = vector.load %arg10[%c48_224, %c0_225] : memref<448x1024xbf16, #tpu.memory_space<vmem>>, vector<16x1024xbf16>
    tpu.vector_store %arg10[%c48_224, %c0_225], %196 {strides = array<i32>} : memref<448x1024xbf16, #tpu.memory_space<vmem>>, vector<16x1024xbf16>,
    %c0_226 = arith.constant 0 : index
    %c13 = arith.constant 13 : index
    %198 = vector.load %arg8[%c0_226, %c13] : memref<16x1536xbf16, #tpu.memory_space<vmem>>, vector<16x1024xbf16>
    %c64_227 = arith.constant 64 : index
    %c0_228 = arith.constant 0 : index
    %199 = vector.load %arg10[%c64_227, %c0_228] : memref<448x1024xbf16, #tpu.memory_space<vmem>>, vector<16x1024xbf16>
    tpu.vector_store %arg10[%c64_227, %c0_228], %198 {strides = array<i32>} : memref<448x1024xbf16, #tpu.memory_space<vmem>>, vector<16x1024xbf16>,
    %c0_229 = arith.constant 0 : index
    %c14 = arith.constant 14 : index
    %200 = vector.load %arg8[%c0_229, %c14] : memref<16x1536xbf16, #tpu.memory_space<vmem>>, vector<16x1024xbf16>
    %c80_230 = arith.constant 80 : index
    %c0_231 = arith.constant 0 : index
    %201 = vector.load %arg10[%c80_230, %c0_231] : memref<448x1024xbf16, #tpu.memory_space<vmem>>, vector<16x1024xbf16>
    tpu.vector_store %arg10[%c80_230, %c0_231], %200 {strides = array<i32>} : memref<448x1024xbf16, #tpu.memory_space<vmem>>, vector<16x1024xbf16>,
    %c0_232 = arith.constant 0 : index
    %c24 = arith.constant 24 : index
    %202 = vector.load %arg8[%c0_232, %c24] : memref<16x1536xbf16, #tpu.memory_space<vmem>>, vector<16x1024xbf16>
    %c96_233 = arith.constant 96 : index
    %c0_234 = arith.constant 0 : index
    %203 = vector.load %arg10[%c96_233, %c0_234] : memref<448x1024xbf16, #tpu.memory_space<vmem>>, vector<16x1024xbf16>
    tpu.vector_store %arg10[%c96_233, %c0_234], %202 {strides = array<i32>} : memref<448x1024xbf16, #tpu.memory_space<vmem>>, vector<16x1024xbf16>,
    %c0_235 = arith.constant 0 : index
    %c25 = arith.constant 25 : index
    %204 = vector.load %arg8[%c0_235, %c25] : memref<16x1536xbf16, #tpu.memory_space<vmem>>, vector<16x1024xbf16>
    %c112_236 = arith.constant 112 : index
    %c0_237 = arith.constant 0 : index
    %205 = vector.load %arg10[%c112_236, %c0_237] : memref<448x1024xbf16, #tpu.memory_space<vmem>>, vector<16x1024xbf16>
    tpu.vector_store %arg10[%c112_236, %c0_237], %204 {strides = array<i32>} : memref<448x1024xbf16, #tpu.memory_space<vmem>>, vector<16x1024xbf16>,
    %c0_238 = arith.constant 0 : index
    %c26 = arith.constant 26 : index
    %206 = vector.load %arg8[%c0_238, %c26] : memref<16x1536xbf16, #tpu.memory_space<vmem>>, vector<16x1024xbf16>
    %c128_239 = arith.constant 128 : index
    %c0_240 = arith.constant 0 : index
    %207 = vector.load %arg10[%c128_239, %c0_240] : memref<448x1024xbf16, #tpu.memory_space<vmem>>, vector<16x1024xbf16>
    tpu.vector_store %arg10[%c128_239, %c0_240], %206 {strides = array<i32>} : memref<448x1024xbf16, #tpu.memory_space<vmem>>, vector<16x1024xbf16>,
    %c0_241 = arith.constant 0 : index
    %c144_242 = arith.constant 144 : index
    %208 = vector.load %arg8[%c0_241, %c144_242] : memref<16x1536xbf16, #tpu.memory_space<vmem>>, vector<16x1024xbf16>
    %c144_243 = arith.constant 144 : index
    %c0_244 = arith.constant 0 : index
    %209 = vector.load %arg10[%c144_243, %c0_244] : memref<448x1024xbf16, #tpu.memory_space<vmem>>, vector<16x1024xbf16>
    tpu.vector_store %arg10[%c144_243, %c0_244], %208 {strides = array<i32>} : memref<448x1024xbf16, #tpu.memory_space<vmem>>, vector<16x1024xbf16>,
    %c0_245 = arith.constant 0 : index
    %c145 = arith.constant 145 : index
    %210 = vector.load %arg8[%c0_245, %c145] : memref<16x1536xbf16, #tpu.memory_space<vmem>>, vector<16x1024xbf16>
    %c160_246 = arith.constant 160 : index
    %c0_247 = arith.constant 0 : index
    %211 = vector.load %arg10[%c160_246, %c0_247] : memref<448x1024xbf16, #tpu.memory_space<vmem>>, vector<16x1024xbf16>
    tpu.vector_store %arg10[%c160_246, %c0_247], %210 {strides = array<i32>} : memref<448x1024xbf16, #tpu.memory_space<vmem>>, vector<16x1024xbf16>,
    %c0_248 = arith.constant 0 : index
    %c146 = arith.constant 146 : index
    %212 = vector.load %arg8[%c0_248, %c146] : memref<16x1536xbf16, #tpu.memory_space<vmem>>, vector<16x1024xbf16>
    %c176_249 = arith.constant 176 : index
    %c0_250 = arith.constant 0 : index
    %213 = vector.load %arg10[%c176_249, %c0_250] : memref<448x1024xbf16, #tpu.memory_space<vmem>>, vector<16x1024xbf16>
    tpu.vector_store %arg10[%c176_249, %c0_250], %212 {strides = array<i32>} : memref<448x1024xbf16, #tpu.memory_space<vmem>>, vector<16x1024xbf16>,
    %c0_251 = arith.constant 0 : index
    %c156 = arith.constant 156 : index
    %214 = vector.load %arg8[%c0_251, %c156] : memref<16x1536xbf16, #tpu.memory_space<vmem>>, vector<16x1024xbf16>
    %c192_252 = arith.constant 192 : index
    %c0_253 = arith.constant 0 : index
    %215 = vector.load %arg10[%c192_252, %c0_253] : memref<448x1024xbf16, #tpu.memory_space<vmem>>, vector<16x1024xbf16>
    tpu.vector_store %arg10[%c192_252, %c0_253], %214 {strides = array<i32>} : memref<448x1024xbf16, #tpu.memory_space<vmem>>, vector<16x1024xbf16>,
    %c0_254 = arith.constant 0 : index
    %c157 = arith.constant 157 : index
    %216 = vector.load %arg8[%c0_254, %c157] : memref<16x1536xbf16, #tpu.memory_space<vmem>>, vector<16x1024xbf16>
    %c208_255 = arith.constant 208 : index
    %c0_256 = arith.constant 0 : index
    %217 = vector.load %arg10[%c208_255, %c0_256] : memref<448x1024xbf16, #tpu.memory_space<vmem>>, vector<16x1024xbf16>
    tpu.vector_store %arg10[%c208_255, %c0_256], %216 {strides = array<i32>} : memref<448x1024xbf16, #tpu.memory_space<vmem>>, vector<16x1024xbf16>,
    %c0_257 = arith.constant 0 : index
    %c158 = arith.constant 158 : index
    %218 = vector.load %arg8[%c0_257, %c158] : memref<16x1536xbf16, #tpu.memory_space<vmem>>, vector<16x1024xbf16>
    %c224_258 = arith.constant 224 : index
    %c0_259 = arith.constant 0 : index
    %219 = vector.load %arg10[%c224_258, %c0_259] : memref<448x1024xbf16, #tpu.memory_space<vmem>>, vector<16x1024xbf16>
    tpu.vector_store %arg10[%c224_258, %c0_259], %218 {strides = array<i32>} : memref<448x1024xbf16, #tpu.memory_space<vmem>>, vector<16x1024xbf16>,
    %c0_260 = arith.constant 0 : index
    %c168 = arith.constant 168 : index
    %220 = vector.load %arg8[%c0_260, %c168] : memref<16x1536xbf16, #tpu.memory_space<vmem>>, vector<16x1024xbf16>
    %c240_261 = arith.constant 240 : index
    %c0_262 = arith.constant 0 : index
    %221 = vector.load %arg10[%c240_261, %c0_262] : memref<448x1024xbf16, #tpu.memory_space<vmem>>, vector<16x1024xbf16>
    tpu.vector_store %arg10[%c240_261, %c0_262], %220 {strides = array<i32>} : memref<448x1024xbf16, #tpu.memory_space<vmem>>, vector<16x1024xbf16>,
    %c0_263 = arith.constant 0 : index
    %c169 = arith.constant 169 : index
    %222 = vector.load %arg8[%c0_263, %c169] : memref<16x1536xbf16, #tpu.memory_space<vmem>>, vector<16x1024xbf16>
    %c256_264 = arith.constant 256 : index
    %c0_265 = arith.constant 0 : index
    %223 = vector.load %arg10[%c256_264, %c0_265] : memref<448x1024xbf16, #tpu.memory_space<vmem>>, vector<16x1024xbf16>
    tpu.vector_store %arg10[%c256_264, %c0_265], %222 {strides = array<i32>} : memref<448x1024xbf16, #tpu.memory_space<vmem>>, vector<16x1024xbf16>,
    %c0_266 = arith.constant 0 : index
    %c170 = arith.constant 170 : index
    %224 = vector.load %arg8[%c0_266, %c170] : memref<16x1536xbf16, #tpu.memory_space<vmem>>, vector<16x1024xbf16>
    %c272_267 = arith.constant 272 : index
    %c0_268 = arith.constant 0 : index
    %225 = vector.load %arg10[%c272_267, %c0_268] : memref<448x1024xbf16, #tpu.memory_space<vmem>>, vector<16x1024xbf16>
    tpu.vector_store %arg10[%c272_267, %c0_268], %224 {strides = array<i32>} : memref<448x1024xbf16, #tpu.memory_space<vmem>>, vector<16x1024xbf16>,
    %c0_269 = arith.constant 0 : index
    %c288_270 = arith.constant 288 : index
    %226 = vector.load %arg8[%c0_269, %c288_270] : memref<16x1536xbf16, #tpu.memory_space<vmem>>, vector<16x1024xbf16>
    %c288_271 = arith.constant 288 : index
    %c0_272 = arith.constant 0 : index
    %227 = vector.load %arg10[%c288_271, %c0_272] : memref<448x1024xbf16, #tpu.memory_space<vmem>>, vector<16x1024xbf16>
    tpu.vector_store %arg10[%c288_271, %c0_272], %226 {strides = array<i32>} : memref<448x1024xbf16, #tpu.memory_space<vmem>>, vector<16x1024xbf16>,
    %c0_273 = arith.constant 0 : index
    %c289 = arith.constant 289 : index
    %228 = vector.load %arg8[%c0_273, %c289] : memref<16x1536xbf16, #tpu.memory_space<vmem>>, vector<16x1024xbf16>
    %c304_274 = arith.constant 304 : index
    %c0_275 = arith.constant 0 : index
    %229 = vector.load %arg10[%c304_274, %c0_275] : memref<448x1024xbf16, #tpu.memory_space<vmem>>, vector<16x1024xbf16>
    tpu.vector_store %arg10[%c304_274, %c0_275], %228 {strides = array<i32>} : memref<448x1024xbf16, #tpu.memory_space<vmem>>, vector<16x1024xbf16>,
    %c0_276 = arith.constant 0 : index
    %c290 = arith.constant 290 : index
    %230 = vector.load %arg8[%c0_276, %c290] : memref<16x1536xbf16, #tpu.memory_space<vmem>>, vector<16x1024xbf16>
    %c320_277 = arith.constant 320 : index
    %c0_278 = arith.constant 0 : index
    %231 = vector.load %arg10[%c320_277, %c0_278] : memref<448x1024xbf16, #tpu.memory_space<vmem>>, vector<16x1024xbf16>
    tpu.vector_store %arg10[%c320_277, %c0_278], %230 {strides = array<i32>} : memref<448x1024xbf16, #tpu.memory_space<vmem>>, vector<16x1024xbf16>,
    %c0_279 = arith.constant 0 : index
    %c300 = arith.constant 300 : index
    %232 = vector.load %arg8[%c0_279, %c300] : memref<16x1536xbf16, #tpu.memory_space<vmem>>, vector<16x1024xbf16>
    %c336_280 = arith.constant 336 : index
    %c0_281 = arith.constant 0 : index
    %233 = vector.load %arg10[%c336_280, %c0_281] : memref<448x1024xbf16, #tpu.memory_space<vmem>>, vector<16x1024xbf16>
    tpu.vector_store %arg10[%c336_280, %c0_281], %232 {strides = array<i32>} : memref<448x1024xbf16, #tpu.memory_space<vmem>>, vector<16x1024xbf16>,
    %c0_282 = arith.constant 0 : index
    %c301 = arith.constant 301 : index
    %234 = vector.load %arg8[%c0_282, %c301] : memref<16x1536xbf16, #tpu.memory_space<vmem>>, vector<16x1024xbf16>
    %c352_283 = arith.constant 352 : index
    %c0_284 = arith.constant 0 : index
    %235 = vector.load %arg10[%c352_283, %c0_284] : memref<448x1024xbf16, #tpu.memory_space<vmem>>, vector<16x1024xbf16>
    tpu.vector_store %arg10[%c352_283, %c0_284], %234 {strides = array<i32>} : memref<448x1024xbf16, #tpu.memory_space<vmem>>, vector<16x1024xbf16>,
    %c0_285 = arith.constant 0 : index
    %c302 = arith.constant 302 : index
    %236 = vector.load %arg8[%c0_285, %c302] : memref<16x1536xbf16, #tpu.memory_space<vmem>>, vector<16x1024xbf16>
    %c368_286 = arith.constant 368 : index
    %c0_287 = arith.constant 0 : index
    %237 = vector.load %arg10[%c368_286, %c0_287] : memref<448x1024xbf16, #tpu.memory_space<vmem>>, vector<16x1024xbf16>
    tpu.vector_store %arg10[%c368_286, %c0_287], %236 {strides = array<i32>} : memref<448x1024xbf16, #tpu.memory_space<vmem>>, vector<16x1024xbf16>,
    %c0_288 = arith.constant 0 : index
    %c312 = arith.constant 312 : index
    %238 = vector.load %arg8[%c0_288, %c312] : memref<16x1536xbf16, #tpu.memory_space<vmem>>, vector<16x1024xbf16>
    %c384_289 = arith.constant 384 : index
    %c0_290 = arith.constant 0 : index
    %239 = vector.load %arg10[%c384_289, %c0_290] : memref<448x1024xbf16, #tpu.memory_space<vmem>>, vector<16x1024xbf16>
    tpu.vector_store %arg10[%c384_289, %c0_290], %238 {strides = array<i32>} : memref<448x1024xbf16, #tpu.memory_space<vmem>>, vector<16x1024xbf16>,
    %c0_291 = arith.constant 0 : index
    %c313 = arith.constant 313 : index
    %240 = vector.load %arg8[%c0_291, %c313] : memref<16x1536xbf16, #tpu.memory_space<vmem>>, vector<16x1024xbf16>
    %c400_292 = arith.constant 400 : index
    %c0_293 = arith.constant 0 : index
    %241 = vector.load %arg10[%c400_292, %c0_293] : memref<448x1024xbf16, #tpu.memory_space<vmem>>, vector<16x1024xbf16>
    tpu.vector_store %arg10[%c400_292, %c0_293], %240 {strides = array<i32>} : memref<448x1024xbf16, #tpu.memory_space<vmem>>, vector<16x1024xbf16>,
    %c0_294 = arith.constant 0 : index
    %c314 = arith.constant 314 : index
    %242 = vector.load %arg8[%c0_294, %c314] : memref<16x1536xbf16, #tpu.memory_space<vmem>>, vector<16x1024xbf16>
    %c416_295 = arith.constant 416 : index
    %c0_296 = arith.constant 0 : index
    %243 = vector.load %arg10[%c416_295, %c0_296] : memref<448x1024xbf16, #tpu.memory_space<vmem>>, vector<16x1024xbf16>
    tpu.vector_store %arg10[%c416_295, %c0_296], %242 {strides = array<i32>} : memref<448x1024xbf16, #tpu.memory_space<vmem>>, vector<16x1024xbf16>,
    %c0_297 = arith.constant 0 : index
    %c0_298 = arith.constant 0 : index
    %c432_299 = arith.constant 432 : index
    %244 = vector.load %arg1[%c0_297, %c0_298, %c432_299] : memref<1x16x2048xbf16, #tpu.memory_space<vmem>>, vector<1x16x1024xbf16>
    %245 = vector.shape_cast %244 : vector<1x16x1024xbf16> to vector<16x1024xbf16>
    %c432_300 = arith.constant 432 : index
    %c0_301 = arith.constant 0 : index
    %246 = vector.load %arg10[%c432_300, %c0_301] : memref<448x1024xbf16, #tpu.memory_space<vmem>>, vector<16x1024xbf16>
    tpu.vector_store %arg10[%c432_300, %c0_301], %245 {strides = array<i32>} : memref<448x1024xbf16, #tpu.memory_space<vmem>>, vector<16x1024xbf16>,
    %c0_302 = arith.constant 0 : index
    %c0_303 = arith.constant 0 : index
    %247 = vector.load %arg10[%c0_302, %c0_303] : memref<448x1024xbf16, #tpu.memory_space<vmem>>, vector<448x1024xbf16>
    %cst_304 = arith.constant dense<0.000000e+00> : vector<8x1024xf32>
    %248 = tpu.matmul %1, %247, %cst_304 {dimension_numbers = #tpu.dot_dimension_numbers<[1], [0], [0], [1], [0, 0, 1, 1], [], []>} : vector<8x448xbf16>, vector<448x1024xbf16>, vector<8x1024xf32> -> vector<8x1024xf32>
    %249 = vector.broadcast %3 : vector<8x1xf32> to vector<8x1024xf32>
    %250 = arith.addf %248, %249 : vector<8x1024xf32>
    %c0_305 = arith.constant 0 : index
    %c0_306 = arith.constant 0 : index
    %c0_307 = arith.constant 0 : index
    %251 = vector.load %arg7[%c0_305, %c0_306, %c0_307] : memref<1x8x1152xf32, #tpu.memory_space<vmem>>, vector<1x8x1024xf32>
    %252 = vector.shape_cast %251 : vector<1x8x1024xf32> to vector<8x1024xf32>
    %253 = vector.shape_cast %250 : vector<8x1024xf32> to vector<1x8x1024xf32>
    tpu.vector_store %arg7[%c0_305, %c0_306, %c0_307], %253 {strides = array<i32>} : memref<1x8x1152xf32, #tpu.memory_space<vmem>>, vector<1x8x1024xf32>,
    %c0_308 = arith.constant 0 : index
    %c1024_309 = arith.constant 1024 : index
    %254 = vector.load %arg8[%c0_308, %c1024_309] : memref<16x1536xbf16, #tpu.memory_space<vmem>>, vector<16x128xbf16>
    %c0_310 = arith.constant 0 : index
    %c0_311 = arith.constant 0 : index
    %255 = vector.load %arg10[%c0_310, %c0_311] : memref<448x1024xbf16, #tpu.memory_space<vmem>>, vector<16x128xbf16>
    tpu.vector_store %arg10[%c0_310, %c0_311], %254 {strides = array<i32>} : memref<448x1024xbf16, #tpu.memory_space<vmem>>, vector<16x128xbf16>,
    %c0_312 = arith.constant 0 : index
    %c1025 = arith.constant 1025 : index
    %256 = vector.load %arg8[%c0_312, %c1025] : memref<16x1536xbf16, #tpu.memory_space<vmem>>, vector<16x128xbf16>
    %c16_313 = arith.constant 16 : index
    %c0_314 = arith.constant 0 : index
    %257 = vector.load %arg10[%c16_313, %c0_314] : memref<448x1024xbf16, #tpu.memory_space<vmem>>, vector<16x128xbf16>
    tpu.vector_store %arg10[%c16_313, %c0_314], %256 {strides = array<i32>} : memref<448x1024xbf16, #tpu.memory_space<vmem>>, vector<16x128xbf16>,
    %c0_315 = arith.constant 0 : index
    %c1026 = arith.constant 1026 : index
    %258 = vector.load %arg8[%c0_315, %c1026] : memref<16x1536xbf16, #tpu.memory_space<vmem>>, vector<16x128xbf16>
    %c32_316 = arith.constant 32 : index
    %c0_317 = arith.constant 0 : index
    %259 = vector.load %arg10[%c32_316, %c0_317] : memref<448x1024xbf16, #tpu.memory_space<vmem>>, vector<16x128xbf16>
    tpu.vector_store %arg10[%c32_316, %c0_317], %258 {strides = array<i32>} : memref<448x1024xbf16, #tpu.memory_space<vmem>>, vector<16x128xbf16>,
    %c0_318 = arith.constant 0 : index
    %c1036 = arith.constant 1036 : index
    %260 = vector.load %arg8[%c0_318, %c1036] : memref<16x1536xbf16, #tpu.memory_space<vmem>>, vector<16x128xbf16>
    %c48_319 = arith.constant 48 : index
    %c0_320 = arith.constant 0 : index
    %261 = vector.load %arg10[%c48_319, %c0_320] : memref<448x1024xbf16, #tpu.memory_space<vmem>>, vector<16x128xbf16>
    tpu.vector_store %arg10[%c48_319, %c0_320], %260 {strides = array<i32>} : memref<448x1024xbf16, #tpu.memory_space<vmem>>, vector<16x128xbf16>,
    %c0_321 = arith.constant 0 : index
    %c1037 = arith.constant 1037 : index
    %262 = vector.load %arg8[%c0_321, %c1037] : memref<16x1536xbf16, #tpu.memory_space<vmem>>, vector<16x128xbf16>
    %c64_322 = arith.constant 64 : index
    %c0_323 = arith.constant 0 : index
    %263 = vector.load %arg10[%c64_322, %c0_323] : memref<448x1024xbf16, #tpu.memory_space<vmem>>, vector<16x128xbf16>
    tpu.vector_store %arg10[%c64_322, %c0_323], %262 {strides = array<i32>} : memref<448x1024xbf16, #tpu.memory_space<vmem>>, vector<16x128xbf16>,
    %c0_324 = arith.constant 0 : index
    %c1038 = arith.constant 1038 : index
    %264 = vector.load %arg8[%c0_324, %c1038] : memref<16x1536xbf16, #tpu.memory_space<vmem>>, vector<16x128xbf16>
    %c80_325 = arith.constant 80 : index
    %c0_326 = arith.constant 0 : index
    %265 = vector.load %arg10[%c80_325, %c0_326] : memref<448x1024xbf16, #tpu.memory_space<vmem>>, vector<16x128xbf16>
    tpu.vector_store %arg10[%c80_325, %c0_326], %264 {strides = array<i32>} : memref<448x1024xbf16, #tpu.memory_space<vmem>>, vector<16x128xbf16>,
    %c0_327 = arith.constant 0 : index
    %c1048 = arith.constant 1048 : index
    %266 = vector.load %arg8[%c0_327, %c1048] : memref<16x1536xbf16, #tpu.memory_space<vmem>>, vector<16x128xbf16>
    %c96_328 = arith.constant 96 : index
    %c0_329 = arith.constant 0 : index
    %267 = vector.load %arg10[%c96_328, %c0_329] : memref<448x1024xbf16, #tpu.memory_space<vmem>>, vector<16x128xbf16>
    tpu.vector_store %arg10[%c96_328, %c0_329], %266 {strides = array<i32>} : memref<448x1024xbf16, #tpu.memory_space<vmem>>, vector<16x128xbf16>,
    %c0_330 = arith.constant 0 : index
    %c1049 = arith.constant 1049 : index
    %268 = vector.load %arg8[%c0_330, %c1049] : memref<16x1536xbf16, #tpu.memory_space<vmem>>, vector<16x128xbf16>
    %c112_331 = arith.constant 112 : index
    %c0_332 = arith.constant 0 : index
    %269 = vector.load %arg10[%c112_331, %c0_332] : memref<448x1024xbf16, #tpu.memory_space<vmem>>, vector<16x128xbf16>
    tpu.vector_store %arg10[%c112_331, %c0_332], %268 {strides = array<i32>} : memref<448x1024xbf16, #tpu.memory_space<vmem>>, vector<16x128xbf16>,
    %c0_333 = arith.constant 0 : index
    %c1050 = arith.constant 1050 : index
    %270 = vector.load %arg8[%c0_333, %c1050] : memref<16x1536xbf16, #tpu.memory_space<vmem>>, vector<16x128xbf16>
    %c128_334 = arith.constant 128 : index
    %c0_335 = arith.constant 0 : index
    %271 = vector.load %arg10[%c128_334, %c0_335] : memref<448x1024xbf16, #tpu.memory_space<vmem>>, vector<16x128xbf16>
    tpu.vector_store %arg10[%c128_334, %c0_335], %270 {strides = array<i32>} : memref<448x1024xbf16, #tpu.memory_space<vmem>>, vector<16x128xbf16>,
    %c0_336 = arith.constant 0 : index
    %c1168_337 = arith.constant 1168 : index
    %272 = vector.load %arg8[%c0_336, %c1168_337] : memref<16x1536xbf16, #tpu.memory_space<vmem>>, vector<16x128xbf16>
    %c144_338 = arith.constant 144 : index
    %c0_339 = arith.constant 0 : index
    %273 = vector.load %arg10[%c144_338, %c0_339] : memref<448x1024xbf16, #tpu.memory_space<vmem>>, vector<16x128xbf16>
    tpu.vector_store %arg10[%c144_338, %c0_339], %272 {strides = array<i32>} : memref<448x1024xbf16, #tpu.memory_space<vmem>>, vector<16x128xbf16>,
    %c0_340 = arith.constant 0 : index
    %c1169 = arith.constant 1169 : index
    %274 = vector.load %arg8[%c0_340, %c1169] : memref<16x1536xbf16, #tpu.memory_space<vmem>>, vector<16x128xbf16>
    %c160_341 = arith.constant 160 : index
    %c0_342 = arith.constant 0 : index
    %275 = vector.load %arg10[%c160_341, %c0_342] : memref<448x1024xbf16, #tpu.memory_space<vmem>>, vector<16x128xbf16>
    tpu.vector_store %arg10[%c160_341, %c0_342], %274 {strides = array<i32>} : memref<448x1024xbf16, #tpu.memory_space<vmem>>, vector<16x128xbf16>,
    %c0_343 = arith.constant 0 : index
    %c1170 = arith.constant 1170 : index
    %276 = vector.load %arg8[%c0_343, %c1170] : memref<16x1536xbf16, #tpu.memory_space<vmem>>, vector<16x128xbf16>
    %c176_344 = arith.constant 176 : index
    %c0_345 = arith.constant 0 : index
    %277 = vector.load %arg10[%c176_344, %c0_345] : memref<448x1024xbf16, #tpu.memory_space<vmem>>, vector<16x128xbf16>
    tpu.vector_store %arg10[%c176_344, %c0_345], %276 {strides = array<i32>} : memref<448x1024xbf16, #tpu.memory_space<vmem>>, vector<16x128xbf16>,
    %c0_346 = arith.constant 0 : index
    %c1180 = arith.constant 1180 : index
    %278 = vector.load %arg8[%c0_346, %c1180] : memref<16x1536xbf16, #tpu.memory_space<vmem>>, vector<16x128xbf16>
    %c192_347 = arith.constant 192 : index
    %c0_348 = arith.constant 0 : index
    %279 = vector.load %arg10[%c192_347, %c0_348] : memref<448x1024xbf16, #tpu.memory_space<vmem>>, vector<16x128xbf16>
    tpu.vector_store %arg10[%c192_347, %c0_348], %278 {strides = array<i32>} : memref<448x1024xbf16, #tpu.memory_space<vmem>>, vector<16x128xbf16>,
    %c0_349 = arith.constant 0 : index
    %c1181 = arith.constant 1181 : index
    %280 = vector.load %arg8[%c0_349, %c1181] : memref<16x1536xbf16, #tpu.memory_space<vmem>>, vector<16x128xbf16>
    %c208_350 = arith.constant 208 : index
    %c0_351 = arith.constant 0 : index
    %281 = vector.load %arg10[%c208_350, %c0_351] : memref<448x1024xbf16, #tpu.memory_space<vmem>>, vector<16x128xbf16>
    tpu.vector_store %arg10[%c208_350, %c0_351], %280 {strides = array<i32>} : memref<448x1024xbf16, #tpu.memory_space<vmem>>, vector<16x128xbf16>,
    %c0_352 = arith.constant 0 : index
    %c1182 = arith.constant 1182 : index
    %282 = vector.load %arg8[%c0_352, %c1182] : memref<16x1536xbf16, #tpu.memory_space<vmem>>, vector<16x128xbf16>
    %c224_353 = arith.constant 224 : index
    %c0_354 = arith.constant 0 : index
    %283 = vector.load %arg10[%c224_353, %c0_354] : memref<448x1024xbf16, #tpu.memory_space<vmem>>, vector<16x128xbf16>
    tpu.vector_store %arg10[%c224_353, %c0_354], %282 {strides = array<i32>} : memref<448x1024xbf16, #tpu.memory_space<vmem>>, vector<16x128xbf16>,
    %c0_355 = arith.constant 0 : index
    %c1192 = arith.constant 1192 : index
    %284 = vector.load %arg8[%c0_355, %c1192] : memref<16x1536xbf16, #tpu.memory_space<vmem>>, vector<16x128xbf16>
    %c240_356 = arith.constant 240 : index
    %c0_357 = arith.constant 0 : index
    %285 = vector.load %arg10[%c240_356, %c0_357] : memref<448x1024xbf16, #tpu.memory_space<vmem>>, vector<16x128xbf16>
    tpu.vector_store %arg10[%c240_356, %c0_357], %284 {strides = array<i32>} : memref<448x1024xbf16, #tpu.memory_space<vmem>>, vector<16x128xbf16>,
    %c0_358 = arith.constant 0 : index
    %c1193 = arith.constant 1193 : index
    %286 = vector.load %arg8[%c0_358, %c1193] : memref<16x1536xbf16, #tpu.memory_space<vmem>>, vector<16x128xbf16>
    %c256_359 = arith.constant 256 : index
    %c0_360 = arith.constant 0 : index
    %287 = vector.load %arg10[%c256_359, %c0_360] : memref<448x1024xbf16, #tpu.memory_space<vmem>>, vector<16x128xbf16>
    tpu.vector_store %arg10[%c256_359, %c0_360], %286 {strides = array<i32>} : memref<448x1024xbf16, #tpu.memory_space<vmem>>, vector<16x128xbf16>,
    %c0_361 = arith.constant 0 : index
    %c1194 = arith.constant 1194 : index
    %288 = vector.load %arg8[%c0_361, %c1194] : memref<16x1536xbf16, #tpu.memory_space<vmem>>, vector<16x128xbf16>
    %c272_362 = arith.constant 272 : index
    %c0_363 = arith.constant 0 : index
    %289 = vector.load %arg10[%c272_362, %c0_363] : memref<448x1024xbf16, #tpu.memory_space<vmem>>, vector<16x128xbf16>
    tpu.vector_store %arg10[%c272_362, %c0_363], %288 {strides = array<i32>} : memref<448x1024xbf16, #tpu.memory_space<vmem>>, vector<16x128xbf16>,
    %c0_364 = arith.constant 0 : index
    %c1312_365 = arith.constant 1312 : index
    %290 = vector.load %arg8[%c0_364, %c1312_365] : memref<16x1536xbf16, #tpu.memory_space<vmem>>, vector<16x128xbf16>
    %c288_366 = arith.constant 288 : index
    %c0_367 = arith.constant 0 : index
    %291 = vector.load %arg10[%c288_366, %c0_367] : memref<448x1024xbf16, #tpu.memory_space<vmem>>, vector<16x128xbf16>
    tpu.vector_store %arg10[%c288_366, %c0_367], %290 {strides = array<i32>} : memref<448x1024xbf16, #tpu.memory_space<vmem>>, vector<16x128xbf16>,
    %c0_368 = arith.constant 0 : index
    %c1313 = arith.constant 1313 : index
    %292 = vector.load %arg8[%c0_368, %c1313] : memref<16x1536xbf16, #tpu.memory_space<vmem>>, vector<16x128xbf16>
    %c304_369 = arith.constant 304 : index
    %c0_370 = arith.constant 0 : index
    %293 = vector.load %arg10[%c304_369, %c0_370] : memref<448x1024xbf16, #tpu.memory_space<vmem>>, vector<16x128xbf16>
    tpu.vector_store %arg10[%c304_369, %c0_370], %292 {strides = array<i32>} : memref<448x1024xbf16, #tpu.memory_space<vmem>>, vector<16x128xbf16>,
    %c0_371 = arith.constant 0 : index
    %c1314 = arith.constant 1314 : index
    %294 = vector.load %arg8[%c0_371, %c1314] : memref<16x1536xbf16, #tpu.memory_space<vmem>>, vector<16x128xbf16>
    %c320_372 = arith.constant 320 : index
    %c0_373 = arith.constant 0 : index
    %295 = vector.load %arg10[%c320_372, %c0_373] : memref<448x1024xbf16, #tpu.memory_space<vmem>>, vector<16x128xbf16>
    tpu.vector_store %arg10[%c320_372, %c0_373], %294 {strides = array<i32>} : memref<448x1024xbf16, #tpu.memory_space<vmem>>, vector<16x128xbf16>,
    %c0_374 = arith.constant 0 : index
    %c1324 = arith.constant 1324 : index
    %296 = vector.load %arg8[%c0_374, %c1324] : memref<16x1536xbf16, #tpu.memory_space<vmem>>, vector<16x128xbf16>
    %c336_375 = arith.constant 336 : index
    %c0_376 = arith.constant 0 : index
    %297 = vector.load %arg10[%c336_375, %c0_376] : memref<448x1024xbf16, #tpu.memory_space<vmem>>, vector<16x128xbf16>
    tpu.vector_store %arg10[%c336_375, %c0_376], %296 {strides = array<i32>} : memref<448x1024xbf16, #tpu.memory_space<vmem>>, vector<16x128xbf16>,
    %c0_377 = arith.constant 0 : index
    %c1325 = arith.constant 1325 : index
    %298 = vector.load %arg8[%c0_377, %c1325] : memref<16x1536xbf16, #tpu.memory_space<vmem>>, vector<16x128xbf16>
    %c352_378 = arith.constant 352 : index
    %c0_379 = arith.constant 0 : index
    %299 = vector.load %arg10[%c352_378, %c0_379] : memref<448x1024xbf16, #tpu.memory_space<vmem>>, vector<16x128xbf16>
    tpu.vector_store %arg10[%c352_378, %c0_379], %298 {strides = array<i32>} : memref<448x1024xbf16, #tpu.memory_space<vmem>>, vector<16x128xbf16>,
    %c0_380 = arith.constant 0 : index
    %c1326 = arith.constant 1326 : index
    %300 = vector.load %arg8[%c0_380, %c1326] : memref<16x1536xbf16, #tpu.memory_space<vmem>>, vector<16x128xbf16>
    %c368_381 = arith.constant 368 : index
    %c0_382 = arith.constant 0 : index
    %301 = vector.load %arg10[%c368_381, %c0_382] : memref<448x1024xbf16, #tpu.memory_space<vmem>>, vector<16x128xbf16>
    tpu.vector_store %arg10[%c368_381, %c0_382], %300 {strides = array<i32>} : memref<448x1024xbf16, #tpu.memory_space<vmem>>, vector<16x128xbf16>,
    %c0_383 = arith.constant 0 : index
    %c1336 = arith.constant 1336 : index
    %302 = vector.load %arg8[%c0_383, %c1336] : memref<16x1536xbf16, #tpu.memory_space<vmem>>, vector<16x128xbf16>
    %c384_384 = arith.constant 384 : index
    %c0_385 = arith.constant 0 : index
    %303 = vector.load %arg10[%c384_384, %c0_385] : memref<448x1024xbf16, #tpu.memory_space<vmem>>, vector<16x128xbf16>
    tpu.vector_store %arg10[%c384_384, %c0_385], %302 {strides = array<i32>} : memref<448x1024xbf16, #tpu.memory_space<vmem>>, vector<16x128xbf16>,
    %c0_386 = arith.constant 0 : index
    %c1337 = arith.constant 1337 : index
    %304 = vector.load %arg8[%c0_386, %c1337] : memref<16x1536xbf16, #tpu.memory_space<vmem>>, vector<16x128xbf16>
    %c400_387 = arith.constant 400 : index
    %c0_388 = arith.constant 0 : index
    %305 = vector.load %arg10[%c400_387, %c0_388] : memref<448x1024xbf16, #tpu.memory_space<vmem>>, vector<16x128xbf16>
    tpu.vector_store %arg10[%c400_387, %c0_388], %304 {strides = array<i32>} : memref<448x1024xbf16, #tpu.memory_space<vmem>>, vector<16x128xbf16>,
    %c0_389 = arith.constant 0 : index
    %c1338 = arith.constant 1338 : index
    %306 = vector.load %arg8[%c0_389, %c1338] : memref<16x1536xbf16, #tpu.memory_space<vmem>>, vector<16x128xbf16>
    %c416_390 = arith.constant 416 : index
    %c0_391 = arith.constant 0 : index
    %307 = vector.load %arg10[%c416_390, %c0_391] : memref<448x1024xbf16, #tpu.memory_space<vmem>>, vector<16x128xbf16>
    tpu.vector_store %arg10[%c416_390, %c0_391], %306 {strides = array<i32>} : memref<448x1024xbf16, #tpu.memory_space<vmem>>, vector<16x128xbf16>,
    %c0_392 = arith.constant 0 : index
    %c0_393 = arith.constant 0 : index
    %c1456_394 = arith.constant 1456 : index
    %308 = vector.load %arg1[%c0_392, %c0_393, %c1456_394] : memref<1x16x2048xbf16, #tpu.memory_space<vmem>>, vector<1x16x128xbf16>
    %309 = vector.shape_cast %308 : vector<1x16x128xbf16> to vector<16x128xbf16>
    %c432_395 = arith.constant 432 : index
    %c0_396 = arith.constant 0 : index
    %310 = vector.load %arg10[%c432_395, %c0_396] : memref<448x1024xbf16, #tpu.memory_space<vmem>>, vector<16x128xbf16>
    tpu.vector_store %arg10[%c432_395, %c0_396], %309 {strides = array<i32>} : memref<448x1024xbf16, #tpu.memory_space<vmem>>, vector<16x128xbf16>,
    %c0_397 = arith.constant 0 : index
    %c0_398 = arith.constant 0 : index
    %311 = vector.load %arg10[%c0_397, %c0_398] : memref<448x1024xbf16, #tpu.memory_space<vmem>>, vector<448x128xbf16>
    %cst_399 = arith.constant dense<0.000000e+00> : vector<8x128xf32>
    %312 = tpu.matmul %1, %311, %cst_399 {dimension_numbers = #tpu.dot_dimension_numbers<[1], [0], [0], [1], [0, 0, 1, 1], [], []>} : vector<8x448xbf16>, vector<448x128xbf16>, vector<8x128xf32> -> vector<8x128xf32>
    %313 = vector.broadcast %3 : vector<8x1xf32> to vector<8x128xf32>
    %314 = arith.addf %312, %313 : vector<8x128xf32>
    %c0_400 = arith.constant 0 : index
    %c0_401 = arith.constant 0 : index
    %c1024_402 = arith.constant 1024 : index
    %315 = vector.load %arg7[%c0_400, %c0_401, %c1024_402] : memref<1x8x1152xf32, #tpu.memory_space<vmem>>, vector<1x8x128xf32>
    %316 = vector.shape_cast %315 : vector<1x8x128xf32> to vector<8x128xf32>
    %317 = vector.shape_cast %314 : vector<8x128xf32> to vector<1x8x128xf32>
    tpu.vector_store %arg7[%c0_400, %c0_401, %c1024_402], %317 {strides = array<i32>} : memref<1x8x1152xf32, #tpu.memory_space<vmem>>, vector<1x8x128xf32>,
    return
  }
  func.func @transform_0(%arg0: i32) -> (i32, i32, i32) {
    %c0_i32 = arith.constant 0 : i32
    %c0_i32_0 = arith.constant 0 : i32
    %c0_i32_1 = arith.constant 0 : i32
    return %arg0, %c0_i32, %c0_i32_0 : i32, i32, i32
  }
  func.func @transform_1(%arg0: i32) -> (i32, i32) {
    %c0_i32 = arith.constant 0 : i32
    %c0_i32_0 = arith.constant 0 : i32
    %c0_i32_1 = arith.constant 0 : i32
    return %c0_i32, %c0_i32_0 : i32, i32
  }
  func.func @transform_2(%arg0: i32) -> (i32, i32) {
    %c0_i32 = arith.constant 0 : i32
    %c0_i32_0 = arith.constant 0 : i32
    %c0_i32_1 = arith.constant 0 : i32
    return %c0_i32, %c0_i32_0 : i32, i32
  }
  func.func @transform_3(%arg0: i32) -> (i32, i32) {
    %c0_i32 = arith.constant 0 : i32
    %c0_i32_0 = arith.constant 0 : i32
    %c0_i32_1 = arith.constant 0 : i32
    return %c0_i32, %c0_i32_0 : i32, i32
  }
  func.func @transform_4(%arg0: i32) -> (i32, i32) {
    %c0_i32 = arith.constant 0 : i32
    %c0_i32_0 = arith.constant 0 : i32
    %c0_i32_1 = arith.constant 0 : i32
    return %c0_i32, %c0_i32_0 : i32, i32
  }
  func.func @transform_5(%arg0: i32) -> (i32, i32) {
    %c0_i32 = arith.constant 0 : i32
    %c0_i32_0 = arith.constant 0 : i32
    %c0_i32_1 = arith.constant 0 : i32
    return %c0_i32, %c0_i32_0 : i32, i32
  }
  func.func @transform_6(%arg0: i32) -> (i32, i32, i32) {
    %c0_i32 = arith.constant 0 : i32
    %c0_i32_0 = arith.constant 0 : i32
    %c0_i32_1 = arith.constant 0 : i32
    return %arg0, %c0_i32, %c0_i32_0 : i32, i32, i32
  }
}

</mosaic_0001>

<llo_original>
// kernel: dblock_forward.1
$region0: #{dblock_forward.1}
  #allocation0 [shape = 'u32[]', space=smem, size = 0x4, offset = 0x4, fixed_abs, tag = 'smem constant byte address 0x4 - core index']
  #allocation1 [shape = 'u32[144,128]{1,0:T(1,128)}', space=vmem, size = 0x12000, scoped, tag = 'internal scratch']
  #allocation2 [shape = 'bf16[16,1536]{1,0:T(16,128)(2,1)}', space=vmem, size = 0xc000, scoped, tag = 'scratch operand']
  #allocation3 [shape = 'bf16[432,1024]{1,0:T(16,128)(2,1)}', space=vmem, size = 0xd8000, scoped, tag = 'scratch operand']
  #allocation4 [shape = 'bf16[448,1024]{1,0:T(16,128)(2,1)}', space=vmem, size = 0xe0000, scoped, tag = 'scratch operand']
  %s0 = inlined_call_operand.vmem [shape: bf16[2,16,2048], index: 0, kind: input, shape index: {}]
  %s1 = inlined_call_operand.vmem [shape: bf16[1,1536], index: 1, kind: input, shape index: {}]
  %s2 = inlined_call_operand.vmem [shape: bf16[16,432], index: 2, kind: input, shape index: {}]
  %s3 = inlined_call_operand.vmem [shape: f32[16,1], index: 3, kind: input, shape index: {}]
  %s4 = inlined_call_operand.vmem [shape: bf16[8,448], index: 4, kind: input, shape index: {}]
  %s5 = inlined_call_operand.vmem [shape: f32[8,1], index: 5, kind: input, shape index: {}]
  %s6 = inlined_call_operand.vmem [shape: f32[2,8,1152], index: 6, kind: output, shape index: {}]
  %s7 = sld [smem:[#allocation0]]
  $region57: #{dblock_forward.1} parent=0
    _
  %s9 = ssub.s32 1, %s7
  %s10 = scalar_select 0, %s9, %s7
  loop: start=0, step=1, limit=4
  $region2: #{dblock_forward.1} parent=0 // loop_pre_header
    _
  $region3: #{dblock_forward.1} parent=0 // loop_header
    %s12 = sphi 0, %s16
    %p13 = scmp.ge.s32.totalorder %s12, 4
    %s22 = sphi 0, %s24
    %s25 = sphi 0, %s22
    %s26 = sphi 0, %s25
    %s42 = sphi 0, %s26
    %s46 = sphi 0, %s46
    %s48 = sphi 0, %s46
    %s49 = sphi 0, %s48
    %s63 = sphi 0, %s49
    %s67 = sphi 0, %s67
    %s69 = sphi 0, %s67
    %s70 = sphi 0, %s69
    %s84 = sphi 0, %s70
    %s88 = sphi 0, %s88
    %s90 = sphi 0, %s88
    %s91 = sphi 0, %s90
    %s105 = sphi 0, %s91
    %s109 = sphi 0, %s109
    %s111 = sphi 0, %s109
    %s112 = sphi 0, %s111
    %s126 = sphi 0, %s112
    %s130 = sphi 0, %s130
    %s132 = sphi 0, %s130
    %s133 = sphi 0, %s132
    %s147 = sphi 0, %s133
    %s153 = sphi 0, %s155
    %s156 = sphi 0, %s153
    %s157 = sphi 0, %s156
    %s173 = sphi 0, %s157
  $region4: #{dblock_forward.1} parent=0 // loop_header_branch
    %15 = sbr.rel (%p13) target = $region8
  $region5: #{dblock_forward.1} parent=0 // loop_body
    %s17 = ssub.s32 %s12, 1
    %s18 = ssub.s32 %s12, 2
    %s19 = sadd.s32 %s12, 1
    %s20 = ssub.s32 %s12, %s19
    %p21 = scmp.eq.s32.totalorder %s20, 0
    %s23 = sadd.s32 %s22, 1
    %s24 = scalar_select %p21, %s22, %s23
    %p27 = pneg %p21
    %p28 = scmp.eq.s32.totalorder %s12, 1
    %p29 = por %p27, %p28
    %p30 = scmp.ne.s32.totalorder %s22, %s25
    %p31 = scmp.eq.s32.totalorder %s12, 0
    %p32 = por %p30, %p31
    %p33 = scmp.ne.s32.totalorder %s22, %s25
    %p34 = scmp.eq.s32.totalorder %s17, 1
    %p35 = por %p33, %p34
    %p36 = scmp.ne.s32.totalorder %s25, %s26
    %p37 = scmp.eq.s32.totalorder %s17, 0
    %p38 = por %p36, %p37
    %p39 = scmp.ne.s32.totalorder %s25, %s26
    %p40 = scmp.eq.s32.totalorder %s18, 1
    %p41 = por %p39, %p40
    %p43 = scmp.ne.s32.totalorder %s26, %s42
    %p44 = scmp.eq.s32.totalorder %s18, 0
    %p45 = por %p43, %p44
    %s47 = sadd.s32 %s46, 1
    %p50 = scmp.eq.s32.totalorder %s12, 1
    %p51 = scmp.ne.s32.totalorder %s46, %s48
    %p52 = scmp.eq.s32.totalorder %s12, 0
    %p53 = por %p51, %p52
    %p54 = scmp.ne.s32.totalorder %s46, %s48
    %p55 = scmp.eq.s32.totalorder %s17, 1
    %p56 = por %p54, %p55
    %p57 = scmp.ne.s32.totalorder %s48, %s49
    %p58 = scmp.eq.s32.totalorder %s17, 0
    %p59 = por %p57, %p58
    %p60 = scmp.ne.s32.totalorder %s48, %s49
    %p61 = scmp.eq.s32.totalorder %s18, 1
    %p62 = por %p60, %p61
    %p64 = scmp.ne.s32.totalorder %s49, %s63
    %p65 = scmp.eq.s32.totalorder %s18, 0
    %p66 = por %p64, %p65
    %s68 = sadd.s32 %s67, 1
    %p71 = scmp.eq.s32.totalorder %s12, 1
    %p72 = scmp.ne.s32.totalorder %s67, %s69
    %p73 = scmp.eq.s32.totalorder %s12, 0
    %p74 = por %p72, %p73
    %p75 = scmp.ne.s32.totalorder %s67, %s69
    %p76 = scmp.eq.s32.totalorder %s17, 1
    %p77 = por %p75, %p76
    %p78 = scmp.ne.s32.totalorder %s69, %s70
    %p79 = scmp.eq.s32.totalorder %s17, 0
    %p80 = por %p78, %p79
    %p81 = scmp.ne.s32.totalorder %s69, %s70
    %p82 = scmp.eq.s32.totalorder %s18, 1
    %p83 = por %p81, %p82
    %p85 = scmp.ne.s32.totalorder %s70, %s84
    %p86 = scmp.eq.s32.totalorder %s18, 0
    %p87 = por %p85, %p86
    %s89 = sadd.s32 %s88, 1
    %p92 = scmp.eq.s32.totalorder %s12, 1
    %p93 = scmp.ne.s32.totalorder %s88, %s90
    %p94 = scmp.eq.s32.totalorder %s12, 0
    %p95 = por %p93, %p94
    %p96 = scmp.ne.s32.totalorder %s88, %s90
    %p97 = scmp.eq.s32.totalorder %s17, 1
    %p98 = por %p96, %p97
    %p99 = scmp.ne.s32.totalorder %s90, %s91
    %p100 = scmp.eq.s32.totalorder %s17, 0
    %p101 = por %p99, %p100
    %p102 = scmp.ne.s32.totalorder %s90, %s91
    %p103 = scmp.eq.s32.totalorder %s18, 1
    %p104 = por %p102, %p103
    %p106 = scmp.ne.s32.totalorder %s91, %s105
    %p107 = scmp.eq.s32.totalorder %s18, 0
    %p108 = por %p106, %p107
    %s110 = sadd.s32 %s109, 1
    %p113 = scmp.eq.s32.totalorder %s12, 1
    %p114 = scmp.ne.s32.totalorder %s109, %s111
    %p115 = scmp.eq.s32.totalorder %s12, 0
    %p116 = por %p114, %p115
    %p117 = scmp.ne.s32.totalorder %s109, %s111
    %p118 = scmp.eq.s32.totalorder %s17, 1
    %p119 = por %p117, %p118
    %p120 = scmp.ne.s32.totalorder %s111, %s112
    %p121 = scmp.eq.s32.totalorder %s17, 0
    %p122 = por %p120, %p121
    %p123 = scmp.ne.s32.totalorder %s111, %s112
    %p124 = scmp.eq.s32.totalorder %s18, 1
    %p125 = por %p123, %p124
    %p127 = scmp.ne.s32.totalorder %s112, %s126
    %p128 = scmp.eq.s32.totalorder %s18, 0
    %p129 = por %p127, %p128
    %s131 = sadd.s32 %s130, 1
    %p134 = scmp.eq.s32.totalorder %s12, 1
    %p135 = scmp.ne.s32.totalorder %s130, %s132
    %p136 = scmp.eq.s32.totalorder %s12, 0
    %p137 = por %p135, %p136
    %p138 = scmp.ne.s32.totalorder %s130, %s132
    %p139 = scmp.eq.s32.totalorder %s17, 1
    %p140 = por %p138, %p139
    %p141 = scmp.ne.s32.totalorder %s132, %s133
    %p142 = scmp.eq.s32.totalorder %s17, 0
    %p143 = por %p141, %p142
    %p144 = scmp.ne.s32.totalorder %s132, %s133
    %p145 = scmp.eq.s32.totalorder %s18, 1
    %p146 = por %p144, %p145
    %p148 = scmp.ne.s32.totalorder %s133, %s147
    %p149 = scmp.eq.s32.totalorder %s18, 0
    %p150 = por %p148, %p149
    %s151 = ssub.s32 %s12, %s19
    %p152 = scmp.eq.s32.totalorder %s151, 0
    %s154 = sadd.s32 %s153, 1
    %s155 = scalar_select %p152, %s153, %s154
    %p158 = pneg %p152
    %p159 = scmp.eq.s32.totalorder %s12, 1
    %p160 = por %p158, %p159
    %p161 = scmp.ne.s32.totalorder %s153, %s156
    %p162 = scmp.eq.s32.totalorder %s12, 0
    %p163 = por %p161, %p162
    %p164 = scmp.ne.s32.totalorder %s153, %s156
    %p165 = scmp.eq.s32.totalorder %s17, 1
    %p166 = por %p164, %p165
    %p167 = scmp.ne.s32.totalorder %s156, %s157
    %p168 = scmp.eq.s32.totalorder %s17, 0
    %p169 = por %p167, %p168
    %p170 = scmp.ne.s32.totalorder %s156, %s157
    %p171 = scmp.eq.s32.totalorder %s18, 1
    %p172 = por %p170, %p171
    %p174 = scmp.ne.s32.totalorder %s157, %s173
    %p175 = scmp.eq.s32.totalorder %s18, 0
    %p176 = por %p174, %p175
    %p177 = scmp.le.s32.totalorder 1, %s12
    %p178 = scmp.lt.s32.totalorder %s12, 3
    %p179 = pnand %p177, %p178
    %p180 = pneg %p179
    // Predicated region
    $region9: #{dblock_forward.1} parent=5 // pred_check
      _
    $region10: #{dblock_forward.1} parent=5 // pred_check_branch
      %182 = sbr.rel (%p179) target = $region12
    $region11: #{dblock_forward.1} parent=5 // pred_region
      %s183 = ssub.s32 %s12, 1
      // Predicated region
      $region13: #{dblock_forward.1} parent=11 // pred_check
        %p184 = pneg %p59
      $region14: #{dblock_forward.1} parent=11 // pred_check_branch
        %186 = sbr.rel (%p184) target = $region16
      $region15: #{dblock_forward.1} parent=11 // pred_region
        _
      $region16: #{dblock_forward.1} parent=11 // pred_fallthru
        _
      // Predicated region
      $region17: #{dblock_forward.1} parent=11 // pred_check
        %p187 = pneg %p80
      $region18: #{dblock_forward.1} parent=11 // pred_check_branch
        %189 = sbr.rel (%p187) target = $region20
      $region19: #{dblock_forward.1} parent=11 // pred_region
        _
      $region20: #{dblock_forward.1} parent=11 // pred_fallthru
        _
      // Predicated region
      $region21: #{dblock_forward.1} parent=11 // pred_check
        %p190 = pneg %p101
      $region22: #{dblock_forward.1} parent=11 // pred_check_branch
        %192 = sbr.rel (%p190) target = $region24
      $region23: #{dblock_forward.1} parent=11 // pred_region
        _
      $region24: #{dblock_forward.1} parent=11 // pred_fallthru
        _
      // Predicated region
      $region25: #{dblock_forward.1} parent=11 // pred_check
        %p193 = pneg %p122
      $region26: #{dblock_forward.1} parent=11 // pred_check_branch
        %195 = sbr.rel (%p193) target = $region28
      $region27: #{dblock_forward.1} parent=11 // pred_region
        _
      $region28: #{dblock_forward.1} parent=11 // pred_fallthru
        _
      // Predicated region
      $region29: #{dblock_forward.1} parent=11 // pred_check
        %p196 = pneg %p143
      $region30: #{dblock_forward.1} parent=11 // pred_check_branch
        %198 = sbr.rel (%p196) target = $region32
      $region31: #{dblock_forward.1} parent=11 // pred_region
        _
      $region32: #{dblock_forward.1} parent=11 // pred_fallthru
        _
    $region12: #{dblock_forward.1} parent=5 // pred_fallthru
      _
    %p199 = scmp.lt.s32.totalorder %s12, 2
    // Predicated region
    $region33: #{dblock_forward.1} parent=5 // pred_check
      %p200 = pneg %p199
    $region34: #{dblock_forward.1} parent=5 // pred_check_branch
      %202 = sbr.rel (%p200) target = $region36
    $region35: #{dblock_forward.1} parent=5 // pred_region
      // Predicated region
      $region37: #{dblock_forward.1} parent=35 // pred_check
        %p203 = pneg %p32
      $region38: #{dblock_forward.1} parent=35 // pred_check_branch
        %205 = sbr.rel (%p203) target = $region40
      $region39: #{dblock_forward.1} parent=35 // pred_region
        %p206 = scmp.lt.s32.totalorder %s12, 1
        %s207 = scalar_select %p206, %s12, 1
        %s208 = smul.addr %s207, 32
        %s209 = smul.addr %s208, 4
        %s210 = scalar_lea.vmem %s0, %s209
      $region40: #{dblock_forward.1} parent=35 // pred_fallthru
        _
    $region36: #{dblock_forward.1} parent=5 // pred_fallthru
      _
    %p211 = scmp.le.s32.totalorder 1, %s12
    %p212 = scmp.lt.s32.totalorder %s12, 3
    %p213 = pnand %p211, %p212
    %p214 = pneg %p213
    // Predicated region
    $region41: #{dblock_forward.1} parent=5 // pred_check
      _
    $region42: #{dblock_forward.1} parent=5 // pred_check_branch
      %216 = sbr.rel (%p213) target = $region44
    $region43: #{dblock_forward.1} parent=5 // pred_region
      %s217 = ssub.s32 %s12, 1
      %p218 = scmp.lt.s32.totalorder %s17, 1
      %s219 = scalar_select %p218, %s17, 1
      %s220 = smul.addr %s219, 32
      %s221 = smul.addr %s220, 4
      %s222 = scalar_lea.vmem %s0, %s221
      %p223 = pneg %p38
      %p224 = pneg %p35
      %p225 = pneg %p59
      %p226 = pneg %p56
      %p227 = pneg %p80
      %p228 = pneg %p77
      %p229 = pneg %p101
      %p230 = pneg %p98
      %p231 = pneg %p122
      %p232 = pneg %p119
      %p233 = pneg %p143
      %p234 = pneg %p140
      %p235 = pneg %p169
      %p236 = pneg %p166
      %p237 = scmp.lt.s32.totalorder %s17, 1
      %s238 = scalar_select %p237, %s17, 1
      %s239 = smul.addr %s238, 9
      %s240 = smul.addr %s239, 8
      %s241 = scalar_lea.vmem %s6, %s240
      %p242 = scmp.lt.s32.totalorder %s17, 1
      %s243 = scalar_select %p242, %s17, 1
      %s244 = smul.addr %s243, 32
      %s245 = smul.addr %s244, 4
      %s246 = scalar_lea.vmem %s0, %s245
      %p247 = scmp.lt.s32.totalorder %s17, 1
      %s248 = scalar_select %p247, %s17, 1
      %s249 = smul.addr %s248, 9
      %s250 = smul.addr %s249, 8
      %s251 = scalar_lea.vmem %s6, %s250
      %v253 = vld [vmem:[%s2] sm:$0xff]
      %v254 = vld [vmem:[%s2 + $0x8] sm:$0xff]
      %v255 = vld [vmem:[%s2 + $0x10] sm:$0xff]
      %v256 = vld [vmem:[%s2 + $0x18] sm:$0xff]
      %v257 = vld [vmem:[%s4] sm:$0xff]
      %v258 = vld [vmem:[%s4 + $0x8] sm:$0xff]
      %v259 = vld [vmem:[%s3] sm:$0xff]
      %v260 = vld [vmem:[%s3 + $0x8] sm:$0xff]
      %v261 = vld [vmem:[%s5] sm:$0xff]
      %v262 = vld [vmem:[%s246] sm:$0xff]
      %v263 = vld [vmem:[%s246 + $0x8] sm:$0xff]
      %v264 = vld [vmem:[%s246 + $0x10] sm:$0xff]
      %v265 = vld [vmem:[%s246 + $0x18] sm:$0xff]
      %v266 = vld [vmem:[%s246 + $0x20] sm:$0xf]
      %v267 = vld [vmem:[%s246 + $0x40] sm:$0xff]
      %v268 = vld [vmem:[%s246 + $0x48] sm:$0xff]
      %v269 = vld [vmem:[%s246 + $0x50] sm:$0xff]
      %v270 = vld [vmem:[%s246 + $0x58] sm:$0xff]
      %v271 = vld [vmem:[%s246 + $0x60] sm:$0xf]
      %v282 = vunpack.c.l.b16 %v262
      %v283 = vunpack.c.h.b16 %v262
      %v284 = vunpack.c.l.b16 %v263
      %v285 = vunpack.c.h.b16 %v263
      %v286 = vunpack.c.l.b16 %v264
      %v287 = vunpack.c.h.b16 %v264
      %v288 = vunpack.c.l.b16 %v265
      %v289 = vunpack.c.h.b16 %v265
      %v290 = vunpack.c.l.b16 %v266
      %v291 = vunpack.c.l.b16 %v267
      %v292 = vunpack.c.h.b16 %v267
      %v293 = vunpack.c.l.b16 %v268
      %v294 = vunpack.c.h.b16 %v268
      %v295 = vunpack.c.l.b16 %v269
      %v296 = vunpack.c.h.b16 %v269
      %v297 = vunpack.c.l.b16 %v270
      %v298 = vunpack.c.h.b16 %v270
      %v299 = vunpack.c.l.b16 %v271
      %v300 = vpack.c.b16 %v291, %v282
      %v301 = vpack.c.b16 %v292, %v283
      %v302 = vpack.c.b16 %v293, %v284
      %v303 = vpack.c.b16 %v294, %v285
      %v304 = vpack.c.b16 %v295, %v286
      %v305 = vpack.c.b16 %v296, %v287
      %v306 = vpack.c.b16 %v297, %v288
      %v307 = vpack.c.b16 %v298, %v289
      %v308 = vpack.c.b16 %v299, %v290
      %309 = vrot.lane.b32.xlu0 %v300, 10
      %v310 = vpop.permute.xlu0 %309
      %311 = vrot.lane.b32.xlu0 %v301, 10
      %v312 = vpop.permute.xlu0 %311
      %313 = vrot.lane.b32.xlu0 %v302, 10
      %v314 = vpop.permute.xlu0 %313
      %315 = vrot.lane.b32.xlu0 %v303, 10
      %v316 = vpop.permute.xlu0 %315
      %317 = vrot.lane.b32.xlu0 %v304, 10
      %v318 = vpop.permute.xlu0 %317
      %319 = vrot.lane.b32.xlu0 %v305, 10
      %v320 = vpop.permute.xlu0 %319
      %321 = vrot.lane.b32.xlu0 %v306, 10
      %v322 = vpop.permute.xlu0 %321
      %323 = vrot.lane.b32.xlu0 %v307, 10
      %v324 = vpop.permute.xlu0 %323
      %325 = vrot.lane.b32.xlu0 %v308, 10
      %v326 = vpop.permute.xlu0 %325
      %vm327 = vcmask 80896
      %v328 = vsel %vm327, %v310, %v312
      %v329 = vsel %vm327, %v312, %v314
      %v330 = vsel %vm327, %v314, %v316
      %v331 = vsel %vm327, %v316, %v318
      %v332 = vsel %vm327, %v318, %v320
      %v333 = vsel %vm327, %v320, %v322
      %v334 = vsel %vm327, %v322, %v324
      %v335 = vsel %vm327, %v324, %v326
      %344 = vst [vmem:[#allocation3] sm:$0xff] %v328
      %345 = vst [vmem:[#allocation3 + $0x8] sm:$0xff] %v329
      %346 = vst [vmem:[#allocation3 + $0x10] sm:$0xff] %v330
      %347 = vst [vmem:[#allocation3 + $0x18] sm:$0xff] %v331
      %348 = vst [vmem:[#allocation3 + $0x20] sm:$0xff] %v332
      %349 = vst [vmem:[#allocation3 + $0x28] sm:$0xff] %v333
      %350 = vst [vmem:[#allocation3 + $0x30] sm:$0xff] %v334
      %351 = vst [vmem:[#allocation3 + $0x38] sm:$0xff] %v335
      %v352 = vld [vmem:[%s246] sm:$0xff]
      %v353 = vld [vmem:[%s246 + $0x8] sm:$0xff]
      %v354 = vld [vmem:[%s246 + $0x10] sm:$0xff]
      %v355 = vld [vmem:[%s246 + $0x18] sm:$0xff]
      %v356 = vld [vmem:[%s246 + $0x20] sm:$0xf]
      %v357 = vld [vmem:[%s246 + $0x40] sm:$0xff]
      %v358 = vld [vmem:[%s246 + $0x48] sm:$0xff]
      %v359 = vld [vmem:[%s246 + $0x50] sm:$0xff]
      %v360 = vld [vmem:[%s246 + $0x58] sm:$0xff]
      %v361 = vld [vmem:[%s246 + $0x60] sm:$0xf]
      %v372 = vunpack.c.l.b16 %v352
      %v373 = vunpack.c.h.b16 %v352
      %v374 = vunpack.c.l.b16 %v353
      %v375 = vunpack.c.h.b16 %v353
      %v376 = vunpack.c.l.b16 %v354
      %v377 = vunpack.c.h.b16 %v354
      %v378 = vunpack.c.l.b16 %v355
      %v379 = vunpack.c.h.b16 %v355
      %v380 = vunpack.c.l.b16 %v356
      %v381 = vunpack.c.l.b16 %v357
      %v382 = vunpack.c.h.b16 %v357
      %v383 = vunpack.c.l.b16 %v358
      %v384 = vunpack.c.h.b16 %v358
      %v385 = vunpack.c.l.b16 %v359
      %v386 = vunpack.c.h.b16 %v359
      %v387 = vunpack.c.l.b16 %v360
      %v388 = vunpack.c.h.b16 %v360
      %v389 = vunpack.c.l.b16 %v361
      %v390 = vpack.c.b16 %v381, %v372
      %v391 = vpack.c.b16 %v382, %v373
      %v392 = vpack.c.b16 %v383, %v374
      %v393 = vpack.c.b16 %v384, %v375
      %v394 = vpack.c.b16 %v385, %v376
      %v395 = vpack.c.b16 %v386, %v377
      %v396 = vpack.c.b16 %v387, %v378
      %v397 = vpack.c.b16 %v388, %v379
      %v398 = vpack.c.b16 %v389, %v380
      %399 = vrot.lane.b32.xlu0 %v390, 9
      %v400 = vpop.permute.xlu0 %399
      %401 = vrot.lane.b32.xlu0 %v391, 9
      %v402 = vpop.permute.xlu0 %401
      %403 = vrot.lane.b32.xlu0 %v392, 9
      %v404 = vpop.permute.xlu0 %403
      %405 = vrot.lane.b32.xlu0 %v393, 9
      %v406 = vpop.permute.xlu0 %405
      %407 = vrot.lane.b32.xlu0 %v394, 9
      %v408 = vpop.permute.xlu0 %407
      %409 = vrot.lane.b32.xlu0 %v395, 9
      %v410 = vpop.permute.xlu0 %409
      %411 = vrot.lane.b32.xlu0 %v396, 9
      %v412 = vpop.permute.xlu0 %411
      %413 = vrot.lane.b32.xlu0 %v397, 9
      %v414 = vpop.permute.xlu0 %413
      %415 = vrot.lane.b32.xlu0 %v398, 9
      %v416 = vpop.permute.xlu0 %415
      %vm417 = vcmask 72704
      %v418 = vsel %vm417, %v400, %v402
      %v419 = vsel %vm417, %v402, %v404
      %v420 = vsel %vm417, %v404, %v406
      %v421 = vsel %vm417, %v406, %v408
      %v422 = vsel %vm417, %v408, %v410
      %v423 = vsel %vm417, %v410, %v412
      %v424 = vsel %vm417, %v412, %v414
      %v425 = vsel %vm417, %v414, %v416
      %434 = vst [vmem:[#allocation3 + $0x40] sm:$0xff] %v418
      %435 = vst [vmem:[#allocation3 + $0x48] sm:$0xff] %v419
      %436 = vst [vmem:[#allocation3 + $0x50] sm:$0xff] %v420
      %437 = vst [vmem:[#allocation3 + $0x58] sm:$0xff] %v421
      %438 = vst [vmem:[#allocation3 + $0x60] sm:$0xff] %v422
      %439 = vst [vmem:[#allocation3 + $0x68] sm:$0xff] %v423
      %440 = vst [vmem:[#allocation3 + $0x70] sm:$0xff] %v424
      %441 = vst [vmem:[#allocation3 + $0x78] sm:$0xff] %v425
      %v442 = vld [vmem:[%s246] sm:$0xff]
      %v443 = vld [vmem:[%s246 + $0x8] sm:$0xff]
      %v444 = vld [vmem:[%s246 + $0x10] sm:$0xff]
      %v445 = vld [vmem:[%s246 + $0x18] sm:$0xff]
      %v446 = vld [vmem:[%s246 + $0x20] sm:$0xf]
      %v447 = vld [vmem:[%s246 + $0x40] sm:$0xff]
      %v448 = vld [vmem:[%s246 + $0x48] sm:$0xff]
      %v449 = vld [vmem:[%s246 + $0x50] sm:$0xff]
      %v450 = vld [vmem:[%s246 + $0x58] sm:$0xff]
      %v451 = vld [vmem:[%s246 + $0x60] sm:$0xf]
      %v462 = vunpack.c.l.b16 %v442
      %v463 = vunpack.c.h.b16 %v442
      %v464 = vunpack.c.l.b16 %v443
      %v465 = vunpack.c.h.b16 %v443
      %v466 = vunpack.c.l.b16 %v444
      %v467 = vunpack.c.h.b16 %v444
      %v468 = vunpack.c.l.b16 %v445
      %v469 = vunpack.c.h.b16 %v445
      %v470 = vunpack.c.l.b16 %v446
      %v471 = vunpack.c.l.b16 %v447
      %v472 = vunpack.c.h.b16 %v447
      %v473 = vunpack.c.l.b16 %v448
      %v474 = vunpack.c.h.b16 %v448
      %v475 = vunpack.c.l.b16 %v449
      %v476 = vunpack.c.h.b16 %v449
      %v477 = vunpack.c.l.b16 %v450
      %v478 = vunpack.c.h.b16 %v450
      %v479 = vunpack.c.l.b16 %v451
      %v480 = vpack.c.b16 %v471, %v462
      %v481 = vpack.c.b16 %v472, %v463
      %v482 = vpack.c.b16 %v473, %v464
      %v483 = vpack.c.b16 %v474, %v465
      %v484 = vpack.c.b16 %v475, %v466
      %v485 = vpack.c.b16 %v476, %v467
      %v486 = vpack.c.b16 %v477, %v468
      %v487 = vpack.c.b16 %v478, %v469
      %v488 = vpack.c.b16 %v479, %v470
      %489 = vrot.lane.b32.xlu0 %v480, 8
      %v490 = vpop.permute.xlu0 %489
      %491 = vrot.lane.b32.xlu0 %v481, 8
      %v492 = vpop.permute.xlu0 %491
      %493 = vrot.lane.b32.xlu0 %v482, 8
      %v494 = vpop.permute.xlu0 %493
      %495 = vrot.lane.b32.xlu0 %v483, 8
      %v496 = vpop.permute.xlu0 %495
      %497 = vrot.lane.b32.xlu0 %v484, 8
      %v498 = vpop.permute.xlu0 %497
      %499 = vrot.lane.b32.xlu0 %v485, 8
      %v500 = vpop.permute.xlu0 %499
      %501 = vrot.lane.b32.xlu0 %v486, 8
      %v502 = vpop.permute.xlu0 %501
      %503 = vrot.lane.b32.xlu0 %v487, 8
      %v504 = vpop.permute.xlu0 %503
      %505 = vrot.lane.b32.xlu0 %v488, 8
      %v506 = vpop.permute.xlu0 %505
      %vm507 = vcmask 64512
      %v508 = vsel %vm507, %v490, %v492
      %v509 = vsel %vm507, %v492, %v494
      %v510 = vsel %vm507, %v494, %v496
      %v511 = vsel %vm507, %v496, %v498
      %v512 = vsel %vm507, %v498, %v500
      %v513 = vsel %vm507, %v500, %v502
      %v514 = vsel %vm507, %v502, %v504
      %v515 = vsel %vm507, %v504, %v506
      %524 = vst [vmem:[#allocation3 + $0x80] sm:$0xff] %v508
      %525 = vst [vmem:[#allocation3 + $0x88] sm:$0xff] %v509
      %526 = vst [vmem:[#allocation3 + $0x90] sm:$0xff] %v510
      %527 = vst [vmem:[#allocation3 + $0x98] sm:$0xff] %v511
      %528 = vst [vmem:[#allocation3 + $0xa0] sm:$0xff] %v512
      %529 = vst [vmem:[#allocation3 + $0xa8] sm:$0xff] %v513
      %530 = vst [vmem:[#allocation3 + $0xb0] sm:$0xff] %v514
      %531 = vst [vmem:[#allocation3 + $0xb8] sm:$0xff] %v515
      %v532 = vld [vmem:[%s246 + $0x4] sm:$0xff]
      %v533 = vld [vmem:[%s246 + $0xc] sm:$0xff]
      %v534 = vld [vmem:[%s246 + $0x14] sm:$0xff]
      %v535 = vld [vmem:[%s246 + $0x1c] sm:$0xff]
      %v536 = vld [vmem:[%s246 + $0x24] sm:$0xf]
      %v537 = vld [vmem:[%s246 + $0x44] sm:$0xff]
      %v538 = vld [vmem:[%s246 + $0x4c] sm:$0xff]
      %v539 = vld [vmem:[%s246 + $0x54] sm:$0xff]
      %v540 = vld [vmem:[%s246 + $0x5c] sm:$0xff]
      %v541 = vld [vmem:[%s246 + $0x64] sm:$0xf]
      %v552 = vunpack.c.l.b16 %v532
      %v553 = vunpack.c.h.b16 %v532
      %v554 = vunpack.c.l.b16 %v533
      %v555 = vunpack.c.h.b16 %v533
      %v556 = vunpack.c.l.b16 %v534
      %v557 = vunpack.c.h.b16 %v534
      %v558 = vunpack.c.l.b16 %v535
      %v559 = vunpack.c.h.b16 %v535
      %v560 = vunpack.c.l.b16 %v536
      %v561 = vunpack.c.l.b16 %v537
      %v562 = vunpack.c.h.b16 %v537
      %v563 = vunpack.c.l.b16 %v538
      %v564 = vunpack.c.h.b16 %v538
      %v565 = vunpack.c.l.b16 %v539
      %v566 = vunpack.c.h.b16 %v539
      %v567 = vunpack.c.l.b16 %v540
      %v568 = vunpack.c.h.b16 %v540
      %v569 = vunpack.c.l.b16 %v541
      %v570 = vpack.c.b16 %v561, %v552
      %v571 = vpack.c.b16 %v562, %v553
      %v572 = vpack.c.b16 %v563, %v554
      %v573 = vpack.c.b16 %v564, %v555
      %v574 = vpack.c.b16 %v565, %v556
      %v575 = vpack.c.b16 %v566, %v557
      %v576 = vpack.c.b16 %v567, %v558
      %v577 = vpack.c.b16 %v568, %v559
      %v578 = vpack.c.b16 %v569, %v560
      %579 = vrot.lane.b32.xlu0 %v570, 126
      %v580 = vpop.permute.xlu0 %579
      %581 = vrot.lane.b32.xlu0 %v571, 126
      %v582 = vpop.permute.xlu0 %581
      %583 = vrot.lane.b32.xlu0 %v572, 126
      %v584 = vpop.permute.xlu0 %583
      %585 = vrot.lane.b32.xlu0 %v573, 126
      %v586 = vpop.permute.xlu0 %585
      %587 = vrot.lane.b32.xlu0 %v574, 126
      %v588 = vpop.permute.xlu0 %587
      %589 = vrot.lane.b32.xlu0 %v575, 126
      %v590 = vpop.permute.xlu0 %589
      %591 = vrot.lane.b32.xlu0 %v576, 126
      %v592 = vpop.permute.xlu0 %591
      %593 = vrot.lane.b32.xlu0 %v577, 126
      %v594 = vpop.permute.xlu0 %593
      %595 = vrot.lane.b32.xlu0 %v578, 126
      %v596 = vpop.permute.xlu0 %595
      %vm597 = vcmask 1031168
      %v598 = vsel %vm597, %v580, %v582
      %v599 = vsel %vm597, %v582, %v584
      %v600 = vsel %vm597, %v584, %v586
      %v601 = vsel %vm597, %v586, %v588
      %v602 = vsel %vm597, %v588, %v590
      %v603 = vsel %vm597, %v590, %v592
      %v604 = vsel %vm597, %v592, %v594
      %v605 = vsel %vm597, %v594, %v596
      %614 = vst [vmem:[#allocation3 + $0xc0] sm:$0xff] %v598
      %615 = vst [vmem:[#allocation3 + $0xc8] sm:$0xff] %v599
      %616 = vst [vmem:[#allocation3 + $0xd0] sm:$0xff] %v600
      %617 = vst [vmem:[#allocation3 + $0xd8] sm:$0xff] %v601
      %618 = vst [vmem:[#allocation3 + $0xe0] sm:$0xff] %v602
      %619 = vst [vmem:[#allocation3 + $0xe8] sm:$0xff] %v603
      %620 = vst [vmem:[#allocation3 + $0xf0] sm:$0xff] %v604
      %621 = vst [vmem:[#allocation3 + $0xf8] sm:$0xff] %v605
      %v622 = vld [vmem:[%s246 + $0x4] sm:$0xff]
      %v623 = vld [vmem:[%s246 + $0xc] sm:$0xff]
      %v624 = vld [vmem:[%s246 + $0x14] sm:$0xff]
      %v625 = vld [vmem:[%s246 + $0x1c] sm:$0xff]
      %v626 = vld [vmem:[%s246 + $0x24] sm:$0xf]
      %v627 = vld [vmem:[%s246 + $0x44] sm:$0xff]
      %v628 = vld [vmem:[%s246 + $0x4c] sm:$0xff]
      %v629 = vld [vmem:[%s246 + $0x54] sm:$0xff]
      %v630 = vld [vmem:[%s246 + $0x5c] sm:$0xff]
      %v631 = vld [vmem:[%s246 + $0x64] sm:$0xf]
      %v642 = vunpack.c.l.b16 %v622
      %v643 = vunpack.c.h.b16 %v622
      %v644 = vunpack.c.l.b16 %v623
      %v645 = vunpack.c.h.b16 %v623
      %v646 = vunpack.c.l.b16 %v624
      %v647 = vunpack.c.h.b16 %v624
      %v648 = vunpack.c.l.b16 %v625
      %v649 = vunpack.c.h.b16 %v625
      %v650 = vunpack.c.l.b16 %v626
      %v651 = vunpack.c.l.b16 %v627
      %v652 = vunpack.c.h.b16 %v627
      %v653 = vunpack.c.l.b16 %v628
      %v654 = vunpack.c.h.b16 %v628
      %v655 = vunpack.c.l.b16 %v629
      %v656 = vunpack.c.h.b16 %v629
      %v657 = vunpack.c.l.b16 %v630
      %v658 = vunpack.c.h.b16 %v630
      %v659 = vunpack.c.l.b16 %v631
      %v660 = vpack.c.b16 %v651, %v642
      %v661 = vpack.c.b16 %v652, %v643
      %v662 = vpack.c.b16 %v653, %v644
      %v663 = vpack.c.b16 %v654, %v645
      %v664 = vpack.c.b16 %v655, %v646
      %v665 = vpack.c.b16 %v656, %v647
      %v666 = vpack.c.b16 %v657, %v648
      %v667 = vpack.c.b16 %v658, %v649
      %v668 = vpack.c.b16 %v659, %v650
      %669 = vrot.lane.b32.xlu0 %v660, 125
      %v670 = vpop.permute.xlu0 %669
      %671 = vrot.lane.b32.xlu0 %v661, 125
      %v672 = vpop.permute.xlu0 %671
      %673 = vrot.lane.b32.xlu0 %v662, 125
      %v674 = vpop.permute.xlu0 %673
      %675 = vrot.lane.b32.xlu0 %v663, 125
      %v676 = vpop.permute.xlu0 %675
      %677 = vrot.lane.b32.xlu0 %v664, 125
      %v678 = vpop.permute.xlu0 %677
      %679 = vrot.lane.b32.xlu0 %v665, 125
      %v680 = vpop.permute.xlu0 %679
      %681 = vrot.lane.b32.xlu0 %v666, 125
      %v682 = vpop.permute.xlu0 %681
      %683 = vrot.lane.b32.xlu0 %v667, 125
      %v684 = vpop.permute.xlu0 %683
      %685 = vrot.lane.b32.xlu0 %v668, 125
      %v686 = vpop.permute.xlu0 %685
      %vm687 = vcmask 1022976
      %v688 = vsel %vm687, %v670, %v672
      %v689 = vsel %vm687, %v672, %v674
      %v690 = vsel %vm687, %v674, %v676
      %v691 = vsel %vm687, %v676, %v678
      %v692 = vsel %vm687, %v678, %v680
      %v693 = vsel %vm687, %v680, %v682
      %v694 = vsel %vm687, %v682, %v684
      %v695 = vsel %vm687, %v684, %v686
      %704 = vst [vmem:[#allocation3 + $0x100] sm:$0xff] %v688
      %705 = vst [vmem:[#allocation3 + $0x108] sm:$0xff] %v689
      %706 = vst [vmem:[#allocation3 + $0x110] sm:$0xff] %v690
      %707 = vst [vmem:[#allocation3 + $0x118] sm:$0xff] %v691
      %708 = vst [vmem:[#allocation3 + $0x120] sm:$0xff] %v692
      %709 = vst [vmem:[#allocation3 + $0x128] sm:$0xff] %v693
      %710 = vst [vmem:[#allocation3 + $0x130] sm:$0xff] %v694
      %711 = vst [vmem:[#allocation3 + $0x138] sm:$0xff] %v695
      %v712 = vld [vmem:[%s246 + $0x4] sm:$0xff]
      %v713 = vld [vmem:[%s246 + $0xc] sm:$0xff]
      %v714 = vld [vmem:[%s246 + $0x14] sm:$0xff]
      %v715 = vld [vmem:[%s246 + $0x1c] sm:$0xff]
      %v716 = vld [vmem:[%s246 + $0x24] sm:$0xf]
      %v717 = vld [vmem:[%s246 + $0x44] sm:$0xff]
      %v718 = vld [vmem:[%s246 + $0x4c] sm:$0xff]
      %v719 = vld [vmem:[%s246 + $0x54] sm:$0xff]
      %v720 = vld [vmem:[%s246 + $0x5c] sm:$0xff]
      %v721 = vld [vmem:[%s246 + $0x64] sm:$0xf]
      %v732 = vunpack.c.l.b16 %v712
      %v733 = vunpack.c.h.b16 %v712
      %v734 = vunpack.c.l.b16 %v713
      %v735 = vunpack.c.h.b16 %v713
      %v736 = vunpack.c.l.b16 %v714
      %v737 = vunpack.c.h.b16 %v714
      %v738 = vunpack.c.l.b16 %v715
      %v739 = vunpack.c.h.b16 %v715
      %v740 = vunpack.c.l.b16 %v716
      %v741 = vunpack.c.l.b16 %v717
      %v742 = vunpack.c.h.b16 %v717
      %v743 = vunpack.c.l.b16 %v718
      %v744 = vunpack.c.h.b16 %v718
      %v745 = vunpack.c.l.b16 %v719
      %v746 = vunpack.c.h.b16 %v719
      %v747 = vunpack.c.l.b16 %v720
      %v748 = vunpack.c.h.b16 %v720
      %v749 = vunpack.c.l.b16 %v721
      %v750 = vpack.c.b16 %v741, %v732
      %v751 = vpack.c.b16 %v742, %v733
      %v752 = vpack.c.b16 %v743, %v734
      %v753 = vpack.c.b16 %v744, %v735
      %v754 = vpack.c.b16 %v745, %v736
      %v755 = vpack.c.b16 %v746, %v737
      %v756 = vpack.c.b16 %v747, %v738
      %v757 = vpack.c.b16 %v748, %v739
      %v758 = vpack.c.b16 %v749, %v740
      %759 = vrot.lane.b32.xlu0 %v750, 124
      %v760 = vpop.permute.xlu0 %759
      %761 = vrot.lane.b32.xlu0 %v751, 124
      %v762 = vpop.permute.xlu0 %761
      %763 = vrot.lane.b32.xlu0 %v752, 124
      %v764 = vpop.permute.xlu0 %763
      %765 = vrot.lane.b32.xlu0 %v753, 124
      %v766 = vpop.permute.xlu0 %765
      %767 = vrot.lane.b32.xlu0 %v754, 124
      %v768 = vpop.permute.xlu0 %767
      %769 = vrot.lane.b32.xlu0 %v755, 124
      %v770 = vpop.permute.xlu0 %769
      %771 = vrot.lane.b32.xlu0 %v756, 124
      %v772 = vpop.permute.xlu0 %771
      %773 = vrot.lane.b32.xlu0 %v757, 124
      %v774 = vpop.permute.xlu0 %773
      %775 = vrot.lane.b32.xlu0 %v758, 124
      %v776 = vpop.permute.xlu0 %775
      %vm777 = vcmask 1014784
      %v778 = vsel %vm777, %v760, %v762
      %v779 = vsel %vm777, %v762, %v764
      %v780 = vsel %vm777, %v764, %v766
      %v781 = vsel %vm777, %v766, %v768
      %v782 = vsel %vm777, %v768, %v770
      %v783 = vsel %vm777, %v770, %v772
      %v784 = vsel %vm777, %v772, %v774
      %v785 = vsel %vm777, %v774, %v776
      %794 = vst [vmem:[#allocation3 + $0x140] sm:$0xff] %v778
      %795 = vst [vmem:[#allocation3 + $0x148] sm:$0xff] %v779
      %796 = vst [vmem:[#allocation3 + $0x150] sm:$0xff] %v780
      %797 = vst [vmem:[#allocation3 + $0x158] sm:$0xff] %v781
      %798 = vst [vmem:[#allocation3 + $0x160] sm:$0xff] %v782
      %799 = vst [vmem:[#allocation3 + $0x168] sm:$0xff] %v783
      %800 = vst [vmem:[#allocation3 + $0x170] sm:$0xff] %v784
      %801 = vst [vmem:[#allocation3 + $0x178] sm:$0xff] %v785
      %v802 = vld [vmem:[%s246 + $0x4] sm:$0xff]
      %v803 = vld [vmem:[%s246 + $0xc] sm:$0xff]
      %v804 = vld [vmem:[%s246 + $0x14] sm:$0xff]
      %v805 = vld [vmem:[%s246 + $0x1c] sm:$0xff]
      %v806 = vld [vmem:[%s246 + $0x24] sm:$0xf]
      %v807 = vld [vmem:[%s246 + $0x44] sm:$0xff]
      %v808 = vld [vmem:[%s246 + $0x4c] sm:$0xff]
      %v809 = vld [vmem:[%s246 + $0x54] sm:$0xff]
      %v810 = vld [vmem:[%s246 + $0x5c] sm:$0xff]
      %v811 = vld [vmem:[%s246 + $0x64] sm:$0xf]
      %v822 = vunpack.c.l.b16 %v802
      %v823 = vunpack.c.h.b16 %v802
      %v824 = vunpack.c.l.b16 %v803
      %v825 = vunpack.c.h.b16 %v803
      %v826 = vunpack.c.l.b16 %v804
      %v827 = vunpack.c.h.b16 %v804
      %v828 = vunpack.c.l.b16 %v805
      %v829 = vunpack.c.h.b16 %v805
      %v830 = vunpack.c.l.b16 %v806
      %v831 = vunpack.c.l.b16 %v807
      %v832 = vunpack.c.h.b16 %v807
      %v833 = vunpack.c.l.b16 %v808
      %v834 = vunpack.c.h.b16 %v808
      %v835 = vunpack.c.l.b16 %v809
      %v836 = vunpack.c.h.b16 %v809
      %v837 = vunpack.c.l.b16 %v810
      %v838 = vunpack.c.h.b16 %v810
      %v839 = vunpack.c.l.b16 %v811
      %v840 = vpack.c.b16 %v831, %v822
      %v841 = vpack.c.b16 %v832, %v823
      %v842 = vpack.c.b16 %v833, %v824
      %v843 = vpack.c.b16 %v834, %v825
      %v844 = vpack.c.b16 %v835, %v826
      %v845 = vpack.c.b16 %v836, %v827
      %v846 = vpack.c.b16 %v837, %v828
      %v847 = vpack.c.b16 %v838, %v829
      %v848 = vpack.c.b16 %v839, %v830
      %849 = vrot.lane.b32.xlu0 %v840, 114
      %v850 = vpop.permute.xlu0 %849
      %851 = vrot.lane.b32.xlu0 %v841, 114
      %v852 = vpop.permute.xlu0 %851
      %853 = vrot.lane.b32.xlu0 %v842, 114
      %v854 = vpop.permute.xlu0 %853
      %855 = vrot.lane.b32.xlu0 %v843, 114
      %v856 = vpop.permute.xlu0 %855
      %857 = vrot.lane.b32.xlu0 %v844, 114
      %v858 = vpop.permute.xlu0 %857
      %859 = vrot.lane.b32.xlu0 %v845, 114
      %v860 = vpop.permute.xlu0 %859
      %861 = vrot.lane.b32.xlu0 %v846, 114
      %v862 = vpop.permute.xlu0 %861
      %863 = vrot.lane.b32.xlu0 %v847, 114
      %v864 = vpop.permute.xlu0 %863
      %865 = vrot.lane.b32.xlu0 %v848, 114
      %v866 = vpop.permute.xlu0 %865
      %vm867 = vcmask 932864
      %v868 = vsel %vm867, %v850, %v852
      %v869 = vsel %vm867, %v852, %v854
      %v870 = vsel %vm867, %v854, %v856
      %v871 = vsel %vm867, %v856, %v858
      %v872 = vsel %vm867, %v858, %v860
      %v873 = vsel %vm867, %v860, %v862
      %v874 = vsel %vm867, %v862, %v864
      %v875 = vsel %vm867, %v864, %v866
      %884 = vst [vmem:[#allocation3 + $0x180] sm:$0xff] %v868
      %885 = vst [vmem:[#allocation3 + $0x188] sm:$0xff] %v869
      %886 = vst [vmem:[#allocation3 + $0x190] sm:$0xff] %v870
      %887 = vst [vmem:[#allocation3 + $0x198] sm:$0xff] %v871
      %888 = vst [vmem:[#allocation3 + $0x1a0] sm:$0xff] %v872
      %889 = vst [vmem:[#allocation3 + $0x1a8] sm:$0xff] %v873
      %890 = vst [vmem:[#allocation3 + $0x1b0] sm:$0xff] %v874
      %891 = vst [vmem:[#allocation3 + $0x1b8] sm:$0xff] %v875
      %v892 = vld [vmem:[%s246 + $0x4] sm:$0xff]
      %v893 = vld [vmem:[%s246 + $0xc] sm:$0xff]
      %v894 = vld [vmem:[%s246 + $0x14] sm:$0xff]
      %v895 = vld [vmem:[%s246 + $0x1c] sm:$0xff]
      %v896 = vld [vmem:[%s246 + $0x24] sm:$0xf]
      %v897 = vld [vmem:[%s246 + $0x44] sm:$0xff]
      %v898 = vld [vmem:[%s246 + $0x4c] sm:$0xff]
      %v899 = vld [vmem:[%s246 + $0x54] sm:$0xff]
      %v900 = vld [vmem:[%s246 + $0x5c] sm:$0xff]
      %v901 = vld [vmem:[%s246 + $0x64] sm:$0xf]
      %v912 = vunpack.c.l.b16 %v892
      %v913 = vunpack.c.h.b16 %v892
      %v914 = vunpack.c.l.b16 %v893
      %v915 = vunpack.c.h.b16 %v893
      %v916 = vunpack.c.l.b16 %v894
      %v917 = vunpack.c.h.b16 %v894
      %v918 = vunpack.c.l.b16 %v895
      %v919 = vunpack.c.h.b16 %v895
      %v920 = vunpack.c.l.b16 %v896
      %v921 = vunpack.c.l.b16 %v897
      %v922 = vunpack.c.h.b16 %v897
      %v923 = vunpack.c.l.b16 %v898
      %v924 = vunpack.c.h.b16 %v898
      %v925 = vunpack.c.l.b16 %v899
      %v926 = vunpack.c.h.b16 %v899
      %v927 = vunpack.c.l.b16 %v900
      %v928 = vunpack.c.h.b16 %v900
      %v929 = vunpack.c.l.b16 %v901
      %v930 = vpack.c.b16 %v921, %v912
      %v931 = vpack.c.b16 %v922, %v913
      %v932 = vpack.c.b16 %v923, %v914
      %v933 = vpack.c.b16 %v924, %v915
      %v934 = vpack.c.b16 %v925, %v916
      %v935 = vpack.c.b16 %v926, %v917
      %v936 = vpack.c.b16 %v927, %v918
      %v937 = vpack.c.b16 %v928, %v919
      %v938 = vpack.c.b16 %v929, %v920
      %939 = vrot.lane.b32.xlu0 %v930, 113
      %v940 = vpop.permute.xlu0 %939
      %941 = vrot.lane.b32.xlu0 %v931, 113
      %v942 = vpop.permute.xlu0 %941
      %943 = vrot.lane.b32.xlu0 %v932, 113
      %v944 = vpop.permute.xlu0 %943
      %945 = vrot.lane.b32.xlu0 %v933, 113
      %v946 = vpop.permute.xlu0 %945
      %947 = vrot.lane.b32.xlu0 %v934, 113
      %v948 = vpop.permute.xlu0 %947
      %949 = vrot.lane.b32.xlu0 %v935, 113
      %v950 = vpop.permute.xlu0 %949
      %951 = vrot.lane.b32.xlu0 %v936, 113
      %v952 = vpop.permute.xlu0 %951
      %953 = vrot.lane.b32.xlu0 %v937, 113
      %v954 = vpop.permute.xlu0 %953
      %955 = vrot.lane.b32.xlu0 %v938, 113
      %v956 = vpop.permute.xlu0 %955
      %vm957 = vcmask 924672
      %v958 = vsel %vm957, %v940, %v942
      %v959 = vsel %vm957, %v942, %v944
      %v960 = vsel %vm957, %v944, %v946
      %v961 = vsel %vm957, %v946, %v948
      %v962 = vsel %vm957, %v948, %v950
      %v963 = vsel %vm957, %v950, %v952
      %v964 = vsel %vm957, %v952, %v954
      %v965 = vsel %vm957, %v954, %v956
      %974 = vst [vmem:[#allocation3 + $0x1c0] sm:$0xff] %v958
      %975 = vst [vmem:[#allocation3 + $0x1c8] sm:$0xff] %v959
      %976 = vst [vmem:[#allocation3 + $0x1d0] sm:$0xff] %v960
      %977 = vst [vmem:[#allocation3 + $0x1d8] sm:$0xff] %v961
      %978 = vst [vmem:[#allocation3 + $0x1e0] sm:$0xff] %v962
      %979 = vst [vmem:[#allocation3 + $0x1e8] sm:$0xff] %v963
      %980 = vst [vmem:[#allocation3 + $0x1f0] sm:$0xff] %v964
      %981 = vst [vmem:[#allocation3 + $0x1f8] sm:$0xff] %v965
      %v982 = vld [vmem:[%s246 + $0x4] sm:$0xff]
      %v983 = vld [vmem:[%s246 + $0xc] sm:$0xff]
      %v984 = vld [vmem:[%s246 + $0x14] sm:$0xff]
      %v985 = vld [vmem:[%s246 + $0x1c] sm:$0xff]
      %v986 = vld [vmem:[%s246 + $0x24] sm:$0xf]
      %v987 = vld [vmem:[%s246 + $0x44] sm:$0xff]
      %v988 = vld [vmem:[%s246 + $0x4c] sm:$0xff]
      %v989 = vld [vmem:[%s246 + $0x54] sm:$0xff]
      %v990 = vld [vmem:[%s246 + $0x5c] sm:$0xff]
      %v991 = vld [vmem:[%s246 + $0x64] sm:$0xf]
      %v1002 = vunpack.c.l.b16 %v982
      %v1003 = vunpack.c.h.b16 %v982
      %v1004 = vunpack.c.l.b16 %v983
      %v1005 = vunpack.c.h.b16 %v983
      %v1006 = vunpack.c.l.b16 %v984
      %v1007 = vunpack.c.h.b16 %v984
      %v1008 = vunpack.c.l.b16 %v985
      %v1009 = vunpack.c.h.b16 %v985
      %v1010 = vunpack.c.l.b16 %v986
      %v1011 = vunpack.c.l.b16 %v987
      %v1012 = vunpack.c.h.b16 %v987
      %v1013 = vunpack.c.l.b16 %v988
      %v1014 = vunpack.c.h.b16 %v988
      %v1015 = vunpack.c.l.b16 %v989
      %v1016 = vunpack.c.h.b16 %v989
      %v1017 = vunpack.c.l.b16 %v990
      %v1018 = vunpack.c.h.b16 %v990
      %v1019 = vunpack.c.l.b16 %v991
      %v1020 = vpack.c.b16 %v1011, %v1002
      %v1021 = vpack.c.b16 %v1012, %v1003
      %v1022 = vpack.c.b16 %v1013, %v1004
      %v1023 = vpack.c.b16 %v1014, %v1005
      %v1024 = vpack.c.b16 %v1015, %v1006
      %v1025 = vpack.c.b16 %v1016, %v1007
      %v1026 = vpack.c.b16 %v1017, %v1008
      %v1027 = vpack.c.b16 %v1018, %v1009
      %v1028 = vpack.c.b16 %v1019, %v1010
      %1029 = vrot.lane.b32.xlu0 %v1020, 112
      %v1030 = vpop.permute.xlu0 %1029
      %1031 = vrot.lane.b32.xlu0 %v1021, 112
      %v1032 = vpop.permute.xlu0 %1031
      %1033 = vrot.lane.b32.xlu0 %v1022, 112
      %v1034 = vpop.permute.xlu0 %1033
      %1035 = vrot.lane.b32.xlu0 %v1023, 112
      %v1036 = vpop.permute.xlu0 %1035
      %1037 = vrot.lane.b32.xlu0 %v1024, 112
      %v1038 = vpop.permute.xlu0 %1037
      %1039 = vrot.lane.b32.xlu0 %v1025, 112
      %v1040 = vpop.permute.xlu0 %1039
      %1041 = vrot.lane.b32.xlu0 %v1026, 112
      %v1042 = vpop.permute.xlu0 %1041
      %1043 = vrot.lane.b32.xlu0 %v1027, 112
      %v1044 = vpop.permute.xlu0 %1043
      %1045 = vrot.lane.b32.xlu0 %v1028, 112
      %v1046 = vpop.permute.xlu0 %1045
      %vm1047 = vcmask 916480
      %v1048 = vsel %vm1047, %v1030, %v1032
      %v1049 = vsel %vm1047, %v1032, %v1034
      %v1050 = vsel %vm1047, %v1034, %v1036
      %v1051 = vsel %vm1047, %v1036, %v1038
      %v1052 = vsel %vm1047, %v1038, %v1040
      %v1053 = vsel %vm1047, %v1040, %v1042
      %v1054 = vsel %vm1047, %v1042, %v1044
      %v1055 = vsel %vm1047, %v1044, %v1046
      %1064 = vst [vmem:[#allocation3 + $0x200] sm:$0xff] %v1048
      %1065 = vst [vmem:[#allocation3 + $0x208] sm:$0xff] %v1049
      %1066 = vst [vmem:[#allocation3 + $0x210] sm:$0xff] %v1050
      %1067 = vst [vmem:[#allocation3 + $0x218] sm:$0xff] %v1051
      %1068 = vst [vmem:[#allocation3 + $0x220] sm:$0xff] %v1052
      %1069 = vst [vmem:[#allocation3 + $0x228] sm:$0xff] %v1053
      %1070 = vst [vmem:[#allocation3 + $0x230] sm:$0xff] %v1054
      %1071 = vst [vmem:[#allocation3 + $0x238] sm:$0xff] %v1055
      %v1072 = vld [vmem:[%s246 + $0x8] sm:$0xff]
      %v1073 = vld [vmem:[%s246 + $0x10] sm:$0xff]
      %v1074 = vld [vmem:[%s246 + $0x18] sm:$0xff]
      %v1075 = vld [vmem:[%s246 + $0x20] sm:$0xff]
      %v1076 = vld [vmem:[%s246 + $0x28] sm:$0xf]
      %v1077 = vld [vmem:[%s246 + $0x48] sm:$0xff]
      %v1078 = vld [vmem:[%s246 + $0x50] sm:$0xff]
      %v1079 = vld [vmem:[%s246 + $0x58] sm:$0xff]
      %v1080 = vld [vmem:[%s246 + $0x60] sm:$0xff]
      %v1081 = vld [vmem:[%s246 + $0x68] sm:$0xf]
      %v1092 = vunpack.c.l.b16 %v1072
      %v1093 = vunpack.c.h.b16 %v1072
      %v1094 = vunpack.c.l.b16 %v1073
      %v1095 = vunpack.c.h.b16 %v1073
      %v1096 = vunpack.c.l.b16 %v1074
      %v1097 = vunpack.c.h.b16 %v1074
      %v1098 = vunpack.c.l.b16 %v1075
      %v1099 = vunpack.c.h.b16 %v1075
      %v1100 = vunpack.c.l.b16 %v1076
      %v1101 = vunpack.c.l.b16 %v1077
      %v1102 = vunpack.c.h.b16 %v1077
      %v1103 = vunpack.c.l.b16 %v1078
      %v1104 = vunpack.c.h.b16 %v1078
      %v1105 = vunpack.c.l.b16 %v1079
      %v1106 = vunpack.c.h.b16 %v1079
      %v1107 = vunpack.c.l.b16 %v1080
      %v1108 = vunpack.c.h.b16 %v1080
      %v1109 = vunpack.c.l.b16 %v1081
      %v1110 = vpack.c.b16 %v1101, %v1092
      %v1111 = vpack.c.b16 %v1102, %v1093
      %v1112 = vpack.c.b16 %v1103, %v1094
      %v1113 = vpack.c.b16 %v1104, %v1095
      %v1114 = vpack.c.b16 %v1105, %v1096
      %v1115 = vpack.c.b16 %v1106, %v1097
      %v1116 = vpack.c.b16 %v1107, %v1098
      %v1117 = vpack.c.b16 %v1108, %v1099
      %v1118 = vpack.c.b16 %v1109, %v1100
      %1119 = vrot.lane.b32.xlu0 %v1110, 122
      %v1120 = vpop.permute.xlu0 %1119
      %1121 = vrot.lane.b32.xlu0 %v1111, 122
      %v1122 = vpop.permute.xlu0 %1121
      %1123 = vrot.lane.b32.xlu0 %v1112, 122
      %v1124 = vpop.permute.xlu0 %1123
      %1125 = vrot.lane.b32.xlu0 %v1113, 122
      %v1126 = vpop.permute.xlu0 %1125
      %1127 = vrot.lane.b32.xlu0 %v1114, 122
      %v1128 = vpop.permute.xlu0 %1127
      %1129 = vrot.lane.b32.xlu0 %v1115, 122
      %v1130 = vpop.permute.xlu0 %1129
      %1131 = vrot.lane.b32.xlu0 %v1116, 122
      %v1132 = vpop.permute.xlu0 %1131
      %1133 = vrot.lane.b32.xlu0 %v1117, 122
      %v1134 = vpop.permute.xlu0 %1133
      %1135 = vrot.lane.b32.xlu0 %v1118, 122
      %v1136 = vpop.permute.xlu0 %1135
      %vm1137 = vcmask 998400
      %v1138 = vsel %vm1137, %v1120, %v1122
      %v1139 = vsel %vm1137, %v1122, %v1124
      %v1140 = vsel %vm1137, %v1124, %v1126
      %v1141 = vsel %vm1137, %v1126, %v1128
      %v1142 = vsel %vm1137, %v1128, %v1130
      %v1143 = vsel %vm1137, %v1130, %v1132
      %v1144 = vsel %vm1137, %v1132, %v1134
      %v1145 = vsel %vm1137, %v1134, %v1136
      %1154 = vst [vmem:[#allocation3 + $0x240] sm:$0xff] %v1138
      %1155 = vst [vmem:[#allocation3 + $0x248] sm:$0xff] %v1139
      %1156 = vst [vmem:[#allocation3 + $0x250] sm:$0xff] %v1140
      %1157 = vst [vmem:[#allocation3 + $0x258] sm:$0xff] %v1141
      %1158 = vst [vmem:[#allocation3 + $0x260] sm:$0xff] %v1142
      %1159 = vst [vmem:[#allocation3 + $0x268] sm:$0xff] %v1143
      %1160 = vst [vmem:[#allocation3 + $0x270] sm:$0xff] %v1144
      %1161 = vst [vmem:[#allocation3 + $0x278] sm:$0xff] %v1145
      %v1162 = vld [vmem:[%s246 + $0x8] sm:$0xff]
      %v1163 = vld [vmem:[%s246 + $0x10] sm:$0xff]
      %v1164 = vld [vmem:[%s246 + $0x18] sm:$0xff]
      %v1165 = vld [vmem:[%s246 + $0x20] sm:$0xff]
      %v1166 = vld [vmem:[%s246 + $0x28] sm:$0xf]
      %v1167 = vld [vmem:[%s246 + $0x48] sm:$0xff]
      %v1168 = vld [vmem:[%s246 + $0x50] sm:$0xff]
      %v1169 = vld [vmem:[%s246 + $0x58] sm:$0xff]
      %v1170 = vld [vmem:[%s246 + $0x60] sm:$0xff]
      %v1171 = vld [vmem:[%s246 + $0x68] sm:$0xf]
      %v1182 = vunpack.c.l.b16 %v1162
      %v1183 = vunpack.c.h.b16 %v1162
      %v1184 = vunpack.c.l.b16 %v1163
      %v1185 = vunpack.c.h.b16 %v1163
      %v1186 = vunpack.c.l.b16 %v1164
      %v1187 = vunpack.c.h.b16 %v1164
      %v1188 = vunpack.c.l.b16 %v1165
      %v1189 = vunpack.c.h.b16 %v1165
      %v1190 = vunpack.c.l.b16 %v1166
      %v1191 = vunpack.c.l.b16 %v1167
      %v1192 = vunpack.c.h.b16 %v1167
      %v1193 = vunpack.c.l.b16 %v1168
      %v1194 = vunpack.c.h.b16 %v1168
      %v1195 = vunpack.c.l.b16 %v1169
      %v1196 = vunpack.c.h.b16 %v1169
      %v1197 = vunpack.c.l.b16 %v1170
      %v1198 = vunpack.c.h.b16 %v1170
      %v1199 = vunpack.c.l.b16 %v1171
      %v1200 = vpack.c.b16 %v1191, %v1182
      %v1201 = vpack.c.b16 %v1192, %v1183
      %v1202 = vpack.c.b16 %v1193, %v1184
      %v1203 = vpack.c.b16 %v1194, %v1185
      %v1204 = vpack.c.b16 %v1195, %v1186
      %v1205 = vpack.c.b16 %v1196, %v1187
      %v1206 = vpack.c.b16 %v1197, %v1188
      %v1207 = vpack.c.b16 %v1198, %v1189
      %v1208 = vpack.c.b16 %v1199, %v1190
      %1209 = vrot.lane.b32.xlu0 %v1200, 121
      %v1210 = vpop.permute.xlu0 %1209
      %1211 = vrot.lane.b32.xlu0 %v1201, 121
      %v1212 = vpop.permute.xlu0 %1211
      %1213 = vrot.lane.b32.xlu0 %v1202, 121
      %v1214 = vpop.permute.xlu0 %1213
      %1215 = vrot.lane.b32.xlu0 %v1203, 121
      %v1216 = vpop.permute.xlu0 %1215
      %1217 = vrot.lane.b32.xlu0 %v1204, 121
      %v1218 = vpop.permute.xlu0 %1217
      %1219 = vrot.lane.b32.xlu0 %v1205, 121
      %v1220 = vpop.permute.xlu0 %1219
      %1221 = vrot.lane.b32.xlu0 %v1206, 121
      %v1222 = vpop.permute.xlu0 %1221
      %1223 = vrot.lane.b32.xlu0 %v1207, 121
      %v1224 = vpop.permute.xlu0 %1223
      %1225 = vrot.lane.b32.xlu0 %v1208, 121
      %v1226 = vpop.permute.xlu0 %1225
      %vm1227 = vcmask 990208
      %v1228 = vsel %vm1227, %v1210, %v1212
      %v1229 = vsel %vm1227, %v1212, %v1214
      %v1230 = vsel %vm1227, %v1214, %v1216
      %v1231 = vsel %vm1227, %v1216, %v1218
      %v1232 = vsel %vm1227, %v1218, %v1220
      %v1233 = vsel %vm1227, %v1220, %v1222
      %v1234 = vsel %vm1227, %v1222, %v1224
      %v1235 = vsel %vm1227, %v1224, %v1226
      %1244 = vst [vmem:[#allocation3 + $0x280] sm:$0xff] %v1228
      %1245 = vst [vmem:[#allocation3 + $0x288] sm:$0xff] %v1229
      %1246 = vst [vmem:[#allocation3 + $0x290] sm:$0xff] %v1230
      %1247 = vst [vmem:[#allocation3 + $0x298] sm:$0xff] %v1231
      %1248 = vst [vmem:[#allocation3 + $0x2a0] sm:$0xff] %v1232
      %1249 = vst [vmem:[#allocation3 + $0x2a8] sm:$0xff] %v1233
      %1250 = vst [vmem:[#allocation3 + $0x2b0] sm:$0xff] %v1234
      %1251 = vst [vmem:[#allocation3 + $0x2b8] sm:$0xff] %v1235
      %v1252 = vld [vmem:[%s246 + $0x8] sm:$0xff]
      %v1253 = vld [vmem:[%s246 + $0x10] sm:$0xff]
      %v1254 = vld [vmem:[%s246 + $0x18] sm:$0xff]
      %v1255 = vld [vmem:[%s246 + $0x20] sm:$0xff]
      %v1256 = vld [vmem:[%s246 + $0x28] sm:$0xf]
      %v1257 = vld [vmem:[%s246 + $0x48] sm:$0xff]
      %v1258 = vld [vmem:[%s246 + $0x50] sm:$0xff]
      %v1259 = vld [vmem:[%s246 + $0x58] sm:$0xff]
      %v1260 = vld [vmem:[%s246 + $0x60] sm:$0xff]
      %v1261 = vld [vmem:[%s246 + $0x68] sm:$0xf]
      %v1272 = vunpack.c.l.b16 %v1252
      %v1273 = vunpack.c.h.b16 %v1252
      %v1274 = vunpack.c.l.b16 %v1253
      %v1275 = vunpack.c.h.b16 %v1253
      %v1276 = vunpack.c.l.b16 %v1254
      %v1277 = vunpack.c.h.b16 %v1254
      %v1278 = vunpack.c.l.b16 %v1255
      %v1279 = vunpack.c.h.b16 %v1255
      %v1280 = vunpack.c.l.b16 %v1256
      %v1281 = vunpack.c.l.b16 %v1257
      %v1282 = vunpack.c.h.b16 %v1257
      %v1283 = vunpack.c.l.b16 %v1258
      %v1284 = vunpack.c.h.b16 %v1258
      %v1285 = vunpack.c.l.b16 %v1259
      %v1286 = vunpack.c.h.b16 %v1259
      %v1287 = vunpack.c.l.b16 %v1260
      %v1288 = vunpack.c.h.b16 %v1260
      %v1289 = vunpack.c.l.b16 %v1261
      %v1290 = vpack.c.b16 %v1281, %v1272
      %v1291 = vpack.c.b16 %v1282, %v1273
      %v1292 = vpack.c.b16 %v1283, %v1274
      %v1293 = vpack.c.b16 %v1284, %v1275
      %v1294 = vpack.c.b16 %v1285, %v1276
      %v1295 = vpack.c.b16 %v1286, %v1277
      %v1296 = vpack.c.b16 %v1287, %v1278
      %v1297 = vpack.c.b16 %v1288, %v1279
      %v1298 = vpack.c.b16 %v1289, %v1280
      %1299 = vrot.lane.b32.xlu0 %v1290, 120
      %v1300 = vpop.permute.xlu0 %1299
      %1301 = vrot.lane.b32.xlu0 %v1291, 120
      %v1302 = vpop.permute.xlu0 %1301
      %1303 = vrot.lane.b32.xlu0 %v1292, 120
      %v1304 = vpop.permute.xlu0 %1303
      %1305 = vrot.lane.b32.xlu0 %v1293, 120
      %v1306 = vpop.permute.xlu0 %1305
      %1307 = vrot.lane.b32.xlu0 %v1294, 120
      %v1308 = vpop.permute.xlu0 %1307
      %1309 = vrot.lane.b32.xlu0 %v1295, 120
      %v1310 = vpop.permute.xlu0 %1309
      %1311 = vrot.lane.b32.xlu0 %v1296, 120
      %v1312 = vpop.permute.xlu0 %1311
      %1313 = vrot.lane.b32.xlu0 %v1297, 120
      %v1314 = vpop.permute.xlu0 %1313
      %1315 = vrot.lane.b32.xlu0 %v1298, 120
      %v1316 = vpop.permute.xlu0 %1315
      %vm1317 = vcmask 982016
      %v1318 = vsel %vm1317, %v1300, %v1302
      %v1319 = vsel %vm1317, %v1302, %v1304
      %v1320 = vsel %vm1317, %v1304, %v1306
      %v1321 = vsel %vm1317, %v1306, %v1308
      %v1322 = vsel %vm1317, %v1308, %v1310
      %v1323 = vsel %vm1317, %v1310, %v1312
      %v1324 = vsel %vm1317, %v1312, %v1314
      %v1325 = vsel %vm1317, %v1314, %v1316
      %1334 = vst [vmem:[#allocation3 + $0x2c0] sm:$0xff] %v1318
      %1335 = vst [vmem:[#allocation3 + $0x2c8] sm:$0xff] %v1319
      %1336 = vst [vmem:[#allocation3 + $0x2d0] sm:$0xff] %v1320
      %1337 = vst [vmem:[#allocation3 + $0x2d8] sm:$0xff] %v1321
      %1338 = vst [vmem:[#allocation3 + $0x2e0] sm:$0xff] %v1322
      %1339 = vst [vmem:[#allocation3 + $0x2e8] sm:$0xff] %v1323
      %1340 = vst [vmem:[#allocation3 + $0x2f0] sm:$0xff] %v1324
      %1341 = vst [vmem:[#allocation3 + $0x2f8] sm:$0xff] %v1325
      %v1342 = vld [vmem:[%s246 + $0x8] sm:$0xff]
      %v1343 = vld [vmem:[%s246 + $0x10] sm:$0xff]
      %v1344 = vld [vmem:[%s246 + $0x18] sm:$0xff]
      %v1345 = vld [vmem:[%s246 + $0x20] sm:$0xff]
      %v1346 = vld [vmem:[%s246 + $0x28] sm:$0xf]
      %v1347 = vld [vmem:[%s246 + $0x48] sm:$0xff]
      %v1348 = vld [vmem:[%s246 + $0x50] sm:$0xff]
      %v1349 = vld [vmem:[%s246 + $0x58] sm:$0xff]
      %v1350 = vld [vmem:[%s246 + $0x60] sm:$0xff]
      %v1351 = vld [vmem:[%s246 + $0x68] sm:$0xf]
      %v1362 = vunpack.c.l.b16 %v1342
      %v1363 = vunpack.c.h.b16 %v1342
      %v1364 = vunpack.c.l.b16 %v1343
      %v1365 = vunpack.c.h.b16 %v1343
      %v1366 = vunpack.c.l.b16 %v1344
      %v1367 = vunpack.c.h.b16 %v1344
      %v1368 = vunpack.c.l.b16 %v1345
      %v1369 = vunpack.c.h.b16 %v1345
      %v1370 = vunpack.c.l.b16 %v1346
      %v1371 = vunpack.c.l.b16 %v1347
      %v1372 = vunpack.c.h.b16 %v1347
      %v1373 = vunpack.c.l.b16 %v1348
      %v1374 = vunpack.c.h.b16 %v1348
      %v1375 = vunpack.c.l.b16 %v1349
      %v1376 = vunpack.c.h.b16 %v1349
      %v1377 = vunpack.c.l.b16 %v1350
      %v1378 = vunpack.c.h.b16 %v1350
      %v1379 = vunpack.c.l.b16 %v1351
      %v1380 = vpack.c.b16 %v1371, %v1362
      %v1381 = vpack.c.b16 %v1372, %v1363
      %v1382 = vpack.c.b16 %v1373, %v1364
      %v1383 = vpack.c.b16 %v1374, %v1365
      %v1384 = vpack.c.b16 %v1375, %v1366
      %v1385 = vpack.c.b16 %v1376, %v1367
      %v1386 = vpack.c.b16 %v1377, %v1368
      %v1387 = vpack.c.b16 %v1378, %v1369
      %v1388 = vpack.c.b16 %v1379, %v1370
      %1389 = vrot.lane.b32.xlu0 %v1380, 110
      %v1390 = vpop.permute.xlu0 %1389
      %1391 = vrot.lane.b32.xlu0 %v1381, 110
      %v1392 = vpop.permute.xlu0 %1391
      %1393 = vrot.lane.b32.xlu0 %v1382, 110
      %v1394 = vpop.permute.xlu0 %1393
      %1395 = vrot.lane.b32.xlu0 %v1383, 110
      %v1396 = vpop.permute.xlu0 %1395
      %1397 = vrot.lane.b32.xlu0 %v1384, 110
      %v1398 = vpop.permute.xlu0 %1397
      %1399 = vrot.lane.b32.xlu0 %v1385, 110
      %v1400 = vpop.permute.xlu0 %1399
      %1401 = vrot.lane.b32.xlu0 %v1386, 110
      %v1402 = vpop.permute.xlu0 %1401
      %1403 = vrot.lane.b32.xlu0 %v1387, 110
      %v1404 = vpop.permute.xlu0 %1403
      %1405 = vrot.lane.b32.xlu0 %v1388, 110
      %v1406 = vpop.permute.xlu0 %1405
      %vm1407 = vcmask 900096
      %v1408 = vsel %vm1407, %v1390, %v1392
      %v1409 = vsel %vm1407, %v1392, %v1394
      %v1410 = vsel %vm1407, %v1394, %v1396
      %v1411 = vsel %vm1407, %v1396, %v1398
      %v1412 = vsel %vm1407, %v1398, %v1400
      %v1413 = vsel %vm1407, %v1400, %v1402
      %v1414 = vsel %vm1407, %v1402, %v1404
      %v1415 = vsel %vm1407, %v1404, %v1406
      %1424 = vst [vmem:[#allocation3 + $0x300] sm:$0xff] %v1408
      %1425 = vst [vmem:[#allocation3 + $0x308] sm:$0xff] %v1409
      %1426 = vst [vmem:[#allocation3 + $0x310] sm:$0xff] %v1410
      %1427 = vst [vmem:[#allocation3 + $0x318] sm:$0xff] %v1411
      %1428 = vst [vmem:[#allocation3 + $0x320] sm:$0xff] %v1412
      %1429 = vst [vmem:[#allocation3 + $0x328] sm:$0xff] %v1413
      %1430 = vst [vmem:[#allocation3 + $0x330] sm:$0xff] %v1414
      %1431 = vst [vmem:[#allocation3 + $0x338] sm:$0xff] %v1415
      %v1432 = vld [vmem:[%s246 + $0x8] sm:$0xff]
      %v1433 = vld [vmem:[%s246 + $0x10] sm:$0xff]
      %v1434 = vld [vmem:[%s246 + $0x18] sm:$0xff]
      %v1435 = vld [vmem:[%s246 + $0x20] sm:$0xff]
      %v1436 = vld [vmem:[%s246 + $0x28] sm:$0xf]
      %v1437 = vld [vmem:[%s246 + $0x48] sm:$0xff]
      %v1438 = vld [vmem:[%s246 + $0x50] sm:$0xff]
      %v1439 = vld [vmem:[%s246 + $0x58] sm:$0xff]
      %v1440 = vld [vmem:[%s246 + $0x60] sm:$0xff]
      %v1441 = vld [vmem:[%s246 + $0x68] sm:$0xf]
      %v1452 = vunpack.c.l.b16 %v1432
      %v1453 = vunpack.c.h.b16 %v1432
      %v1454 = vunpack.c.l.b16 %v1433
      %v1455 = vunpack.c.h.b16 %v1433
      %v1456 = vunpack.c.l.b16 %v1434
      %v1457 = vunpack.c.h.b16 %v1434
      %v1458 = vunpack.c.l.b16 %v1435
      %v1459 = vunpack.c.h.b16 %v1435
      %v1460 = vunpack.c.l.b16 %v1436
      %v1461 = vunpack.c.l.b16 %v1437
      %v1462 = vunpack.c.h.b16 %v1437
      %v1463 = vunpack.c.l.b16 %v1438
      %v1464 = vunpack.c.h.b16 %v1438
      %v1465 = vunpack.c.l.b16 %v1439
      %v1466 = vunpack.c.h.b16 %v1439
      %v1467 = vunpack.c.l.b16 %v1440
      %v1468 = vunpack.c.h.b16 %v1440
      %v1469 = vunpack.c.l.b16 %v1441
      %v1470 = vpack.c.b16 %v1461, %v1452
      %v1471 = vpack.c.b16 %v1462, %v1453
      %v1472 = vpack.c.b16 %v1463, %v1454
      %v1473 = vpack.c.b16 %v1464, %v1455
      %v1474 = vpack.c.b16 %v1465, %v1456
      %v1475 = vpack.c.b16 %v1466, %v1457
      %v1476 = vpack.c.b16 %v1467, %v1458
      %v1477 = vpack.c.b16 %v1468, %v1459
      %v1478 = vpack.c.b16 %v1469, %v1460
      %1479 = vrot.lane.b32.xlu0 %v1470, 109
      %v1480 = vpop.permute.xlu0 %1479
      %1481 = vrot.lane.b32.xlu0 %v1471, 109
      %v1482 = vpop.permute.xlu0 %1481
      %1483 = vrot.lane.b32.xlu0 %v1472, 109
      %v1484 = vpop.permute.xlu0 %1483
      %1485 = vrot.lane.b32.xlu0 %v1473, 109
      %v1486 = vpop.permute.xlu0 %1485
      %1487 = vrot.lane.b32.xlu0 %v1474, 109
      %v1488 = vpop.permute.xlu0 %1487
      %1489 = vrot.lane.b32.xlu0 %v1475, 109
      %v1490 = vpop.permute.xlu0 %1489
      %1491 = vrot.lane.b32.xlu0 %v1476, 109
      %v1492 = vpop.permute.xlu0 %1491
      %1493 = vrot.lane.b32.xlu0 %v1477, 109
      %v1494 = vpop.permute.xlu0 %1493
      %1495 = vrot.lane.b32.xlu0 %v1478, 109
      %v1496 = vpop.permute.xlu0 %1495
      %vm1497 = vcmask 891904
      %v1498 = vsel %vm1497, %v1480, %v1482
      %v1499 = vsel %vm1497, %v1482, %v1484
      %v1500 = vsel %vm1497, %v1484, %v1486
      %v1501 = vsel %vm1497, %v1486, %v1488
      %v1502 = vsel %vm1497, %v1488, %v1490
      %v1503 = vsel %vm1497, %v1490, %v1492
      %v1504 = vsel %vm1497, %v1492, %v1494
      %v1505 = vsel %vm1497, %v1494, %v1496
      %1514 = vst [vmem:[#allocation3 + $0x340] sm:$0xff] %v1498
      %1515 = vst [vmem:[#allocation3 + $0x348] sm:$0xff] %v1499
      %1516 = vst [vmem:[#allocation3 + $0x350] sm:$0xff] %v1500
      %1517 = vst [vmem:[#allocation3 + $0x358] sm:$0xff] %v1501
      %1518 = vst [vmem:[#allocation3 + $0x360] sm:$0xff] %v1502
      %1519 = vst [vmem:[#allocation3 + $0x368] sm:$0xff] %v1503
      %1520 = vst [vmem:[#allocation3 + $0x370] sm:$0xff] %v1504
      %1521 = vst [vmem:[#allocation3 + $0x378] sm:$0xff] %v1505
      %v1522 = vld [vmem:[%s246 + $0x8] sm:$0xff]
      %v1523 = vld [vmem:[%s246 + $0x10] sm:$0xff]
      %v1524 = vld [vmem:[%s246 + $0x18] sm:$0xff]
      %v1525 = vld [vmem:[%s246 + $0x20] sm:$0xff]
      %v1526 = vld [vmem:[%s246 + $0x28] sm:$0xf]
      %v1527 = vld [vmem:[%s246 + $0x48] sm:$0xff]
      %v1528 = vld [vmem:[%s246 + $0x50] sm:$0xff]
      %v1529 = vld [vmem:[%s246 + $0x58] sm:$0xff]
      %v1530 = vld [vmem:[%s246 + $0x60] sm:$0xff]
      %v1531 = vld [vmem:[%s246 + $0x68] sm:$0xf]
      %v1542 = vunpack.c.l.b16 %v1522
      %v1543 = vunpack.c.h.b16 %v1522
      %v1544 = vunpack.c.l.b16 %v1523
      %v1545 = vunpack.c.h.b16 %v1523
      %v1546 = vunpack.c.l.b16 %v1524
      %v1547 = vunpack.c.h.b16 %v1524
      %v1548 = vunpack.c.l.b16 %v1525
      %v1549 = vunpack.c.h.b16 %v1525
      %v1550 = vunpack.c.l.b16 %v1526
      %v1551 = vunpack.c.l.b16 %v1527
      %v1552 = vunpack.c.h.b16 %v1527
      %v1553 = vunpack.c.l.b16 %v1528
      %v1554 = vunpack.c.h.b16 %v1528
      %v1555 = vunpack.c.l.b16 %v1529
      %v1556 = vunpack.c.h.b16 %v1529
      %v1557 = vunpack.c.l.b16 %v1530
      %v1558 = vunpack.c.h.b16 %v1530
      %v1559 = vunpack.c.l.b16 %v1531
      %v1560 = vpack.c.b16 %v1551, %v1542
      %v1561 = vpack.c.b16 %v1552, %v1543
      %v1562 = vpack.c.b16 %v1553, %v1544
      %v1563 = vpack.c.b16 %v1554, %v1545
      %v1564 = vpack.c.b16 %v1555, %v1546
      %v1565 = vpack.c.b16 %v1556, %v1547
      %v1566 = vpack.c.b16 %v1557, %v1548
      %v1567 = vpack.c.b16 %v1558, %v1549
      %v1568 = vpack.c.b16 %v1559, %v1550
      %1569 = vrot.lane.b32.xlu0 %v1560, 108
      %v1570 = vpop.permute.xlu0 %1569
      %1571 = vrot.lane.b32.xlu0 %v1561, 108
      %v1572 = vpop.permute.xlu0 %1571
      %1573 = vrot.lane.b32.xlu0 %v1562, 108
      %v1574 = vpop.permute.xlu0 %1573
      %1575 = vrot.lane.b32.xlu0 %v1563, 108
      %v1576 = vpop.permute.xlu0 %1575
      %1577 = vrot.lane.b32.xlu0 %v1564, 108
      %v1578 = vpop.permute.xlu0 %1577
      %1579 = vrot.lane.b32.xlu0 %v1565, 108
      %v1580 = vpop.permute.xlu0 %1579
      %1581 = vrot.lane.b32.xlu0 %v1566, 108
      %v1582 = vpop.permute.xlu0 %1581
      %1583 = vrot.lane.b32.xlu0 %v1567, 108
      %v1584 = vpop.permute.xlu0 %1583
      %1585 = vrot.lane.b32.xlu0 %v1568, 108
      %v1586 = vpop.permute.xlu0 %1585
      %vm1587 = vcmask 883712
      %v1588 = vsel %vm1587, %v1570, %v1572
      %v1589 = vsel %vm1587, %v1572, %v1574
      %v1590 = vsel %vm1587, %v1574, %v1576
      %v1591 = vsel %vm1587, %v1576, %v1578
      %v1592 = vsel %vm1587, %v1578, %v1580
      %v1593 = vsel %vm1587, %v1580, %v1582
      %v1594 = vsel %vm1587, %v1582, %v1584
      %v1595 = vsel %vm1587, %v1584, %v1586
      %1604 = vst [vmem:[#allocation3 + $0x380] sm:$0xff] %v1588
      %1605 = vst [vmem:[#allocation3 + $0x388] sm:$0xff] %v1589
      %1606 = vst [vmem:[#allocation3 + $0x390] sm:$0xff] %v1590
      %1607 = vst [vmem:[#allocation3 + $0x398] sm:$0xff] %v1591
      %1608 = vst [vmem:[#allocation3 + $0x3a0] sm:$0xff] %v1592
      %1609 = vst [vmem:[#allocation3 + $0x3a8] sm:$0xff] %v1593
      %1610 = vst [vmem:[#allocation3 + $0x3b0] sm:$0xff] %v1594
      %1611 = vst [vmem:[#allocation3 + $0x3b8] sm:$0xff] %v1595
      %v1612 = vld [vmem:[%s246 + $0x8] sm:$0xff]
      %v1613 = vld [vmem:[%s246 + $0x10] sm:$0xff]
      %v1614 = vld [vmem:[%s246 + $0x18] sm:$0xff]
      %v1615 = vld [vmem:[%s246 + $0x20] sm:$0xff]
      %v1616 = vld [vmem:[%s246 + $0x28] sm:$0xf]
      %v1617 = vld [vmem:[%s246 + $0x48] sm:$0xff]
      %v1618 = vld [vmem:[%s246 + $0x50] sm:$0xff]
      %v1619 = vld [vmem:[%s246 + $0x58] sm:$0xff]
      %v1620 = vld [vmem:[%s246 + $0x60] sm:$0xff]
      %v1621 = vld [vmem:[%s246 + $0x68] sm:$0xf]
      %v1632 = vunpack.c.l.b16 %v1612
      %v1633 = vunpack.c.h.b16 %v1612
      %v1634 = vunpack.c.l.b16 %v1613
      %v1635 = vunpack.c.h.b16 %v1613
      %v1636 = vunpack.c.l.b16 %v1614
      %v1637 = vunpack.c.h.b16 %v1614
      %v1638 = vunpack.c.l.b16 %v1615
      %v1639 = vunpack.c.h.b16 %v1615
      %v1640 = vunpack.c.l.b16 %v1616
      %v1641 = vunpack.c.l.b16 %v1617
      %v1642 = vunpack.c.h.b16 %v1617
      %v1643 = vunpack.c.l.b16 %v1618
      %v1644 = vunpack.c.h.b16 %v1618
      %v1645 = vunpack.c.l.b16 %v1619
      %v1646 = vunpack.c.h.b16 %v1619
      %v1647 = vunpack.c.l.b16 %v1620
      %v1648 = vunpack.c.h.b16 %v1620
      %v1649 = vunpack.c.l.b16 %v1621
      %v1650 = vpack.c.b16 %v1641, %v1632
      %v1651 = vpack.c.b16 %v1642, %v1633
      %v1652 = vpack.c.b16 %v1643, %v1634
      %v1653 = vpack.c.b16 %v1644, %v1635
      %v1654 = vpack.c.b16 %v1645, %v1636
      %v1655 = vpack.c.b16 %v1646, %v1637
      %v1656 = vpack.c.b16 %v1647, %v1638
      %v1657 = vpack.c.b16 %v1648, %v1639
      %v1658 = vpack.c.b16 %v1649, %v1640
      %1659 = vrot.lane.b32.xlu0 %v1650, 98
      %v1660 = vpop.permute.xlu0 %1659
      %1661 = vrot.lane.b32.xlu0 %v1651, 98
      %v1662 = vpop.permute.xlu0 %1661
      %1663 = vrot.lane.b32.xlu0 %v1652, 98
      %v1664 = vpop.permute.xlu0 %1663
      %1665 = vrot.lane.b32.xlu0 %v1653, 98
      %v1666 = vpop.permute.xlu0 %1665
      %1667 = vrot.lane.b32.xlu0 %v1654, 98
      %v1668 = vpop.permute.xlu0 %1667
      %1669 = vrot.lane.b32.xlu0 %v1655, 98
      %v1670 = vpop.permute.xlu0 %1669
      %1671 = vrot.lane.b32.xlu0 %v1656, 98
      %v1672 = vpop.permute.xlu0 %1671
      %1673 = vrot.lane.b32.xlu0 %v1657, 98
      %v1674 = vpop.permute.xlu0 %1673
      %1675 = vrot.lane.b32.xlu0 %v1658, 98
      %v1676 = vpop.permute.xlu0 %1675
      %vm1677 = vcmask 801792
      %v1678 = vsel %vm1677, %v1660, %v1662
      %v1679 = vsel %vm1677, %v1662, %v1664
      %v1680 = vsel %vm1677, %v1664, %v1666
      %v1681 = vsel %vm1677, %v1666, %v1668
      %v1682 = vsel %vm1677, %v1668, %v1670
      %v1683 = vsel %vm1677, %v1670, %v1672
      %v1684 = vsel %vm1677, %v1672, %v1674
      %v1685 = vsel %vm1677, %v1674, %v1676
      %1694 = vst [vmem:[#allocation3 + $0x3c0] sm:$0xff] %v1678
      %1695 = vst [vmem:[#allocation3 + $0x3c8] sm:$0xff] %v1679
      %1696 = vst [vmem:[#allocation3 + $0x3d0] sm:$0xff] %v1680
      %1697 = vst [vmem:[#allocation3 + $0x3d8] sm:$0xff] %v1681
      %1698 = vst [vmem:[#allocation3 + $0x3e0] sm:$0xff] %v1682
      %1699 = vst [vmem:[#allocation3 + $0x3e8] sm:$0xff] %v1683
      %1700 = vst [vmem:[#allocation3 + $0x3f0] sm:$0xff] %v1684
      %1701 = vst [vmem:[#allocation3 + $0x3f8] sm:$0xff] %v1685
      %v1702 = vld [vmem:[%s246 + $0x8] sm:$0xff]
      %v1703 = vld [vmem:[%s246 + $0x10] sm:$0xff]
      %v1704 = vld [vmem:[%s246 + $0x18] sm:$0xff]
      %v1705 = vld [vmem:[%s246 + $0x20] sm:$0xff]
      %v1706 = vld [vmem:[%s246 + $0x28] sm:$0xf]
      %v1707 = vld [vmem:[%s246 + $0x48] sm:$0xff]
      %v1708 = vld [vmem:[%s246 + $0x50] sm:$0xff]
      %v1709 = vld [vmem:[%s246 + $0x58] sm:$0xff]
      %v1710 = vld [vmem:[%s246 + $0x60] sm:$0xff]
      %v1711 = vld [vmem:[%s246 + $0x68] sm:$0xf]
      %v1722 = vunpack.c.l.b16 %v1702
      %v1723 = vunpack.c.h.b16 %v1702
      %v1724 = vunpack.c.l.b16 %v1703
      %v1725 = vunpack.c.h.b16 %v1703
      %v1726 = vunpack.c.l.b16 %v1704
      %v1727 = vunpack.c.h.b16 %v1704
      %v1728 = vunpack.c.l.b16 %v1705
      %v1729 = vunpack.c.h.b16 %v1705
      %v1730 = vunpack.c.l.b16 %v1706
      %v1731 = vunpack.c.l.b16 %v1707
      %v1732 = vunpack.c.h.b16 %v1707
      %v1733 = vunpack.c.l.b16 %v1708
      %v1734 = vunpack.c.h.b16 %v1708
      %v1735 = vunpack.c.l.b16 %v1709
      %v1736 = vunpack.c.h.b16 %v1709
      %v1737 = vunpack.c.l.b16 %v1710
      %v1738 = vunpack.c.h.b16 %v1710
      %v1739 = vunpack.c.l.b16 %v1711
      %v1740 = vpack.c.b16 %v1731, %v1722
      %v1741 = vpack.c.b16 %v1732, %v1723
      %v1742 = vpack.c.b16 %v1733, %v1724
      %v1743 = vpack.c.b16 %v1734, %v1725
      %v1744 = vpack.c.b16 %v1735, %v1726
      %v1745 = vpack.c.b16 %v1736, %v1727
      %v1746 = vpack.c.b16 %v1737, %v1728
      %v1747 = vpack.c.b16 %v1738, %v1729
      %v1748 = vpack.c.b16 %v1739, %v1730
      %1749 = vrot.lane.b32.xlu0 %v1740, 97
      %v1750 = vpop.permute.xlu0 %1749
      %1751 = vrot.lane.b32.xlu0 %v1741, 97
      %v1752 = vpop.permute.xlu0 %1751
      %1753 = vrot.lane.b32.xlu0 %v1742, 97
      %v1754 = vpop.permute.xlu0 %1753
      %1755 = vrot.lane.b32.xlu0 %v1743, 97
      %v1756 = vpop.permute.xlu0 %1755
      %1757 = vrot.lane.b32.xlu0 %v1744, 97
      %v1758 = vpop.permute.xlu0 %1757
      %1759 = vrot.lane.b32.xlu0 %v1745, 97
      %v1760 = vpop.permute.xlu0 %1759
      %1761 = vrot.lane.b32.xlu0 %v1746, 97
      %v1762 = vpop.permute.xlu0 %1761
      %1763 = vrot.lane.b32.xlu0 %v1747, 97
      %v1764 = vpop.permute.xlu0 %1763
      %1765 = vrot.lane.b32.xlu0 %v1748, 97
      %v1766 = vpop.permute.xlu0 %1765
      %vm1767 = vcmask 793600
      %v1768 = vsel %vm1767, %v1750, %v1752
      %v1769 = vsel %vm1767, %v1752, %v1754
      %v1770 = vsel %vm1767, %v1754, %v1756
      %v1771 = vsel %vm1767, %v1756, %v1758
      %v1772 = vsel %vm1767, %v1758, %v1760
      %v1773 = vsel %vm1767, %v1760, %v1762
      %v1774 = vsel %vm1767, %v1762, %v1764
      %v1775 = vsel %vm1767, %v1764, %v1766
      %1784 = vst [vmem:[#allocation3 + $0x400] sm:$0xff] %v1768
      %1785 = vst [vmem:[#allocation3 + $0x408] sm:$0xff] %v1769
      %1786 = vst [vmem:[#allocation3 + $0x410] sm:$0xff] %v1770
      %1787 = vst [vmem:[#allocation3 + $0x418] sm:$0xff] %v1771
      %1788 = vst [vmem:[#allocation3 + $0x420] sm:$0xff] %v1772
      %1789 = vst [vmem:[#allocation3 + $0x428] sm:$0xff] %v1773
      %1790 = vst [vmem:[#allocation3 + $0x430] sm:$0xff] %v1774
      %1791 = vst [vmem:[#allocation3 + $0x438] sm:$0xff] %v1775
      %v1792 = vld [vmem:[%s246 + $0x8] sm:$0xff]
      %v1793 = vld [vmem:[%s246 + $0x10] sm:$0xff]
      %v1794 = vld [vmem:[%s246 + $0x18] sm:$0xff]
      %v1795 = vld [vmem:[%s246 + $0x20] sm:$0xff]
      %v1796 = vld [vmem:[%s246 + $0x28] sm:$0xf]
      %v1797 = vld [vmem:[%s246 + $0x48] sm:$0xff]
      %v1798 = vld [vmem:[%s246 + $0x50] sm:$0xff]
      %v1799 = vld [vmem:[%s246 + $0x58] sm:$0xff]
      %v1800 = vld [vmem:[%s246 + $0x60] sm:$0xff]
      %v1801 = vld [vmem:[%s246 + $0x68] sm:$0xf]
      %v1812 = vunpack.c.l.b16 %v1792
      %v1813 = vunpack.c.h.b16 %v1792
      %v1814 = vunpack.c.l.b16 %v1793
      %v1815 = vunpack.c.h.b16 %v1793
      %v1816 = vunpack.c.l.b16 %v1794
      %v1817 = vunpack.c.h.b16 %v1794
      %v1818 = vunpack.c.l.b16 %v1795
      %v1819 = vunpack.c.h.b16 %v1795
      %v1820 = vunpack.c.l.b16 %v1796
      %v1821 = vunpack.c.l.b16 %v1797
      %v1822 = vunpack.c.h.b16 %v1797
      %v1823 = vunpack.c.l.b16 %v1798
      %v1824 = vunpack.c.h.b16 %v1798
      %v1825 = vunpack.c.l.b16 %v1799
      %v1826 = vunpack.c.h.b16 %v1799
      %v1827 = vunpack.c.l.b16 %v1800
      %v1828 = vunpack.c.h.b16 %v1800
      %v1829 = vunpack.c.l.b16 %v1801
      %v1830 = vpack.c.b16 %v1821, %v1812
      %v1831 = vpack.c.b16 %v1822, %v1813
      %v1832 = vpack.c.b16 %v1823, %v1814
      %v1833 = vpack.c.b16 %v1824, %v1815
      %v1834 = vpack.c.b16 %v1825, %v1816
      %v1835 = vpack.c.b16 %v1826, %v1817
      %v1836 = vpack.c.b16 %v1827, %v1818
      %v1837 = vpack.c.b16 %v1828, %v1819
      %v1838 = vpack.c.b16 %v1829, %v1820
      %1839 = vrot.lane.b32.xlu0 %v1830, 96
      %v1840 = vpop.permute.xlu0 %1839
      %1841 = vrot.lane.b32.xlu0 %v1831, 96
      %v1842 = vpop.permute.xlu0 %1841
      %1843 = vrot.lane.b32.xlu0 %v1832, 96
      %v1844 = vpop.permute.xlu0 %1843
      %1845 = vrot.lane.b32.xlu0 %v1833, 96
      %v1846 = vpop.permute.xlu0 %1845
      %1847 = vrot.lane.b32.xlu0 %v1834, 96
      %v1848 = vpop.permute.xlu0 %1847
      %1849 = vrot.lane.b32.xlu0 %v1835, 96
      %v1850 = vpop.permute.xlu0 %1849
      %1851 = vrot.lane.b32.xlu0 %v1836, 96
      %v1852 = vpop.permute.xlu0 %1851
      %1853 = vrot.lane.b32.xlu0 %v1837, 96
      %v1854 = vpop.permute.xlu0 %1853
      %1855 = vrot.lane.b32.xlu0 %v1838, 96
      %v1856 = vpop.permute.xlu0 %1855
      %vm1857 = vcmask 785408
      %v1858 = vsel %vm1857, %v1840, %v1842
      %v1859 = vsel %vm1857, %v1842, %v1844
      %v1860 = vsel %vm1857, %v1844, %v1846
      %v1861 = vsel %vm1857, %v1846, %v1848
      %v1862 = vsel %vm1857, %v1848, %v1850
      %v1863 = vsel %vm1857, %v1850, %v1852
      %v1864 = vsel %vm1857, %v1852, %v1854
      %v1865 = vsel %vm1857, %v1854, %v1856
      %1874 = vst [vmem:[#allocation3 + $0x440] sm:$0xff] %v1858
      %1875 = vst [vmem:[#allocation3 + $0x448] sm:$0xff] %v1859
      %1876 = vst [vmem:[#allocation3 + $0x450] sm:$0xff] %v1860
      %1877 = vst [vmem:[#allocation3 + $0x458] sm:$0xff] %v1861
      %1878 = vst [vmem:[#allocation3 + $0x460] sm:$0xff] %v1862
      %1879 = vst [vmem:[#allocation3 + $0x468] sm:$0xff] %v1863
      %1880 = vst [vmem:[#allocation3 + $0x470] sm:$0xff] %v1864
      %1881 = vst [vmem:[#allocation3 + $0x478] sm:$0xff] %v1865
      %v1882 = vld [vmem:[%s246 + $0xc] sm:$0xff]
      %v1883 = vld [vmem:[%s246 + $0x14] sm:$0xff]
      %v1884 = vld [vmem:[%s246 + $0x1c] sm:$0xff]
      %v1885 = vld [vmem:[%s246 + $0x24] sm:$0xff]
      %v1886 = vld [vmem:[%s246 + $0x2c] sm:$0xf]
      %v1887 = vld [vmem:[%s246 + $0x4c] sm:$0xff]
      %v1888 = vld [vmem:[%s246 + $0x54] sm:$0xff]
      %v1889 = vld [vmem:[%s246 + $0x5c] sm:$0xff]
      %v1890 = vld [vmem:[%s246 + $0x64] sm:$0xff]
      %v1891 = vld [vmem:[%s246 + $0x6c] sm:$0xf]
      %v1902 = vunpack.c.l.b16 %v1882
      %v1903 = vunpack.c.h.b16 %v1882
      %v1904 = vunpack.c.l.b16 %v1883
      %v1905 = vunpack.c.h.b16 %v1883
      %v1906 = vunpack.c.l.b16 %v1884
      %v1907 = vunpack.c.h.b16 %v1884
      %v1908 = vunpack.c.l.b16 %v1885
      %v1909 = vunpack.c.h.b16 %v1885
      %v1910 = vunpack.c.l.b16 %v1886
      %v1911 = vunpack.c.l.b16 %v1887
      %v1912 = vunpack.c.h.b16 %v1887
      %v1913 = vunpack.c.l.b16 %v1888
      %v1914 = vunpack.c.h.b16 %v1888
      %v1915 = vunpack.c.l.b16 %v1889
      %v1916 = vunpack.c.h.b16 %v1889
      %v1917 = vunpack.c.l.b16 %v1890
      %v1918 = vunpack.c.h.b16 %v1890
      %v1919 = vunpack.c.l.b16 %v1891
      %v1920 = vpack.c.b16 %v1911, %v1902
      %v1921 = vpack.c.b16 %v1912, %v1903
      %v1922 = vpack.c.b16 %v1913, %v1904
      %v1923 = vpack.c.b16 %v1914, %v1905
      %v1924 = vpack.c.b16 %v1915, %v1906
      %v1925 = vpack.c.b16 %v1916, %v1907
      %v1926 = vpack.c.b16 %v1917, %v1908
      %v1927 = vpack.c.b16 %v1918, %v1909
      %v1928 = vpack.c.b16 %v1919, %v1910
      %1929 = vrot.lane.b32.xlu0 %v1920, 106
      %v1930 = vpop.permute.xlu0 %1929
      %1931 = vrot.lane.b32.xlu0 %v1921, 106
      %v1932 = vpop.permute.xlu0 %1931
      %1933 = vrot.lane.b32.xlu0 %v1922, 106
      %v1934 = vpop.permute.xlu0 %1933
      %1935 = vrot.lane.b32.xlu0 %v1923, 106
      %v1936 = vpop.permute.xlu0 %1935
      %1937 = vrot.lane.b32.xlu0 %v1924, 106
      %v1938 = vpop.permute.xlu0 %1937
      %1939 = vrot.lane.b32.xlu0 %v1925, 106
      %v1940 = vpop.permute.xlu0 %1939
      %1941 = vrot.lane.b32.xlu0 %v1926, 106
      %v1942 = vpop.permute.xlu0 %1941
      %1943 = vrot.lane.b32.xlu0 %v1927, 106
      %v1944 = vpop.permute.xlu0 %1943
      %1945 = vrot.lane.b32.xlu0 %v1928, 106
      %v1946 = vpop.permute.xlu0 %1945
      %vm1947 = vcmask 867328
      %v1948 = vsel %vm1947, %v1930, %v1932
      %v1949 = vsel %vm1947, %v1932, %v1934
      %v1950 = vsel %vm1947, %v1934, %v1936
      %v1951 = vsel %vm1947, %v1936, %v1938
      %v1952 = vsel %vm1947, %v1938, %v1940
      %v1953 = vsel %vm1947, %v1940, %v1942
      %v1954 = vsel %vm1947, %v1942, %v1944
      %v1955 = vsel %vm1947, %v1944, %v1946
      %1964 = vst [vmem:[#allocation3 + $0x480] sm:$0xff] %v1948
      %1965 = vst [vmem:[#allocation3 + $0x488] sm:$0xff] %v1949
      %1966 = vst [vmem:[#allocation3 + $0x490] sm:$0xff] %v1950
      %1967 = vst [vmem:[#allocation3 + $0x498] sm:$0xff] %v1951
      %1968 = vst [vmem:[#allocation3 + $0x4a0] sm:$0xff] %v1952
      %1969 = vst [vmem:[#allocation3 + $0x4a8] sm:$0xff] %v1953
      %1970 = vst [vmem:[#allocation3 + $0x4b0] sm:$0xff] %v1954
      %1971 = vst [vmem:[#allocation3 + $0x4b8] sm:$0xff] %v1955
      %v1972 = vld [vmem:[%s246 + $0xc] sm:$0xff]
      %v1973 = vld [vmem:[%s246 + $0x14] sm:$0xff]
      %v1974 = vld [vmem:[%s246 + $0x1c] sm:$0xff]
      %v1975 = vld [vmem:[%s246 + $0x24] sm:$0xff]
      %v1976 = vld [vmem:[%s246 + $0x2c] sm:$0xf]
      %v1977 = vld [vmem:[%s246 + $0x4c] sm:$0xff]
      %v1978 = vld [vmem:[%s246 + $0x54] sm:$0xff]
      %v1979 = vld [vmem:[%s246 + $0x5c] sm:$0xff]
      %v1980 = vld [vmem:[%s246 + $0x64] sm:$0xff]
      %v1981 = vld [vmem:[%s246 + $0x6c] sm:$0xf]
      %v1992 = vunpack.c.l.b16 %v1972
      %v1993 = vunpack.c.h.b16 %v1972
      %v1994 = vunpack.c.l.b16 %v1973
      %v1995 = vunpack.c.h.b16 %v1973
      %v1996 = vunpack.c.l.b16 %v1974
      %v1997 = vunpack.c.h.b16 %v1974
      %v1998 = vunpack.c.l.b16 %v1975
      %v1999 = vunpack.c.h.b16 %v1975
      %v2000 = vunpack.c.l.b16 %v1976
      %v2001 = vunpack.c.l.b16 %v1977
      %v2002 = vunpack.c.h.b16 %v1977
      %v2003 = vunpack.c.l.b16 %v1978
      %v2004 = vunpack.c.h.b16 %v1978
      %v2005 = vunpack.c.l.b16 %v1979
      %v2006 = vunpack.c.h.b16 %v1979
      %v2007 = vunpack.c.l.b16 %v1980
      %v2008 = vunpack.c.h.b16 %v1980
      %v2009 = vunpack.c.l.b16 %v1981
      %v2010 = vpack.c.b16 %v2001, %v1992
      %v2011 = vpack.c.b16 %v2002, %v1993
      %v2012 = vpack.c.b16 %v2003, %v1994
      %v2013 = vpack.c.b16 %v2004, %v1995
      %v2014 = vpack.c.b16 %v2005, %v1996
      %v2015 = vpack.c.b16 %v2006, %v1997
      %v2016 = vpack.c.b16 %v2007, %v1998
      %v2017 = vpack.c.b16 %v2008, %v1999
      %v2018 = vpack.c.b16 %v2009, %v2000
      %2019 = vrot.lane.b32.xlu0 %v2010, 105
      %v2020 = vpop.permute.xlu0 %2019
      %2021 = vrot.lane.b32.xlu0 %v2011, 105
      %v2022 = vpop.permute.xlu0 %2021
      %2023 = vrot.lane.b32.xlu0 %v2012, 105
      %v2024 = vpop.permute.xlu0 %2023
      %2025 = vrot.lane.b32.xlu0 %v2013, 105
      %v2026 = vpop.permute.xlu0 %2025
      %2027 = vrot.lane.b32.xlu0 %v2014, 105
      %v2028 = vpop.permute.xlu0 %2027
      %2029 = vrot.lane.b32.xlu0 %v2015, 105
      %v2030 = vpop.permute.xlu0 %2029
      %2031 = vrot.lane.b32.xlu0 %v2016, 105
      %v2032 = vpop.permute.xlu0 %2031
      %2033 = vrot.lane.b32.xlu0 %v2017, 105
      %v2034 = vpop.permute.xlu0 %2033
      %2035 = vrot.lane.b32.xlu0 %v2018, 105
      %v2036 = vpop.permute.xlu0 %2035
      %vm2037 = vcmask 859136
      %v2038 = vsel %vm2037, %v2020, %v2022
      %v2039 = vsel %vm2037, %v2022, %v2024
      %v2040 = vsel %vm2037, %v2024, %v2026
      %v2041 = vsel %vm2037, %v2026, %v2028
      %v2042 = vsel %vm2037, %v2028, %v2030
      %v2043 = vsel %vm2037, %v2030, %v2032
      %v2044 = vsel %vm2037, %v2032, %v2034
      %v2045 = vsel %vm2037, %v2034, %v2036
      %2054 = vst [vmem:[#allocation3 + $0x4c0] sm:$0xff] %v2038
      %2055 = vst [vmem:[#allocation3 + $0x4c8] sm:$0xff] %v2039
      %2056 = vst [vmem:[#allocation3 + $0x4d0] sm:$0xff] %v2040
      %2057 = vst [vmem:[#allocation3 + $0x4d8] sm:$0xff] %v2041
      %2058 = vst [vmem:[#allocation3 + $0x4e0] sm:$0xff] %v2042
      %2059 = vst [vmem:[#allocation3 + $0x4e8] sm:$0xff] %v2043
      %2060 = vst [vmem:[#allocation3 + $0x4f0] sm:$0xff] %v2044
      %2061 = vst [vmem:[#allocation3 + $0x4f8] sm:$0xff] %v2045
      %v2062 = vld [vmem:[%s246 + $0xc] sm:$0xff]
      %v2063 = vld [vmem:[%s246 + $0x14] sm:$0xff]
      %v2064 = vld [vmem:[%s246 + $0x1c] sm:$0xff]
      %v2065 = vld [vmem:[%s246 + $0x24] sm:$0xff]
      %v2066 = vld [vmem:[%s246 + $0x2c] sm:$0xf]
      %v2067 = vld [vmem:[%s246 + $0x4c] sm:$0xff]
      %v2068 = vld [vmem:[%s246 + $0x54] sm:$0xff]
      %v2069 = vld [vmem:[%s246 + $0x5c] sm:$0xff]
      %v2070 = vld [vmem:[%s246 + $0x64] sm:$0xff]
      %v2071 = vld [vmem:[%s246 + $0x6c] sm:$0xf]
      %v2082 = vunpack.c.l.b16 %v2062
      %v2083 = vunpack.c.h.b16 %v2062
      %v2084 = vunpack.c.l.b16 %v2063
      %v2085 = vunpack.c.h.b16 %v2063
      %v2086 = vunpack.c.l.b16 %v2064
      %v2087 = vunpack.c.h.b16 %v2064
      %v2088 = vunpack.c.l.b16 %v2065
      %v2089 = vunpack.c.h.b16 %v2065
      %v2090 = vunpack.c.l.b16 %v2066
      %v2091 = vunpack.c.l.b16 %v2067
      %v2092 = vunpack.c.h.b16 %v2067
      %v2093 = vunpack.c.l.b16 %v2068
      %v2094 = vunpack.c.h.b16 %v2068
      %v2095 = vunpack.c.l.b16 %v2069
      %v2096 = vunpack.c.h.b16 %v2069
      %v2097 = vunpack.c.l.b16 %v2070
      %v2098 = vunpack.c.h.b16 %v2070
      %v2099 = vunpack.c.l.b16 %v2071
      %v2100 = vpack.c.b16 %v2091, %v2082
      %v2101 = vpack.c.b16 %v2092, %v2083
      %v2102 = vpack.c.b16 %v2093, %v2084
      %v2103 = vpack.c.b16 %v2094, %v2085
      %v2104 = vpack.c.b16 %v2095, %v2086
      %v2105 = vpack.c.b16 %v2096, %v2087
      %v2106 = vpack.c.b16 %v2097, %v2088
      %v2107 = vpack.c.b16 %v2098, %v2089
      %v2108 = vpack.c.b16 %v2099, %v2090
      %2109 = vrot.lane.b32.xlu0 %v2100, 104
      %v2110 = vpop.permute.xlu0 %2109
      %2111 = vrot.lane.b32.xlu0 %v2101, 104
      %v2112 = vpop.permute.xlu0 %2111
      %2113 = vrot.lane.b32.xlu0 %v2102, 104
      %v2114 = vpop.permute.xlu0 %2113
      %2115 = vrot.lane.b32.xlu0 %v2103, 104
      %v2116 = vpop.permute.xlu0 %2115
      %2117 = vrot.lane.b32.xlu0 %v2104, 104
      %v2118 = vpop.permute.xlu0 %2117
      %2119 = vrot.lane.b32.xlu0 %v2105, 104
      %v2120 = vpop.permute.xlu0 %2119
      %2121 = vrot.lane.b32.xlu0 %v2106, 104
      %v2122 = vpop.permute.xlu0 %2121
      %2123 = vrot.lane.b32.xlu0 %v2107, 104
      %v2124 = vpop.permute.xlu0 %2123
      %2125 = vrot.lane.b32.xlu0 %v2108, 104
      %v2126 = vpop.permute.xlu0 %2125
      %vm2127 = vcmask 850944
      %v2128 = vsel %vm2127, %v2110, %v2112
      %v2129 = vsel %vm2127, %v2112, %v2114
      %v2130 = vsel %vm2127, %v2114, %v2116
      %v2131 = vsel %vm2127, %v2116, %v2118
      %v2132 = vsel %vm2127, %v2118, %v2120
      %v2133 = vsel %vm2127, %v2120, %v2122
      %v2134 = vsel %vm2127, %v2122, %v2124
      %v2135 = vsel %vm2127, %v2124, %v2126
      %2144 = vst [vmem:[#allocation3 + $0x500] sm:$0xff] %v2128
      %2145 = vst [vmem:[#allocation3 + $0x508] sm:$0xff] %v2129
      %2146 = vst [vmem:[#allocation3 + $0x510] sm:$0xff] %v2130
      %2147 = vst [vmem:[#allocation3 + $0x518] sm:$0xff] %v2131
      %2148 = vst [vmem:[#allocation3 + $0x520] sm:$0xff] %v2132
      %2149 = vst [vmem:[#allocation3 + $0x528] sm:$0xff] %v2133
      %2150 = vst [vmem:[#allocation3 + $0x530] sm:$0xff] %v2134
      %2151 = vst [vmem:[#allocation3 + $0x538] sm:$0xff] %v2135
      %v2152 = vld [vmem:[%s246 + $0xc] sm:$0xff]
      %v2153 = vld [vmem:[%s246 + $0x14] sm:$0xff]
      %v2154 = vld [vmem:[%s246 + $0x1c] sm:$0xff]
      %v2155 = vld [vmem:[%s246 + $0x24] sm:$0xff]
      %v2156 = vld [vmem:[%s246 + $0x2c] sm:$0xf]
      %v2157 = vld [vmem:[%s246 + $0x4c] sm:$0xff]
      %v2158 = vld [vmem:[%s246 + $0x54] sm:$0xff]
      %v2159 = vld [vmem:[%s246 + $0x5c] sm:$0xff]
      %v2160 = vld [vmem:[%s246 + $0x64] sm:$0xff]
      %v2161 = vld [vmem:[%s246 + $0x6c] sm:$0xf]
      %v2172 = vunpack.c.l.b16 %v2152
      %v2173 = vunpack.c.h.b16 %v2152
      %v2174 = vunpack.c.l.b16 %v2153
      %v2175 = vunpack.c.h.b16 %v2153
      %v2176 = vunpack.c.l.b16 %v2154
      %v2177 = vunpack.c.h.b16 %v2154
      %v2178 = vunpack.c.l.b16 %v2155
      %v2179 = vunpack.c.h.b16 %v2155
      %v2180 = vunpack.c.l.b16 %v2156
      %v2181 = vunpack.c.l.b16 %v2157
      %v2182 = vunpack.c.h.b16 %v2157
      %v2183 = vunpack.c.l.b16 %v2158
      %v2184 = vunpack.c.h.b16 %v2158
      %v2185 = vunpack.c.l.b16 %v2159
      %v2186 = vunpack.c.h.b16 %v2159
      %v2187 = vunpack.c.l.b16 %v2160
      %v2188 = vunpack.c.h.b16 %v2160
      %v2189 = vunpack.c.l.b16 %v2161
      %v2190 = vpack.c.b16 %v2181, %v2172
      %v2191 = vpack.c.b16 %v2182, %v2173
      %v2192 = vpack.c.b16 %v2183, %v2174
      %v2193 = vpack.c.b16 %v2184, %v2175
      %v2194 = vpack.c.b16 %v2185, %v2176
      %v2195 = vpack.c.b16 %v2186, %v2177
      %v2196 = vpack.c.b16 %v2187, %v2178
      %v2197 = vpack.c.b16 %v2188, %v2179
      %v2198 = vpack.c.b16 %v2189, %v2180
      %2199 = vrot.lane.b32.xlu0 %v2190, 94
      %v2200 = vpop.permute.xlu0 %2199
      %2201 = vrot.lane.b32.xlu0 %v2191, 94
      %v2202 = vpop.permute.xlu0 %2201
      %2203 = vrot.lane.b32.xlu0 %v2192, 94
      %v2204 = vpop.permute.xlu0 %2203
      %2205 = vrot.lane.b32.xlu0 %v2193, 94
      %v2206 = vpop.permute.xlu0 %2205
      %2207 = vrot.lane.b32.xlu0 %v2194, 94
      %v2208 = vpop.permute.xlu0 %2207
      %2209 = vrot.lane.b32.xlu0 %v2195, 94
      %v2210 = vpop.permute.xlu0 %2209
      %2211 = vrot.lane.b32.xlu0 %v2196, 94
      %v2212 = vpop.permute.xlu0 %2211
      %2213 = vrot.lane.b32.xlu0 %v2197, 94
      %v2214 = vpop.permute.xlu0 %2213
      %2215 = vrot.lane.b32.xlu0 %v2198, 94
      %v2216 = vpop.permute.xlu0 %2215
      %vm2217 = vcmask 769024
      %v2218 = vsel %vm2217, %v2200, %v2202
      %v2219 = vsel %vm2217, %v2202, %v2204
      %v2220 = vsel %vm2217, %v2204, %v2206
      %v2221 = vsel %vm2217, %v2206, %v2208
      %v2222 = vsel %vm2217, %v2208, %v2210
      %v2223 = vsel %vm2217, %v2210, %v2212
      %v2224 = vsel %vm2217, %v2212, %v2214
      %v2225 = vsel %vm2217, %v2214, %v2216
      %2234 = vst [vmem:[#allocation3 + $0x540] sm:$0xff] %v2218
      %2235 = vst [vmem:[#allocation3 + $0x548] sm:$0xff] %v2219
      %2236 = vst [vmem:[#allocation3 + $0x550] sm:$0xff] %v2220
      %2237 = vst [vmem:[#allocation3 + $0x558] sm:$0xff] %v2221
      %2238 = vst [vmem:[#allocation3 + $0x560] sm:$0xff] %v2222
      %2239 = vst [vmem:[#allocation3 + $0x568] sm:$0xff] %v2223
      %2240 = vst [vmem:[#allocation3 + $0x570] sm:$0xff] %v2224
      %2241 = vst [vmem:[#allocation3 + $0x578] sm:$0xff] %v2225
      %v2242 = vld [vmem:[%s246 + $0xc] sm:$0xff]
      %v2243 = vld [vmem:[%s246 + $0x14] sm:$0xff]
      %v2244 = vld [vmem:[%s246 + $0x1c] sm:$0xff]
      %v2245 = vld [vmem:[%s246 + $0x24] sm:$0xff]
      %v2246 = vld [vmem:[%s246 + $0x2c] sm:$0xf]
      %v2247 = vld [vmem:[%s246 + $0x4c] sm:$0xff]
      %v2248 = vld [vmem:[%s246 + $0x54] sm:$0xff]
      %v2249 = vld [vmem:[%s246 + $0x5c] sm:$0xff]
      %v2250 = vld [vmem:[%s246 + $0x64] sm:$0xff]
      %v2251 = vld [vmem:[%s246 + $0x6c] sm:$0xf]
      %v2262 = vunpack.c.l.b16 %v2242
      %v2263 = vunpack.c.h.b16 %v2242
      %v2264 = vunpack.c.l.b16 %v2243
      %v2265 = vunpack.c.h.b16 %v2243
      %v2266 = vunpack.c.l.b16 %v2244
      %v2267 = vunpack.c.h.b16 %v2244
      %v2268 = vunpack.c.l.b16 %v2245
      %v2269 = vunpack.c.h.b16 %v2245
      %v2270 = vunpack.c.l.b16 %v2246
      %v2271 = vunpack.c.l.b16 %v2247
      %v2272 = vunpack.c.h.b16 %v2247
      %v2273 = vunpack.c.l.b16 %v2248
      %v2274 = vunpack.c.h.b16 %v2248
      %v2275 = vunpack.c.l.b16 %v2249
      %v2276 = vunpack.c.h.b16 %v2249
      %v2277 = vunpack.c.l.b16 %v2250
      %v2278 = vunpack.c.h.b16 %v2250
      %v2279 = vunpack.c.l.b16 %v2251
      %v2280 = vpack.c.b16 %v2271, %v2262
      %v2281 = vpack.c.b16 %v2272, %v2263
      %v2282 = vpack.c.b16 %v2273, %v2264
      %v2283 = vpack.c.b16 %v2274, %v2265
      %v2284 = vpack.c.b16 %v2275, %v2266
      %v2285 = vpack.c.b16 %v2276, %v2267
      %v2286 = vpack.c.b16 %v2277, %v2268
      %v2287 = vpack.c.b16 %v2278, %v2269
      %v2288 = vpack.c.b16 %v2279, %v2270
      %2289 = vrot.lane.b32.xlu0 %v2280, 93
      %v2290 = vpop.permute.xlu0 %2289
      %2291 = vrot.lane.b32.xlu0 %v2281, 93
      %v2292 = vpop.permute.xlu0 %2291
      %2293 = vrot.lane.b32.xlu0 %v2282, 93
      %v2294 = vpop.permute.xlu0 %2293
      %2295 = vrot.lane.b32.xlu0 %v2283, 93
      %v2296 = vpop.permute.xlu0 %2295
      %2297 = vrot.lane.b32.xlu0 %v2284, 93
      %v2298 = vpop.permute.xlu0 %2297
      %2299 = vrot.lane.b32.xlu0 %v2285, 93
      %v2300 = vpop.permute.xlu0 %2299
      %2301 = vrot.lane.b32.xlu0 %v2286, 93
      %v2302 = vpop.permute.xlu0 %2301
      %2303 = vrot.lane.b32.xlu0 %v2287, 93
      %v2304 = vpop.permute.xlu0 %2303
      %2305 = vrot.lane.b32.xlu0 %v2288, 93
      %v2306 = vpop.permute.xlu0 %2305
      %vm2307 = vcmask 760832
      %v2308 = vsel %vm2307, %v2290, %v2292
      %v2309 = vsel %vm2307, %v2292, %v2294
      %v2310 = vsel %vm2307, %v2294, %v2296
      %v2311 = vsel %vm2307, %v2296, %v2298
      %v2312 = vsel %vm2307, %v2298, %v2300
      %v2313 = vsel %vm2307, %v2300, %v2302
      %v2314 = vsel %vm2307, %v2302, %v2304
      %v2315 = vsel %vm2307, %v2304, %v2306
      %2324 = vst [vmem:[#allocation3 + $0x580] sm:$0xff] %v2308
      %2325 = vst [vmem:[#allocation3 + $0x588] sm:$0xff] %v2309
      %2326 = vst [vmem:[#allocation3 + $0x590] sm:$0xff] %v2310
      %2327 = vst [vmem:[#allocation3 + $0x598] sm:$0xff] %v2311
      %2328 = vst [vmem:[#allocation3 + $0x5a0] sm:$0xff] %v2312
      %2329 = vst [vmem:[#allocation3 + $0x5a8] sm:$0xff] %v2313
      %2330 = vst [vmem:[#allocation3 + $0x5b0] sm:$0xff] %v2314
      %2331 = vst [vmem:[#allocation3 + $0x5b8] sm:$0xff] %v2315
      %v2332 = vld [vmem:[%s246 + $0xc] sm:$0xff]
      %v2333 = vld [vmem:[%s246 + $0x14] sm:$0xff]
      %v2334 = vld [vmem:[%s246 + $0x1c] sm:$0xff]
      %v2335 = vld [vmem:[%s246 + $0x24] sm:$0xff]
      %v2336 = vld [vmem:[%s246 + $0x2c] sm:$0xf]
      %v2337 = vld [vmem:[%s246 + $0x4c] sm:$0xff]
      %v2338 = vld [vmem:[%s246 + $0x54] sm:$0xff]
      %v2339 = vld [vmem:[%s246 + $0x5c] sm:$0xff]
      %v2340 = vld [vmem:[%s246 + $0x64] sm:$0xff]
      %v2341 = vld [vmem:[%s246 + $0x6c] sm:$0xf]
      %v2352 = vunpack.c.l.b16 %v2332
      %v2353 = vunpack.c.h.b16 %v2332
      %v2354 = vunpack.c.l.b16 %v2333
      %v2355 = vunpack.c.h.b16 %v2333
      %v2356 = vunpack.c.l.b16 %v2334
      %v2357 = vunpack.c.h.b16 %v2334
      %v2358 = vunpack.c.l.b16 %v2335
      %v2359 = vunpack.c.h.b16 %v2335
      %v2360 = vunpack.c.l.b16 %v2336
      %v2361 = vunpack.c.l.b16 %v2337
      %v2362 = vunpack.c.h.b16 %v2337
      %v2363 = vunpack.c.l.b16 %v2338
      %v2364 = vunpack.c.h.b16 %v2338
      %v2365 = vunpack.c.l.b16 %v2339
      %v2366 = vunpack.c.h.b16 %v2339
      %v2367 = vunpack.c.l.b16 %v2340
      %v2368 = vunpack.c.h.b16 %v2340
      %v2369 = vunpack.c.l.b16 %v2341
      %v2370 = vpack.c.b16 %v2361, %v2352
      %v2371 = vpack.c.b16 %v2362, %v2353
      %v2372 = vpack.c.b16 %v2363, %v2354
      %v2373 = vpack.c.b16 %v2364, %v2355
      %v2374 = vpack.c.b16 %v2365, %v2356
      %v2375 = vpack.c.b16 %v2366, %v2357
      %v2376 = vpack.c.b16 %v2367, %v2358
      %v2377 = vpack.c.b16 %v2368, %v2359
      %v2378 = vpack.c.b16 %v2369, %v2360
      %2379 = vrot.lane.b32.xlu0 %v2370, 92
      %v2380 = vpop.permute.xlu0 %2379
      %2381 = vrot.lane.b32.xlu0 %v2371, 92
      %v2382 = vpop.permute.xlu0 %2381
      %2383 = vrot.lane.b32.xlu0 %v2372, 92
      %v2384 = vpop.permute.xlu0 %2383
      %2385 = vrot.lane.b32.xlu0 %v2373, 92
      %v2386 = vpop.permute.xlu0 %2385
      %2387 = vrot.lane.b32.xlu0 %v2374, 92
      %v2388 = vpop.permute.xlu0 %2387
      %2389 = vrot.lane.b32.xlu0 %v2375, 92
      %v2390 = vpop.permute.xlu0 %2389
      %2391 = vrot.lane.b32.xlu0 %v2376, 92
      %v2392 = vpop.permute.xlu0 %2391
      %2393 = vrot.lane.b32.xlu0 %v2377, 92
      %v2394 = vpop.permute.xlu0 %2393
      %2395 = vrot.lane.b32.xlu0 %v2378, 92
      %v2396 = vpop.permute.xlu0 %2395
      %vm2397 = vcmask 752640
      %v2398 = vsel %vm2397, %v2380, %v2382
      %v2399 = vsel %vm2397, %v2382, %v2384
      %v2400 = vsel %vm2397, %v2384, %v2386
      %v2401 = vsel %vm2397, %v2386, %v2388
      %v2402 = vsel %vm2397, %v2388, %v2390
      %v2403 = vsel %vm2397, %v2390, %v2392
      %v2404 = vsel %vm2397, %v2392, %v2394
      %v2405 = vsel %vm2397, %v2394, %v2396
      %2414 = vst [vmem:[#allocation3 + $0x5c0] sm:$0xff] %v2398
      %2415 = vst [vmem:[#allocation3 + $0x5c8] sm:$0xff] %v2399
      %2416 = vst [vmem:[#allocation3 + $0x5d0] sm:$0xff] %v2400
      %2417 = vst [vmem:[#allocation3 + $0x5d8] sm:$0xff] %v2401
      %2418 = vst [vmem:[#allocation3 + $0x5e0] sm:$0xff] %v2402
      %2419 = vst [vmem:[#allocation3 + $0x5e8] sm:$0xff] %v2403
      %2420 = vst [vmem:[#allocation3 + $0x5f0] sm:$0xff] %v2404
      %2421 = vst [vmem:[#allocation3 + $0x5f8] sm:$0xff] %v2405
      %v2422 = vld [vmem:[%s246 + $0xc] sm:$0xff]
      %v2423 = vld [vmem:[%s246 + $0x14] sm:$0xff]
      %v2424 = vld [vmem:[%s246 + $0x1c] sm:$0xff]
      %v2425 = vld [vmem:[%s246 + $0x24] sm:$0xff]
      %v2426 = vld [vmem:[%s246 + $0x2c] sm:$0xf]
      %v2427 = vld [vmem:[%s246 + $0x4c] sm:$0xff]
      %v2428 = vld [vmem:[%s246 + $0x54] sm:$0xff]
      %v2429 = vld [vmem:[%s246 + $0x5c] sm:$0xff]
      %v2430 = vld [vmem:[%s246 + $0x64] sm:$0xff]
      %v2431 = vld [vmem:[%s246 + $0x6c] sm:$0xf]
      %v2442 = vunpack.c.l.b16 %v2422
      %v2443 = vunpack.c.h.b16 %v2422
      %v2444 = vunpack.c.l.b16 %v2423
      %v2445 = vunpack.c.h.b16 %v2423
      %v2446 = vunpack.c.l.b16 %v2424
      %v2447 = vunpack.c.h.b16 %v2424
      %v2448 = vunpack.c.l.b16 %v2425
      %v2449 = vunpack.c.h.b16 %v2425
      %v2450 = vunpack.c.l.b16 %v2426
      %v2451 = vunpack.c.l.b16 %v2427
      %v2452 = vunpack.c.h.b16 %v2427
      %v2453 = vunpack.c.l.b16 %v2428
      %v2454 = vunpack.c.h.b16 %v2428
      %v2455 = vunpack.c.l.b16 %v2429
      %v2456 = vunpack.c.h.b16 %v2429
      %v2457 = vunpack.c.l.b16 %v2430
      %v2458 = vunpack.c.h.b16 %v2430
      %v2459 = vunpack.c.l.b16 %v2431
      %v2460 = vpack.c.b16 %v2451, %v2442
      %v2461 = vpack.c.b16 %v2452, %v2443
      %v2462 = vpack.c.b16 %v2453, %v2444
      %v2463 = vpack.c.b16 %v2454, %v2445
      %v2464 = vpack.c.b16 %v2455, %v2446
      %v2465 = vpack.c.b16 %v2456, %v2447
      %v2466 = vpack.c.b16 %v2457, %v2448
      %v2467 = vpack.c.b16 %v2458, %v2449
      %v2468 = vpack.c.b16 %v2459, %v2450
      %2469 = vrot.lane.b32.xlu0 %v2460, 82
      %v2470 = vpop.permute.xlu0 %2469
      %2471 = vrot.lane.b32.xlu0 %v2461, 82
      %v2472 = vpop.permute.xlu0 %2471
      %2473 = vrot.lane.b32.xlu0 %v2462, 82
      %v2474 = vpop.permute.xlu0 %2473
      %2475 = vrot.lane.b32.xlu0 %v2463, 82
      %v2476 = vpop.permute.xlu0 %2475
      %2477 = vrot.lane.b32.xlu0 %v2464, 82
      %v2478 = vpop.permute.xlu0 %2477
      %2479 = vrot.lane.b32.xlu0 %v2465, 82
      %v2480 = vpop.permute.xlu0 %2479
      %2481 = vrot.lane.b32.xlu0 %v2466, 82
      %v2482 = vpop.permute.xlu0 %2481
      %2483 = vrot.lane.b32.xlu0 %v2467, 82
      %v2484 = vpop.permute.xlu0 %2483
      %2485 = vrot.lane.b32.xlu0 %v2468, 82
      %v2486 = vpop.permute.xlu0 %2485
      %vm2487 = vcmask 670720
      %v2488 = vsel %vm2487, %v2470, %v2472
      %v2489 = vsel %vm2487, %v2472, %v2474
      %v2490 = vsel %vm2487, %v2474, %v2476
      %v2491 = vsel %vm2487, %v2476, %v2478
      %v2492 = vsel %vm2487, %v2478, %v2480
      %v2493 = vsel %vm2487, %v2480, %v2482
      %v2494 = vsel %vm2487, %v2482, %v2484
      %v2495 = vsel %vm2487, %v2484, %v2486
      %2504 = vst [vmem:[#allocation3 + $0x600] sm:$0xff] %v2488
      %2505 = vst [vmem:[#allocation3 + $0x608] sm:$0xff] %v2489
      %2506 = vst [vmem:[#allocation3 + $0x610] sm:$0xff] %v2490
      %2507 = vst [vmem:[#allocation3 + $0x618] sm:$0xff] %v2491
      %2508 = vst [vmem:[#allocation3 + $0x620] sm:$0xff] %v2492
      %2509 = vst [vmem:[#allocation3 + $0x628] sm:$0xff] %v2493
      %2510 = vst [vmem:[#allocation3 + $0x630] sm:$0xff] %v2494
      %2511 = vst [vmem:[#allocation3 + $0x638] sm:$0xff] %v2495
      %v2512 = vld [vmem:[%s246 + $0xc] sm:$0xff]
      %v2513 = vld [vmem:[%s246 + $0x14] sm:$0xff]
      %v2514 = vld [vmem:[%s246 + $0x1c] sm:$0xff]
      %v2515 = vld [vmem:[%s246 + $0x24] sm:$0xff]
      %v2516 = vld [vmem:[%s246 + $0x2c] sm:$0xf]
      %v2517 = vld [vmem:[%s246 + $0x4c] sm:$0xff]
      %v2518 = vld [vmem:[%s246 + $0x54] sm:$0xff]
      %v2519 = vld [vmem:[%s246 + $0x5c] sm:$0xff]
      %v2520 = vld [vmem:[%s246 + $0x64] sm:$0xff]
      %v2521 = vld [vmem:[%s246 + $0x6c] sm:$0xf]
      %v2532 = vunpack.c.l.b16 %v2512
      %v2533 = vunpack.c.h.b16 %v2512
      %v2534 = vunpack.c.l.b16 %v2513
      %v2535 = vunpack.c.h.b16 %v2513
      %v2536 = vunpack.c.l.b16 %v2514
      %v2537 = vunpack.c.h.b16 %v2514
      %v2538 = vunpack.c.l.b16 %v2515
      %v2539 = vunpack.c.h.b16 %v2515
      %v2540 = vunpack.c.l.b16 %v2516
      %v2541 = vunpack.c.l.b16 %v2517
      %v2542 = vunpack.c.h.b16 %v2517
      %v2543 = vunpack.c.l.b16 %v2518
      %v2544 = vunpack.c.h.b16 %v2518
      %v2545 = vunpack.c.l.b16 %v2519
      %v2546 = vunpack.c.h.b16 %v2519
      %v2547 = vunpack.c.l.b16 %v2520
      %v2548 = vunpack.c.h.b16 %v2520
      %v2549 = vunpack.c.l.b16 %v2521
      %v2550 = vpack.c.b16 %v2541, %v2532
      %v2551 = vpack.c.b16 %v2542, %v2533
      %v2552 = vpack.c.b16 %v2543, %v2534
      %v2553 = vpack.c.b16 %v2544, %v2535
      %v2554 = vpack.c.b16 %v2545, %v2536
      %v2555 = vpack.c.b16 %v2546, %v2537
      %v2556 = vpack.c.b16 %v2547, %v2538
      %v2557 = vpack.c.b16 %v2548, %v2539
      %v2558 = vpack.c.b16 %v2549, %v2540
      %2559 = vrot.lane.b32.xlu0 %v2550, 81
      %v2560 = vpop.permute.xlu0 %2559
      %2561 = vrot.lane.b32.xlu0 %v2551, 81
      %v2562 = vpop.permute.xlu0 %2561
      %2563 = vrot.lane.b32.xlu0 %v2552, 81
      %v2564 = vpop.permute.xlu0 %2563
      %2565 = vrot.lane.b32.xlu0 %v2553, 81
      %v2566 = vpop.permute.xlu0 %2565
      %2567 = vrot.lane.b32.xlu0 %v2554, 81
      %v2568 = vpop.permute.xlu0 %2567
      %2569 = vrot.lane.b32.xlu0 %v2555, 81
      %v2570 = vpop.permute.xlu0 %2569
      %2571 = vrot.lane.b32.xlu0 %v2556, 81
      %v2572 = vpop.permute.xlu0 %2571
      %2573 = vrot.lane.b32.xlu0 %v2557, 81
      %v2574 = vpop.permute.xlu0 %2573
      %2575 = vrot.lane.b32.xlu0 %v2558, 81
      %v2576 = vpop.permute.xlu0 %2575
      %vm2577 = vcmask 662528
      %v2578 = vsel %vm2577, %v2560, %v2562
      %v2579 = vsel %vm2577, %v2562, %v2564
      %v2580 = vsel %vm2577, %v2564, %v2566
      %v2581 = vsel %vm2577, %v2566, %v2568
      %v2582 = vsel %vm2577, %v2568, %v2570
      %v2583 = vsel %vm2577, %v2570, %v2572
      %v2584 = vsel %vm2577, %v2572, %v2574
      %v2585 = vsel %vm2577, %v2574, %v2576
      %2594 = vst [vmem:[#allocation3 + $0x640] sm:$0xff] %v2578
      %2595 = vst [vmem:[#allocation3 + $0x648] sm:$0xff] %v2579
      %2596 = vst [vmem:[#allocation3 + $0x650] sm:$0xff] %v2580
      %2597 = vst [vmem:[#allocation3 + $0x658] sm:$0xff] %v2581
      %2598 = vst [vmem:[#allocation3 + $0x660] sm:$0xff] %v2582
      %2599 = vst [vmem:[#allocation3 + $0x668] sm:$0xff] %v2583
      %2600 = vst [vmem:[#allocation3 + $0x670] sm:$0xff] %v2584
      %2601 = vst [vmem:[#allocation3 + $0x678] sm:$0xff] %v2585
      %v2602 = vld [vmem:[%s246 + $0xc] sm:$0xff]
      %v2603 = vld [vmem:[%s246 + $0x14] sm:$0xff]
      %v2604 = vld [vmem:[%s246 + $0x1c] sm:$0xff]
      %v2605 = vld [vmem:[%s246 + $0x24] sm:$0xff]
      %v2606 = vld [vmem:[%s246 + $0x2c] sm:$0xf]
      %v2607 = vld [vmem:[%s246 + $0x4c] sm:$0xff]
      %v2608 = vld [vmem:[%s246 + $0x54] sm:$0xff]
      %v2609 = vld [vmem:[%s246 + $0x5c] sm:$0xff]
      %v2610 = vld [vmem:[%s246 + $0x64] sm:$0xff]
      %v2611 = vld [vmem:[%s246 + $0x6c] sm:$0xf]
      %v2622 = vunpack.c.l.b16 %v2602
      %v2623 = vunpack.c.h.b16 %v2602
      %v2624 = vunpack.c.l.b16 %v2603
      %v2625 = vunpack.c.h.b16 %v2603
      %v2626 = vunpack.c.l.b16 %v2604
      %v2627 = vunpack.c.h.b16 %v2604
      %v2628 = vunpack.c.l.b16 %v2605
      %v2629 = vunpack.c.h.b16 %v2605
      %v2630 = vunpack.c.l.b16 %v2606
      %v2631 = vunpack.c.l.b16 %v2607
      %v2632 = vunpack.c.h.b16 %v2607
      %v2633 = vunpack.c.l.b16 %v2608
      %v2634 = vunpack.c.h.b16 %v2608
      %v2635 = vunpack.c.l.b16 %v2609
      %v2636 = vunpack.c.h.b16 %v2609
      %v2637 = vunpack.c.l.b16 %v2610
      %v2638 = vunpack.c.h.b16 %v2610
      %v2639 = vunpack.c.l.b16 %v2611
      %v2640 = vpack.c.b16 %v2631, %v2622
      %v2641 = vpack.c.b16 %v2632, %v2623
      %v2642 = vpack.c.b16 %v2633, %v2624
      %v2643 = vpack.c.b16 %v2634, %v2625
      %v2644 = vpack.c.b16 %v2635, %v2626
      %v2645 = vpack.c.b16 %v2636, %v2627
      %v2646 = vpack.c.b16 %v2637, %v2628
      %v2647 = vpack.c.b16 %v2638, %v2629
      %v2648 = vpack.c.b16 %v2639, %v2630
      %2649 = vrot.lane.b32.xlu0 %v2640, 80
      %v2650 = vpop.permute.xlu0 %2649
      %2651 = vrot.lane.b32.xlu0 %v2641, 80
      %v2652 = vpop.permute.xlu0 %2651
      %2653 = vrot.lane.b32.xlu0 %v2642, 80
      %v2654 = vpop.permute.xlu0 %2653
      %2655 = vrot.lane.b32.xlu0 %v2643, 80
      %v2656 = vpop.permute.xlu0 %2655
      %2657 = vrot.lane.b32.xlu0 %v2644, 80
      %v2658 = vpop.permute.xlu0 %2657
      %2659 = vrot.lane.b32.xlu0 %v2645, 80
      %v2660 = vpop.permute.xlu0 %2659
      %2661 = vrot.lane.b32.xlu0 %v2646, 80
      %v2662 = vpop.permute.xlu0 %2661
      %2663 = vrot.lane.b32.xlu0 %v2647, 80
      %v2664 = vpop.permute.xlu0 %2663
      %2665 = vrot.lane.b32.xlu0 %v2648, 80
      %v2666 = vpop.permute.xlu0 %2665
      %vm2667 = vcmask 654336
      %v2668 = vsel %vm2667, %v2650, %v2652
      %v2669 = vsel %vm2667, %v2652, %v2654
      %v2670 = vsel %vm2667, %v2654, %v2656
      %v2671 = vsel %vm2667, %v2656, %v2658
      %v2672 = vsel %vm2667, %v2658, %v2660
      %v2673 = vsel %vm2667, %v2660, %v2662
      %v2674 = vsel %vm2667, %v2662, %v2664
      %v2675 = vsel %vm2667, %v2664, %v2666
      %2684 = vst [vmem:[#allocation3 + $0x680] sm:$0xff] %v2668
      %2685 = vst [vmem:[#allocation3 + $0x688] sm:$0xff] %v2669
      %2686 = vst [vmem:[#allocation3 + $0x690] sm:$0xff] %v2670
      %2687 = vst [vmem:[#allocation3 + $0x698] sm:$0xff] %v2671
      %2688 = vst [vmem:[#allocation3 + $0x6a0] sm:$0xff] %v2672
      %2689 = vst [vmem:[#allocation3 + $0x6a8] sm:$0xff] %v2673
      %2690 = vst [vmem:[#allocation3 + $0x6b0] sm:$0xff] %v2674
      %2691 = vst [vmem:[#allocation3 + $0x6b8] sm:$0xff] %v2675
      %v2692 = vld [vmem:[#allocation3] sm:$0xff]
      %v2693 = vld [vmem:[#allocation3 + $0x8] sm:$0xff]
      %v2694 = vld [vmem:[#allocation3 + $0x10] sm:$0xff]
      %v2695 = vld [vmem:[#allocation3 + $0x18] sm:$0xff]
      %v2696 = vld [vmem:[#allocation3 + $0x20] sm:$0xff]
      %v2697 = vld [vmem:[#allocation3 + $0x28] sm:$0xff]
      %v2698 = vld [vmem:[#allocation3 + $0x30] sm:$0xff]
      %v2699 = vld [vmem:[#allocation3 + $0x38] sm:$0xff]
      %v2700 = vld [vmem:[#allocation3 + $0x40] sm:$0xff]
      %v2701 = vld [vmem:[#allocation3 + $0x48] sm:$0xff]
      %v2702 = vld [vmem:[#allocation3 + $0x50] sm:$0xff]
      %v2703 = vld [vmem:[#allocation3 + $0x58] sm:$0xff]
      %v2704 = vld [vmem:[#allocation3 + $0x60] sm:$0xff]
      %v2705 = vld [vmem:[#allocation3 + $0x68] sm:$0xff]
      %v2706 = vld [vmem:[#allocation3 + $0x70] sm:$0xff]
      %v2707 = vld [vmem:[#allocation3 + $0x78] sm:$0xff]
      %v2708 = vld [vmem:[#allocation3 + $0x80] sm:$0xff]
      %v2709 = vld [vmem:[#allocation3 + $0x88] sm:$0xff]
      %v2710 = vld [vmem:[#allocation3 + $0x90] sm:$0xff]
      %v2711 = vld [vmem:[#allocation3 + $0x98] sm:$0xff]
      %v2712 = vld [vmem:[#allocation3 + $0xa0] sm:$0xff]
      %v2713 = vld [vmem:[#allocation3 + $0xa8] sm:$0xff]
      %v2714 = vld [vmem:[#allocation3 + $0xb0] sm:$0xff]
      %v2715 = vld [vmem:[#allocation3 + $0xb8] sm:$0xff]
      %v2716 = vld [vmem:[#allocation3 + $0xc0] sm:$0xff]
      %v2717 = vld [vmem:[#allocation3 + $0xc8] sm:$0xff]
      %v2718 = vld [vmem:[#allocation3 + $0xd0] sm:$0xff]
      %v2719 = vld [vmem:[#allocation3 + $0xd8] sm:$0xff]
      %v2720 = vld [vmem:[#allocation3 + $0xe0] sm:$0xff]
      %v2721 = vld [vmem:[#allocation3 + $0xe8] sm:$0xff]
      %v2722 = vld [vmem:[#allocation3 + $0xf0] sm:$0xff]
      %v2723 = vld [vmem:[#allocation3 + $0xf8] sm:$0xff]
      %v2724 = vld [vmem:[#allocation3 + $0x100] sm:$0xff]
      %v2725 = vld [vmem:[#allocation3 + $0x108] sm:$0xff]
      %v2726 = vld [vmem:[#allocation3 + $0x110] sm:$0xff]
      %v2727 = vld [vmem:[#allocation3 + $0x118] sm:$0xff]
      %v2728 = vld [vmem:[#allocation3 + $0x120] sm:$0xff]
      %v2729 = vld [vmem:[#allocation3 + $0x128] sm:$0xff]
      %v2730 = vld [vmem:[#allocation3 + $0x130] sm:$0xff]
      %v2731 = vld [vmem:[#allocation3 + $0x138] sm:$0xff]
      %v2732 = vld [vmem:[#allocation3 + $0x140] sm:$0xff]
      %v2733 = vld [vmem:[#allocation3 + $0x148] sm:$0xff]
      %v2734 = vld [vmem:[#allocation3 + $0x150] sm:$0xff]
      %v2735 = vld [vmem:[#allocation3 + $0x158] sm:$0xff]
      %v2736 = vld [vmem:[#allocation3 + $0x160] sm:$0xff]
      %v2737 = vld [vmem:[#allocation3 + $0x168] sm:$0xff]
      %v2738 = vld [vmem:[#allocation3 + $0x170] sm:$0xff]
      %v2739 = vld [vmem:[#allocation3 + $0x178] sm:$0xff]
      %v2740 = vld [vmem:[#allocation3 + $0x180] sm:$0xff]
      %v2741 = vld [vmem:[#allocation3 + $0x188] sm:$0xff]
      %v2742 = vld [vmem:[#allocation3 + $0x190] sm:$0xff]
      %v2743 = vld [vmem:[#allocation3 + $0x198] sm:$0xff]
      %v2744 = vld [vmem:[#allocation3 + $0x1a0] sm:$0xff]
      %v2745 = vld [vmem:[#allocation3 + $0x1a8] sm:$0xff]
      %v2746 = vld [vmem:[#allocation3 + $0x1b0] sm:$0xff]
      %v2747 = vld [vmem:[#allocation3 + $0x1b8] sm:$0xff]
      %v2748 = vld [vmem:[#allocation3 + $0x1c0] sm:$0xff]
      %v2749 = vld [vmem:[#allocation3 + $0x1c8] sm:$0xff]
      %v2750 = vld [vmem:[#allocation3 + $0x1d0] sm:$0xff]
      %v2751 = vld [vmem:[#allocation3 + $0x1d8] sm:$0xff]
      %v2752 = vld [vmem:[#allocation3 + $0x1e0] sm:$0xff]
      %v2753 = vld [vmem:[#allocation3 + $0x1e8] sm:$0xff]
      %v2754 = vld [vmem:[#allocation3 + $0x1f0] sm:$0xff]
      %v2755 = vld [vmem:[#allocation3 + $0x1f8] sm:$0xff]
      %v2756 = vld [vmem:[#allocation3 + $0x200] sm:$0xff]
      %v2757 = vld [vmem:[#allocation3 + $0x208] sm:$0xff]
      %v2758 = vld [vmem:[#allocation3 + $0x210] sm:$0xff]
      %v2759 = vld [vmem:[#allocation3 + $0x218] sm:$0xff]
      %v2760 = vld [vmem:[#allocation3 + $0x220] sm:$0xff]
      %v2761 = vld [vmem:[#allocation3 + $0x228] sm:$0xff]
      %v2762 = vld [vmem:[#allocation3 + $0x230] sm:$0xff]
      %v2763 = vld [vmem:[#allocation3 + $0x238] sm:$0xff]
      %v2764 = vld [vmem:[#allocation3 + $0x240] sm:$0xff]
      %v2765 = vld [vmem:[#allocation3 + $0x248] sm:$0xff]
      %v2766 = vld [vmem:[#allocation3 + $0x250] sm:$0xff]
      %v2767 = vld [vmem:[#allocation3 + $0x258] sm:$0xff]
      %v2768 = vld [vmem:[#allocation3 + $0x260] sm:$0xff]
      %v2769 = vld [vmem:[#allocation3 + $0x268] sm:$0xff]
      %v2770 = vld [vmem:[#allocation3 + $0x270] sm:$0xff]
      %v2771 = vld [vmem:[#allocation3 + $0x278] sm:$0xff]
      %v2772 = vld [vmem:[#allocation3 + $0x280] sm:$0xff]
      %v2773 = vld [vmem:[#allocation3 + $0x288] sm:$0xff]
      %v2774 = vld [vmem:[#allocation3 + $0x290] sm:$0xff]
      %v2775 = vld [vmem:[#allocation3 + $0x298] sm:$0xff]
      %v2776 = vld [vmem:[#allocation3 + $0x2a0] sm:$0xff]
      %v2777 = vld [vmem:[#allocation3 + $0x2a8] sm:$0xff]
      %v2778 = vld [vmem:[#allocation3 + $0x2b0] sm:$0xff]
      %v2779 = vld [vmem:[#allocation3 + $0x2b8] sm:$0xff]
      %v2780 = vld [vmem:[#allocation3 + $0x2c0] sm:$0xff]
      %v2781 = vld [vmem:[#allocation3 + $0x2c8] sm:$0xff]
      %v2782 = vld [vmem:[#allocation3 + $0x2d0] sm:$0xff]
      %v2783 = vld [vmem:[#allocation3 + $0x2d8] sm:$0xff]
      %v2784 = vld [vmem:[#allocation3 + $0x2e0] sm:$0xff]
      %v2785 = vld [vmem:[#allocation3 + $0x2e8] sm:$0xff]
      %v2786 = vld [vmem:[#allocation3 + $0x2f0] sm:$0xff]
      %v2787 = vld [vmem:[#allocation3 + $0x2f8] sm:$0xff]
      %v2788 = vld [vmem:[#allocation3 + $0x300] sm:$0xff]
      %v2789 = vld [vmem:[#allocation3 + $0x308] sm:$0xff]
      %v2790 = vld [vmem:[#allocation3 + $0x310] sm:$0xff]
      %v2791 = vld [vmem:[#allocation3 + $0x318] sm:$0xff]
      %v2792 = vld [vmem:[#allocation3 + $0x320] sm:$0xff]
      %v2793 = vld [vmem:[#allocation3 + $0x328] sm:$0xff]
      %v2794 = vld [vmem:[#allocation3 + $0x330] sm:$0xff]
      %v2795 = vld [vmem:[#allocation3 + $0x338] sm:$0xff]
      %v2796 = vld [vmem:[#allocation3 + $0x340] sm:$0xff]
      %v2797 = vld [vmem:[#allocation3 + $0x348] sm:$0xff]
      %v2798 = vld [vmem:[#allocation3 + $0x350] sm:$0xff]
      %v2799 = vld [vmem:[#allocation3 + $0x358] sm:$0xff]
      %v2800 = vld [vmem:[#allocation3 + $0x360] sm:$0xff]
      %v2801 = vld [vmem:[#allocation3 + $0x368] sm:$0xff]
      %v2802 = vld [vmem:[#allocation3 + $0x370] sm:$0xff]
      %v2803 = vld [vmem:[#allocation3 + $0x378] sm:$0xff]
      %v2804 = vld [vmem:[#allocation3 + $0x380] sm:$0xff]
      %v2805 = vld [vmem:[#allocation3 + $0x388] sm:$0xff]
      %v2806 = vld [vmem:[#allocation3 + $0x390] sm:$0xff]
      %v2807 = vld [vmem:[#allocation3 + $0x398] sm:$0xff]
      %v2808 = vld [vmem:[#allocation3 + $0x3a0] sm:$0xff]
      %v2809 = vld [vmem:[#allocation3 + $0x3a8] sm:$0xff]
      %v2810 = vld [vmem:[#allocation3 + $0x3b0] sm:$0xff]
      %v2811 = vld [vmem:[#allocation3 + $0x3b8] sm:$0xff]
      %v2812 = vld [vmem:[#allocation3 + $0x3c0] sm:$0xff]
      %v2813 = vld [vmem:[#allocation3 + $0x3c8] sm:$0xff]
      %v2814 = vld [vmem:[#allocation3 + $0x3d0] sm:$0xff]
      %v2815 = vld [vmem:[#allocation3 + $0x3d8] sm:$0xff]
      %v2816 = vld [vmem:[#allocation3 + $0x3e0] sm:$0xff]
      %v2817 = vld [vmem:[#allocation3 + $0x3e8] sm:$0xff]
      %v2818 = vld [vmem:[#allocation3 + $0x3f0] sm:$0xff]
      %v2819 = vld [vmem:[#allocation3 + $0x3f8] sm:$0xff]
      %v2820 = vld [vmem:[#allocation3 + $0x400] sm:$0xff]
      %v2821 = vld [vmem:[#allocation3 + $0x408] sm:$0xff]
      %v2822 = vld [vmem:[#allocation3 + $0x410] sm:$0xff]
      %v2823 = vld [vmem:[#allocation3 + $0x418] sm:$0xff]
      %v2824 = vld [vmem:[#allocation3 + $0x420] sm:$0xff]
      %v2825 = vld [vmem:[#allocation3 + $0x428] sm:$0xff]
      %v2826 = vld [vmem:[#allocation3 + $0x430] sm:$0xff]
      %v2827 = vld [vmem:[#allocation3 + $0x438] sm:$0xff]
      %v2828 = vld [vmem:[#allocation3 + $0x440] sm:$0xff]
      %v2829 = vld [vmem:[#allocation3 + $0x448] sm:$0xff]
      %v2830 = vld [vmem:[#allocation3 + $0x450] sm:$0xff]
      %v2831 = vld [vmem:[#allocation3 + $0x458] sm:$0xff]
      %v2832 = vld [vmem:[#allocation3 + $0x460] sm:$0xff]
      %v2833 = vld [vmem:[#allocation3 + $0x468] sm:$0xff]
      %v2834 = vld [vmem:[#allocation3 + $0x470] sm:$0xff]
      %v2835 = vld [vmem:[#allocation3 + $0x478] sm:$0xff]
      %v2836 = vld [vmem:[#allocation3 + $0x480] sm:$0xff]
      %v2837 = vld [vmem:[#allocation3 + $0x488] sm:$0xff]
      %v2838 = vld [vmem:[#allocation3 + $0x490] sm:$0xff]
      %v2839 = vld [vmem:[#allocation3 + $0x498] sm:$0xff]
      %v2840 = vld [vmem:[#allocation3 + $0x4a0] sm:$0xff]
      %v2841 = vld [vmem:[#allocation3 + $0x4a8] sm:$0xff]
      %v2842 = vld [vmem:[#allocation3 + $0x4b0] sm:$0xff]
      %v2843 = vld [vmem:[#allocation3 + $0x4b8] sm:$0xff]
      %v2844 = vld [vmem:[#allocation3 + $0x4c0] sm:$0xff]
      %v2845 = vld [vmem:[#allocation3 + $0x4c8] sm:$0xff]
      %v2846 = vld [vmem:[#allocation3 + $0x4d0] sm:$0xff]
      %v2847 = vld [vmem:[#allocation3 + $0x4d8] sm:$0xff]
      %v2848 = vld [vmem:[#allocation3 + $0x4e0] sm:$0xff]
      %v2849 = vld [vmem:[#allocation3 + $0x4e8] sm:$0xff]
      %v2850 = vld [vmem:[#allocation3 + $0x4f0] sm:$0xff]
      %v2851 = vld [vmem:[#allocation3 + $0x4f8] sm:$0xff]
      %v2852 = vld [vmem:[#allocation3 + $0x500] sm:$0xff]
      %v2853 = vld [vmem:[#allocation3 + $0x508] sm:$0xff]
      %v2854 = vld [vmem:[#allocation3 + $0x510] sm:$0xff]
      %v2855 = vld [vmem:[#allocation3 + $0x518] sm:$0xff]
      %v2856 = vld [vmem:[#allocation3 + $0x520] sm:$0xff]
      %v2857 = vld [vmem:[#allocation3 + $0x528] sm:$0xff]
      %v2858 = vld [vmem:[#allocation3 + $0x530] sm:$0xff]
      %v2859 = vld [vmem:[#allocation3 + $0x538] sm:$0xff]
      %v2860 = vld [vmem:[#allocation3 + $0x540] sm:$0xff]
      %v2861 = vld [vmem:[#allocation3 + $0x548] sm:$0xff]
      %v2862 = vld [vmem:[#allocation3 + $0x550] sm:$0xff]
      %v2863 = vld [vmem:[#allocation3 + $0x558] sm:$0xff]
      %v2864 = vld [vmem:[#allocation3 + $0x560] sm:$0xff]
      %v2865 = vld [vmem:[#allocation3 + $0x568] sm:$0xff]
      %v2866 = vld [vmem:[#allocation3 + $0x570] sm:$0xff]
      %v2867 = vld [vmem:[#allocation3 + $0x578] sm:$0xff]
      %v2868 = vld [vmem:[#allocation3 + $0x580] sm:$0xff]
      %v2869 = vld [vmem:[#allocation3 + $0x588] sm:$0xff]
      %v2870 = vld [vmem:[#allocation3 + $0x590] sm:$0xff]
      %v2871 = vld [vmem:[#allocation3 + $0x598] sm:$0xff]
      %v2872 = vld [vmem:[#allocation3 + $0x5a0] sm:$0xff]
      %v2873 = vld [vmem:[#allocation3 + $0x5a8] sm:$0xff]
      %v2874 = vld [vmem:[#allocation3 + $0x5b0] sm:$0xff]
      %v2875 = vld [vmem:[#allocation3 + $0x5b8] sm:$0xff]
      %v2876 = vld [vmem:[#allocation3 + $0x5c0] sm:$0xff]
      %v2877 = vld [vmem:[#allocation3 + $0x5c8] sm:$0xff]
      %v2878 = vld [vmem:[#allocation3 + $0x5d0] sm:$0xff]
      %v2879 = vld [vmem:[#allocation3 + $0x5d8] sm:$0xff]
      %v2880 = vld [vmem:[#allocation3 + $0x5e0] sm:$0xff]
      %v2881 = vld [vmem:[#allocation3 + $0x5e8] sm:$0xff]
      %v2882 = vld [vmem:[#allocation3 + $0x5f0] sm:$0xff]
      %v2883 = vld [vmem:[#allocation3 + $0x5f8] sm:$0xff]
      %v2884 = vld [vmem:[#allocation3 + $0x600] sm:$0xff]
      %v2885 = vld [vmem:[#allocation3 + $0x608] sm:$0xff]
      %v2886 = vld [vmem:[#allocation3 + $0x610] sm:$0xff]
      %v2887 = vld [vmem:[#allocation3 + $0x618] sm:$0xff]
      %v2888 = vld [vmem:[#allocation3 + $0x620] sm:$0xff]
      %v2889 = vld [vmem:[#allocation3 + $0x628] sm:$0xff]
      %v2890 = vld [vmem:[#allocation3 + $0x630] sm:$0xff]
      %v2891 = vld [vmem:[#allocation3 + $0x638] sm:$0xff]
      %v2892 = vld [vmem:[#allocation3 + $0x640] sm:$0xff]
      %v2893 = vld [vmem:[#allocation3 + $0x648] sm:$0xff]
      %v2894 = vld [vmem:[#allocation3 + $0x650] sm:$0xff]
      %v2895 = vld [vmem:[#allocation3 + $0x658] sm:$0xff]
      %v2896 = vld [vmem:[#allocation3 + $0x660] sm:$0xff]
      %v2897 = vld [vmem:[#allocation3 + $0x668] sm:$0xff]
      %v2898 = vld [vmem:[#allocation3 + $0x670] sm:$0xff]
      %v2899 = vld [vmem:[#allocation3 + $0x678] sm:$0xff]
      %v2900 = vld [vmem:[#allocation3 + $0x680] sm:$0xff]
      %v2901 = vld [vmem:[#allocation3 + $0x688] sm:$0xff]
      %v2902 = vld [vmem:[#allocation3 + $0x690] sm:$0xff]
      %v2903 = vld [vmem:[#allocation3 + $0x698] sm:$0xff]
      %v2904 = vld [vmem:[#allocation3 + $0x6a0] sm:$0xff]
      %v2905 = vld [vmem:[#allocation3 + $0x6a8] sm:$0xff]
      %v2906 = vld [vmem:[#allocation3 + $0x6b0] sm:$0xff]
      %v2907 = vld [vmem:[#allocation3 + $0x6b8] sm:$0xff]
      %2909 = vset.pattern.permute.xlu0 0
      %2910 = vperm.xlu0 %2909, %v259
      %v2911 = vpop.permute.xlu0 %2910
      %2914 = vset.pattern.permute.xlu0 0
      %2915 = vperm.xlu0 %2914, %v260
      %v2916 = vpop.permute.xlu0 %2915
      %v2922 = vunpack.c.l.b16 %v253
      %v2923 = vunpack.c.h.b16 %v253
      %v2924 = vunpack.c.l.b16 %v254
      %v2925 = vunpack.c.h.b16 %v254
      %v2926 = vunpack.c.l.b16 %v255
      %v2927 = vunpack.c.h.b16 %v255
      %v2928 = vunpack.c.l.b16 %v256
      %v2929 = vunpack.c.h.b16 %v256
      %v2930 = vpack.c.b16 %v2926, %v2922
      %v2931 = vpack.c.b16 %v2927, %v2923
      %v2932 = vpack.c.b16 %v2928, %v2924
      %v2933 = vpack.c.b16 %v2929, %v2925
      %vm2937 = vcmask 392192
      %v2939 = vsel %vm2937, %v2933, 0
      %2941 = vmatprep.subr.bf16.mxu0 %v2693
      %2942 = vmatpush1.bf16.msra.mxu0 %v2692
      %2943 = vmatprep.subr.bf16.mxu0 %v2701
      %2944 = vmatpush1.bf16.msra.mxu0 %v2700
      %2945 = vmatprep.subr.bf16.mxu0 %v2709
      %2946 = vmatpush1.bf16.msra.mxu0 %v2708
      %2947 = vmatprep.subr.bf16.mxu0 %v2717
      %2948 = vmatpush1.bf16.msra.mxu0 %v2716
      %2949 = vmatprep.subr.bf16.mxu0 %v2725
      %2950 = vmatpush1.bf16.msra.mxu0 %v2724
      %2951 = vmatprep.subr.bf16.mxu0 %v2733
      %2952 = vmatpush1.bf16.msra.mxu0 %v2732
      %2953 = vmatprep.subr.bf16.mxu0 %v2741
      %2954 = vmatpush1.bf16.msra.mxu0 %v2740
      %2955 = vmatprep.subr.bf16.mxu0 %v2749
      %2956 = vmatpush1.bf16.msra.mxu0 %v2748
      %2957 = vmatprep.subr.bf16.mxu0 %v2757
      %2958 = vmatpush1.bf16.msra.mxu0 %v2756
      %2959 = vmatprep.subr.bf16.mxu0 %v2765
      %2960 = vmatpush1.bf16.msra.mxu0 %v2764
      %2961 = vmatprep.subr.bf16.mxu0 %v2773
      %2962 = vmatpush1.bf16.msra.mxu0 %v2772
      %2963 = vmatprep.subr.bf16.mxu0 %v2781
      %2964 = vmatpush1.bf16.msra.mxu0 %v2780
      %2965 = vmatprep.subr.bf16.mxu0 %v2789
      %2966 = vmatpush1.bf16.msra.mxu0 %v2788
      %2967 = vmatprep.subr.bf16.mxu0 %v2797
      %2968 = vmatpush1.bf16.msra.mxu0 %v2796
      %2969 = vmatprep.subr.bf16.mxu0 %v2805
      %2970 = vmatpush1.bf16.msra.mxu0 %v2804
      %2971 = vmatprep.subr.bf16.mxu0 %v2813
      %2972 = vmatpush1.bf16.msra.mxu0 %v2812
      %2973 = vmatprep.mubr.bf16.mxu0 %v2931
      %2974 = vmatmul.mubr.bf16.gmra.mrb[0].mxu0 %v2930
      %v2975 = vpop.f32.mrb[0].mxu0
      %v2976 = vadd.f32 %v2911, %v2975
      %v2977 = vpop.f32.mrb[0].mxu0
      %v2978 = vadd.f32 %v2911, %v2977
      %v2979 = vpop.f32.mrb[0].mxu0
      %v2980 = vadd.f32 %v2916, %v2979
      %v2981 = vpop.f32.mrb[0].mxu0
      %v2982 = vadd.f32 %v2916, %v2981
      %2983 = vdwg.mxu0
      %2984 = vmatprep.subr.bf16.mxu0 %v2821
      %2985 = vmatpush1.bf16.msra.mxu0 %v2820
      %2986 = vmatprep.subr.bf16.mxu0 %v2829
      %2987 = vmatpush1.bf16.msra.mxu0 %v2828
      %2988 = vmatprep.subr.bf16.mxu0 %v2837
      %2989 = vmatpush1.bf16.msra.mxu0 %v2836
      %2990 = vmatprep.subr.bf16.mxu0 %v2845
      %2991 = vmatpush1.bf16.msra.mxu0 %v2844
      %2992 = vmatprep.subr.bf16.mxu0 %v2853
      %2993 = vmatpush1.bf16.msra.mxu0 %v2852
      %2994 = vmatprep.subr.bf16.mxu0 %v2861
      %2995 = vmatpush1.bf16.msra.mxu0 %v2860
      %2996 = vmatprep.subr.bf16.mxu0 %v2869
      %2997 = vmatpush1.bf16.msra.mxu0 %v2868
      %2998 = vmatprep.subr.bf16.mxu0 %v2877
      %2999 = vmatpush1.bf16.msra.mxu0 %v2876
      %3000 = vmatprep.subr.bf16.mxu0 %v2885
      %3001 = vmatpush1.bf16.msra.mxu0 %v2884
      %3002 = vmatprep.subr.bf16.mxu0 %v2893
      %3003 = vmatpush1.bf16.msra.mxu0 %v2892
      %3004 = vmatprep.subr.bf16.mxu0 %v2901
      %3005 = vmatpush1.bf16.msra.mxu0 %v2900
      %3006 = vmatprep.subr.bf16.mxu0 0
      %3007 = vmatpush1.bf16.msra.mxu0 0
      %3008 = vmatprep.subr.bf16.mxu0 0
      %3009 = vmatpush1.bf16.msra.mxu0 0
      %3010 = vmatprep.subr.bf16.mxu0 0
      %3011 = vmatpush1.bf16.msra.mxu0 0
      %3012 = vmatprep.subr.bf16.mxu0 0
      %3013 = vmatpush1.bf16.msra.mxu0 0
      %3014 = vmatprep.subr.bf16.mxu0 0
      %3015 = vmatpush1.bf16.msra.mxu0 0
      %3016 = vmatprep.mubr.bf16.mxu0 %v2939
      %3017 = vmatmul.mubr.bf16.gmra.mrb[0].mxu0 %v2932
      %v3018 = vpop.f32.mrb[0].mxu0
      %v3019 = vadd.f32 %v2976, %v3018
      %v3020 = vpop.f32.mrb[0].mxu0
      %v3021 = vadd.f32 %v2978, %v3020
      %v3022 = vpop.f32.mrb[0].mxu0
      %v3023 = vadd.f32 %v2980, %v3022
      %v3024 = vpop.f32.mrb[0].mxu0
      %v3025 = vadd.f32 %v2982, %v3024
      %3026 = vdwg.mxu0
      %3027 = vmatprep.subr.bf16.mxu0 %v2695
      %3028 = vmatpush1.bf16.msra.mxu0 %v2694
      %3029 = vmatprep.subr.bf16.mxu0 %v2703
      %3030 = vmatpush1.bf16.msra.mxu0 %v2702
      %3031 = vmatprep.subr.bf16.mxu0 %v2711
      %3032 = vmatpush1.bf16.msra.mxu0 %v2710
      %3033 = vmatprep.subr.bf16.mxu0 %v2719
      %3034 = vmatpush1.bf16.msra.mxu0 %v2718
      %3035 = vmatprep.subr.bf16.mxu0 %v2727
      %3036 = vmatpush1.bf16.msra.mxu0 %v2726
      %3037 = vmatprep.subr.bf16.mxu0 %v2735
      %3038 = vmatpush1.bf16.msra.mxu0 %v2734
      %3039 = vmatprep.subr.bf16.mxu0 %v2743
      %3040 = vmatpush1.bf16.msra.mxu0 %v2742
      %3041 = vmatprep.subr.bf16.mxu0 %v2751
      %3042 = vmatpush1.bf16.msra.mxu0 %v2750
      %3043 = vmatprep.subr.bf16.mxu0 %v2759
      %3044 = vmatpush1.bf16.msra.mxu0 %v2758
      %3045 = vmatprep.subr.bf16.mxu0 %v2767
      %3046 = vmatpush1.bf16.msra.mxu0 %v2766
      %3047 = vmatprep.subr.bf16.mxu0 %v2775
      %3048 = vmatpush1.bf16.msra.mxu0 %v2774
      %3049 = vmatprep.subr.bf16.mxu0 %v2783
      %3050 = vmatpush1.bf16.msra.mxu0 %v2782
      %3051 = vmatprep.subr.bf16.mxu0 %v2791
      %3052 = vmatpush1.bf16.msra.mxu0 %v2790
      %3053 = vmatprep.subr.bf16.mxu0 %v2799
      %3054 = vmatpush1.bf16.msra.mxu0 %v2798
      %3055 = vmatprep.subr.bf16.mxu0 %v2807
      %3056 = vmatpush1.bf16.msra.mxu0 %v2806
      %3057 = vmatprep.subr.bf16.mxu0 %v2815
      %3058 = vmatpush1.bf16.msra.mxu0 %v2814
      %3059 = vmatprep.mubr.bf16.mxu0 %v2931
      %3060 = vmatmul.mubr.bf16.gmra.mrb[0].mxu0 %v2930
      %v3061 = vpop.f32.mrb[0].mxu0
      %v3062 = vadd.f32 %v2911, %v3061
      %v3063 = vpop.f32.mrb[0].mxu0
      %v3064 = vadd.f32 %v2911, %v3063
      %v3065 = vpop.f32.mrb[0].mxu0
      %v3066 = vadd.f32 %v2916, %v3065
      %v3067 = vpop.f32.mrb[0].mxu0
      %v3068 = vadd.f32 %v2916, %v3067
      %3069 = vdwg.mxu0
      %3070 = vmatprep.subr.bf16.mxu0 %v2823
      %3071 = vmatpush1.bf16.msra.mxu0 %v2822
      %3072 = vmatprep.subr.bf16.mxu0 %v2831
      %3073 = vmatpush1.bf16.msra.mxu0 %v2830
      %3074 = vmatprep.subr.bf16.mxu0 %v2839
      %3075 = vmatpush1.bf16.msra.mxu0 %v2838
      %3076 = vmatprep.subr.bf16.mxu0 %v2847
      %3077 = vmatpush1.bf16.msra.mxu0 %v2846
      %3078 = vmatprep.subr.bf16.mxu0 %v2855
      %3079 = vmatpush1.bf16.msra.mxu0 %v2854
      %3080 = vmatprep.subr.bf16.mxu0 %v2863
      %3081 = vmatpush1.bf16.msra.mxu0 %v2862
      %3082 = vmatprep.subr.bf16.mxu0 %v2871
      %3083 = vmatpush1.bf16.msra.mxu0 %v2870
      %3084 = vmatprep.subr.bf16.mxu0 %v2879
      %3085 = vmatpush1.bf16.msra.mxu0 %v2878
      %3086 = vmatprep.subr.bf16.mxu0 %v2887
      %3087 = vmatpush1.bf16.msra.mxu0 %v2886
      %3088 = vmatprep.subr.bf16.mxu0 %v2895
      %3089 = vmatpush1.bf16.msra.mxu0 %v2894
      %3090 = vmatprep.subr.bf16.mxu0 %v2903
      %3091 = vmatpush1.bf16.msra.mxu0 %v2902
      %3092 = vmatprep.subr.bf16.mxu0 0
      %3093 = vmatpush1.bf16.msra.mxu0 0
      %3094 = vmatprep.subr.bf16.mxu0 0
      %3095 = vmatpush1.bf16.msra.mxu0 0
      %3096 = vmatprep.subr.bf16.mxu0 0
      %3097 = vmatpush1.bf16.msra.mxu0 0
      %3098 = vmatprep.subr.bf16.mxu0 0
      %3099 = vmatpush1.bf16.msra.mxu0 0
      %3100 = vmatprep.subr.bf16.mxu0 0
      %3101 = vmatpush1.bf16.msra.mxu0 0
      %3102 = vmatprep.mubr.bf16.mxu0 %v2939
      %3103 = vmatmul.mubr.bf16.gmra.mrb[0].mxu0 %v2932
      %v3104 = vpop.f32.mrb[0].mxu0
      %v3105 = vadd.f32 %v3062, %v3104
      %v3106 = vpop.f32.mrb[0].mxu0
      %v3107 = vadd.f32 %v3064, %v3106
      %v3108 = vpop.f32.mrb[0].mxu0
      %v3109 = vadd.f32 %v3066, %v3108
      %v3110 = vpop.f32.mrb[0].mxu0
      %v3111 = vadd.f32 %v3068, %v3110
      %3112 = vdwg.mxu0
      %3113 = vmatprep.subr.bf16.mxu0 %v2697
      %3114 = vmatpush1.bf16.msra.mxu0 %v2696
      %3115 = vmatprep.subr.bf16.mxu0 %v2705
      %3116 = vmatpush1.bf16.msra.mxu0 %v2704
      %3117 = vmatprep.subr.bf16.mxu0 %v2713
      %3118 = vmatpush1.bf16.msra.mxu0 %v2712
      %3119 = vmatprep.subr.bf16.mxu0 %v2721
      %3120 = vmatpush1.bf16.msra.mxu0 %v2720
      %3121 = vmatprep.subr.bf16.mxu0 %v2729
      %3122 = vmatpush1.bf16.msra.mxu0 %v2728
      %3123 = vmatprep.subr.bf16.mxu0 %v2737
      %3124 = vmatpush1.bf16.msra.mxu0 %v2736
      %3125 = vmatprep.subr.bf16.mxu0 %v2745
      %3126 = vmatpush1.bf16.msra.mxu0 %v2744
      %3127 = vmatprep.subr.bf16.mxu0 %v2753
      %3128 = vmatpush1.bf16.msra.mxu0 %v2752
      %3129 = vmatprep.subr.bf16.mxu0 %v2761
      %3130 = vmatpush1.bf16.msra.mxu0 %v2760
      %3131 = vmatprep.subr.bf16.mxu0 %v2769
      %3132 = vmatpush1.bf16.msra.mxu0 %v2768
      %3133 = vmatprep.subr.bf16.mxu0 %v2777
      %3134 = vmatpush1.bf16.msra.mxu0 %v2776
      %3135 = vmatprep.subr.bf16.mxu0 %v2785
      %3136 = vmatpush1.bf16.msra.mxu0 %v2784
      %3137 = vmatprep.subr.bf16.mxu0 %v2793
      %3138 = vmatpush1.bf16.msra.mxu0 %v2792
      %3139 = vmatprep.subr.bf16.mxu0 %v2801
      %3140 = vmatpush1.bf16.msra.mxu0 %v2800
      %3141 = vmatprep.subr.bf16.mxu0 %v2809
      %3142 = vmatpush1.bf16.msra.mxu0 %v2808
      %3143 = vmatprep.subr.bf16.mxu0 %v2817
      %3144 = vmatpush1.bf16.msra.mxu0 %v2816
      %3145 = vmatprep.mubr.bf16.mxu0 %v2931
      %3146 = vmatmul.mubr.bf16.gmra.mrb[0].mxu0 %v2930
      %v3147 = vpop.f32.mrb[0].mxu0
      %v3148 = vadd.f32 %v2911, %v3147
      %v3149 = vpop.f32.mrb[0].mxu0
      %v3150 = vadd.f32 %v2911, %v3149
      %v3151 = vpop.f32.mrb[0].mxu0
      %v3152 = vadd.f32 %v2916, %v3151
      %v3153 = vpop.f32.mrb[0].mxu0
      %v3154 = vadd.f32 %v2916, %v3153
      %3155 = vdwg.mxu0
      %3156 = vmatprep.subr.bf16.mxu0 %v2825
      %3157 = vmatpush1.bf16.msra.mxu0 %v2824
      %3158 = vmatprep.subr.bf16.mxu0 %v2833
      %3159 = vmatpush1.bf16.msra.mxu0 %v2832
      %3160 = vmatprep.subr.bf16.mxu0 %v2841
      %3161 = vmatpush1.bf16.msra.mxu0 %v2840
      %3162 = vmatprep.subr.bf16.mxu0 %v2849
      %3163 = vmatpush1.bf16.msra.mxu0 %v2848
      %3164 = vmatprep.subr.bf16.mxu0 %v2857
      %3165 = vmatpush1.bf16.msra.mxu0 %v2856
      %3166 = vmatprep.subr.bf16.mxu0 %v2865
      %3167 = vmatpush1.bf16.msra.mxu0 %v2864
      %3168 = vmatprep.subr.bf16.mxu0 %v2873
      %3169 = vmatpush1.bf16.msra.mxu0 %v2872
      %3170 = vmatprep.subr.bf16.mxu0 %v2881
      %3171 = vmatpush1.bf16.msra.mxu0 %v2880
      %3172 = vmatprep.subr.bf16.mxu0 %v2889
      %3173 = vmatpush1.bf16.msra.mxu0 %v2888
      %3174 = vmatprep.subr.bf16.mxu0 %v2897
      %3175 = vmatpush1.bf16.msra.mxu0 %v2896
      %3176 = vmatprep.subr.bf16.mxu0 %v2905
      %3177 = vmatpush1.bf16.msra.mxu0 %v2904
      %3178 = vmatprep.subr.bf16.mxu0 0
      %3179 = vmatpush1.bf16.msra.mxu0 0
      %3180 = vmatprep.subr.bf16.mxu0 0
      %3181 = vmatpush1.bf16.msra.mxu0 0
      %3182 = vmatprep.subr.bf16.mxu0 0
      %3183 = vmatpush1.bf16.msra.mxu0 0
      %3184 = vmatprep.subr.bf16.mxu0 0
      %3185 = vmatpush1.bf16.msra.mxu0 0
      %3186 = vmatprep.subr.bf16.mxu0 0
      %3187 = vmatpush1.bf16.msra.mxu0 0
      %3188 = vmatprep.mubr.bf16.mxu0 %v2939
      %3189 = vmatmul.mubr.bf16.gmra.mrb[0].mxu0 %v2932
      %v3190 = vpop.f32.mrb[0].mxu0
      %v3191 = vadd.f32 %v3148, %v3190
      %v3192 = vpop.f32.mrb[0].mxu0
      %v3193 = vadd.f32 %v3150, %v3192
      %v3194 = vpop.f32.mrb[0].mxu0
      %v3195 = vadd.f32 %v3152, %v3194
      %v3196 = vpop.f32.mrb[0].mxu0
      %v3197 = vadd.f32 %v3154, %v3196
      %3198 = vdwg.mxu0
      %3199 = vmatprep.subr.bf16.mxu0 %v2699
      %3200 = vmatpush1.bf16.msra.mxu0 %v2698
      %3201 = vmatprep.subr.bf16.mxu0 %v2707
      %3202 = vmatpush1.bf16.msra.mxu0 %v2706
      %3203 = vmatprep.subr.bf16.mxu0 %v2715
      %3204 = vmatpush1.bf16.msra.mxu0 %v2714
      %3205 = vmatprep.subr.bf16.mxu0 %v2723
      %3206 = vmatpush1.bf16.msra.mxu0 %v2722
      %3207 = vmatprep.subr.bf16.mxu0 %v2731
      %3208 = vmatpush1.bf16.msra.mxu0 %v2730
      %3209 = vmatprep.subr.bf16.mxu0 %v2739
      %3210 = vmatpush1.bf16.msra.mxu0 %v2738
      %3211 = vmatprep.subr.bf16.mxu0 %v2747
      %3212 = vmatpush1.bf16.msra.mxu0 %v2746
      %3213 = vmatprep.subr.bf16.mxu0 %v2755
      %3214 = vmatpush1.bf16.msra.mxu0 %v2754
      %3215 = vmatprep.subr.bf16.mxu0 %v2763
      %3216 = vmatpush1.bf16.msra.mxu0 %v2762
      %3217 = vmatprep.subr.bf16.mxu0 %v2771
      %3218 = vmatpush1.bf16.msra.mxu0 %v2770
      %3219 = vmatprep.subr.bf16.mxu0 %v2779
      %3220 = vmatpush1.bf16.msra.mxu0 %v2778
      %3221 = vmatprep.subr.bf16.mxu0 %v2787
      %3222 = vmatpush1.bf16.msra.mxu0 %v2786
      %3223 = vmatprep.subr.bf16.mxu0 %v2795
      %3224 = vmatpush1.bf16.msra.mxu0 %v2794
      %3225 = vmatprep.subr.bf16.mxu0 %v2803
      %3226 = vmatpush1.bf16.msra.mxu0 %v2802
      %3227 = vmatprep.subr.bf16.mxu0 %v2811
      %3228 = vmatpush1.bf16.msra.mxu0 %v2810
      %3229 = vmatprep.subr.bf16.mxu0 %v2819
      %3230 = vmatpush1.bf16.msra.mxu0 %v2818
      %3231 = vmatprep.mubr.bf16.mxu0 %v2931
      %3232 = vmatmul.mubr.bf16.gmra.mrb[0].mxu0 %v2930
      %v3233 = vpop.f32.mrb[0].mxu0
      %v3234 = vadd.f32 %v2911, %v3233
      %v3235 = vpop.f32.mrb[0].mxu0
      %v3236 = vadd.f32 %v2911, %v3235
      %v3237 = vpop.f32.mrb[0].mxu0
      %v3238 = vadd.f32 %v2916, %v3237
      %v3239 = vpop.f32.mrb[0].mxu0
      %v3240 = vadd.f32 %v2916, %v3239
      %3241 = vdwg.mxu0
      %3242 = vmatprep.subr.bf16.mxu0 %v2827
      %3243 = vmatpush1.bf16.msra.mxu0 %v2826
      %3244 = vmatprep.subr.bf16.mxu0 %v2835
      %3245 = vmatpush1.bf16.msra.mxu0 %v2834
      %3246 = vmatprep.subr.bf16.mxu0 %v2843
      %3247 = vmatpush1.bf16.msra.mxu0 %v2842
      %3248 = vmatprep.subr.bf16.mxu0 %v2851
      %3249 = vmatpush1.bf16.msra.mxu0 %v2850
      %3250 = vmatprep.subr.bf16.mxu0 %v2859
      %3251 = vmatpush1.bf16.msra.mxu0 %v2858
      %3252 = vmatprep.subr.bf16.mxu0 %v2867
      %3253 = vmatpush1.bf16.msra.mxu0 %v2866
      %3254 = vmatprep.subr.bf16.mxu0 %v2875
      %3255 = vmatpush1.bf16.msra.mxu0 %v2874
      %3256 = vmatprep.subr.bf16.mxu0 %v2883
      %3257 = vmatpush1.bf16.msra.mxu0 %v2882
      %3258 = vmatprep.subr.bf16.mxu0 %v2891
      %3259 = vmatpush1.bf16.msra.mxu0 %v2890
      %3260 = vmatprep.subr.bf16.mxu0 %v2899
      %3261 = vmatpush1.bf16.msra.mxu0 %v2898
      %3262 = vmatprep.subr.bf16.mxu0 %v2907
      %3263 = vmatpush1.bf16.msra.mxu0 %v2906
      %3264 = vmatprep.subr.bf16.mxu0 0
      %3265 = vmatpush1.bf16.msra.mxu0 0
      %3266 = vmatprep.subr.bf16.mxu0 0
      %3267 = vmatpush1.bf16.msra.mxu0 0
      %3268 = vmatprep.subr.bf16.mxu0 0
      %3269 = vmatpush1.bf16.msra.mxu0 0
      %3270 = vmatprep.subr.bf16.mxu0 0
      %3271 = vmatpush1.bf16.msra.mxu0 0
      %3272 = vmatprep.subr.bf16.mxu0 0
      %3273 = vmatpush1.bf16.msra.mxu0 0
      %3274 = vmatprep.mubr.bf16.mxu0 %v2939
      %3275 = vmatmul.mubr.bf16.gmra.mrb[0].mxu0 %v2932
      %v3276 = vpop.f32.mrb[0].mxu0
      %v3277 = vadd.f32 %v3234, %v3276
      %v3278 = vpop.f32.mrb[0].mxu0
      %v3279 = vadd.f32 %v3236, %v3278
      %v3280 = vpop.f32.mrb[0].mxu0
      %v3281 = vadd.f32 %v3238, %v3280
      %v3282 = vpop.f32.mrb[0].mxu0
      %v3283 = vadd.f32 %v3240, %v3282
      %3284 = vdwg.mxu0
      %v3285 = vmax.f32 %v3019, 0.0
      %v3286 = vmax.f32 %v3021, 0.0
      %v3287 = vmax.f32 %v3105, 0.0
      %v3288 = vmax.f32 %v3107, 0.0
      %v3289 = vmax.f32 %v3191, 0.0
      %v3290 = vmax.f32 %v3193, 0.0
      %v3291 = vmax.f32 %v3277, 0.0
      %v3292 = vmax.f32 %v3279, 0.0
      %v3293 = vmax.f32 %v3023, 0.0
      %v3294 = vmax.f32 %v3025, 0.0
      %v3295 = vmax.f32 %v3109, 0.0
      %v3296 = vmax.f32 %v3111, 0.0
      %v3297 = vmax.f32 %v3195, 0.0
      %v3298 = vmax.f32 %v3197, 0.0
      %v3299 = vmax.f32 %v3281, 0.0
      %v3300 = vmax.f32 %v3283, 0.0
      %v3301 = vld [vmem:[%s1] sm:$0xff]
      %v3302 = vunpack.c.l.bf16 %v3301
      %v3303 = vunpack.c.h.bf16 %v3301
      %v3306 = vlaneseq
      %v3307 = vshrl.u32 %v3306, 7
      %v3308 = vsub.s32 0, %v3307
      %v3309 = vrot.slane %v3302, %v3308
      %v3310 = vlaneseq
      %v3311 = vshrl.u32 %v3310, 7
      %v3312 = vsub.s32 2, %v3311
      %v3313 = vrot.slane %v3302, %v3312
      %v3314 = vlaneseq
      %v3315 = vshrl.u32 %v3314, 7
      %v3316 = vsub.s32 4, %v3315
      %v3317 = vrot.slane %v3302, %v3316
      %v3318 = vlaneseq
      %v3319 = vshrl.u32 %v3318, 7
      %v3320 = vsub.s32 6, %v3319
      %v3321 = vrot.slane %v3302, %v3320
      %v3322 = vlaneseq
      %v3323 = vshrl.u32 %v3322, 7
      %v3324 = vsub.s32 0, %v3323
      %v3325 = vrot.slane %v3303, %v3324
      %v3326 = vlaneseq
      %v3327 = vshrl.u32 %v3326, 7
      %v3328 = vsub.s32 2, %v3327
      %v3329 = vrot.slane %v3303, %v3328
      %v3330 = vlaneseq
      %v3331 = vshrl.u32 %v3330, 7
      %v3332 = vsub.s32 4, %v3331
      %v3333 = vrot.slane %v3303, %v3332
      %v3334 = vlaneseq
      %v3335 = vshrl.u32 %v3334, 7
      %v3336 = vsub.s32 6, %v3335
      %v3337 = vrot.slane %v3303, %v3336
      %v3346 = vlaneseq
      %v3347 = vshrl.u32 %v3346, 7
      %v3348 = vsub.s32 0, %v3347
      %v3349 = vrot.slane %v3309, %v3348
      %v3350 = vlaneseq
      %v3351 = vshrl.u32 %v3350, 7
      %v3352 = vsub.s32 0, %v3351
      %v3353 = vrot.slane %v3313, %v3352
      %v3354 = vlaneseq
      %v3355 = vshrl.u32 %v3354, 7
      %v3356 = vsub.s32 0, %v3355
      %v3357 = vrot.slane %v3317, %v3356
      %v3358 = vlaneseq
      %v3359 = vshrl.u32 %v3358, 7
      %v3360 = vsub.s32 0, %v3359
      %v3361 = vrot.slane %v3321, %v3360
      %v3362 = vlaneseq
      %v3363 = vshrl.u32 %v3362, 7
      %v3364 = vsub.s32 0, %v3363
      %v3365 = vrot.slane %v3325, %v3364
      %v3366 = vlaneseq
      %v3367 = vshrl.u32 %v3366, 7
      %v3368 = vsub.s32 0, %v3367
      %v3369 = vrot.slane %v3329, %v3368
      %v3370 = vlaneseq
      %v3371 = vshrl.u32 %v3370, 7
      %v3372 = vsub.s32 0, %v3371
      %v3373 = vrot.slane %v3333, %v3372
      %v3374 = vlaneseq
      %v3375 = vshrl.u32 %v3374, 7
      %v3376 = vsub.s32 0, %v3375
      %v3377 = vrot.slane %v3337, %v3376
      %v3378 = vmul.f32 %v3349, %v3285
      %v3379 = vmul.f32 %v3353, %v3286
      %v3380 = vmul.f32 %v3357, %v3287
      %v3381 = vmul.f32 %v3361, %v3288
      %v3382 = vmul.f32 %v3365, %v3289
      %v3383 = vmul.f32 %v3369, %v3290
      %v3384 = vmul.f32 %v3373, %v3291
      %v3385 = vmul.f32 %v3377, %v3292
      %v3386 = vmul.f32 %v3349, %v3293
      %v3387 = vmul.f32 %v3353, %v3294
      %v3388 = vmul.f32 %v3357, %v3295
      %v3389 = vmul.f32 %v3361, %v3296
      %v3390 = vmul.f32 %v3365, %v3297
      %v3391 = vmul.f32 %v3369, %v3298
      %v3392 = vmul.f32 %v3373, %v3299
      %v3393 = vmul.f32 %v3377, %v3300
      %v3394 = vpack.c.bf16 %v3386, %v3378
      %v3395 = vpack.c.bf16 %v3387, %v3379
      %v3396 = vpack.c.bf16 %v3388, %v3380
      %v3397 = vpack.c.bf16 %v3389, %v3381
      %v3398 = vpack.c.bf16 %v3390, %v3382
      %v3399 = vpack.c.bf16 %v3391, %v3383
      %v3400 = vpack.c.bf16 %v3392, %v3384
      %v3401 = vpack.c.bf16 %v3393, %v3385
      %3402 = vst [vmem:[#allocation2] sm:$0xff] %v3394
      %3403 = vst [vmem:[#allocation2 + $0x8] sm:$0xff] %v3395
      %3404 = vst [vmem:[#allocation2 + $0x10] sm:$0xff] %v3396
      %3405 = vst [vmem:[#allocation2 + $0x18] sm:$0xff] %v3397
      %3406 = vst [vmem:[#allocation2 + $0x20] sm:$0xff] %v3398
      %3407 = vst [vmem:[#allocation2 + $0x28] sm:$0xff] %v3399
      %3408 = vst [vmem:[#allocation2 + $0x30] sm:$0xff] %v3400
      %3409 = vst [vmem:[#allocation2 + $0x38] sm:$0xff] %v3401
      %v3410 = vld [vmem:[%s246 + $0x20] sm:$0xff]
      %v3411 = vld [vmem:[%s246 + $0x28] sm:$0xff]
      %v3412 = vld [vmem:[%s246 + $0x30] sm:$0xf]
      %v3413 = vld [vmem:[%s246 + $0x60] sm:$0xff]
      %v3414 = vld [vmem:[%s246 + $0x68] sm:$0xff]
      %v3415 = vld [vmem:[%s246 + $0x70] sm:$0xf]
      %v3422 = vunpack.c.l.b16 %v3410
      %v3423 = vunpack.c.h.b16 %v3410
      %v3424 = vunpack.c.l.b16 %v3411
      %v3425 = vunpack.c.h.b16 %v3411
      %v3426 = vunpack.c.l.b16 %v3412
      %v3427 = vunpack.c.l.b16 %v3413
      %v3428 = vunpack.c.h.b16 %v3413
      %v3429 = vunpack.c.l.b16 %v3414
      %v3430 = vunpack.c.h.b16 %v3414
      %v3431 = vunpack.c.l.b16 %v3415
      %v3432 = vpack.c.b16 %v3427, %v3422
      %v3433 = vpack.c.b16 %v3428, %v3423
      %v3434 = vpack.c.b16 %v3429, %v3424
      %v3435 = vpack.c.b16 %v3430, %v3425
      %v3436 = vpack.c.b16 %v3431, %v3426
      %3437 = vrot.lane.b32.xlu0 %v3432, 10
      %v3438 = vpop.permute.xlu0 %3437
      %3439 = vrot.lane.b32.xlu0 %v3433, 10
      %v3440 = vpop.permute.xlu0 %3439
      %3441 = vrot.lane.b32.xlu0 %v3434, 10
      %v3442 = vpop.permute.xlu0 %3441
      %3443 = vrot.lane.b32.xlu0 %v3435, 10
      %v3444 = vpop.permute.xlu0 %3443
      %3445 = vrot.lane.b32.xlu0 %v3436, 10
      %v3446 = vpop.permute.xlu0 %3445
      %v3447 = vsel %vm327, %v3438, %v3440
      %v3448 = vsel %vm327, %v3440, %v3442
      %v3449 = vsel %vm327, %v3442, %v3444
      %v3450 = vsel %vm327, %v3444, %v3446
      %3455 = vst [vmem:[#allocation3] sm:$0xff] %v3447
      %3456 = vst [vmem:[#allocation3 + $0x8] sm:$0xff] %v3448
      %3457 = vst [vmem:[#allocation3 + $0x10] sm:$0xff] %v3449
      %3458 = vst [vmem:[#allocation3 + $0x18] sm:$0xff] %v3450
      %v3459 = vld [vmem:[%s246 + $0x20] sm:$0xff]
      %v3460 = vld [vmem:[%s246 + $0x28] sm:$0xff]
      %v3461 = vld [vmem:[%s246 + $0x30] sm:$0xf]
      %v3462 = vld [vmem:[%s246 + $0x60] sm:$0xff]
      %v3463 = vld [vmem:[%s246 + $0x68] sm:$0xff]
      %v3464 = vld [vmem:[%s246 + $0x70] sm:$0xf]
      %v3471 = vunpack.c.l.b16 %v3459
      %v3472 = vunpack.c.h.b16 %v3459
      %v3473 = vunpack.c.l.b16 %v3460
      %v3474 = vunpack.c.h.b16 %v3460
      %v3475 = vunpack.c.l.b16 %v3461
      %v3476 = vunpack.c.l.b16 %v3462
      %v3477 = vunpack.c.h.b16 %v3462
      %v3478 = vunpack.c.l.b16 %v3463
      %v3479 = vunpack.c.h.b16 %v3463
      %v3480 = vunpack.c.l.b16 %v3464
      %v3481 = vpack.c.b16 %v3476, %v3471
      %v3482 = vpack.c.b16 %v3477, %v3472
      %v3483 = vpack.c.b16 %v3478, %v3473
      %v3484 = vpack.c.b16 %v3479, %v3474
      %v3485 = vpack.c.b16 %v3480, %v3475
      %3486 = vrot.lane.b32.xlu0 %v3481, 9
      %v3487 = vpop.permute.xlu0 %3486
      %3488 = vrot.lane.b32.xlu0 %v3482, 9
      %v3489 = vpop.permute.xlu0 %3488
      %3490 = vrot.lane.b32.xlu0 %v3483, 9
      %v3491 = vpop.permute.xlu0 %3490
      %3492 = vrot.lane.b32.xlu0 %v3484, 9
      %v3493 = vpop.permute.xlu0 %3492
      %3494 = vrot.lane.b32.xlu0 %v3485, 9
      %v3495 = vpop.permute.xlu0 %3494
      %v3496 = vsel %vm417, %v3487, %v3489
      %v3497 = vsel %vm417, %v3489, %v3491
      %v3498 = vsel %vm417, %v3491, %v3493
      %v3499 = vsel %vm417, %v3493, %v3495
      %3504 = vst [vmem:[#allocation3 + $0x40] sm:$0xff] %v3496
      %3505 = vst [vmem:[#allocation3 + $0x48] sm:$0xff] %v3497
      %3506 = vst [vmem:[#allocation3 + $0x50] sm:$0xff] %v3498
      %3507 = vst [vmem:[#allocation3 + $0x58] sm:$0xff] %v3499
      %v3508 = vld [vmem:[%s246 + $0x20] sm:$0xff]
      %v3509 = vld [vmem:[%s246 + $0x28] sm:$0xff]
      %v3510 = vld [vmem:[%s246 + $0x30] sm:$0xf]
      %v3511 = vld [vmem:[%s246 + $0x60] sm:$0xff]
      %v3512 = vld [vmem:[%s246 + $0x68] sm:$0xff]
      %v3513 = vld [vmem:[%s246 + $0x70] sm:$0xf]
      %v3520 = vunpack.c.l.b16 %v3508
      %v3521 = vunpack.c.h.b16 %v3508
      %v3522 = vunpack.c.l.b16 %v3509
      %v3523 = vunpack.c.h.b16 %v3509
      %v3524 = vunpack.c.l.b16 %v3510
      %v3525 = vunpack.c.l.b16 %v3511
      %v3526 = vunpack.c.h.b16 %v3511
      %v3527 = vunpack.c.l.b16 %v3512
      %v3528 = vunpack.c.h.b16 %v3512
      %v3529 = vunpack.c.l.b16 %v3513
      %v3530 = vpack.c.b16 %v3525, %v3520
      %v3531 = vpack.c.b16 %v3526, %v3521
      %v3532 = vpack.c.b16 %v3527, %v3522
      %v3533 = vpack.c.b16 %v3528, %v3523
      %v3534 = vpack.c.b16 %v3529, %v3524
      %3535 = vrot.lane.b32.xlu0 %v3530, 8
      %v3536 = vpop.permute.xlu0 %3535
      %3537 = vrot.lane.b32.xlu0 %v3531, 8
      %v3538 = vpop.permute.xlu0 %3537
      %3539 = vrot.lane.b32.xlu0 %v3532, 8
      %v3540 = vpop.permute.xlu0 %3539
      %3541 = vrot.lane.b32.xlu0 %v3533, 8
      %v3542 = vpop.permute.xlu0 %3541
      %3543 = vrot.lane.b32.xlu0 %v3534, 8
      %v3544 = vpop.permute.xlu0 %3543
      %v3545 = vsel %vm507, %v3536, %v3538
      %v3546 = vsel %vm507, %v3538, %v3540
      %v3547 = vsel %vm507, %v3540, %v3542
      %v3548 = vsel %vm507, %v3542, %v3544
      %3553 = vst [vmem:[#allocation3 + $0x80] sm:$0xff] %v3545
      %3554 = vst [vmem:[#allocation3 + $0x88] sm:$0xff] %v3546
      %3555 = vst [vmem:[#allocation3 + $0x90] sm:$0xff] %v3547
      %3556 = vst [vmem:[#allocation3 + $0x98] sm:$0xff] %v3548
      %v3557 = vld [vmem:[%s246 + $0x24] sm:$0xff]
      %v3558 = vld [vmem:[%s246 + $0x2c] sm:$0xff]
      %v3559 = vld [vmem:[%s246 + $0x34] sm:$0xf]
      %v3560 = vld [vmem:[%s246 + $0x64] sm:$0xff]
      %v3561 = vld [vmem:[%s246 + $0x6c] sm:$0xff]
      %v3562 = vld [vmem:[%s246 + $0x74] sm:$0xf]
      %v3569 = vunpack.c.l.b16 %v3557
      %v3570 = vunpack.c.h.b16 %v3557
      %v3571 = vunpack.c.l.b16 %v3558
      %v3572 = vunpack.c.h.b16 %v3558
      %v3573 = vunpack.c.l.b16 %v3559
      %v3574 = vunpack.c.l.b16 %v3560
      %v3575 = vunpack.c.h.b16 %v3560
      %v3576 = vunpack.c.l.b16 %v3561
      %v3577 = vunpack.c.h.b16 %v3561
      %v3578 = vunpack.c.l.b16 %v3562
      %v3579 = vpack.c.b16 %v3574, %v3569
      %v3580 = vpack.c.b16 %v3575, %v3570
      %v3581 = vpack.c.b16 %v3576, %v3571
      %v3582 = vpack.c.b16 %v3577, %v3572
      %v3583 = vpack.c.b16 %v3578, %v3573
      %3584 = vrot.lane.b32.xlu0 %v3579, 126
      %v3585 = vpop.permute.xlu0 %3584
      %3586 = vrot.lane.b32.xlu0 %v3580, 126
      %v3587 = vpop.permute.xlu0 %3586
      %3588 = vrot.lane.b32.xlu0 %v3581, 126
      %v3589 = vpop.permute.xlu0 %3588
      %3590 = vrot.lane.b32.xlu0 %v3582, 126
      %v3591 = vpop.permute.xlu0 %3590
      %3592 = vrot.lane.b32.xlu0 %v3583, 126
      %v3593 = vpop.permute.xlu0 %3592
      %v3594 = vsel %vm597, %v3585, %v3587
      %v3595 = vsel %vm597, %v3587, %v3589
      %v3596 = vsel %vm597, %v3589, %v3591
      %v3597 = vsel %vm597, %v3591, %v3593
      %3602 = vst [vmem:[#allocation3 + $0xc0] sm:$0xff] %v3594
      %3603 = vst [vmem:[#allocation3 + $0xc8] sm:$0xff] %v3595
      %3604 = vst [vmem:[#allocation3 + $0xd0] sm:$0xff] %v3596
      %3605 = vst [vmem:[#allocation3 + $0xd8] sm:$0xff] %v3597
      %v3606 = vld [vmem:[%s246 + $0x24] sm:$0xff]
      %v3607 = vld [vmem:[%s246 + $0x2c] sm:$0xff]
      %v3608 = vld [vmem:[%s246 + $0x34] sm:$0xf]
      %v3609 = vld [vmem:[%s246 + $0x64] sm:$0xff]
      %v3610 = vld [vmem:[%s246 + $0x6c] sm:$0xff]
      %v3611 = vld [vmem:[%s246 + $0x74] sm:$0xf]
      %v3618 = vunpack.c.l.b16 %v3606
      %v3619 = vunpack.c.h.b16 %v3606
      %v3620 = vunpack.c.l.b16 %v3607
      %v3621 = vunpack.c.h.b16 %v3607
      %v3622 = vunpack.c.l.b16 %v3608
      %v3623 = vunpack.c.l.b16 %v3609
      %v3624 = vunpack.c.h.b16 %v3609
      %v3625 = vunpack.c.l.b16 %v3610
      %v3626 = vunpack.c.h.b16 %v3610
      %v3627 = vunpack.c.l.b16 %v3611
      %v3628 = vpack.c.b16 %v3623, %v3618
      %v3629 = vpack.c.b16 %v3624, %v3619
      %v3630 = vpack.c.b16 %v3625, %v3620
      %v3631 = vpack.c.b16 %v3626, %v3621
      %v3632 = vpack.c.b16 %v3627, %v3622
      %3633 = vrot.lane.b32.xlu0 %v3628, 125
      %v3634 = vpop.permute.xlu0 %3633
      %3635 = vrot.lane.b32.xlu0 %v3629, 125
      %v3636 = vpop.permute.xlu0 %3635
      %3637 = vrot.lane.b32.xlu0 %v3630, 125
      %v3638 = vpop.permute.xlu0 %3637
      %3639 = vrot.lane.b32.xlu0 %v3631, 125
      %v3640 = vpop.permute.xlu0 %3639
      %3641 = vrot.lane.b32.xlu0 %v3632, 125
      %v3642 = vpop.permute.xlu0 %3641
      %v3643 = vsel %vm687, %v3634, %v3636
      %v3644 = vsel %vm687, %v3636, %v3638
      %v3645 = vsel %vm687, %v3638, %v3640
      %v3646 = vsel %vm687, %v3640, %v3642
      %3651 = vst [vmem:[#allocation3 + $0x100] sm:$0xff] %v3643
      %3652 = vst [vmem:[#allocation3 + $0x108] sm:$0xff] %v3644
      %3653 = vst [vmem:[#allocation3 + $0x110] sm:$0xff] %v3645
      %3654 = vst [vmem:[#allocation3 + $0x118] sm:$0xff] %v3646
      %v3655 = vld [vmem:[%s246 + $0x24] sm:$0xff]
      %v3656 = vld [vmem:[%s246 + $0x2c] sm:$0xff]
      %v3657 = vld [vmem:[%s246 + $0x34] sm:$0xf]
      %v3658 = vld [vmem:[%s246 + $0x64] sm:$0xff]
      %v3659 = vld [vmem:[%s246 + $0x6c] sm:$0xff]
      %v3660 = vld [vmem:[%s246 + $0x74] sm:$0xf]
      %v3667 = vunpack.c.l.b16 %v3655
      %v3668 = vunpack.c.h.b16 %v3655
      %v3669 = vunpack.c.l.b16 %v3656
      %v3670 = vunpack.c.h.b16 %v3656
      %v3671 = vunpack.c.l.b16 %v3657
      %v3672 = vunpack.c.l.b16 %v3658
      %v3673 = vunpack.c.h.b16 %v3658
      %v3674 = vunpack.c.l.b16 %v3659
      %v3675 = vunpack.c.h.b16 %v3659
      %v3676 = vunpack.c.l.b16 %v3660
      %v3677 = vpack.c.b16 %v3672, %v3667
      %v3678 = vpack.c.b16 %v3673, %v3668
      %v3679 = vpack.c.b16 %v3674, %v3669
      %v3680 = vpack.c.b16 %v3675, %v3670
      %v3681 = vpack.c.b16 %v3676, %v3671
      %3682 = vrot.lane.b32.xlu0 %v3677, 124
      %v3683 = vpop.permute.xlu0 %3682
      %3684 = vrot.lane.b32.xlu0 %v3678, 124
      %v3685 = vpop.permute.xlu0 %3684
      %3686 = vrot.lane.b32.xlu0 %v3679, 124
      %v3687 = vpop.permute.xlu0 %3686
      %3688 = vrot.lane.b32.xlu0 %v3680, 124
      %v3689 = vpop.permute.xlu0 %3688
      %3690 = vrot.lane.b32.xlu0 %v3681, 124
      %v3691 = vpop.permute.xlu0 %3690
      %v3692 = vsel %vm777, %v3683, %v3685
      %v3693 = vsel %vm777, %v3685, %v3687
      %v3694 = vsel %vm777, %v3687, %v3689
      %v3695 = vsel %vm777, %v3689, %v3691
      %3700 = vst [vmem:[#allocation3 + $0x140] sm:$0xff] %v3692
      %3701 = vst [vmem:[#allocation3 + $0x148] sm:$0xff] %v3693
      %3702 = vst [vmem:[#allocation3 + $0x150] sm:$0xff] %v3694
      %3703 = vst [vmem:[#allocation3 + $0x158] sm:$0xff] %v3695
      %v3704 = vld [vmem:[%s246 + $0x24] sm:$0xff]
      %v3705 = vld [vmem:[%s246 + $0x2c] sm:$0xff]
      %v3706 = vld [vmem:[%s246 + $0x34] sm:$0xf]
      %v3707 = vld [vmem:[%s246 + $0x64] sm:$0xff]
      %v3708 = vld [vmem:[%s246 + $0x6c] sm:$0xff]
      %v3709 = vld [vmem:[%s246 + $0x74] sm:$0xf]
      %v3716 = vunpack.c.l.b16 %v3704
      %v3717 = vunpack.c.h.b16 %v3704
      %v3718 = vunpack.c.l.b16 %v3705
      %v3719 = vunpack.c.h.b16 %v3705
      %v3720 = vunpack.c.l.b16 %v3706
      %v3721 = vunpack.c.l.b16 %v3707
      %v3722 = vunpack.c.h.b16 %v3707
      %v3723 = vunpack.c.l.b16 %v3708
      %v3724 = vunpack.c.h.b16 %v3708
      %v3725 = vunpack.c.l.b16 %v3709
      %v3726 = vpack.c.b16 %v3721, %v3716
      %v3727 = vpack.c.b16 %v3722, %v3717
      %v3728 = vpack.c.b16 %v3723, %v3718
      %v3729 = vpack.c.b16 %v3724, %v3719
      %v3730 = vpack.c.b16 %v3725, %v3720
      %3731 = vrot.lane.b32.xlu0 %v3726, 114
      %v3732 = vpop.permute.xlu0 %3731
      %3733 = vrot.lane.b32.xlu0 %v3727, 114
      %v3734 = vpop.permute.xlu0 %3733
      %3735 = vrot.lane.b32.xlu0 %v3728, 114
      %v3736 = vpop.permute.xlu0 %3735
      %3737 = vrot.lane.b32.xlu0 %v3729, 114
      %v3738 = vpop.permute.xlu0 %3737
      %3739 = vrot.lane.b32.xlu0 %v3730, 114
      %v3740 = vpop.permute.xlu0 %3739
      %v3741 = vsel %vm867, %v3732, %v3734
      %v3742 = vsel %vm867, %v3734, %v3736
      %v3743 = vsel %vm867, %v3736, %v3738
      %v3744 = vsel %vm867, %v3738, %v3740
      %3749 = vst [vmem:[#allocation3 + $0x180] sm:$0xff] %v3741
      %3750 = vst [vmem:[#allocation3 + $0x188] sm:$0xff] %v3742
      %3751 = vst [vmem:[#allocation3 + $0x190] sm:$0xff] %v3743
      %3752 = vst [vmem:[#allocation3 + $0x198] sm:$0xff] %v3744
      %v3753 = vld [vmem:[%s246 + $0x24] sm:$0xff]
      %v3754 = vld [vmem:[%s246 + $0x2c] sm:$0xff]
      %v3755 = vld [vmem:[%s246 + $0x34] sm:$0xf]
      %v3756 = vld [vmem:[%s246 + $0x64] sm:$0xff]
      %v3757 = vld [vmem:[%s246 + $0x6c] sm:$0xff]
      %v3758 = vld [vmem:[%s246 + $0x74] sm:$0xf]
      %v3765 = vunpack.c.l.b16 %v3753
      %v3766 = vunpack.c.h.b16 %v3753
      %v3767 = vunpack.c.l.b16 %v3754
      %v3768 = vunpack.c.h.b16 %v3754
      %v3769 = vunpack.c.l.b16 %v3755
      %v3770 = vunpack.c.l.b16 %v3756
      %v3771 = vunpack.c.h.b16 %v3756
      %v3772 = vunpack.c.l.b16 %v3757
      %v3773 = vunpack.c.h.b16 %v3757
      %v3774 = vunpack.c.l.b16 %v3758
      %v3775 = vpack.c.b16 %v3770, %v3765
      %v3776 = vpack.c.b16 %v3771, %v3766
      %v3777 = vpack.c.b16 %v3772, %v3767
      %v3778 = vpack.c.b16 %v3773, %v3768
      %v3779 = vpack.c.b16 %v3774, %v3769
      %3780 = vrot.lane.b32.xlu0 %v3775, 113
      %v3781 = vpop.permute.xlu0 %3780
      %3782 = vrot.lane.b32.xlu0 %v3776, 113
      %v3783 = vpop.permute.xlu0 %3782
      %3784 = vrot.lane.b32.xlu0 %v3777, 113
      %v3785 = vpop.permute.xlu0 %3784
      %3786 = vrot.lane.b32.xlu0 %v3778, 113
      %v3787 = vpop.permute.xlu0 %3786
      %3788 = vrot.lane.b32.xlu0 %v3779, 113
      %v3789 = vpop.permute.xlu0 %3788
      %v3790 = vsel %vm957, %v3781, %v3783
      %v3791 = vsel %vm957, %v3783, %v3785
      %v3792 = vsel %vm957, %v3785, %v3787
      %v3793 = vsel %vm957, %v3787, %v3789
      %3798 = vst [vmem:[#allocation3 + $0x1c0] sm:$0xff] %v3790
      %3799 = vst [vmem:[#allocation3 + $0x1c8] sm:$0xff] %v3791
      %3800 = vst [vmem:[#allocation3 + $0x1d0] sm:$0xff] %v3792
      %3801 = vst [vmem:[#allocation3 + $0x1d8] sm:$0xff] %v3793
      %v3802 = vld [vmem:[%s246 + $0x24] sm:$0xff]
      %v3803 = vld [vmem:[%s246 + $0x2c] sm:$0xff]
      %v3804 = vld [vmem:[%s246 + $0x34] sm:$0xf]
      %v3805 = vld [vmem:[%s246 + $0x64] sm:$0xff]
      %v3806 = vld [vmem:[%s246 + $0x6c] sm:$0xff]
      %v3807 = vld [vmem:[%s246 + $0x74] sm:$0xf]
      %v3814 = vunpack.c.l.b16 %v3802
      %v3815 = vunpack.c.h.b16 %v3802
      %v3816 = vunpack.c.l.b16 %v3803
      %v3817 = vunpack.c.h.b16 %v3803
      %v3818 = vunpack.c.l.b16 %v3804
      %v3819 = vunpack.c.l.b16 %v3805
      %v3820 = vunpack.c.h.b16 %v3805
      %v3821 = vunpack.c.l.b16 %v3806
      %v3822 = vunpack.c.h.b16 %v3806
      %v3823 = vunpack.c.l.b16 %v3807
      %v3824 = vpack.c.b16 %v3819, %v3814
      %v3825 = vpack.c.b16 %v3820, %v3815
      %v3826 = vpack.c.b16 %v3821, %v3816
      %v3827 = vpack.c.b16 %v3822, %v3817
      %v3828 = vpack.c.b16 %v3823, %v3818
      %3829 = vrot.lane.b32.xlu0 %v3824, 112
      %v3830 = vpop.permute.xlu0 %3829
      %3831 = vrot.lane.b32.xlu0 %v3825, 112
      %v3832 = vpop.permute.xlu0 %3831
      %3833 = vrot.lane.b32.xlu0 %v3826, 112
      %v3834 = vpop.permute.xlu0 %3833
      %3835 = vrot.lane.b32.xlu0 %v3827, 112
      %v3836 = vpop.permute.xlu0 %3835
      %3837 = vrot.lane.b32.xlu0 %v3828, 112
      %v3838 = vpop.permute.xlu0 %3837
      %v3839 = vsel %vm1047, %v3830, %v3832
      %v3840 = vsel %vm1047, %v3832, %v3834
      %v3841 = vsel %vm1047, %v3834, %v3836
      %v3842 = vsel %vm1047, %v3836, %v3838
      %3847 = vst [vmem:[#allocation3 + $0x200] sm:$0xff] %v3839
      %3848 = vst [vmem:[#allocation3 + $0x208] sm:$0xff] %v3840
      %3849 = vst [vmem:[#allocation3 + $0x210] sm:$0xff] %v3841
      %3850 = vst [vmem:[#allocation3 + $0x218] sm:$0xff] %v3842
      %v3851 = vld [vmem:[%s246 + $0x28] sm:$0xff]
      %v3852 = vld [vmem:[%s246 + $0x30] sm:$0xff]
      %v3853 = vld [vmem:[%s246 + $0x38] sm:$0xf]
      %v3854 = vld [vmem:[%s246 + $0x68] sm:$0xff]
      %v3855 = vld [vmem:[%s246 + $0x70] sm:$0xff]
      %v3856 = vld [vmem:[%s246 + $0x78] sm:$0xf]
      %v3863 = vunpack.c.l.b16 %v3851
      %v3864 = vunpack.c.h.b16 %v3851
      %v3865 = vunpack.c.l.b16 %v3852
      %v3866 = vunpack.c.h.b16 %v3852
      %v3867 = vunpack.c.l.b16 %v3853
      %v3868 = vunpack.c.l.b16 %v3854
      %v3869 = vunpack.c.h.b16 %v3854
      %v3870 = vunpack.c.l.b16 %v3855
      %v3871 = vunpack.c.h.b16 %v3855
      %v3872 = vunpack.c.l.b16 %v3856
      %v3873 = vpack.c.b16 %v3868, %v3863
      %v3874 = vpack.c.b16 %v3869, %v3864
      %v3875 = vpack.c.b16 %v3870, %v3865
      %v3876 = vpack.c.b16 %v3871, %v3866
      %v3877 = vpack.c.b16 %v3872, %v3867
      %3878 = vrot.lane.b32.xlu0 %v3873, 122
      %v3879 = vpop.permute.xlu0 %3878
      %3880 = vrot.lane.b32.xlu0 %v3874, 122
      %v3881 = vpop.permute.xlu0 %3880
      %3882 = vrot.lane.b32.xlu0 %v3875, 122
      %v3883 = vpop.permute.xlu0 %3882
      %3884 = vrot.lane.b32.xlu0 %v3876, 122
      %v3885 = vpop.permute.xlu0 %3884
      %3886 = vrot.lane.b32.xlu0 %v3877, 122
      %v3887 = vpop.permute.xlu0 %3886
      %v3888 = vsel %vm1137, %v3879, %v3881
      %v3889 = vsel %vm1137, %v3881, %v3883
      %v3890 = vsel %vm1137, %v3883, %v3885
      %v3891 = vsel %vm1137, %v3885, %v3887
      %3896 = vst [vmem:[#allocation3 + $0x240] sm:$0xff] %v3888
      %3897 = vst [vmem:[#allocation3 + $0x248] sm:$0xff] %v3889
      %3898 = vst [vmem:[#allocation3 + $0x250] sm:$0xff] %v3890
      %3899 = vst [vmem:[#allocation3 + $0x258] sm:$0xff] %v3891
      %v3900 = vld [vmem:[%s246 + $0x28] sm:$0xff]
      %v3901 = vld [vmem:[%s246 + $0x30] sm:$0xff]
      %v3902 = vld [vmem:[%s246 + $0x38] sm:$0xf]
      %v3903 = vld [vmem:[%s246 + $0x68] sm:$0xff]
      %v3904 = vld [vmem:[%s246 + $0x70] sm:$0xff]
      %v3905 = vld [vmem:[%s246 + $0x78] sm:$0xf]
      %v3912 = vunpack.c.l.b16 %v3900
      %v3913 = vunpack.c.h.b16 %v3900
      %v3914 = vunpack.c.l.b16 %v3901
      %v3915 = vunpack.c.h.b16 %v3901
      %v3916 = vunpack.c.l.b16 %v3902
      %v3917 = vunpack.c.l.b16 %v3903
      %v3918 = vunpack.c.h.b16 %v3903
      %v3919 = vunpack.c.l.b16 %v3904
      %v3920 = vunpack.c.h.b16 %v3904
      %v3921 = vunpack.c.l.b16 %v3905
      %v3922 = vpack.c.b16 %v3917, %v3912
      %v3923 = vpack.c.b16 %v3918, %v3913
      %v3924 = vpack.c.b16 %v3919, %v3914
      %v3925 = vpack.c.b16 %v3920, %v3915
      %v3926 = vpack.c.b16 %v3921, %v3916
      %3927 = vrot.lane.b32.xlu0 %v3922, 121
      %v3928 = vpop.permute.xlu0 %3927
      %3929 = vrot.lane.b32.xlu0 %v3923, 121
      %v3930 = vpop.permute.xlu0 %3929
      %3931 = vrot.lane.b32.xlu0 %v3924, 121
      %v3932 = vpop.permute.xlu0 %3931
      %3933 = vrot.lane.b32.xlu0 %v3925, 121
      %v3934 = vpop.permute.xlu0 %3933
      %3935 = vrot.lane.b32.xlu0 %v3926, 121
      %v3936 = vpop.permute.xlu0 %3935
      %v3937 = vsel %vm1227, %v3928, %v3930
      %v3938 = vsel %vm1227, %v3930, %v3932
      %v3939 = vsel %vm1227, %v3932, %v3934
      %v3940 = vsel %vm1227, %v3934, %v3936
      %3945 = vst [vmem:[#allocation3 + $0x280] sm:$0xff] %v3937
      %3946 = vst [vmem:[#allocation3 + $0x288] sm:$0xff] %v3938
      %3947 = vst [vmem:[#allocation3 + $0x290] sm:$0xff] %v3939
      %3948 = vst [vmem:[#allocation3 + $0x298] sm:$0xff] %v3940
      %v3949 = vld [vmem:[%s246 + $0x28] sm:$0xff]
      %v3950 = vld [vmem:[%s246 + $0x30] sm:$0xff]
      %v3951 = vld [vmem:[%s246 + $0x38] sm:$0xf]
      %v3952 = vld [vmem:[%s246 + $0x68] sm:$0xff]
      %v3953 = vld [vmem:[%s246 + $0x70] sm:$0xff]
      %v3954 = vld [vmem:[%s246 + $0x78] sm:$0xf]
      %v3961 = vunpack.c.l.b16 %v3949
      %v3962 = vunpack.c.h.b16 %v3949
      %v3963 = vunpack.c.l.b16 %v3950
      %v3964 = vunpack.c.h.b16 %v3950
      %v3965 = vunpack.c.l.b16 %v3951
      %v3966 = vunpack.c.l.b16 %v3952
      %v3967 = vunpack.c.h.b16 %v3952
      %v3968 = vunpack.c.l.b16 %v3953
      %v3969 = vunpack.c.h.b16 %v3953
      %v3970 = vunpack.c.l.b16 %v3954
      %v3971 = vpack.c.b16 %v3966, %v3961
      %v3972 = vpack.c.b16 %v3967, %v3962
      %v3973 = vpack.c.b16 %v3968, %v3963
      %v3974 = vpack.c.b16 %v3969, %v3964
      %v3975 = vpack.c.b16 %v3970, %v3965
      %3976 = vrot.lane.b32.xlu0 %v3971, 120
      %v3977 = vpop.permute.xlu0 %3976
      %3978 = vrot.lane.b32.xlu0 %v3972, 120
      %v3979 = vpop.permute.xlu0 %3978
      %3980 = vrot.lane.b32.xlu0 %v3973, 120
      %v3981 = vpop.permute.xlu0 %3980
      %3982 = vrot.lane.b32.xlu0 %v3974, 120
      %v3983 = vpop.permute.xlu0 %3982
      %3984 = vrot.lane.b32.xlu0 %v3975, 120
      %v3985 = vpop.permute.xlu0 %3984
      %v3986 = vsel %vm1317, %v3977, %v3979
      %v3987 = vsel %vm1317, %v3979, %v3981
      %v3988 = vsel %vm1317, %v3981, %v3983
      %v3989 = vsel %vm1317, %v3983, %v3985
      %3994 = vst [vmem:[#allocation3 + $0x2c0] sm:$0xff] %v3986
      %3995 = vst [vmem:[#allocation3 + $0x2c8] sm:$0xff] %v3987
      %3996 = vst [vmem:[#allocation3 + $0x2d0] sm:$0xff] %v3988
      %3997 = vst [vmem:[#allocation3 + $0x2d8] sm:$0xff] %v3989
      %v3998 = vld [vmem:[%s246 + $0x28] sm:$0xff]
      %v3999 = vld [vmem:[%s246 + $0x30] sm:$0xff]
      %v4000 = vld [vmem:[%s246 + $0x38] sm:$0xf]
      %v4001 = vld [vmem:[%s246 + $0x68] sm:$0xff]
      %v4002 = vld [vmem:[%s246 + $0x70] sm:$0xff]
      %v4003 = vld [vmem:[%s246 + $0x78] sm:$0xf]
      %v4010 = vunpack.c.l.b16 %v3998
      %v4011 = vunpack.c.h.b16 %v3998
      %v4012 = vunpack.c.l.b16 %v3999
      %v4013 = vunpack.c.h.b16 %v3999
      %v4014 = vunpack.c.l.b16 %v4000
      %v4015 = vunpack.c.l.b16 %v4001
      %v4016 = vunpack.c.h.b16 %v4001
      %v4017 = vunpack.c.l.b16 %v4002
      %v4018 = vunpack.c.h.b16 %v4002
      %v4019 = vunpack.c.l.b16 %v4003
      %v4020 = vpack.c.b16 %v4015, %v4010
      %v4021 = vpack.c.b16 %v4016, %v4011
      %v4022 = vpack.c.b16 %v4017, %v4012
      %v4023 = vpack.c.b16 %v4018, %v4013
      %v4024 = vpack.c.b16 %v4019, %v4014
      %4025 = vrot.lane.b32.xlu0 %v4020, 110
      %v4026 = vpop.permute.xlu0 %4025
      %4027 = vrot.lane.b32.xlu0 %v4021, 110
      %v4028 = vpop.permute.xlu0 %4027
      %4029 = vrot.lane.b32.xlu0 %v4022, 110
      %v4030 = vpop.permute.xlu0 %4029
      %4031 = vrot.lane.b32.xlu0 %v4023, 110
      %v4032 = vpop.permute.xlu0 %4031
      %4033 = vrot.lane.b32.xlu0 %v4024, 110
      %v4034 = vpop.permute.xlu0 %4033
      %v4035 = vsel %vm1407, %v4026, %v4028
      %v4036 = vsel %vm1407, %v4028, %v4030
      %v4037 = vsel %vm1407, %v4030, %v4032
      %v4038 = vsel %vm1407, %v4032, %v4034
      %4043 = vst [vmem:[#allocation3 + $0x300] sm:$0xff] %v4035
      %4044 = vst [vmem:[#allocation3 + $0x308] sm:$0xff] %v4036
      %4045 = vst [vmem:[#allocation3 + $0x310] sm:$0xff] %v4037
      %4046 = vst [vmem:[#allocation3 + $0x318] sm:$0xff] %v4038
      %v4047 = vld [vmem:[%s246 + $0x28] sm:$0xff]
      %v4048 = vld [vmem:[%s246 + $0x30] sm:$0xff]
      %v4049 = vld [vmem:[%s246 + $0x38] sm:$0xf]
      %v4050 = vld [vmem:[%s246 + $0x68] sm:$0xff]
      %v4051 = vld [vmem:[%s246 + $0x70] sm:$0xff]
      %v4052 = vld [vmem:[%s246 + $0x78] sm:$0xf]
      %v4059 = vunpack.c.l.b16 %v4047
      %v4060 = vunpack.c.h.b16 %v4047
      %v4061 = vunpack.c.l.b16 %v4048
      %v4062 = vunpack.c.h.b16 %v4048
      %v4063 = vunpack.c.l.b16 %v4049
      %v4064 = vunpack.c.l.b16 %v4050
      %v4065 = vunpack.c.h.b16 %v4050
      %v4066 = vunpack.c.l.b16 %v4051
      %v4067 = vunpack.c.h.b16 %v4051
      %v4068 = vunpack.c.l.b16 %v4052
      %v4069 = vpack.c.b16 %v4064, %v4059
      %v4070 = vpack.c.b16 %v4065, %v4060
      %v4071 = vpack.c.b16 %v4066, %v4061
      %v4072 = vpack.c.b16 %v4067, %v4062
      %v4073 = vpack.c.b16 %v4068, %v4063
      %4074 = vrot.lane.b32.xlu0 %v4069, 109
      %v4075 = vpop.permute.xlu0 %4074
      %4076 = vrot.lane.b32.xlu0 %v4070, 109
      %v4077 = vpop.permute.xlu0 %4076
      %4078 = vrot.lane.b32.xlu0 %v4071, 109
      %v4079 = vpop.permute.xlu0 %4078
      %4080 = vrot.lane.b32.xlu0 %v4072, 109
      %v4081 = vpop.permute.xlu0 %4080
      %4082 = vrot.lane.b32.xlu0 %v4073, 109
      %v4083 = vpop.permute.xlu0 %4082
      %v4084 = vsel %vm1497, %v4075, %v4077
      %v4085 = vsel %vm1497, %v4077, %v4079
      %v4086 = vsel %vm1497, %v4079, %v4081
      %v4087 = vsel %vm1497, %v4081, %v4083
      %4092 = vst [vmem:[#allocation3 + $0x340] sm:$0xff] %v4084
      %4093 = vst [vmem:[#allocation3 + $0x348] sm:$0xff] %v4085
      %4094 = vst [vmem:[#allocation3 + $0x350] sm:$0xff] %v4086
      %4095 = vst [vmem:[#allocation3 + $0x358] sm:$0xff] %v4087
      %v4096 = vld [vmem:[%s246 + $0x28] sm:$0xff]
      %v4097 = vld [vmem:[%s246 + $0x30] sm:$0xff]
      %v4098 = vld [vmem:[%s246 + $0x38] sm:$0xf]
      %v4099 = vld [vmem:[%s246 + $0x68] sm:$0xff]
      %v4100 = vld [vmem:[%s246 + $0x70] sm:$0xff]
      %v4101 = vld [vmem:[%s246 + $0x78] sm:$0xf]
      %v4108 = vunpack.c.l.b16 %v4096
      %v4109 = vunpack.c.h.b16 %v4096
      %v4110 = vunpack.c.l.b16 %v4097
      %v4111 = vunpack.c.h.b16 %v4097
      %v4112 = vunpack.c.l.b16 %v4098
      %v4113 = vunpack.c.l.b16 %v4099
      %v4114 = vunpack.c.h.b16 %v4099
      %v4115 = vunpack.c.l.b16 %v4100
      %v4116 = vunpack.c.h.b16 %v4100
      %v4117 = vunpack.c.l.b16 %v4101
      %v4118 = vpack.c.b16 %v4113, %v4108
      %v4119 = vpack.c.b16 %v4114, %v4109
      %v4120 = vpack.c.b16 %v4115, %v4110
      %v4121 = vpack.c.b16 %v4116, %v4111
      %v4122 = vpack.c.b16 %v4117, %v4112
      %4123 = vrot.lane.b32.xlu0 %v4118, 108
      %v4124 = vpop.permute.xlu0 %4123
      %4125 = vrot.lane.b32.xlu0 %v4119, 108
      %v4126 = vpop.permute.xlu0 %4125
      %4127 = vrot.lane.b32.xlu0 %v4120, 108
      %v4128 = vpop.permute.xlu0 %4127
      %4129 = vrot.lane.b32.xlu0 %v4121, 108
      %v4130 = vpop.permute.xlu0 %4129
      %4131 = vrot.lane.b32.xlu0 %v4122, 108
      %v4132 = vpop.permute.xlu0 %4131
      %v4133 = vsel %vm1587, %v4124, %v4126
      %v4134 = vsel %vm1587, %v4126, %v4128
      %v4135 = vsel %vm1587, %v4128, %v4130
      %v4136 = vsel %vm1587, %v4130, %v4132
      %4141 = vst [vmem:[#allocation3 + $0x380] sm:$0xff] %v4133
      %4142 = vst [vmem:[#allocation3 + $0x388] sm:$0xff] %v4134
      %4143 = vst [vmem:[#allocation3 + $0x390] sm:$0xff] %v4135
      %4144 = vst [vmem:[#allocation3 + $0x398] sm:$0xff] %v4136
      %v4145 = vld [vmem:[%s246 + $0x28] sm:$0xff]
      %v4146 = vld [vmem:[%s246 + $0x30] sm:$0xff]
      %v4147 = vld [vmem:[%s246 + $0x38] sm:$0xf]
      %v4148 = vld [vmem:[%s246 + $0x68] sm:$0xff]
      %v4149 = vld [vmem:[%s246 + $0x70] sm:$0xff]
      %v4150 = vld [vmem:[%s246 + $0x78] sm:$0xf]
      %v4157 = vunpack.c.l.b16 %v4145
      %v4158 = vunpack.c.h.b16 %v4145
      %v4159 = vunpack.c.l.b16 %v4146
      %v4160 = vunpack.c.h.b16 %v4146
      %v4161 = vunpack.c.l.b16 %v4147
      %v4162 = vunpack.c.l.b16 %v4148
      %v4163 = vunpack.c.h.b16 %v4148
      %v4164 = vunpack.c.l.b16 %v4149
      %v4165 = vunpack.c.h.b16 %v4149
      %v4166 = vunpack.c.l.b16 %v4150
      %v4167 = vpack.c.b16 %v4162, %v4157
      %v4168 = vpack.c.b16 %v4163, %v4158
      %v4169 = vpack.c.b16 %v4164, %v4159
      %v4170 = vpack.c.b16 %v4165, %v4160
      %v4171 = vpack.c.b16 %v4166, %v4161
      %4172 = vrot.lane.b32.xlu0 %v4167, 98
      %v4173 = vpop.permute.xlu0 %4172
      %4174 = vrot.lane.b32.xlu0 %v4168, 98
      %v4175 = vpop.permute.xlu0 %4174
      %4176 = vrot.lane.b32.xlu0 %v4169, 98
      %v4177 = vpop.permute.xlu0 %4176
      %4178 = vrot.lane.b32.xlu0 %v4170, 98
      %v4179 = vpop.permute.xlu0 %4178
      %4180 = vrot.lane.b32.xlu0 %v4171, 98
      %v4181 = vpop.permute.xlu0 %4180
      %v4182 = vsel %vm1677, %v4173, %v4175
      %v4183 = vsel %vm1677, %v4175, %v4177
      %v4184 = vsel %vm1677, %v4177, %v4179
      %v4185 = vsel %vm1677, %v4179, %v4181
      %4190 = vst [vmem:[#allocation3 + $0x3c0] sm:$0xff] %v4182
      %4191 = vst [vmem:[#allocation3 + $0x3c8] sm:$0xff] %v4183
      %4192 = vst [vmem:[#allocation3 + $0x3d0] sm:$0xff] %v4184
      %4193 = vst [vmem:[#allocation3 + $0x3d8] sm:$0xff] %v4185
      %v4194 = vld [vmem:[%s246 + $0x28] sm:$0xff]
      %v4195 = vld [vmem:[%s246 + $0x30] sm:$0xff]
      %v4196 = vld [vmem:[%s246 + $0x38] sm:$0xf]
      %v4197 = vld [vmem:[%s246 + $0x68] sm:$0xff]
      %v4198 = vld [vmem:[%s246 + $0x70] sm:$0xff]
      %v4199 = vld [vmem:[%s246 + $0x78] sm:$0xf]
      %v4206 = vunpack.c.l.b16 %v4194
      %v4207 = vunpack.c.h.b16 %v4194
      %v4208 = vunpack.c.l.b16 %v4195
      %v4209 = vunpack.c.h.b16 %v4195
      %v4210 = vunpack.c.l.b16 %v4196
      %v4211 = vunpack.c.l.b16 %v4197
      %v4212 = vunpack.c.h.b16 %v4197
      %v4213 = vunpack.c.l.b16 %v4198
      %v4214 = vunpack.c.h.b16 %v4198
      %v4215 = vunpack.c.l.b16 %v4199
      %v4216 = vpack.c.b16 %v4211, %v4206
      %v4217 = vpack.c.b16 %v4212, %v4207
      %v4218 = vpack.c.b16 %v4213, %v4208
      %v4219 = vpack.c.b16 %v4214, %v4209
      %v4220 = vpack.c.b16 %v4215, %v4210
      %4221 = vrot.lane.b32.xlu0 %v4216, 97
      %v4222 = vpop.permute.xlu0 %4221
      %4223 = vrot.lane.b32.xlu0 %v4217, 97
      %v4224 = vpop.permute.xlu0 %4223
      %4225 = vrot.lane.b32.xlu0 %v4218, 97
      %v4226 = vpop.permute.xlu0 %4225
      %4227 = vrot.lane.b32.xlu0 %v4219, 97
      %v4228 = vpop.permute.xlu0 %4227
      %4229 = vrot.lane.b32.xlu0 %v4220, 97
      %v4230 = vpop.permute.xlu0 %4229
      %v4231 = vsel %vm1767, %v4222, %v4224
      %v4232 = vsel %vm1767, %v4224, %v4226
      %v4233 = vsel %vm1767, %v4226, %v4228
      %v4234 = vsel %vm1767, %v4228, %v4230
      %4239 = vst [vmem:[#allocation3 + $0x400] sm:$0xff] %v4231
      %4240 = vst [vmem:[#allocation3 + $0x408] sm:$0xff] %v4232
      %4241 = vst [vmem:[#allocation3 + $0x410] sm:$0xff] %v4233
      %4242 = vst [vmem:[#allocation3 + $0x418] sm:$0xff] %v4234
      %v4243 = vld [vmem:[%s246 + $0x28] sm:$0xff]
      %v4244 = vld [vmem:[%s246 + $0x30] sm:$0xff]
      %v4245 = vld [vmem:[%s246 + $0x38] sm:$0xf]
      %v4246 = vld [vmem:[%s246 + $0x68] sm:$0xff]
      %v4247 = vld [vmem:[%s246 + $0x70] sm:$0xff]
      %v4248 = vld [vmem:[%s246 + $0x78] sm:$0xf]
      %v4255 = vunpack.c.l.b16 %v4243
      %v4256 = vunpack.c.h.b16 %v4243
      %v4257 = vunpack.c.l.b16 %v4244
      %v4258 = vunpack.c.h.b16 %v4244
      %v4259 = vunpack.c.l.b16 %v4245
      %v4260 = vunpack.c.l.b16 %v4246
      %v4261 = vunpack.c.h.b16 %v4246
      %v4262 = vunpack.c.l.b16 %v4247
      %v4263 = vunpack.c.h.b16 %v4247
      %v4264 = vunpack.c.l.b16 %v4248
      %v4265 = vpack.c.b16 %v4260, %v4255
      %v4266 = vpack.c.b16 %v4261, %v4256
      %v4267 = vpack.c.b16 %v4262, %v4257
      %v4268 = vpack.c.b16 %v4263, %v4258
      %v4269 = vpack.c.b16 %v4264, %v4259
      %4270 = vrot.lane.b32.xlu0 %v4265, 96
      %v4271 = vpop.permute.xlu0 %4270
      %4272 = vrot.lane.b32.xlu0 %v4266, 96
      %v4273 = vpop.permute.xlu0 %4272
      %4274 = vrot.lane.b32.xlu0 %v4267, 96
      %v4275 = vpop.permute.xlu0 %4274
      %4276 = vrot.lane.b32.xlu0 %v4268, 96
      %v4277 = vpop.permute.xlu0 %4276
      %4278 = vrot.lane.b32.xlu0 %v4269, 96
      %v4279 = vpop.permute.xlu0 %4278
      %v4280 = vsel %vm1857, %v4271, %v4273
      %v4281 = vsel %vm1857, %v4273, %v4275
      %v4282 = vsel %vm1857, %v4275, %v4277
      %v4283 = vsel %vm1857, %v4277, %v4279
      %4288 = vst [vmem:[#allocation3 + $0x440] sm:$0xff] %v4280
      %4289 = vst [vmem:[#allocation3 + $0x448] sm:$0xff] %v4281
      %4290 = vst [vmem:[#allocation3 + $0x450] sm:$0xff] %v4282
      %4291 = vst [vmem:[#allocation3 + $0x458] sm:$0xff] %v4283
      %v4292 = vld [vmem:[%s246 + $0x2c] sm:$0xff]
      %v4293 = vld [vmem:[%s246 + $0x34] sm:$0xff]
      %v4294 = vld [vmem:[%s246 + $0x3c] sm:$0xf]
      %v4295 = vld [vmem:[%s246 + $0x6c] sm:$0xff]
      %v4296 = vld [vmem:[%s246 + $0x74] sm:$0xff]
      %v4297 = vld [vmem:[%s246 + $0x7c] sm:$0xf]
      %v4304 = vunpack.c.l.b16 %v4292
      %v4305 = vunpack.c.h.b16 %v4292
      %v4306 = vunpack.c.l.b16 %v4293
      %v4307 = vunpack.c.h.b16 %v4293
      %v4308 = vunpack.c.l.b16 %v4294
      %v4309 = vunpack.c.l.b16 %v4295
      %v4310 = vunpack.c.h.b16 %v4295
      %v4311 = vunpack.c.l.b16 %v4296
      %v4312 = vunpack.c.h.b16 %v4296
      %v4313 = vunpack.c.l.b16 %v4297
      %v4314 = vpack.c.b16 %v4309, %v4304
      %v4315 = vpack.c.b16 %v4310, %v4305
      %v4316 = vpack.c.b16 %v4311, %v4306
      %v4317 = vpack.c.b16 %v4312, %v4307
      %v4318 = vpack.c.b16 %v4313, %v4308
      %4319 = vrot.lane.b32.xlu0 %v4314, 106
      %v4320 = vpop.permute.xlu0 %4319
      %4321 = vrot.lane.b32.xlu0 %v4315, 106
      %v4322 = vpop.permute.xlu0 %4321
      %4323 = vrot.lane.b32.xlu0 %v4316, 106
      %v4324 = vpop.permute.xlu0 %4323
      %4325 = vrot.lane.b32.xlu0 %v4317, 106
      %v4326 = vpop.permute.xlu0 %4325
      %4327 = vrot.lane.b32.xlu0 %v4318, 106
      %v4328 = vpop.permute.xlu0 %4327
      %v4329 = vsel %vm1947, %v4320, %v4322
      %v4330 = vsel %vm1947, %v4322, %v4324
      %v4331 = vsel %vm1947, %v4324, %v4326
      %v4332 = vsel %vm1947, %v4326, %v4328
      %4337 = vst [vmem:[#allocation3 + $0x480] sm:$0xff] %v4329
      %4338 = vst [vmem:[#allocation3 + $0x488] sm:$0xff] %v4330
      %4339 = vst [vmem:[#allocation3 + $0x490] sm:$0xff] %v4331
      %4340 = vst [vmem:[#allocation3 + $0x498] sm:$0xff] %v4332
      %v4341 = vld [vmem:[%s246 + $0x2c] sm:$0xff]
      %v4342 = vld [vmem:[%s246 + $0x34] sm:$0xff]
      %v4343 = vld [vmem:[%s246 + $0x3c] sm:$0xf]
      %v4344 = vld [vmem:[%s246 + $0x6c] sm:$0xff]
      %v4345 = vld [vmem:[%s246 + $0x74] sm:$0xff]
      %v4346 = vld [vmem:[%s246 + $0x7c] sm:$0xf]
      %v4353 = vunpack.c.l.b16 %v4341
      %v4354 = vunpack.c.h.b16 %v4341
      %v4355 = vunpack.c.l.b16 %v4342
      %v4356 = vunpack.c.h.b16 %v4342
      %v4357 = vunpack.c.l.b16 %v4343
      %v4358 = vunpack.c.l.b16 %v4344
      %v4359 = vunpack.c.h.b16 %v4344
      %v4360 = vunpack.c.l.b16 %v4345
      %v4361 = vunpack.c.h.b16 %v4345
      %v4362 = vunpack.c.l.b16 %v4346
      %v4363 = vpack.c.b16 %v4358, %v4353
      %v4364 = vpack.c.b16 %v4359, %v4354
      %v4365 = vpack.c.b16 %v4360, %v4355
      %v4366 = vpack.c.b16 %v4361, %v4356
      %v4367 = vpack.c.b16 %v4362, %v4357
      %4368 = vrot.lane.b32.xlu0 %v4363, 105
      %v4369 = vpop.permute.xlu0 %4368
      %4370 = vrot.lane.b32.xlu0 %v4364, 105
      %v4371 = vpop.permute.xlu0 %4370
      %4372 = vrot.lane.b32.xlu0 %v4365, 105
      %v4373 = vpop.permute.xlu0 %4372
      %4374 = vrot.lane.b32.xlu0 %v4366, 105
      %v4375 = vpop.permute.xlu0 %4374
      %4376 = vrot.lane.b32.xlu0 %v4367, 105
      %v4377 = vpop.permute.xlu0 %4376
      %v4378 = vsel %vm2037, %v4369, %v4371
      %v4379 = vsel %vm2037, %v4371, %v4373
      %v4380 = vsel %vm2037, %v4373, %v4375
      %v4381 = vsel %vm2037, %v4375, %v4377
      %4386 = vst [vmem:[#allocation3 + $0x4c0] sm:$0xff] %v4378
      %4387 = vst [vmem:[#allocation3 + $0x4c8] sm:$0xff] %v4379
      %4388 = vst [vmem:[#allocation3 + $0x4d0] sm:$0xff] %v4380
      %4389 = vst [vmem:[#allocation3 + $0x4d8] sm:$0xff] %v4381
      %v4390 = vld [vmem:[%s246 + $0x2c] sm:$0xff]
      %v4391 = vld [vmem:[%s246 + $0x34] sm:$0xff]
      %v4392 = vld [vmem:[%s246 + $0x3c] sm:$0xf]
      %v4393 = vld [vmem:[%s246 + $0x6c] sm:$0xff]
      %v4394 = vld [vmem:[%s246 + $0x74] sm:$0xff]
      %v4395 = vld [vmem:[%s246 + $0x7c] sm:$0xf]
      %v4402 = vunpack.c.l.b16 %v4390
      %v4403 = vunpack.c.h.b16 %v4390
      %v4404 = vunpack.c.l.b16 %v4391
      %v4405 = vunpack.c.h.b16 %v4391
      %v4406 = vunpack.c.l.b16 %v4392
      %v4407 = vunpack.c.l.b16 %v4393
      %v4408 = vunpack.c.h.b16 %v4393
      %v4409 = vunpack.c.l.b16 %v4394
      %v4410 = vunpack.c.h.b16 %v4394
      %v4411 = vunpack.c.l.b16 %v4395
      %v4412 = vpack.c.b16 %v4407, %v4402
      %v4413 = vpack.c.b16 %v4408, %v4403
      %v4414 = vpack.c.b16 %v4409, %v4404
      %v4415 = vpack.c.b16 %v4410, %v4405
      %v4416 = vpack.c.b16 %v4411, %v4406
      %4417 = vrot.lane.b32.xlu0 %v4412, 104
      %v4418 = vpop.permute.xlu0 %4417
      %4419 = vrot.lane.b32.xlu0 %v4413, 104
      %v4420 = vpop.permute.xlu0 %4419
      %4421 = vrot.lane.b32.xlu0 %v4414, 104
      %v4422 = vpop.permute.xlu0 %4421
      %4423 = vrot.lane.b32.xlu0 %v4415, 104
      %v4424 = vpop.permute.xlu0 %4423
      %4425 = vrot.lane.b32.xlu0 %v4416, 104
      %v4426 = vpop.permute.xlu0 %4425
      %v4427 = vsel %vm2127, %v4418, %v4420
      %v4428 = vsel %vm2127, %v4420, %v4422
      %v4429 = vsel %vm2127, %v4422, %v4424
      %v4430 = vsel %vm2127, %v4424, %v4426
      %4435 = vst [vmem:[#allocation3 + $0x500] sm:$0xff] %v4427
      %4436 = vst [vmem:[#allocation3 + $0x508] sm:$0xff] %v4428
      %4437 = vst [vmem:[#allocation3 + $0x510] sm:$0xff] %v4429
      %4438 = vst [vmem:[#allocation3 + $0x518] sm:$0xff] %v4430
      %v4439 = vld [vmem:[%s246 + $0x2c] sm:$0xff]
      %v4440 = vld [vmem:[%s246 + $0x34] sm:$0xff]
      %v4441 = vld [vmem:[%s246 + $0x3c] sm:$0xf]
      %v4442 = vld [vmem:[%s246 + $0x6c] sm:$0xff]
      %v4443 = vld [vmem:[%s246 + $0x74] sm:$0xff]
      %v4444 = vld [vmem:[%s246 + $0x7c] sm:$0xf]
      %v4451 = vunpack.c.l.b16 %v4439
      %v4452 = vunpack.c.h.b16 %v4439
      %v4453 = vunpack.c.l.b16 %v4440
      %v4454 = vunpack.c.h.b16 %v4440
      %v4455 = vunpack.c.l.b16 %v4441
      %v4456 = vunpack.c.l.b16 %v4442
      %v4457 = vunpack.c.h.b16 %v4442
      %v4458 = vunpack.c.l.b16 %v4443
      %v4459 = vunpack.c.h.b16 %v4443
      %v4460 = vunpack.c.l.b16 %v4444
      %v4461 = vpack.c.b16 %v4456, %v4451
      %v4462 = vpack.c.b16 %v4457, %v4452
      %v4463 = vpack.c.b16 %v4458, %v4453
      %v4464 = vpack.c.b16 %v4459, %v4454
      %v4465 = vpack.c.b16 %v4460, %v4455
      %4466 = vrot.lane.b32.xlu0 %v4461, 94
      %v4467 = vpop.permute.xlu0 %4466
      %4468 = vrot.lane.b32.xlu0 %v4462, 94
      %v4469 = vpop.permute.xlu0 %4468
      %4470 = vrot.lane.b32.xlu0 %v4463, 94
      %v4471 = vpop.permute.xlu0 %4470
      %4472 = vrot.lane.b32.xlu0 %v4464, 94
      %v4473 = vpop.permute.xlu0 %4472
      %4474 = vrot.lane.b32.xlu0 %v4465, 94
      %v4475 = vpop.permute.xlu0 %4474
      %v4476 = vsel %vm2217, %v4467, %v4469
      %v4477 = vsel %vm2217, %v4469, %v4471
      %v4478 = vsel %vm2217, %v4471, %v4473
      %v4479 = vsel %vm2217, %v4473, %v4475
      %4484 = vst [vmem:[#allocation3 + $0x540] sm:$0xff] %v4476
      %4485 = vst [vmem:[#allocation3 + $0x548] sm:$0xff] %v4477
      %4486 = vst [vmem:[#allocation3 + $0x550] sm:$0xff] %v4478
      %4487 = vst [vmem:[#allocation3 + $0x558] sm:$0xff] %v4479
      %v4488 = vld [vmem:[%s246 + $0x2c] sm:$0xff]
      %v4489 = vld [vmem:[%s246 + $0x34] sm:$0xff]
      %v4490 = vld [vmem:[%s246 + $0x3c] sm:$0xf]
      %v4491 = vld [vmem:[%s246 + $0x6c] sm:$0xff]
      %v4492 = vld [vmem:[%s246 + $0x74] sm:$0xff]
      %v4493 = vld [vmem:[%s246 + $0x7c] sm:$0xf]
      %v4500 = vunpack.c.l.b16 %v4488
      %v4501 = vunpack.c.h.b16 %v4488
      %v4502 = vunpack.c.l.b16 %v4489
      %v4503 = vunpack.c.h.b16 %v4489
      %v4504 = vunpack.c.l.b16 %v4490
      %v4505 = vunpack.c.l.b16 %v4491
      %v4506 = vunpack.c.h.b16 %v4491
      %v4507 = vunpack.c.l.b16 %v4492
      %v4508 = vunpack.c.h.b16 %v4492
      %v4509 = vunpack.c.l.b16 %v4493
      %v4510 = vpack.c.b16 %v4505, %v4500
      %v4511 = vpack.c.b16 %v4506, %v4501
      %v4512 = vpack.c.b16 %v4507, %v4502
      %v4513 = vpack.c.b16 %v4508, %v4503
      %v4514 = vpack.c.b16 %v4509, %v4504
      %4515 = vrot.lane.b32.xlu0 %v4510, 93
      %v4516 = vpop.permute.xlu0 %4515
      %4517 = vrot.lane.b32.xlu0 %v4511, 93
      %v4518 = vpop.permute.xlu0 %4517
      %4519 = vrot.lane.b32.xlu0 %v4512, 93
      %v4520 = vpop.permute.xlu0 %4519
      %4521 = vrot.lane.b32.xlu0 %v4513, 93
      %v4522 = vpop.permute.xlu0 %4521
      %4523 = vrot.lane.b32.xlu0 %v4514, 93
      %v4524 = vpop.permute.xlu0 %4523
      %v4525 = vsel %vm2307, %v4516, %v4518
      %v4526 = vsel %vm2307, %v4518, %v4520
      %v4527 = vsel %vm2307, %v4520, %v4522
      %v4528 = vsel %vm2307, %v4522, %v4524
      %4533 = vst [vmem:[#allocation3 + $0x580] sm:$0xff] %v4525
      %4534 = vst [vmem:[#allocation3 + $0x588] sm:$0xff] %v4526
      %4535 = vst [vmem:[#allocation3 + $0x590] sm:$0xff] %v4527
      %4536 = vst [vmem:[#allocation3 + $0x598] sm:$0xff] %v4528
      %v4537 = vld [vmem:[%s246 + $0x2c] sm:$0xff]
      %v4538 = vld [vmem:[%s246 + $0x34] sm:$0xff]
      %v4539 = vld [vmem:[%s246 + $0x3c] sm:$0xf]
      %v4540 = vld [vmem:[%s246 + $0x6c] sm:$0xff]
      %v4541 = vld [vmem:[%s246 + $0x74] sm:$0xff]
      %v4542 = vld [vmem:[%s246 + $0x7c] sm:$0xf]
      %v4549 = vunpack.c.l.b16 %v4537
      %v4550 = vunpack.c.h.b16 %v4537
      %v4551 = vunpack.c.l.b16 %v4538
      %v4552 = vunpack.c.h.b16 %v4538
      %v4553 = vunpack.c.l.b16 %v4539
      %v4554 = vunpack.c.l.b16 %v4540
      %v4555 = vunpack.c.h.b16 %v4540
      %v4556 = vunpack.c.l.b16 %v4541
      %v4557 = vunpack.c.h.b16 %v4541
      %v4558 = vunpack.c.l.b16 %v4542
      %v4559 = vpack.c.b16 %v4554, %v4549
      %v4560 = vpack.c.b16 %v4555, %v4550
      %v4561 = vpack.c.b16 %v4556, %v4551
      %v4562 = vpack.c.b16 %v4557, %v4552
      %v4563 = vpack.c.b16 %v4558, %v4553
      %4564 = vrot.lane.b32.xlu0 %v4559, 92
      %v4565 = vpop.permute.xlu0 %4564
      %4566 = vrot.lane.b32.xlu0 %v4560, 92
      %v4567 = vpop.permute.xlu0 %4566
      %4568 = vrot.lane.b32.xlu0 %v4561, 92
      %v4569 = vpop.permute.xlu0 %4568
      %4570 = vrot.lane.b32.xlu0 %v4562, 92
      %v4571 = vpop.permute.xlu0 %4570
      %4572 = vrot.lane.b32.xlu0 %v4563, 92
      %v4573 = vpop.permute.xlu0 %4572
      %v4574 = vsel %vm2397, %v4565, %v4567
      %v4575 = vsel %vm2397, %v4567, %v4569
      %v4576 = vsel %vm2397, %v4569, %v4571
      %v4577 = vsel %vm2397, %v4571, %v4573
      %4582 = vst [vmem:[#allocation3 + $0x5c0] sm:$0xff] %v4574
      %4583 = vst [vmem:[#allocation3 + $0x5c8] sm:$0xff] %v4575
      %4584 = vst [vmem:[#allocation3 + $0x5d0] sm:$0xff] %v4576
      %4585 = vst [vmem:[#allocation3 + $0x5d8] sm:$0xff] %v4577
      %v4586 = vld [vmem:[%s246 + $0x2c] sm:$0xff]
      %v4587 = vld [vmem:[%s246 + $0x34] sm:$0xff]
      %v4588 = vld [vmem:[%s246 + $0x3c] sm:$0xf]
      %v4589 = vld [vmem:[%s246 + $0x6c] sm:$0xff]
      %v4590 = vld [vmem:[%s246 + $0x74] sm:$0xff]
      %v4591 = vld [vmem:[%s246 + $0x7c] sm:$0xf]
      %v4598 = vunpack.c.l.b16 %v4586
      %v4599 = vunpack.c.h.b16 %v4586
      %v4600 = vunpack.c.l.b16 %v4587
      %v4601 = vunpack.c.h.b16 %v4587
      %v4602 = vunpack.c.l.b16 %v4588
      %v4603 = vunpack.c.l.b16 %v4589
      %v4604 = vunpack.c.h.b16 %v4589
      %v4605 = vunpack.c.l.b16 %v4590
      %v4606 = vunpack.c.h.b16 %v4590
      %v4607 = vunpack.c.l.b16 %v4591
      %v4608 = vpack.c.b16 %v4603, %v4598
      %v4609 = vpack.c.b16 %v4604, %v4599
      %v4610 = vpack.c.b16 %v4605, %v4600
      %v4611 = vpack.c.b16 %v4606, %v4601
      %v4612 = vpack.c.b16 %v4607, %v4602
      %4613 = vrot.lane.b32.xlu0 %v4608, 82
      %v4614 = vpop.permute.xlu0 %4613
      %4615 = vrot.lane.b32.xlu0 %v4609, 82
      %v4616 = vpop.permute.xlu0 %4615
      %4617 = vrot.lane.b32.xlu0 %v4610, 82
      %v4618 = vpop.permute.xlu0 %4617
      %4619 = vrot.lane.b32.xlu0 %v4611, 82
      %v4620 = vpop.permute.xlu0 %4619
      %4621 = vrot.lane.b32.xlu0 %v4612, 82
      %v4622 = vpop.permute.xlu0 %4621
      %v4623 = vsel %vm2487, %v4614, %v4616
      %v4624 = vsel %vm2487, %v4616, %v4618
      %v4625 = vsel %vm2487, %v4618, %v4620
      %v4626 = vsel %vm2487, %v4620, %v4622
      %4631 = vst [vmem:[#allocation3 + $0x600] sm:$0xff] %v4623
      %4632 = vst [vmem:[#allocation3 + $0x608] sm:$0xff] %v4624
      %4633 = vst [vmem:[#allocation3 + $0x610] sm:$0xff] %v4625
      %4634 = vst [vmem:[#allocation3 + $0x618] sm:$0xff] %v4626
      %v4635 = vld [vmem:[%s246 + $0x2c] sm:$0xff]
      %v4636 = vld [vmem:[%s246 + $0x34] sm:$0xff]
      %v4637 = vld [vmem:[%s246 + $0x3c] sm:$0xf]
      %v4638 = vld [vmem:[%s246 + $0x6c] sm:$0xff]
      %v4639 = vld [vmem:[%s246 + $0x74] sm:$0xff]
      %v4640 = vld [vmem:[%s246 + $0x7c] sm:$0xf]
      %v4647 = vunpack.c.l.b16 %v4635
      %v4648 = vunpack.c.h.b16 %v4635
      %v4649 = vunpack.c.l.b16 %v4636
      %v4650 = vunpack.c.h.b16 %v4636
      %v4651 = vunpack.c.l.b16 %v4637
      %v4652 = vunpack.c.l.b16 %v4638
      %v4653 = vunpack.c.h.b16 %v4638
      %v4654 = vunpack.c.l.b16 %v4639
      %v4655 = vunpack.c.h.b16 %v4639
      %v4656 = vunpack.c.l.b16 %v4640
      %v4657 = vpack.c.b16 %v4652, %v4647
      %v4658 = vpack.c.b16 %v4653, %v4648
      %v4659 = vpack.c.b16 %v4654, %v4649
      %v4660 = vpack.c.b16 %v4655, %v4650
      %v4661 = vpack.c.b16 %v4656, %v4651
      %4662 = vrot.lane.b32.xlu0 %v4657, 81
      %v4663 = vpop.permute.xlu0 %4662
      %4664 = vrot.lane.b32.xlu0 %v4658, 81
      %v4665 = vpop.permute.xlu0 %4664
      %4666 = vrot.lane.b32.xlu0 %v4659, 81
      %v4667 = vpop.permute.xlu0 %4666
      %4668 = vrot.lane.b32.xlu0 %v4660, 81
      %v4669 = vpop.permute.xlu0 %4668
      %4670 = vrot.lane.b32.xlu0 %v4661, 81
      %v4671 = vpop.permute.xlu0 %4670
      %v4672 = vsel %vm2577, %v4663, %v4665
      %v4673 = vsel %vm2577, %v4665, %v4667
      %v4674 = vsel %vm2577, %v4667, %v4669
      %v4675 = vsel %vm2577, %v4669, %v4671
      %4680 = vst [vmem:[#allocation3 + $0x640] sm:$0xff] %v4672
      %4681 = vst [vmem:[#allocation3 + $0x648] sm:$0xff] %v4673
      %4682 = vst [vmem:[#allocation3 + $0x650] sm:$0xff] %v4674
      %4683 = vst [vmem:[#allocation3 + $0x658] sm:$0xff] %v4675
      %v4684 = vld [vmem:[%s246 + $0x2c] sm:$0xff]
      %v4685 = vld [vmem:[%s246 + $0x34] sm:$0xff]
      %v4686 = vld [vmem:[%s246 + $0x3c] sm:$0xf]
      %v4687 = vld [vmem:[%s246 + $0x6c] sm:$0xff]
      %v4688 = vld [vmem:[%s246 + $0x74] sm:$0xff]
      %v4689 = vld [vmem:[%s246 + $0x7c] sm:$0xf]
      %v4696 = vunpack.c.l.b16 %v4684
      %v4697 = vunpack.c.h.b16 %v4684
      %v4698 = vunpack.c.l.b16 %v4685
      %v4699 = vunpack.c.h.b16 %v4685
      %v4700 = vunpack.c.l.b16 %v4686
      %v4701 = vunpack.c.l.b16 %v4687
      %v4702 = vunpack.c.h.b16 %v4687
      %v4703 = vunpack.c.l.b16 %v4688
      %v4704 = vunpack.c.h.b16 %v4688
      %v4705 = vunpack.c.l.b16 %v4689
      %v4706 = vpack.c.b16 %v4701, %v4696
      %v4707 = vpack.c.b16 %v4702, %v4697
      %v4708 = vpack.c.b16 %v4703, %v4698
      %v4709 = vpack.c.b16 %v4704, %v4699
      %v4710 = vpack.c.b16 %v4705, %v4700
      %4711 = vrot.lane.b32.xlu0 %v4706, 80
      %v4712 = vpop.permute.xlu0 %4711
      %4713 = vrot.lane.b32.xlu0 %v4707, 80
      %v4714 = vpop.permute.xlu0 %4713
      %4715 = vrot.lane.b32.xlu0 %v4708, 80
      %v4716 = vpop.permute.xlu0 %4715
      %4717 = vrot.lane.b32.xlu0 %v4709, 80
      %v4718 = vpop.permute.xlu0 %4717
      %4719 = vrot.lane.b32.xlu0 %v4710, 80
      %v4720 = vpop.permute.xlu0 %4719
      %v4721 = vsel %vm2667, %v4712, %v4714
      %v4722 = vsel %vm2667, %v4714, %v4716
      %v4723 = vsel %vm2667, %v4716, %v4718
      %v4724 = vsel %vm2667, %v4718, %v4720
      %4729 = vst [vmem:[#allocation3 + $0x680] sm:$0xff] %v4721
      %4730 = vst [vmem:[#allocation3 + $0x688] sm:$0xff] %v4722
      %4731 = vst [vmem:[#allocation3 + $0x690] sm:$0xff] %v4723
      %4732 = vst [vmem:[#allocation3 + $0x698] sm:$0xff] %v4724
      %v4733 = vld [vmem:[#allocation3] sm:$0xff]
      %v4734 = vld [vmem:[#allocation3 + $0x8] sm:$0xff]
      %v4735 = vld [vmem:[#allocation3 + $0x10] sm:$0xff]
      %v4736 = vld [vmem:[#allocation3 + $0x18] sm:$0xff]
      %v4737 = vld [vmem:[#allocation3 + $0x40] sm:$0xff]
      %v4738 = vld [vmem:[#allocation3 + $0x48] sm:$0xff]
      %v4739 = vld [vmem:[#allocation3 + $0x50] sm:$0xff]
      %v4740 = vld [vmem:[#allocation3 + $0x58] sm:$0xff]
      %v4741 = vld [vmem:[#allocation3 + $0x80] sm:$0xff]
      %v4742 = vld [vmem:[#allocation3 + $0x88] sm:$0xff]
      %v4743 = vld [vmem:[#allocation3 + $0x90] sm:$0xff]
      %v4744 = vld [vmem:[#allocation3 + $0x98] sm:$0xff]
      %v4745 = vld [vmem:[#allocation3 + $0xc0] sm:$0xff]
      %v4746 = vld [vmem:[#allocation3 + $0xc8] sm:$0xff]
      %v4747 = vld [vmem:[#allocation3 + $0xd0] sm:$0xff]
      %v4748 = vld [vmem:[#allocation3 + $0xd8] sm:$0xff]
      %v4749 = vld [vmem:[#allocation3 + $0x100] sm:$0xff]
      %v4750 = vld [vmem:[#allocation3 + $0x108] sm:$0xff]
      %v4751 = vld [vmem:[#allocation3 + $0x110] sm:$0xff]
      %v4752 = vld [vmem:[#allocation3 + $0x118] sm:$0xff]
      %v4753 = vld [vmem:[#allocation3 + $0x140] sm:$0xff]
      %v4754 = vld [vmem:[#allocation3 + $0x148] sm:$0xff]
      %v4755 = vld [vmem:[#allocation3 + $0x150] sm:$0xff]
      %v4756 = vld [vmem:[#allocation3 + $0x158] sm:$0xff]
      %v4757 = vld [vmem:[#allocation3 + $0x180] sm:$0xff]
      %v4758 = vld [vmem:[#allocation3 + $0x188] sm:$0xff]
      %v4759 = vld [vmem:[#allocation3 + $0x190] sm:$0xff]
      %v4760 = vld [vmem:[#allocation3 + $0x198] sm:$0xff]
      %v4761 = vld [vmem:[#allocation3 + $0x1c0] sm:$0xff]
      %v4762 = vld [vmem:[#allocation3 + $0x1c8] sm:$0xff]
      %v4763 = vld [vmem:[#allocation3 + $0x1d0] sm:$0xff]
      %v4764 = vld [vmem:[#allocation3 + $0x1d8] sm:$0xff]
      %v4765 = vld [vmem:[#allocation3 + $0x200] sm:$0xff]
      %v4766 = vld [vmem:[#allocation3 + $0x208] sm:$0xff]
      %v4767 = vld [vmem:[#allocation3 + $0x210] sm:$0xff]
      %v4768 = vld [vmem:[#allocation3 + $0x218] sm:$0xff]
      %v4769 = vld [vmem:[#allocation3 + $0x240] sm:$0xff]
      %v4770 = vld [vmem:[#allocation3 + $0x248] sm:$0xff]
      %v4771 = vld [vmem:[#allocation3 + $0x250] sm:$0xff]
      %v4772 = vld [vmem:[#allocation3 + $0x258] sm:$0xff]
      %v4773 = vld [vmem:[#allocation3 + $0x280] sm:$0xff]
      %v4774 = vld [vmem:[#allocation3 + $0x288] sm:$0xff]
      %v4775 = vld [vmem:[#allocation3 + $0x290] sm:$0xff]
      %v4776 = vld [vmem:[#allocation3 + $0x298] sm:$0xff]
      %v4777 = vld [vmem:[#allocation3 + $0x2c0] sm:$0xff]
      %v4778 = vld [vmem:[#allocation3 + $0x2c8] sm:$0xff]
      %v4779 = vld [vmem:[#allocation3 + $0x2d0] sm:$0xff]
      %v4780 = vld [vmem:[#allocation3 + $0x2d8] sm:$0xff]
      %v4781 = vld [vmem:[#allocation3 + $0x300] sm:$0xff]
      %v4782 = vld [vmem:[#allocation3 + $0x308] sm:$0xff]
      %v4783 = vld [vmem:[#allocation3 + $0x310] sm:$0xff]
      %v4784 = vld [vmem:[#allocation3 + $0x318] sm:$0xff]
      %v4785 = vld [vmem:[#allocation3 + $0x340] sm:$0xff]
      %v4786 = vld [vmem:[#allocation3 + $0x348] sm:$0xff]
      %v4787 = vld [vmem:[#allocation3 + $0x350] sm:$0xff]
      %v4788 = vld [vmem:[#allocation3 + $0x358] sm:$0xff]
      %v4789 = vld [vmem:[#allocation3 + $0x380] sm:$0xff]
      %v4790 = vld [vmem:[#allocation3 + $0x388] sm:$0xff]
      %v4791 = vld [vmem:[#allocation3 + $0x390] sm:$0xff]
      %v4792 = vld [vmem:[#allocation3 + $0x398] sm:$0xff]
      %v4793 = vld [vmem:[#allocation3 + $0x3c0] sm:$0xff]
      %v4794 = vld [vmem:[#allocation3 + $0x3c8] sm:$0xff]
      %v4795 = vld [vmem:[#allocation3 + $0x3d0] sm:$0xff]
      %v4796 = vld [vmem:[#allocation3 + $0x3d8] sm:$0xff]
      %v4797 = vld [vmem:[#allocation3 + $0x400] sm:$0xff]
      %v4798 = vld [vmem:[#allocation3 + $0x408] sm:$0xff]
      %v4799 = vld [vmem:[#allocation3 + $0x410] sm:$0xff]
      %v4800 = vld [vmem:[#allocation3 + $0x418] sm:$0xff]
      %v4801 = vld [vmem:[#allocation3 + $0x440] sm:$0xff]
      %v4802 = vld [vmem:[#allocation3 + $0x448] sm:$0xff]
      %v4803 = vld [vmem:[#allocation3 + $0x450] sm:$0xff]
      %v4804 = vld [vmem:[#allocation3 + $0x458] sm:$0xff]
      %v4805 = vld [vmem:[#allocation3 + $0x480] sm:$0xff]
      %v4806 = vld [vmem:[#allocation3 + $0x488] sm:$0xff]
      %v4807 = vld [vmem:[#allocation3 + $0x490] sm:$0xff]
      %v4808 = vld [vmem:[#allocation3 + $0x498] sm:$0xff]
      %v4809 = vld [vmem:[#allocation3 + $0x4c0] sm:$0xff]
      %v4810 = vld [vmem:[#allocation3 + $0x4c8] sm:$0xff]
      %v4811 = vld [vmem:[#allocation3 + $0x4d0] sm:$0xff]
      %v4812 = vld [vmem:[#allocation3 + $0x4d8] sm:$0xff]
      %v4813 = vld [vmem:[#allocation3 + $0x500] sm:$0xff]
      %v4814 = vld [vmem:[#allocation3 + $0x508] sm:$0xff]
      %v4815 = vld [vmem:[#allocation3 + $0x510] sm:$0xff]
      %v4816 = vld [vmem:[#allocation3 + $0x518] sm:$0xff]
      %v4817 = vld [vmem:[#allocation3 + $0x540] sm:$0xff]
      %v4818 = vld [vmem:[#allocation3 + $0x548] sm:$0xff]
      %v4819 = vld [vmem:[#allocation3 + $0x550] sm:$0xff]
      %v4820 = vld [vmem:[#allocation3 + $0x558] sm:$0xff]
      %v4821 = vld [vmem:[#allocation3 + $0x580] sm:$0xff]
      %v4822 = vld [vmem:[#allocation3 + $0x588] sm:$0xff]
      %v4823 = vld [vmem:[#allocation3 + $0x590] sm:$0xff]
      %v4824 = vld [vmem:[#allocation3 + $0x598] sm:$0xff]
      %v4825 = vld [vmem:[#allocation3 + $0x5c0] sm:$0xff]
      %v4826 = vld [vmem:[#allocation3 + $0x5c8] sm:$0xff]
      %v4827 = vld [vmem:[#allocation3 + $0x5d0] sm:$0xff]
      %v4828 = vld [vmem:[#allocation3 + $0x5d8] sm:$0xff]
      %v4829 = vld [vmem:[#allocation3 + $0x600] sm:$0xff]
      %v4830 = vld [vmem:[#allocation3 + $0x608] sm:$0xff]
      %v4831 = vld [vmem:[#allocation3 + $0x610] sm:$0xff]
      %v4832 = vld [vmem:[#allocation3 + $0x618] sm:$0xff]
      %v4833 = vld [vmem:[#allocation3 + $0x640] sm:$0xff]
      %v4834 = vld [vmem:[#allocation3 + $0x648] sm:$0xff]
      %v4835 = vld [vmem:[#allocation3 + $0x650] sm:$0xff]
      %v4836 = vld [vmem:[#allocation3 + $0x658] sm:$0xff]
      %v4837 = vld [vmem:[#allocation3 + $0x680] sm:$0xff]
      %v4838 = vld [vmem:[#allocation3 + $0x688] sm:$0xff]
      %v4839 = vld [vmem:[#allocation3 + $0x690] sm:$0xff]
      %v4840 = vld [vmem:[#allocation3 + $0x698] sm:$0xff]
      %4841 = vmatprep.subr.bf16.mxu0 %v4734
      %4842 = vmatpush1.bf16.msra.mxu0 %v4733
      %4843 = vmatprep.subr.bf16.mxu0 %v4738
      %4844 = vmatpush1.bf16.msra.mxu0 %v4737
      %4845 = vmatprep.subr.bf16.mxu0 %v4742
      %4846 = vmatpush1.bf16.msra.mxu0 %v4741
      %4847 = vmatprep.subr.bf16.mxu0 %v4746
      %4848 = vmatpush1.bf16.msra.mxu0 %v4745
      %4849 = vmatprep.subr.bf16.mxu0 %v4750
      %4850 = vmatpush1.bf16.msra.mxu0 %v4749
      %4851 = vmatprep.subr.bf16.mxu0 %v4754
      %4852 = vmatpush1.bf16.msra.mxu0 %v4753
      %4853 = vmatprep.subr.bf16.mxu0 %v4758
      %4854 = vmatpush1.bf16.msra.mxu0 %v4757
      %4855 = vmatprep.subr.bf16.mxu0 %v4762
      %4856 = vmatpush1.bf16.msra.mxu0 %v4761
      %4857 = vmatprep.subr.bf16.mxu0 %v4766
      %4858 = vmatpush1.bf16.msra.mxu0 %v4765
      %4859 = vmatprep.subr.bf16.mxu0 %v4770
      %4860 = vmatpush1.bf16.msra.mxu0 %v4769
      %4861 = vmatprep.subr.bf16.mxu0 %v4774
      %4862 = vmatpush1.bf16.msra.mxu0 %v4773
      %4863 = vmatprep.subr.bf16.mxu0 %v4778
      %4864 = vmatpush1.bf16.msra.mxu0 %v4777
      %4865 = vmatprep.subr.bf16.mxu0 %v4782
      %4866 = vmatpush1.bf16.msra.mxu0 %v4781
      %4867 = vmatprep.subr.bf16.mxu0 %v4786
      %4868 = vmatpush1.bf16.msra.mxu0 %v4785
      %4869 = vmatprep.subr.bf16.mxu0 %v4790
      %4870 = vmatpush1.bf16.msra.mxu0 %v4789
      %4871 = vmatprep.subr.bf16.mxu0 %v4794
      %4872 = vmatpush1.bf16.msra.mxu0 %v4793
      %4873 = vmatprep.mubr.bf16.mxu0 %v2931
      %4874 = vmatmul.mubr.bf16.gmra.mrb[0].mxu0 %v2930
      %v4875 = vpop.f32.mrb[0].mxu0
      %v4876 = vadd.f32 %v2911, %v4875
      %v4877 = vpop.f32.mrb[0].mxu0
      %v4878 = vadd.f32 %v2911, %v4877
      %v4879 = vpop.f32.mrb[0].mxu0
      %v4880 = vadd.f32 %v2916, %v4879
      %v4881 = vpop.f32.mrb[0].mxu0
      %v4882 = vadd.f32 %v2916, %v4881
      %4883 = vdwg.mxu0
      %4884 = vmatprep.subr.bf16.mxu0 %v4798
      %4885 = vmatpush1.bf16.msra.mxu0 %v4797
      %4886 = vmatprep.subr.bf16.mxu0 %v4802
      %4887 = vmatpush1.bf16.msra.mxu0 %v4801
      %4888 = vmatprep.subr.bf16.mxu0 %v4806
      %4889 = vmatpush1.bf16.msra.mxu0 %v4805
      %4890 = vmatprep.subr.bf16.mxu0 %v4810
      %4891 = vmatpush1.bf16.msra.mxu0 %v4809
      %4892 = vmatprep.subr.bf16.mxu0 %v4814
      %4893 = vmatpush1.bf16.msra.mxu0 %v4813
      %4894 = vmatprep.subr.bf16.mxu0 %v4818
      %4895 = vmatpush1.bf16.msra.mxu0 %v4817
      %4896 = vmatprep.subr.bf16.mxu0 %v4822
      %4897 = vmatpush1.bf16.msra.mxu0 %v4821
      %4898 = vmatprep.subr.bf16.mxu0 %v4826
      %4899 = vmatpush1.bf16.msra.mxu0 %v4825
      %4900 = vmatprep.subr.bf16.mxu0 %v4830
      %4901 = vmatpush1.bf16.msra.mxu0 %v4829
      %4902 = vmatprep.subr.bf16.mxu0 %v4834
      %4903 = vmatpush1.bf16.msra.mxu0 %v4833
      %4904 = vmatprep.subr.bf16.mxu0 %v4838
      %4905 = vmatpush1.bf16.msra.mxu0 %v4837
      %4906 = vmatprep.subr.bf16.mxu0 0
      %4907 = vmatpush1.bf16.msra.mxu0 0
      %4908 = vmatprep.subr.bf16.mxu0 0
      %4909 = vmatpush1.bf16.msra.mxu0 0
      %4910 = vmatprep.subr.bf16.mxu0 0
      %4911 = vmatpush1.bf16.msra.mxu0 0
      %4912 = vmatprep.subr.bf16.mxu0 0
      %4913 = vmatpush1.bf16.msra.mxu0 0
      %4914 = vmatprep.subr.bf16.mxu0 0
      %4915 = vmatpush1.bf16.msra.mxu0 0
      %4916 = vmatprep.mubr.bf16.mxu0 %v2939
      %4917 = vmatmul.mubr.bf16.gmra.mrb[0].mxu0 %v2932
      %v4918 = vpop.f32.mrb[0].mxu0
      %v4919 = vadd.f32 %v4876, %v4918
      %v4920 = vpop.f32.mrb[0].mxu0
      %v4921 = vadd.f32 %v4878, %v4920
      %v4922 = vpop.f32.mrb[0].mxu0
      %v4923 = vadd.f32 %v4880, %v4922
      %v4924 = vpop.f32.mrb[0].mxu0
      %v4925 = vadd.f32 %v4882, %v4924
      %4926 = vdwg.mxu0
      %4927 = vmatprep.subr.bf16.mxu0 %v4736
      %4928 = vmatpush1.bf16.msra.mxu0 %v4735
      %4929 = vmatprep.subr.bf16.mxu0 %v4740
      %4930 = vmatpush1.bf16.msra.mxu0 %v4739
      %4931 = vmatprep.subr.bf16.mxu0 %v4744
      %4932 = vmatpush1.bf16.msra.mxu0 %v4743
      %4933 = vmatprep.subr.bf16.mxu0 %v4748
      %4934 = vmatpush1.bf16.msra.mxu0 %v4747
      %4935 = vmatprep.subr.bf16.mxu0 %v4752
      %4936 = vmatpush1.bf16.msra.mxu0 %v4751
      %4937 = vmatprep.subr.bf16.mxu0 %v4756
      %4938 = vmatpush1.bf16.msra.mxu0 %v4755
      %4939 = vmatprep.subr.bf16.mxu0 %v4760
      %4940 = vmatpush1.bf16.msra.mxu0 %v4759
      %4941 = vmatprep.subr.bf16.mxu0 %v4764
      %4942 = vmatpush1.bf16.msra.mxu0 %v4763
      %4943 = vmatprep.subr.bf16.mxu0 %v4768
      %4944 = vmatpush1.bf16.msra.mxu0 %v4767
      %4945 = vmatprep.subr.bf16.mxu0 %v4772
      %4946 = vmatpush1.bf16.msra.mxu0 %v4771
      %4947 = vmatprep.subr.bf16.mxu0 %v4776
      %4948 = vmatpush1.bf16.msra.mxu0 %v4775
      %4949 = vmatprep.subr.bf16.mxu0 %v4780
      %4950 = vmatpush1.bf16.msra.mxu0 %v4779
      %4951 = vmatprep.subr.bf16.mxu0 %v4784
      %4952 = vmatpush1.bf16.msra.mxu0 %v4783
      %4953 = vmatprep.subr.bf16.mxu0 %v4788
      %4954 = vmatpush1.bf16.msra.mxu0 %v4787
      %4955 = vmatprep.subr.bf16.mxu0 %v4792
      %4956 = vmatpush1.bf16.msra.mxu0 %v4791
      %4957 = vmatprep.subr.bf16.mxu0 %v4796
      %4958 = vmatpush1.bf16.msra.mxu0 %v4795
      %4959 = vmatprep.mubr.bf16.mxu0 %v2931
      %4960 = vmatmul.mubr.bf16.gmra.mrb[0].mxu0 %v2930
      %v4961 = vpop.f32.mrb[0].mxu0
      %v4962 = vadd.f32 %v2911, %v4961
      %v4963 = vpop.f32.mrb[0].mxu0
      %v4964 = vadd.f32 %v2911, %v4963
      %v4965 = vpop.f32.mrb[0].mxu0
      %v4966 = vadd.f32 %v2916, %v4965
      %v4967 = vpop.f32.mrb[0].mxu0
      %v4968 = vadd.f32 %v2916, %v4967
      %4969 = vdwg.mxu0
      %4970 = vmatprep.subr.bf16.mxu0 %v4800
      %4971 = vmatpush1.bf16.msra.mxu0 %v4799
      %4972 = vmatprep.subr.bf16.mxu0 %v4804
      %4973 = vmatpush1.bf16.msra.mxu0 %v4803
      %4974 = vmatprep.subr.bf16.mxu0 %v4808
      %4975 = vmatpush1.bf16.msra.mxu0 %v4807
      %4976 = vmatprep.subr.bf16.mxu0 %v4812
      %4977 = vmatpush1.bf16.msra.mxu0 %v4811
      %4978 = vmatprep.subr.bf16.mxu0 %v4816
      %4979 = vmatpush1.bf16.msra.mxu0 %v4815
      %4980 = vmatprep.subr.bf16.mxu0 %v4820
      %4981 = vmatpush1.bf16.msra.mxu0 %v4819
      %4982 = vmatprep.subr.bf16.mxu0 %v4824
      %4983 = vmatpush1.bf16.msra.mxu0 %v4823
      %4984 = vmatprep.subr.bf16.mxu0 %v4828
      %4985 = vmatpush1.bf16.msra.mxu0 %v4827
      %4986 = vmatprep.subr.bf16.mxu0 %v4832
      %4987 = vmatpush1.bf16.msra.mxu0 %v4831
      %4988 = vmatprep.subr.bf16.mxu0 %v4836
      %4989 = vmatpush1.bf16.msra.mxu0 %v4835
      %4990 = vmatprep.subr.bf16.mxu0 %v4840
      %4991 = vmatpush1.bf16.msra.mxu0 %v4839
      %4992 = vmatprep.subr.bf16.mxu0 0
      %4993 = vmatpush1.bf16.msra.mxu0 0
      %4994 = vmatprep.subr.bf16.mxu0 0
      %4995 = vmatpush1.bf16.msra.mxu0 0
      %4996 = vmatprep.subr.bf16.mxu0 0
      %4997 = vmatpush1.bf16.msra.mxu0 0
      %4998 = vmatprep.subr.bf16.mxu0 0
      %4999 = vmatpush1.bf16.msra.mxu0 0
      %5000 = vmatprep.subr.bf16.mxu0 0
      %5001 = vmatpush1.bf16.msra.mxu0 0
      %5002 = vmatprep.mubr.bf16.mxu0 %v2939
      %5003 = vmatmul.mubr.bf16.gmra.mrb[0].mxu0 %v2932
      %v5004 = vpop.f32.mrb[0].mxu0
      %v5005 = vadd.f32 %v4962, %v5004
      %v5006 = vpop.f32.mrb[0].mxu0
      %v5007 = vadd.f32 %v4964, %v5006
      %v5008 = vpop.f32.mrb[0].mxu0
      %v5009 = vadd.f32 %v4966, %v5008
      %v5010 = vpop.f32.mrb[0].mxu0
      %v5011 = vadd.f32 %v4968, %v5010
      %5012 = vdwg.mxu0
      %v5013 = vmax.f32 %v4919, 0.0
      %v5014 = vmax.f32 %v4921, 0.0
      %v5015 = vmax.f32 %v5005, 0.0
      %v5016 = vmax.f32 %v5007, 0.0
      %v5017 = vmax.f32 %v4923, 0.0
      %v5018 = vmax.f32 %v4925, 0.0
      %v5019 = vmax.f32 %v5009, 0.0
      %v5020 = vmax.f32 %v5011, 0.0
      %v5021 = vld [vmem:[%s1 + $0x8] sm:$0xf]
      %v5022 = vunpack.c.l.bf16 %v5021
      %v5024 = vlaneseq
      %v5025 = vshrl.u32 %v5024, 7
      %v5026 = vsub.s32 0, %v5025
      %v5027 = vrot.slane %v5022, %v5026
      %v5028 = vlaneseq
      %v5029 = vshrl.u32 %v5028, 7
      %v5030 = vsub.s32 2, %v5029
      %v5031 = vrot.slane %v5022, %v5030
      %v5032 = vlaneseq
      %v5033 = vshrl.u32 %v5032, 7
      %v5034 = vsub.s32 4, %v5033
      %v5035 = vrot.slane %v5022, %v5034
      %v5036 = vlaneseq
      %v5037 = vshrl.u32 %v5036, 7
      %v5038 = vsub.s32 6, %v5037
      %v5039 = vrot.slane %v5022, %v5038
      %v5044 = vlaneseq
      %v5045 = vshrl.u32 %v5044, 7
      %v5046 = vsub.s32 0, %v5045
      %v5047 = vrot.slane %v5027, %v5046
      %v5048 = vlaneseq
      %v5049 = vshrl.u32 %v5048, 7
      %v5050 = vsub.s32 0, %v5049
      %v5051 = vrot.slane %v5031, %v5050
      %v5052 = vlaneseq
      %v5053 = vshrl.u32 %v5052, 7
      %v5054 = vsub.s32 0, %v5053
      %v5055 = vrot.slane %v5035, %v5054
      %v5056 = vlaneseq
      %v5057 = vshrl.u32 %v5056, 7
      %v5058 = vsub.s32 0, %v5057
      %v5059 = vrot.slane %v5039, %v5058
      %v5060 = vmul.f32 %v5047, %v5013
      %v5061 = vmul.f32 %v5051, %v5014
      %v5062 = vmul.f32 %v5055, %v5015
      %v5063 = vmul.f32 %v5059, %v5016
      %v5064 = vmul.f32 %v5047, %v5017
      %v5065 = vmul.f32 %v5051, %v5018
      %v5066 = vmul.f32 %v5055, %v5019
      %v5067 = vmul.f32 %v5059, %v5020
      %v5068 = vpack.c.bf16 %v5064, %v5060
      %v5069 = vpack.c.bf16 %v5065, %v5061
      %v5070 = vpack.c.bf16 %v5066, %v5062
      %v5071 = vpack.c.bf16 %v5067, %v5063
      %5072 = vst [vmem:[#allocation2 + $0x40] sm:$0xff] %v5068
      %5073 = vst [vmem:[#allocation2 + $0x48] sm:$0xff] %v5069
      %5074 = vst [vmem:[#allocation2 + $0x50] sm:$0xff] %v5070
      %5075 = vst [vmem:[#allocation2 + $0x58] sm:$0xff] %v5071
      %v5076 = vld [vmem:[#allocation2] sm:$0xff]
      %v5077 = vld [vmem:[#allocation2 + $0x8] sm:$0xff]
      %v5078 = vld [vmem:[#allocation2 + $0x10] sm:$0xff]
      %v5079 = vld [vmem:[#allocation2 + $0x18] sm:$0xff]
      %v5080 = vld [vmem:[#allocation2 + $0x20] sm:$0xff]
      %v5081 = vld [vmem:[#allocation2 + $0x28] sm:$0xff]
      %v5082 = vld [vmem:[#allocation2 + $0x30] sm:$0xff]
      %v5083 = vld [vmem:[#allocation2 + $0x38] sm:$0xff]
      %5084 = vst [vmem:[#allocation4] sm:$0xff] %v5076
      %5085 = vst [vmem:[#allocation4 + $0x8] sm:$0xff] %v5077
      %5086 = vst [vmem:[#allocation4 + $0x10] sm:$0xff] %v5078
      %5087 = vst [vmem:[#allocation4 + $0x18] sm:$0xff] %v5079
      %5088 = vst [vmem:[#allocation4 + $0x20] sm:$0xff] %v5080
      %5089 = vst [vmem:[#allocation4 + $0x28] sm:$0xff] %v5081
      %5090 = vst [vmem:[#allocation4 + $0x30] sm:$0xff] %v5082
      %5091 = vst [vmem:[#allocation4 + $0x38] sm:$0xff] %v5083
      %v5092 = vld [vmem:[#allocation2] sm:$0xff]
      %v5093 = vld [vmem:[#allocation2 + $0x8] sm:$0xff]
      %v5094 = vld [vmem:[#allocation2 + $0x10] sm:$0xff]
      %v5095 = vld [vmem:[#allocation2 + $0x18] sm:$0xff]
      %v5096 = vld [vmem:[#allocation2 + $0x20] sm:$0xff]
      %v5097 = vld [vmem:[#allocation2 + $0x28] sm:$0xff]
      %v5098 = vld [vmem:[#allocation2 + $0x30] sm:$0xff]
      %v5099 = vld [vmem:[#allocation2 + $0x38] sm:$0xff]
      %v5100 = vld [vmem:[#allocation2 + $0x40] sm:$0xff]
      %5110 = vrot.lane.b32.xlu0 %v5092, 127
      %v5111 = vpop.permute.xlu0 %5110
      %5112 = vrot.lane.b32.xlu0 %v5093, 127
      %v5113 = vpop.permute.xlu0 %5112
      %5114 = vrot.lane.b32.xlu0 %v5094, 127
      %v5115 = vpop.permute.xlu0 %5114
      %5116 = vrot.lane.b32.xlu0 %v5095, 127
      %v5117 = vpop.permute.xlu0 %5116
      %5118 = vrot.lane.b32.xlu0 %v5096, 127
      %v5119 = vpop.permute.xlu0 %5118
      %5120 = vrot.lane.b32.xlu0 %v5097, 127
      %v5121 = vpop.permute.xlu0 %5120
      %5122 = vrot.lane.b32.xlu0 %v5098, 127
      %v5123 = vpop.permute.xlu0 %5122
      %5124 = vrot.lane.b32.xlu0 %v5099, 127
      %v5125 = vpop.permute.xlu0 %5124
      %5126 = vrot.lane.b32.xlu0 %v5100, 127
      %v5127 = vpop.permute.xlu0 %5126
      %vm5128 = vcmask 1039360
      %v5129 = vsel %vm5128, %v5111, %v5113
      %v5130 = vsel %vm5128, %v5113, %v5115
      %v5131 = vsel %vm5128, %v5115, %v5117
      %v5132 = vsel %vm5128, %v5117, %v5119
      %v5133 = vsel %vm5128, %v5119, %v5121
      %v5134 = vsel %vm5128, %v5121, %v5123
      %v5135 = vsel %vm5128, %v5123, %v5125
      %v5136 = vsel %vm5128, %v5125, %v5127
      %5145 = vst [vmem:[#allocation4 + $0x40] sm:$0xff] %v5129
      %5146 = vst [vmem:[#allocation4 + $0x48] sm:$0xff] %v5130
      %5147 = vst [vmem:[#allocation4 + $0x50] sm:$0xff] %v5131
      %5148 = vst [vmem:[#allocation4 + $0x58] sm:$0xff] %v5132
      %5149 = vst [vmem:[#allocation4 + $0x60] sm:$0xff] %v5133
      %5150 = vst [vmem:[#allocation4 + $0x68] sm:$0xff] %v5134
      %5151 = vst [vmem:[#allocation4 + $0x70] sm:$0xff] %v5135
      %5152 = vst [vmem:[#allocation4 + $0x78] sm:$0xff] %v5136
      %v5153 = vld [vmem:[#allocation2] sm:$0xff]
      %v5154 = vld [vmem:[#allocation2 + $0x8] sm:$0xff]
      %v5155 = vld [vmem:[#allocation2 + $0x10] sm:$0xff]
      %v5156 = vld [vmem:[#allocation2 + $0x18] sm:$0xff]
      %v5157 = vld [vmem:[#allocation2 + $0x20] sm:$0xff]
      %v5158 = vld [vmem:[#allocation2 + $0x28] sm:$0xff]
      %v5159 = vld [vmem:[#allocation2 + $0x30] sm:$0xff]
      %v5160 = vld [vmem:[#allocation2 + $0x38] sm:$0xff]
      %v5161 = vld [vmem:[#allocation2 + $0x40] sm:$0xff]
      %5171 = vrot.lane.b32.xlu0 %v5153, 126
      %v5172 = vpop.permute.xlu0 %5171
      %5173 = vrot.lane.b32.xlu0 %v5154, 126
      %v5174 = vpop.permute.xlu0 %5173
      %5175 = vrot.lane.b32.xlu0 %v5155, 126
      %v5176 = vpop.permute.xlu0 %5175
      %5177 = vrot.lane.b32.xlu0 %v5156, 126
      %v5178 = vpop.permute.xlu0 %5177
      %5179 = vrot.lane.b32.xlu0 %v5157, 126
      %v5180 = vpop.permute.xlu0 %5179
      %5181 = vrot.lane.b32.xlu0 %v5158, 126
      %v5182 = vpop.permute.xlu0 %5181
      %5183 = vrot.lane.b32.xlu0 %v5159, 126
      %v5184 = vpop.permute.xlu0 %5183
      %5185 = vrot.lane.b32.xlu0 %v5160, 126
      %v5186 = vpop.permute.xlu0 %5185
      %5187 = vrot.lane.b32.xlu0 %v5161, 126
      %v5188 = vpop.permute.xlu0 %5187
      %v5189 = vsel %vm597, %v5172, %v5174
      %v5190 = vsel %vm597, %v5174, %v5176
      %v5191 = vsel %vm597, %v5176, %v5178
      %v5192 = vsel %vm597, %v5178, %v5180
      %v5193 = vsel %vm597, %v5180, %v5182
      %v5194 = vsel %vm597, %v5182, %v5184
      %v5195 = vsel %vm597, %v5184, %v5186
      %v5196 = vsel %vm597, %v5186, %v5188
      %5205 = vst [vmem:[#allocation4 + $0x80] sm:$0xff] %v5189
      %5206 = vst [vmem:[#allocation4 + $0x88] sm:$0xff] %v5190
      %5207 = vst [vmem:[#allocation4 + $0x90] sm:$0xff] %v5191
      %5208 = vst [vmem:[#allocation4 + $0x98] sm:$0xff] %v5192
      %5209 = vst [vmem:[#allocation4 + $0xa0] sm:$0xff] %v5193
      %5210 = vst [vmem:[#allocation4 + $0xa8] sm:$0xff] %v5194
      %5211 = vst [vmem:[#allocation4 + $0xb0] sm:$0xff] %v5195
      %5212 = vst [vmem:[#allocation4 + $0xb8] sm:$0xff] %v5196
      %v5213 = vld [vmem:[#allocation2] sm:$0xff]
      %v5214 = vld [vmem:[#allocation2 + $0x8] sm:$0xff]
      %v5215 = vld [vmem:[#allocation2 + $0x10] sm:$0xff]
      %v5216 = vld [vmem:[#allocation2 + $0x18] sm:$0xff]
      %v5217 = vld [vmem:[#allocation2 + $0x20] sm:$0xff]
      %v5218 = vld [vmem:[#allocation2 + $0x28] sm:$0xff]
      %v5219 = vld [vmem:[#allocation2 + $0x30] sm:$0xff]
      %v5220 = vld [vmem:[#allocation2 + $0x38] sm:$0xff]
      %v5221 = vld [vmem:[#allocation2 + $0x40] sm:$0xff]
      %5231 = vrot.lane.b32.xlu0 %v5213, 116
      %v5232 = vpop.permute.xlu0 %5231
      %5233 = vrot.lane.b32.xlu0 %v5214, 116
      %v5234 = vpop.permute.xlu0 %5233
      %5235 = vrot.lane.b32.xlu0 %v5215, 116
      %v5236 = vpop.permute.xlu0 %5235
      %5237 = vrot.lane.b32.xlu0 %v5216, 116
      %v5238 = vpop.permute.xlu0 %5237
      %5239 = vrot.lane.b32.xlu0 %v5217, 116
      %v5240 = vpop.permute.xlu0 %5239
      %5241 = vrot.lane.b32.xlu0 %v5218, 116
      %v5242 = vpop.permute.xlu0 %5241
      %5243 = vrot.lane.b32.xlu0 %v5219, 116
      %v5244 = vpop.permute.xlu0 %5243
      %5245 = vrot.lane.b32.xlu0 %v5220, 116
      %v5246 = vpop.permute.xlu0 %5245
      %5247 = vrot.lane.b32.xlu0 %v5221, 116
      %v5248 = vpop.permute.xlu0 %5247
      %vm5249 = vcmask 949248
      %v5250 = vsel %vm5249, %v5232, %v5234
      %v5251 = vsel %vm5249, %v5234, %v5236
      %v5252 = vsel %vm5249, %v5236, %v5238
      %v5253 = vsel %vm5249, %v5238, %v5240
      %v5254 = vsel %vm5249, %v5240, %v5242
      %v5255 = vsel %vm5249, %v5242, %v5244
      %v5256 = vsel %vm5249, %v5244, %v5246
      %v5257 = vsel %vm5249, %v5246, %v5248
      %5266 = vst [vmem:[#allocation4 + $0xc0] sm:$0xff] %v5250
      %5267 = vst [vmem:[#allocation4 + $0xc8] sm:$0xff] %v5251
      %5268 = vst [vmem:[#allocation4 + $0xd0] sm:$0xff] %v5252
      %5269 = vst [vmem:[#allocation4 + $0xd8] sm:$0xff] %v5253
      %5270 = vst [vmem:[#allocation4 + $0xe0] sm:$0xff] %v5254
      %5271 = vst [vmem:[#allocation4 + $0xe8] sm:$0xff] %v5255
      %5272 = vst [vmem:[#allocation4 + $0xf0] sm:$0xff] %v5256
      %5273 = vst [vmem:[#allocation4 + $0xf8] sm:$0xff] %v5257
      %v5274 = vld [vmem:[#allocation2] sm:$0xff]
      %v5275 = vld [vmem:[#allocation2 + $0x8] sm:$0xff]
      %v5276 = vld [vmem:[#allocation2 + $0x10] sm:$0xff]
      %v5277 = vld [vmem:[#allocation2 + $0x18] sm:$0xff]
      %v5278 = vld [vmem:[#allocation2 + $0x20] sm:$0xff]
      %v5279 = vld [vmem:[#allocation2 + $0x28] sm:$0xff]
      %v5280 = vld [vmem:[#allocation2 + $0x30] sm:$0xff]
      %v5281 = vld [vmem:[#allocation2 + $0x38] sm:$0xff]
      %v5282 = vld [vmem:[#allocation2 + $0x40] sm:$0xff]
      %5292 = vrot.lane.b32.xlu0 %v5274, 115
      %v5293 = vpop.permute.xlu0 %5292
      %5294 = vrot.lane.b32.xlu0 %v5275, 115
      %v5295 = vpop.permute.xlu0 %5294
      %5296 = vrot.lane.b32.xlu0 %v5276, 115
      %v5297 = vpop.permute.xlu0 %5296
      %5298 = vrot.lane.b32.xlu0 %v5277, 115
      %v5299 = vpop.permute.xlu0 %5298
      %5300 = vrot.lane.b32.xlu0 %v5278, 115
      %v5301 = vpop.permute.xlu0 %5300
      %5302 = vrot.lane.b32.xlu0 %v5279, 115
      %v5303 = vpop.permute.xlu0 %5302
      %5304 = vrot.lane.b32.xlu0 %v5280, 115
      %v5305 = vpop.permute.xlu0 %5304
      %5306 = vrot.lane.b32.xlu0 %v5281, 115
      %v5307 = vpop.permute.xlu0 %5306
      %5308 = vrot.lane.b32.xlu0 %v5282, 115
      %v5309 = vpop.permute.xlu0 %5308
      %vm5310 = vcmask 941056
      %v5311 = vsel %vm5310, %v5293, %v5295
      %v5312 = vsel %vm5310, %v5295, %v5297
      %v5313 = vsel %vm5310, %v5297, %v5299
      %v5314 = vsel %vm5310, %v5299, %v5301
      %v5315 = vsel %vm5310, %v5301, %v5303
      %v5316 = vsel %vm5310, %v5303, %v5305
      %v5317 = vsel %vm5310, %v5305, %v5307
      %v5318 = vsel %vm5310, %v5307, %v5309
      %5327 = vst [vmem:[#allocation4 + $0x100] sm:$0xff] %v5311
      %5328 = vst [vmem:[#allocation4 + $0x108] sm:$0xff] %v5312
      %5329 = vst [vmem:[#allocation4 + $0x110] sm:$0xff] %v5313
      %5330 = vst [vmem:[#allocation4 + $0x118] sm:$0xff] %v5314
      %5331 = vst [vmem:[#allocation4 + $0x120] sm:$0xff] %v5315
      %5332 = vst [vmem:[#allocation4 + $0x128] sm:$0xff] %v5316
      %5333 = vst [vmem:[#allocation4 + $0x130] sm:$0xff] %v5317
      %5334 = vst [vmem:[#allocation4 + $0x138] sm:$0xff] %v5318
      %v5335 = vld [vmem:[#allocation2] sm:$0xff]
      %v5336 = vld [vmem:[#allocation2 + $0x8] sm:$0xff]
      %v5337 = vld [vmem:[#allocation2 + $0x10] sm:$0xff]
      %v5338 = vld [vmem:[#allocation2 + $0x18] sm:$0xff]
      %v5339 = vld [vmem:[#allocation2 + $0x20] sm:$0xff]
      %v5340 = vld [vmem:[#allocation2 + $0x28] sm:$0xff]
      %v5341 = vld [vmem:[#allocation2 + $0x30] sm:$0xff]
      %v5342 = vld [vmem:[#allocation2 + $0x38] sm:$0xff]
      %v5343 = vld [vmem:[#allocation2 + $0x40] sm:$0xff]
      %5353 = vrot.lane.b32.xlu0 %v5335, 114
      %v5354 = vpop.permute.xlu0 %5353
      %5355 = vrot.lane.b32.xlu0 %v5336, 114
      %v5356 = vpop.permute.xlu0 %5355
      %5357 = vrot.lane.b32.xlu0 %v5337, 114
      %v5358 = vpop.permute.xlu0 %5357
      %5359 = vrot.lane.b32.xlu0 %v5338, 114
      %v5360 = vpop.permute.xlu0 %5359
      %5361 = vrot.lane.b32.xlu0 %v5339, 114
      %v5362 = vpop.permute.xlu0 %5361
      %5363 = vrot.lane.b32.xlu0 %v5340, 114
      %v5364 = vpop.permute.xlu0 %5363
      %5365 = vrot.lane.b32.xlu0 %v5341, 114
      %v5366 = vpop.permute.xlu0 %5365
      %5367 = vrot.lane.b32.xlu0 %v5342, 114
      %v5368 = vpop.permute.xlu0 %5367
      %5369 = vrot.lane.b32.xlu0 %v5343, 114
      %v5370 = vpop.permute.xlu0 %5369
      %v5371 = vsel %vm867, %v5354, %v5356
      %v5372 = vsel %vm867, %v5356, %v5358
      %v5373 = vsel %vm867, %v5358, %v5360
      %v5374 = vsel %vm867, %v5360, %v5362
      %v5375 = vsel %vm867, %v5362, %v5364
      %v5376 = vsel %vm867, %v5364, %v5366
      %v5377 = vsel %vm867, %v5366, %v5368
      %v5378 = vsel %vm867, %v5368, %v5370
      %5387 = vst [vmem:[#allocation4 + $0x140] sm:$0xff] %v5371
      %5388 = vst [vmem:[#allocation4 + $0x148] sm:$0xff] %v5372
      %5389 = vst [vmem:[#allocation4 + $0x150] sm:$0xff] %v5373
      %5390 = vst [vmem:[#allocation4 + $0x158] sm:$0xff] %v5374
      %5391 = vst [vmem:[#allocation4 + $0x160] sm:$0xff] %v5375
      %5392 = vst [vmem:[#allocation4 + $0x168] sm:$0xff] %v5376
      %5393 = vst [vmem:[#allocation4 + $0x170] sm:$0xff] %v5377
      %5394 = vst [vmem:[#allocation4 + $0x178] sm:$0xff] %v5378
      %v5395 = vld [vmem:[#allocation2] sm:$0xff]
      %v5396 = vld [vmem:[#allocation2 + $0x8] sm:$0xff]
      %v5397 = vld [vmem:[#allocation2 + $0x10] sm:$0xff]
      %v5398 = vld [vmem:[#allocation2 + $0x18] sm:$0xff]
      %v5399 = vld [vmem:[#allocation2 + $0x20] sm:$0xff]
      %v5400 = vld [vmem:[#allocation2 + $0x28] sm:$0xff]
      %v5401 = vld [vmem:[#allocation2 + $0x30] sm:$0xff]
      %v5402 = vld [vmem:[#allocation2 + $0x38] sm:$0xff]
      %v5403 = vld [vmem:[#allocation2 + $0x40] sm:$0xff]
      %5413 = vrot.lane.b32.xlu0 %v5395, 104
      %v5414 = vpop.permute.xlu0 %5413
      %5415 = vrot.lane.b32.xlu0 %v5396, 104
      %v5416 = vpop.permute.xlu0 %5415
      %5417 = vrot.lane.b32.xlu0 %v5397, 104
      %v5418 = vpop.permute.xlu0 %5417
      %5419 = vrot.lane.b32.xlu0 %v5398, 104
      %v5420 = vpop.permute.xlu0 %5419
      %5421 = vrot.lane.b32.xlu0 %v5399, 104
      %v5422 = vpop.permute.xlu0 %5421
      %5423 = vrot.lane.b32.xlu0 %v5400, 104
      %v5424 = vpop.permute.xlu0 %5423
      %5425 = vrot.lane.b32.xlu0 %v5401, 104
      %v5426 = vpop.permute.xlu0 %5425
      %5427 = vrot.lane.b32.xlu0 %v5402, 104
      %v5428 = vpop.permute.xlu0 %5427
      %5429 = vrot.lane.b32.xlu0 %v5403, 104
      %v5430 = vpop.permute.xlu0 %5429
      %v5431 = vsel %vm2127, %v5414, %v5416
      %v5432 = vsel %vm2127, %v5416, %v5418
      %v5433 = vsel %vm2127, %v5418, %v5420
      %v5434 = vsel %vm2127, %v5420, %v5422
      %v5435 = vsel %vm2127, %v5422, %v5424
      %v5436 = vsel %vm2127, %v5424, %v5426
      %v5437 = vsel %vm2127, %v5426, %v5428
      %v5438 = vsel %vm2127, %v5428, %v5430
      %5447 = vst [vmem:[#allocation4 + $0x180] sm:$0xff] %v5431
      %5448 = vst [vmem:[#allocation4 + $0x188] sm:$0xff] %v5432
      %5449 = vst [vmem:[#allocation4 + $0x190] sm:$0xff] %v5433
      %5450 = vst [vmem:[#allocation4 + $0x198] sm:$0xff] %v5434
      %5451 = vst [vmem:[#allocation4 + $0x1a0] sm:$0xff] %v5435
      %5452 = vst [vmem:[#allocation4 + $0x1a8] sm:$0xff] %v5436
      %5453 = vst [vmem:[#allocation4 + $0x1b0] sm:$0xff] %v5437
      %5454 = vst [vmem:[#allocation4 + $0x1b8] sm:$0xff] %v5438
      %v5455 = vld [vmem:[#allocation2] sm:$0xff]
      %v5456 = vld [vmem:[#allocation2 + $0x8] sm:$0xff]
      %v5457 = vld [vmem:[#allocation2 + $0x10] sm:$0xff]
      %v5458 = vld [vmem:[#allocation2 + $0x18] sm:$0xff]
      %v5459 = vld [vmem:[#allocation2 + $0x20] sm:$0xff]
      %v5460 = vld [vmem:[#allocation2 + $0x28] sm:$0xff]
      %v5461 = vld [vmem:[#allocation2 + $0x30] sm:$0xff]
      %v5462 = vld [vmem:[#allocation2 + $0x38] sm:$0xff]
      %v5463 = vld [vmem:[#allocation2 + $0x40] sm:$0xff]
      %5473 = vrot.lane.b32.xlu0 %v5455, 103
      %v5474 = vpop.permute.xlu0 %5473
      %5475 = vrot.lane.b32.xlu0 %v5456, 103
      %v5476 = vpop.permute.xlu0 %5475
      %5477 = vrot.lane.b32.xlu0 %v5457, 103
      %v5478 = vpop.permute.xlu0 %5477
      %5479 = vrot.lane.b32.xlu0 %v5458, 103
      %v5480 = vpop.permute.xlu0 %5479
      %5481 = vrot.lane.b32.xlu0 %v5459, 103
      %v5482 = vpop.permute.xlu0 %5481
      %5483 = vrot.lane.b32.xlu0 %v5460, 103
      %v5484 = vpop.permute.xlu0 %5483
      %5485 = vrot.lane.b32.xlu0 %v5461, 103
      %v5486 = vpop.permute.xlu0 %5485
      %5487 = vrot.lane.b32.xlu0 %v5462, 103
      %v5488 = vpop.permute.xlu0 %5487
      %5489 = vrot.lane.b32.xlu0 %v5463, 103
      %v5490 = vpop.permute.xlu0 %5489
      %vm5491 = vcmask 842752
      %v5492 = vsel %vm5491, %v5474, %v5476
      %v5493 = vsel %vm5491, %v5476, %v5478
      %v5494 = vsel %vm5491, %v5478, %v5480
      %v5495 = vsel %vm5491, %v5480, %v5482
      %v5496 = vsel %vm5491, %v5482, %v5484
      %v5497 = vsel %vm5491, %v5484, %v5486
      %v5498 = vsel %vm5491, %v5486, %v5488
      %v5499 = vsel %vm5491, %v5488, %v5490
      %5508 = vst [vmem:[#allocation4 + $0x1c0] sm:$0xff] %v5492
      %5509 = vst [vmem:[#allocation4 + $0x1c8] sm:$0xff] %v5493
      %5510 = vst [vmem:[#allocation4 + $0x1d0] sm:$0xff] %v5494
      %5511 = vst [vmem:[#allocation4 + $0x1d8] sm:$0xff] %v5495
      %5512 = vst [vmem:[#allocation4 + $0x1e0] sm:$0xff] %v5496
      %5513 = vst [vmem:[#allocation4 + $0x1e8] sm:$0xff] %v5497
      %5514 = vst [vmem:[#allocation4 + $0x1f0] sm:$0xff] %v5498
      %5515 = vst [vmem:[#allocation4 + $0x1f8] sm:$0xff] %v5499
      %v5516 = vld [vmem:[#allocation2] sm:$0xff]
      %v5517 = vld [vmem:[#allocation2 + $0x8] sm:$0xff]
      %v5518 = vld [vmem:[#allocation2 + $0x10] sm:$0xff]
      %v5519 = vld [vmem:[#allocation2 + $0x18] sm:$0xff]
      %v5520 = vld [vmem:[#allocation2 + $0x20] sm:$0xff]
      %v5521 = vld [vmem:[#allocation2 + $0x28] sm:$0xff]
      %v5522 = vld [vmem:[#allocation2 + $0x30] sm:$0xff]
      %v5523 = vld [vmem:[#allocation2 + $0x38] sm:$0xff]
      %v5524 = vld [vmem:[#allocation2 + $0x40] sm:$0xff]
      %5534 = vrot.lane.b32.xlu0 %v5516, 102
      %v5535 = vpop.permute.xlu0 %5534
      %5536 = vrot.lane.b32.xlu0 %v5517, 102
      %v5537 = vpop.permute.xlu0 %5536
      %5538 = vrot.lane.b32.xlu0 %v5518, 102
      %v5539 = vpop.permute.xlu0 %5538
      %5540 = vrot.lane.b32.xlu0 %v5519, 102
      %v5541 = vpop.permute.xlu0 %5540
      %5542 = vrot.lane.b32.xlu0 %v5520, 102
      %v5543 = vpop.permute.xlu0 %5542
      %5544 = vrot.lane.b32.xlu0 %v5521, 102
      %v5545 = vpop.permute.xlu0 %5544
      %5546 = vrot.lane.b32.xlu0 %v5522, 102
      %v5547 = vpop.permute.xlu0 %5546
      %5548 = vrot.lane.b32.xlu0 %v5523, 102
      %v5549 = vpop.permute.xlu0 %5548
      %5550 = vrot.lane.b32.xlu0 %v5524, 102
      %v5551 = vpop.permute.xlu0 %5550
      %vm5552 = vcmask 834560
      %v5553 = vsel %vm5552, %v5535, %v5537
      %v5554 = vsel %vm5552, %v5537, %v5539
      %v5555 = vsel %vm5552, %v5539, %v5541
      %v5556 = vsel %vm5552, %v5541, %v5543
      %v5557 = vsel %vm5552, %v5543, %v5545
      %v5558 = vsel %vm5552, %v5545, %v5547
      %v5559 = vsel %vm5552, %v5547, %v5549
      %v5560 = vsel %vm5552, %v5549, %v5551
      %5569 = vst [vmem:[#allocation4 + $0x200] sm:$0xff] %v5553
      %5570 = vst [vmem:[#allocation4 + $0x208] sm:$0xff] %v5554
      %5571 = vst [vmem:[#allocation4 + $0x210] sm:$0xff] %v5555
      %5572 = vst [vmem:[#allocation4 + $0x218] sm:$0xff] %v5556
      %5573 = vst [vmem:[#allocation4 + $0x220] sm:$0xff] %v5557
      %5574 = vst [vmem:[#allocation4 + $0x228] sm:$0xff] %v5558
      %5575 = vst [vmem:[#allocation4 + $0x230] sm:$0xff] %v5559
      %5576 = vst [vmem:[#allocation4 + $0x238] sm:$0xff] %v5560
      %v5577 = vld [vmem:[#allocation2 + $0x8] sm:$0xff]
      %v5578 = vld [vmem:[#allocation2 + $0x10] sm:$0xff]
      %v5579 = vld [vmem:[#allocation2 + $0x18] sm:$0xff]
      %v5580 = vld [vmem:[#allocation2 + $0x20] sm:$0xff]
      %v5581 = vld [vmem:[#allocation2 + $0x28] sm:$0xff]
      %v5582 = vld [vmem:[#allocation2 + $0x30] sm:$0xff]
      %v5583 = vld [vmem:[#allocation2 + $0x38] sm:$0xff]
      %v5584 = vld [vmem:[#allocation2 + $0x40] sm:$0xff]
      %v5585 = vld [vmem:[#allocation2 + $0x48] sm:$0xff]
      %5595 = vrot.lane.b32.xlu0 %v5577, 112
      %v5596 = vpop.permute.xlu0 %5595
      %5597 = vrot.lane.b32.xlu0 %v5578, 112
      %v5598 = vpop.permute.xlu0 %5597
      %5599 = vrot.lane.b32.xlu0 %v5579, 112
      %v5600 = vpop.permute.xlu0 %5599
      %5601 = vrot.lane.b32.xlu0 %v5580, 112
      %v5602 = vpop.permute.xlu0 %5601
      %5603 = vrot.lane.b32.xlu0 %v5581, 112
      %v5604 = vpop.permute.xlu0 %5603
      %5605 = vrot.lane.b32.xlu0 %v5582, 112
      %v5606 = vpop.permute.xlu0 %5605
      %5607 = vrot.lane.b32.xlu0 %v5583, 112
      %v5608 = vpop.permute.xlu0 %5607
      %5609 = vrot.lane.b32.xlu0 %v5584, 112
      %v5610 = vpop.permute.xlu0 %5609
      %5611 = vrot.lane.b32.xlu0 %v5585, 112
      %v5612 = vpop.permute.xlu0 %5611
      %v5613 = vsel %vm1047, %v5596, %v5598
      %v5614 = vsel %vm1047, %v5598, %v5600
      %v5615 = vsel %vm1047, %v5600, %v5602
      %v5616 = vsel %vm1047, %v5602, %v5604
      %v5617 = vsel %vm1047, %v5604, %v5606
      %v5618 = vsel %vm1047, %v5606, %v5608
      %v5619 = vsel %vm1047, %v5608, %v5610
      %v5620 = vsel %vm1047, %v5610, %v5612
      %5629 = vst [vmem:[#allocation4 + $0x240] sm:$0xff] %v5613
      %5630 = vst [vmem:[#allocation4 + $0x248] sm:$0xff] %v5614
      %5631 = vst [vmem:[#allocation4 + $0x250] sm:$0xff] %v5615
      %5632 = vst [vmem:[#allocation4 + $0x258] sm:$0xff] %v5616
      %5633 = vst [vmem:[#allocation4 + $0x260] sm:$0xff] %v5617
      %5634 = vst [vmem:[#allocation4 + $0x268] sm:$0xff] %v5618
      %5635 = vst [vmem:[#allocation4 + $0x270] sm:$0xff] %v5619
      %5636 = vst [vmem:[#allocation4 + $0x278] sm:$0xff] %v5620
      %v5637 = vld [vmem:[#allocation2 + $0x8] sm:$0xff]
      %v5638 = vld [vmem:[#allocation2 + $0x10] sm:$0xff]
      %v5639 = vld [vmem:[#allocation2 + $0x18] sm:$0xff]
      %v5640 = vld [vmem:[#allocation2 + $0x20] sm:$0xff]
      %v5641 = vld [vmem:[#allocation2 + $0x28] sm:$0xff]
      %v5642 = vld [vmem:[#allocation2 + $0x30] sm:$0xff]
      %v5643 = vld [vmem:[#allocation2 + $0x38] sm:$0xff]
      %v5644 = vld [vmem:[#allocation2 + $0x40] sm:$0xff]
      %v5645 = vld [vmem:[#allocation2 + $0x48] sm:$0xff]
      %5655 = vrot.lane.b32.xlu0 %v5637, 111
      %v5656 = vpop.permute.xlu0 %5655
      %5657 = vrot.lane.b32.xlu0 %v5638, 111
      %v5658 = vpop.permute.xlu0 %5657
      %5659 = vrot.lane.b32.xlu0 %v5639, 111
      %v5660 = vpop.permute.xlu0 %5659
      %5661 = vrot.lane.b32.xlu0 %v5640, 111
      %v5662 = vpop.permute.xlu0 %5661
      %5663 = vrot.lane.b32.xlu0 %v5641, 111
      %v5664 = vpop.permute.xlu0 %5663
      %5665 = vrot.lane.b32.xlu0 %v5642, 111
      %v5666 = vpop.permute.xlu0 %5665
      %5667 = vrot.lane.b32.xlu0 %v5643, 111
      %v5668 = vpop.permute.xlu0 %5667
      %5669 = vrot.lane.b32.xlu0 %v5644, 111
      %v5670 = vpop.permute.xlu0 %5669
      %5671 = vrot.lane.b32.xlu0 %v5645, 111
      %v5672 = vpop.permute.xlu0 %5671
      %vm5673 = vcmask 908288
      %v5674 = vsel %vm5673, %v5656, %v5658
      %v5675 = vsel %vm5673, %v5658, %v5660
      %v5676 = vsel %vm5673, %v5660, %v5662
      %v5677 = vsel %vm5673, %v5662, %v5664
      %v5678 = vsel %vm5673, %v5664, %v5666
      %v5679 = vsel %vm5673, %v5666, %v5668
      %v5680 = vsel %vm5673, %v5668, %v5670
      %v5681 = vsel %vm5673, %v5670, %v5672
      %5690 = vst [vmem:[#allocation4 + $0x280] sm:$0xff] %v5674
      %5691 = vst [vmem:[#allocation4 + $0x288] sm:$0xff] %v5675
      %5692 = vst [vmem:[#allocation4 + $0x290] sm:$0xff] %v5676
      %5693 = vst [vmem:[#allocation4 + $0x298] sm:$0xff] %v5677
      %5694 = vst [vmem:[#allocation4 + $0x2a0] sm:$0xff] %v5678
      %5695 = vst [vmem:[#allocation4 + $0x2a8] sm:$0xff] %v5679
      %5696 = vst [vmem:[#allocation4 + $0x2b0] sm:$0xff] %v5680
      %5697 = vst [vmem:[#allocation4 + $0x2b8] sm:$0xff] %v5681
      %v5698 = vld [vmem:[#allocation2 + $0x8] sm:$0xff]
      %v5699 = vld [vmem:[#allocation2 + $0x10] sm:$0xff]
      %v5700 = vld [vmem:[#allocation2 + $0x18] sm:$0xff]
      %v5701 = vld [vmem:[#allocation2 + $0x20] sm:$0xff]
      %v5702 = vld [vmem:[#allocation2 + $0x28] sm:$0xff]
      %v5703 = vld [vmem:[#allocation2 + $0x30] sm:$0xff]
      %v5704 = vld [vmem:[#allocation2 + $0x38] sm:$0xff]
      %v5705 = vld [vmem:[#allocation2 + $0x40] sm:$0xff]
      %v5706 = vld [vmem:[#allocation2 + $0x48] sm:$0xff]
      %5716 = vrot.lane.b32.xlu0 %v5698, 110
      %v5717 = vpop.permute.xlu0 %5716
      %5718 = vrot.lane.b32.xlu0 %v5699, 110
      %v5719 = vpop.permute.xlu0 %5718
      %5720 = vrot.lane.b32.xlu0 %v5700, 110
      %v5721 = vpop.permute.xlu0 %5720
      %5722 = vrot.lane.b32.xlu0 %v5701, 110
      %v5723 = vpop.permute.xlu0 %5722
      %5724 = vrot.lane.b32.xlu0 %v5702, 110
      %v5725 = vpop.permute.xlu0 %5724
      %5726 = vrot.lane.b32.xlu0 %v5703, 110
      %v5727 = vpop.permute.xlu0 %5726
      %5728 = vrot.lane.b32.xlu0 %v5704, 110
      %v5729 = vpop.permute.xlu0 %5728
      %5730 = vrot.lane.b32.xlu0 %v5705, 110
      %v5731 = vpop.permute.xlu0 %5730
      %5732 = vrot.lane.b32.xlu0 %v5706, 110
      %v5733 = vpop.permute.xlu0 %5732
      %v5734 = vsel %vm1407, %v5717, %v5719
      %v5735 = vsel %vm1407, %v5719, %v5721
      %v5736 = vsel %vm1407, %v5721, %v5723
      %v5737 = vsel %vm1407, %v5723, %v5725
      %v5738 = vsel %vm1407, %v5725, %v5727
      %v5739 = vsel %vm1407, %v5727, %v5729
      %v5740 = vsel %vm1407, %v5729, %v5731
      %v5741 = vsel %vm1407, %v5731, %v5733
      %5750 = vst [vmem:[#allocation4 + $0x2c0] sm:$0xff] %v5734
      %5751 = vst [vmem:[#allocation4 + $0x2c8] sm:$0xff] %v5735
      %5752 = vst [vmem:[#allocation4 + $0x2d0] sm:$0xff] %v5736
      %5753 = vst [vmem:[#allocation4 + $0x2d8] sm:$0xff] %v5737
      %5754 = vst [vmem:[#allocation4 + $0x2e0] sm:$0xff] %v5738
      %5755 = vst [vmem:[#allocation4 + $0x2e8] sm:$0xff] %v5739
      %5756 = vst [vmem:[#allocation4 + $0x2f0] sm:$0xff] %v5740
      %5757 = vst [vmem:[#allocation4 + $0x2f8] sm:$0xff] %v5741
      %v5758 = vld [vmem:[#allocation2 + $0x8] sm:$0xff]
      %v5759 = vld [vmem:[#allocation2 + $0x10] sm:$0xff]
      %v5760 = vld [vmem:[#allocation2 + $0x18] sm:$0xff]
      %v5761 = vld [vmem:[#allocation2 + $0x20] sm:$0xff]
      %v5762 = vld [vmem:[#allocation2 + $0x28] sm:$0xff]
      %v5763 = vld [vmem:[#allocation2 + $0x30] sm:$0xff]
      %v5764 = vld [vmem:[#allocation2 + $0x38] sm:$0xff]
      %v5765 = vld [vmem:[#allocation2 + $0x40] sm:$0xff]
      %v5766 = vld [vmem:[#allocation2 + $0x48] sm:$0xff]
      %5776 = vrot.lane.b32.xlu0 %v5758, 100
      %v5777 = vpop.permute.xlu0 %5776
      %5778 = vrot.lane.b32.xlu0 %v5759, 100
      %v5779 = vpop.permute.xlu0 %5778
      %5780 = vrot.lane.b32.xlu0 %v5760, 100
      %v5781 = vpop.permute.xlu0 %5780
      %5782 = vrot.lane.b32.xlu0 %v5761, 100
      %v5783 = vpop.permute.xlu0 %5782
      %5784 = vrot.lane.b32.xlu0 %v5762, 100
      %v5785 = vpop.permute.xlu0 %5784
      %5786 = vrot.lane.b32.xlu0 %v5763, 100
      %v5787 = vpop.permute.xlu0 %5786
      %5788 = vrot.lane.b32.xlu0 %v5764, 100
      %v5789 = vpop.permute.xlu0 %5788
      %5790 = vrot.lane.b32.xlu0 %v5765, 100
      %v5791 = vpop.permute.xlu0 %5790
      %5792 = vrot.lane.b32.xlu0 %v5766, 100
      %v5793 = vpop.permute.xlu0 %5792
      %vm5794 = vcmask 818176
      %v5795 = vsel %vm5794, %v5777, %v5779
      %v5796 = vsel %vm5794, %v5779, %v5781
      %v5797 = vsel %vm5794, %v5781, %v5783
      %v5798 = vsel %vm5794, %v5783, %v5785
      %v5799 = vsel %vm5794, %v5785, %v5787
      %v5800 = vsel %vm5794, %v5787, %v5789
      %v5801 = vsel %vm5794, %v5789, %v5791
      %v5802 = vsel %vm5794, %v5791, %v5793
      %5811 = vst [vmem:[#allocation4 + $0x300] sm:$0xff] %v5795
      %5812 = vst [vmem:[#allocation4 + $0x308] sm:$0xff] %v5796
      %5813 = vst [vmem:[#allocation4 + $0x310] sm:$0xff] %v5797
      %5814 = vst [vmem:[#allocation4 + $0x318] sm:$0xff] %v5798
      %5815 = vst [vmem:[#allocation4 + $0x320] sm:$0xff] %v5799
      %5816 = vst [vmem:[#allocation4 + $0x328] sm:$0xff] %v5800
      %5817 = vst [vmem:[#allocation4 + $0x330] sm:$0xff] %v5801
      %5818 = vst [vmem:[#allocation4 + $0x338] sm:$0xff] %v5802
      %v5819 = vld [vmem:[#allocation2 + $0x8] sm:$0xff]
      %v5820 = vld [vmem:[#allocation2 + $0x10] sm:$0xff]
      %v5821 = vld [vmem:[#allocation2 + $0x18] sm:$0xff]
      %v5822 = vld [vmem:[#allocation2 + $0x20] sm:$0xff]
      %v5823 = vld [vmem:[#allocation2 + $0x28] sm:$0xff]
      %v5824 = vld [vmem:[#allocation2 + $0x30] sm:$0xff]
      %v5825 = vld [vmem:[#allocation2 + $0x38] sm:$0xff]
      %v5826 = vld [vmem:[#allocation2 + $0x40] sm:$0xff]
      %v5827 = vld [vmem:[#allocation2 + $0x48] sm:$0xff]
      %5837 = vrot.lane.b32.xlu0 %v5819, 99
      %v5838 = vpop.permute.xlu0 %5837
      %5839 = vrot.lane.b32.xlu0 %v5820, 99
      %v5840 = vpop.permute.xlu0 %5839
      %5841 = vrot.lane.b32.xlu0 %v5821, 99
      %v5842 = vpop.permute.xlu0 %5841
      %5843 = vrot.lane.b32.xlu0 %v5822, 99
      %v5844 = vpop.permute.xlu0 %5843
      %5845 = vrot.lane.b32.xlu0 %v5823, 99
      %v5846 = vpop.permute.xlu0 %5845
      %5847 = vrot.lane.b32.xlu0 %v5824, 99
      %v5848 = vpop.permute.xlu0 %5847
      %5849 = vrot.lane.b32.xlu0 %v5825, 99
      %v5850 = vpop.permute.xlu0 %5849
      %5851 = vrot.lane.b32.xlu0 %v5826, 99
      %v5852 = vpop.permute.xlu0 %5851
      %5853 = vrot.lane.b32.xlu0 %v5827, 99
      %v5854 = vpop.permute.xlu0 %5853
      %vm5855 = vcmask 809984
      %v5856 = vsel %vm5855, %v5838, %v5840
      %v5857 = vsel %vm5855, %v5840, %v5842
      %v5858 = vsel %vm5855, %v5842, %v5844
      %v5859 = vsel %vm5855, %v5844, %v5846
      %v5860 = vsel %vm5855, %v5846, %v5848
      %v5861 = vsel %vm5855, %v5848, %v5850
      %v5862 = vsel %vm5855, %v5850, %v5852
      %v5863 = vsel %vm5855, %v5852, %v5854
      %5872 = vst [vmem:[#allocation4 + $0x340] sm:$0xff] %v5856
      %5873 = vst [vmem:[#allocation4 + $0x348] sm:$0xff] %v5857
      %5874 = vst [vmem:[#allocation4 + $0x350] sm:$0xff] %v5858
      %5875 = vst [vmem:[#allocation4 + $0x358] sm:$0xff] %v5859
      %5876 = vst [vmem:[#allocation4 + $0x360] sm:$0xff] %v5860
      %5877 = vst [vmem:[#allocation4 + $0x368] sm:$0xff] %v5861
      %5878 = vst [vmem:[#allocation4 + $0x370] sm:$0xff] %v5862
      %5879 = vst [vmem:[#allocation4 + $0x378] sm:$0xff] %v5863
      %v5880 = vld [vmem:[#allocation2 + $0x8] sm:$0xff]
      %v5881 = vld [vmem:[#allocation2 + $0x10] sm:$0xff]
      %v5882 = vld [vmem:[#allocation2 + $0x18] sm:$0xff]
      %v5883 = vld [vmem:[#allocation2 + $0x20] sm:$0xff]
      %v5884 = vld [vmem:[#allocation2 + $0x28] sm:$0xff]
      %v5885 = vld [vmem:[#allocation2 + $0x30] sm:$0xff]
      %v5886 = vld [vmem:[#allocation2 + $0x38] sm:$0xff]
      %v5887 = vld [vmem:[#allocation2 + $0x40] sm:$0xff]
      %v5888 = vld [vmem:[#allocation2 + $0x48] sm:$0xff]
      %5898 = vrot.lane.b32.xlu0 %v5880, 98
      %v5899 = vpop.permute.xlu0 %5898
      %5900 = vrot.lane.b32.xlu0 %v5881, 98
      %v5901 = vpop.permute.xlu0 %5900
      %5902 = vrot.lane.b32.xlu0 %v5882, 98
      %v5903 = vpop.permute.xlu0 %5902
      %5904 = vrot.lane.b32.xlu0 %v5883, 98
      %v5905 = vpop.permute.xlu0 %5904
      %5906 = vrot.lane.b32.xlu0 %v5884, 98
      %v5907 = vpop.permute.xlu0 %5906
      %5908 = vrot.lane.b32.xlu0 %v5885, 98
      %v5909 = vpop.permute.xlu0 %5908
      %5910 = vrot.lane.b32.xlu0 %v5886, 98
      %v5911 = vpop.permute.xlu0 %5910
      %5912 = vrot.lane.b32.xlu0 %v5887, 98
      %v5913 = vpop.permute.xlu0 %5912
      %5914 = vrot.lane.b32.xlu0 %v5888, 98
      %v5915 = vpop.permute.xlu0 %5914
      %v5916 = vsel %vm1677, %v5899, %v5901
      %v5917 = vsel %vm1677, %v5901, %v5903
      %v5918 = vsel %vm1677, %v5903, %v5905
      %v5919 = vsel %vm1677, %v5905, %v5907
      %v5920 = vsel %vm1677, %v5907, %v5909
      %v5921 = vsel %vm1677, %v5909, %v5911
      %v5922 = vsel %vm1677, %v5911, %v5913
      %v5923 = vsel %vm1677, %v5913, %v5915
      %5932 = vst [vmem:[#allocation4 + $0x380] sm:$0xff] %v5916
      %5933 = vst [vmem:[#allocation4 + $0x388] sm:$0xff] %v5917
      %5934 = vst [vmem:[#allocation4 + $0x390] sm:$0xff] %v5918
      %5935 = vst [vmem:[#allocation4 + $0x398] sm:$0xff] %v5919
      %5936 = vst [vmem:[#allocation4 + $0x3a0] sm:$0xff] %v5920
      %5937 = vst [vmem:[#allocation4 + $0x3a8] sm:$0xff] %v5921
      %5938 = vst [vmem:[#allocation4 + $0x3b0] sm:$0xff] %v5922
      %5939 = vst [vmem:[#allocation4 + $0x3b8] sm:$0xff] %v5923
      %v5940 = vld [vmem:[#allocation2 + $0x8] sm:$0xff]
      %v5941 = vld [vmem:[#allocation2 + $0x10] sm:$0xff]
      %v5942 = vld [vmem:[#allocation2 + $0x18] sm:$0xff]
      %v5943 = vld [vmem:[#allocation2 + $0x20] sm:$0xff]
      %v5944 = vld [vmem:[#allocation2 + $0x28] sm:$0xff]
      %v5945 = vld [vmem:[#allocation2 + $0x30] sm:$0xff]
      %v5946 = vld [vmem:[#allocation2 + $0x38] sm:$0xff]
      %v5947 = vld [vmem:[#allocation2 + $0x40] sm:$0xff]
      %v5948 = vld [vmem:[#allocation2 + $0x48] sm:$0xff]
      %5958 = vrot.lane.b32.xlu0 %v5940, 88
      %v5959 = vpop.permute.xlu0 %5958
      %5960 = vrot.lane.b32.xlu0 %v5941, 88
      %v5961 = vpop.permute.xlu0 %5960
      %5962 = vrot.lane.b32.xlu0 %v5942, 88
      %v5963 = vpop.permute.xlu0 %5962
      %5964 = vrot.lane.b32.xlu0 %v5943, 88
      %v5965 = vpop.permute.xlu0 %5964
      %5966 = vrot.lane.b32.xlu0 %v5944, 88
      %v5967 = vpop.permute.xlu0 %5966
      %5968 = vrot.lane.b32.xlu0 %v5945, 88
      %v5969 = vpop.permute.xlu0 %5968
      %5970 = vrot.lane.b32.xlu0 %v5946, 88
      %v5971 = vpop.permute.xlu0 %5970
      %5972 = vrot.lane.b32.xlu0 %v5947, 88
      %v5973 = vpop.permute.xlu0 %5972
      %5974 = vrot.lane.b32.xlu0 %v5948, 88
      %v5975 = vpop.permute.xlu0 %5974
      %vm5976 = vcmask 719872
      %v5977 = vsel %vm5976, %v5959, %v5961
      %v5978 = vsel %vm5976, %v5961, %v5963
      %v5979 = vsel %vm5976, %v5963, %v5965
      %v5980 = vsel %vm5976, %v5965, %v5967
      %v5981 = vsel %vm5976, %v5967, %v5969
      %v5982 = vsel %vm5976, %v5969, %v5971
      %v5983 = vsel %vm5976, %v5971, %v5973
      %v5984 = vsel %vm5976, %v5973, %v5975
      %5993 = vst [vmem:[#allocation4 + $0x3c0] sm:$0xff] %v5977
      %5994 = vst [vmem:[#allocation4 + $0x3c8] sm:$0xff] %v5978
      %5995 = vst [vmem:[#allocation4 + $0x3d0] sm:$0xff] %v5979
      %5996 = vst [vmem:[#allocation4 + $0x3d8] sm:$0xff] %v5980
      %5997 = vst [vmem:[#allocation4 + $0x3e0] sm:$0xff] %v5981
      %5998 = vst [vmem:[#allocation4 + $0x3e8] sm:$0xff] %v5982
      %5999 = vst [vmem:[#allocation4 + $0x3f0] sm:$0xff] %v5983
      %6000 = vst [vmem:[#allocation4 + $0x3f8] sm:$0xff] %v5984
      %v6001 = vld [vmem:[#allocation2 + $0x8] sm:$0xff]
      %v6002 = vld [vmem:[#allocation2 + $0x10] sm:$0xff]
      %v6003 = vld [vmem:[#allocation2 + $0x18] sm:$0xff]
      %v6004 = vld [vmem:[#allocation2 + $0x20] sm:$0xff]
      %v6005 = vld [vmem:[#allocation2 + $0x28] sm:$0xff]
      %v6006 = vld [vmem:[#allocation2 + $0x30] sm:$0xff]
      %v6007 = vld [vmem:[#allocation2 + $0x38] sm:$0xff]
      %v6008 = vld [vmem:[#allocation2 + $0x40] sm:$0xff]
      %v6009 = vld [vmem:[#allocation2 + $0x48] sm:$0xff]
      %6019 = vrot.lane.b32.xlu0 %v6001, 87
      %v6020 = vpop.permute.xlu0 %6019
      %6021 = vrot.lane.b32.xlu0 %v6002, 87
      %v6022 = vpop.permute.xlu0 %6021
      %6023 = vrot.lane.b32.xlu0 %v6003, 87
      %v6024 = vpop.permute.xlu0 %6023
      %6025 = vrot.lane.b32.xlu0 %v6004, 87
      %v6026 = vpop.permute.xlu0 %6025
      %6027 = vrot.lane.b32.xlu0 %v6005, 87
      %v6028 = vpop.permute.xlu0 %6027
      %6029 = vrot.lane.b32.xlu0 %v6006, 87
      %v6030 = vpop.permute.xlu0 %6029
      %6031 = vrot.lane.b32.xlu0 %v6007, 87
      %v6032 = vpop.permute.xlu0 %6031
      %6033 = vrot.lane.b32.xlu0 %v6008, 87
      %v6034 = vpop.permute.xlu0 %6033
      %6035 = vrot.lane.b32.xlu0 %v6009, 87
      %v6036 = vpop.permute.xlu0 %6035
      %vm6037 = vcmask 711680
      %v6038 = vsel %vm6037, %v6020, %v6022
      %v6039 = vsel %vm6037, %v6022, %v6024
      %v6040 = vsel %vm6037, %v6024, %v6026
      %v6041 = vsel %vm6037, %v6026, %v6028
      %v6042 = vsel %vm6037, %v6028, %v6030
      %v6043 = vsel %vm6037, %v6030, %v6032
      %v6044 = vsel %vm6037, %v6032, %v6034
      %v6045 = vsel %vm6037, %v6034, %v6036
      %6054 = vst [vmem:[#allocation4 + $0x400] sm:$0xff] %v6038
      %6055 = vst [vmem:[#allocation4 + $0x408] sm:$0xff] %v6039
      %6056 = vst [vmem:[#allocation4 + $0x410] sm:$0xff] %v6040
      %6057 = vst [vmem:[#allocation4 + $0x418] sm:$0xff] %v6041
      %6058 = vst [vmem:[#allocation4 + $0x420] sm:$0xff] %v6042
      %6059 = vst [vmem:[#allocation4 + $0x428] sm:$0xff] %v6043
      %6060 = vst [vmem:[#allocation4 + $0x430] sm:$0xff] %v6044
      %6061 = vst [vmem:[#allocation4 + $0x438] sm:$0xff] %v6045
      %v6062 = vld [vmem:[#allocation2 + $0x8] sm:$0xff]
      %v6063 = vld [vmem:[#allocation2 + $0x10] sm:$0xff]
      %v6064 = vld [vmem:[#allocation2 + $0x18] sm:$0xff]
      %v6065 = vld [vmem:[#allocation2 + $0x20] sm:$0xff]
      %v6066 = vld [vmem:[#allocation2 + $0x28] sm:$0xff]
      %v6067 = vld [vmem:[#allocation2 + $0x30] sm:$0xff]
      %v6068 = vld [vmem:[#allocation2 + $0x38] sm:$0xff]
      %v6069 = vld [vmem:[#allocation2 + $0x40] sm:$0xff]
      %v6070 = vld [vmem:[#allocation2 + $0x48] sm:$0xff]
      %6080 = vrot.lane.b32.xlu0 %v6062, 86
      %v6081 = vpop.permute.xlu0 %6080
      %6082 = vrot.lane.b32.xlu0 %v6063, 86
      %v6083 = vpop.permute.xlu0 %6082
      %6084 = vrot.lane.b32.xlu0 %v6064, 86
      %v6085 = vpop.permute.xlu0 %6084
      %6086 = vrot.lane.b32.xlu0 %v6065, 86
      %v6087 = vpop.permute.xlu0 %6086
      %6088 = vrot.lane.b32.xlu0 %v6066, 86
      %v6089 = vpop.permute.xlu0 %6088
      %6090 = vrot.lane.b32.xlu0 %v6067, 86
      %v6091 = vpop.permute.xlu0 %6090
      %6092 = vrot.lane.b32.xlu0 %v6068, 86
      %v6093 = vpop.permute.xlu0 %6092
      %6094 = vrot.lane.b32.xlu0 %v6069, 86
      %v6095 = vpop.permute.xlu0 %6094
      %6096 = vrot.lane.b32.xlu0 %v6070, 86
      %v6097 = vpop.permute.xlu0 %6096
      %vm6098 = vcmask 703488
      %v6099 = vsel %vm6098, %v6081, %v6083
      %v6100 = vsel %vm6098, %v6083, %v6085
      %v6101 = vsel %vm6098, %v6085, %v6087
      %v6102 = vsel %vm6098, %v6087, %v6089
      %v6103 = vsel %vm6098, %v6089, %v6091
      %v6104 = vsel %vm6098, %v6091, %v6093
      %v6105 = vsel %vm6098, %v6093, %v6095
      %v6106 = vsel %vm6098, %v6095, %v6097
      %6115 = vst [vmem:[#allocation4 + $0x440] sm:$0xff] %v6099
      %6116 = vst [vmem:[#allocation4 + $0x448] sm:$0xff] %v6100
      %6117 = vst [vmem:[#allocation4 + $0x450] sm:$0xff] %v6101
      %6118 = vst [vmem:[#allocation4 + $0x458] sm:$0xff] %v6102
      %6119 = vst [vmem:[#allocation4 + $0x460] sm:$0xff] %v6103
      %6120 = vst [vmem:[#allocation4 + $0x468] sm:$0xff] %v6104
      %6121 = vst [vmem:[#allocation4 + $0x470] sm:$0xff] %v6105
      %6122 = vst [vmem:[#allocation4 + $0x478] sm:$0xff] %v6106
      %v6123 = vld [vmem:[#allocation2 + $0x10] sm:$0xff]
      %v6124 = vld [vmem:[#allocation2 + $0x18] sm:$0xff]
      %v6125 = vld [vmem:[#allocation2 + $0x20] sm:$0xff]
      %v6126 = vld [vmem:[#allocation2 + $0x28] sm:$0xff]
      %v6127 = vld [vmem:[#allocation2 + $0x30] sm:$0xff]
      %v6128 = vld [vmem:[#allocation2 + $0x38] sm:$0xff]
      %v6129 = vld [vmem:[#allocation2 + $0x40] sm:$0xff]
      %v6130 = vld [vmem:[#allocation2 + $0x48] sm:$0xff]
      %v6131 = vld [vmem:[#allocation2 + $0x50] sm:$0xff]
      %6141 = vrot.lane.b32.xlu0 %v6123, 96
      %v6142 = vpop.permute.xlu0 %6141
      %6143 = vrot.lane.b32.xlu0 %v6124, 96
      %v6144 = vpop.permute.xlu0 %6143
      %6145 = vrot.lane.b32.xlu0 %v6125, 96
      %v6146 = vpop.permute.xlu0 %6145
      %6147 = vrot.lane.b32.xlu0 %v6126, 96
      %v6148 = vpop.permute.xlu0 %6147
      %6149 = vrot.lane.b32.xlu0 %v6127, 96
      %v6150 = vpop.permute.xlu0 %6149
      %6151 = vrot.lane.b32.xlu0 %v6128, 96
      %v6152 = vpop.permute.xlu0 %6151
      %6153 = vrot.lane.b32.xlu0 %v6129, 96
      %v6154 = vpop.permute.xlu0 %6153
      %6155 = vrot.lane.b32.xlu0 %v6130, 96
      %v6156 = vpop.permute.xlu0 %6155
      %6157 = vrot.lane.b32.xlu0 %v6131, 96
      %v6158 = vpop.permute.xlu0 %6157
      %v6159 = vsel %vm1857, %v6142, %v6144
      %v6160 = vsel %vm1857, %v6144, %v6146
      %v6161 = vsel %vm1857, %v6146, %v6148
      %v6162 = vsel %vm1857, %v6148, %v6150
      %v6163 = vsel %vm1857, %v6150, %v6152
      %v6164 = vsel %vm1857, %v6152, %v6154
      %v6165 = vsel %vm1857, %v6154, %v6156
      %v6166 = vsel %vm1857, %v6156, %v6158
      %6175 = vst [vmem:[#allocation4 + $0x480] sm:$0xff] %v6159
      %6176 = vst [vmem:[#allocation4 + $0x488] sm:$0xff] %v6160
      %6177 = vst [vmem:[#allocation4 + $0x490] sm:$0xff] %v6161
      %6178 = vst [vmem:[#allocation4 + $0x498] sm:$0xff] %v6162
      %6179 = vst [vmem:[#allocation4 + $0x4a0] sm:$0xff] %v6163
      %6180 = vst [vmem:[#allocation4 + $0x4a8] sm:$0xff] %v6164
      %6181 = vst [vmem:[#allocation4 + $0x4b0] sm:$0xff] %v6165
      %6182 = vst [vmem:[#allocation4 + $0x4b8] sm:$0xff] %v6166
      %v6183 = vld [vmem:[#allocation2 + $0x10] sm:$0xff]
      %v6184 = vld [vmem:[#allocation2 + $0x18] sm:$0xff]
      %v6185 = vld [vmem:[#allocation2 + $0x20] sm:$0xff]
      %v6186 = vld [vmem:[#allocation2 + $0x28] sm:$0xff]
      %v6187 = vld [vmem:[#allocation2 + $0x30] sm:$0xff]
      %v6188 = vld [vmem:[#allocation2 + $0x38] sm:$0xff]
      %v6189 = vld [vmem:[#allocation2 + $0x40] sm:$0xff]
      %v6190 = vld [vmem:[#allocation2 + $0x48] sm:$0xff]
      %v6191 = vld [vmem:[#allocation2 + $0x50] sm:$0xff]
      %6201 = vrot.lane.b32.xlu0 %v6183, 95
      %v6202 = vpop.permute.xlu0 %6201
      %6203 = vrot.lane.b32.xlu0 %v6184, 95
      %v6204 = vpop.permute.xlu0 %6203
      %6205 = vrot.lane.b32.xlu0 %v6185, 95
      %v6206 = vpop.permute.xlu0 %6205
      %6207 = vrot.lane.b32.xlu0 %v6186, 95
      %v6208 = vpop.permute.xlu0 %6207
      %6209 = vrot.lane.b32.xlu0 %v6187, 95
      %v6210 = vpop.permute.xlu0 %6209
      %6211 = vrot.lane.b32.xlu0 %v6188, 95
      %v6212 = vpop.permute.xlu0 %6211
      %6213 = vrot.lane.b32.xlu0 %v6189, 95
      %v6214 = vpop.permute.xlu0 %6213
      %6215 = vrot.lane.b32.xlu0 %v6190, 95
      %v6216 = vpop.permute.xlu0 %6215
      %6217 = vrot.lane.b32.xlu0 %v6191, 95
      %v6218 = vpop.permute.xlu0 %6217
      %vm6219 = vcmask 777216
      %v6220 = vsel %vm6219, %v6202, %v6204
      %v6221 = vsel %vm6219, %v6204, %v6206
      %v6222 = vsel %vm6219, %v6206, %v6208
      %v6223 = vsel %vm6219, %v6208, %v6210
      %v6224 = vsel %vm6219, %v6210, %v6212
      %v6225 = vsel %vm6219, %v6212, %v6214
      %v6226 = vsel %vm6219, %v6214, %v6216
      %v6227 = vsel %vm6219, %v6216, %v6218
      %6236 = vst [vmem:[#allocation4 + $0x4c0] sm:$0xff] %v6220
      %6237 = vst [vmem:[#allocation4 + $0x4c8] sm:$0xff] %v6221
      %6238 = vst [vmem:[#allocation4 + $0x4d0] sm:$0xff] %v6222
      %6239 = vst [vmem:[#allocation4 + $0x4d8] sm:$0xff] %v6223
      %6240 = vst [vmem:[#allocation4 + $0x4e0] sm:$0xff] %v6224
      %6241 = vst [vmem:[#allocation4 + $0x4e8] sm:$0xff] %v6225
      %6242 = vst [vmem:[#allocation4 + $0x4f0] sm:$0xff] %v6226
      %6243 = vst [vmem:[#allocation4 + $0x4f8] sm:$0xff] %v6227
      %v6244 = vld [vmem:[#allocation2 + $0x10] sm:$0xff]
      %v6245 = vld [vmem:[#allocation2 + $0x18] sm:$0xff]
      %v6246 = vld [vmem:[#allocation2 + $0x20] sm:$0xff]
      %v6247 = vld [vmem:[#allocation2 + $0x28] sm:$0xff]
      %v6248 = vld [vmem:[#allocation2 + $0x30] sm:$0xff]
      %v6249 = vld [vmem:[#allocation2 + $0x38] sm:$0xff]
      %v6250 = vld [vmem:[#allocation2 + $0x40] sm:$0xff]
      %v6251 = vld [vmem:[#allocation2 + $0x48] sm:$0xff]
      %v6252 = vld [vmem:[#allocation2 + $0x50] sm:$0xff]
      %6262 = vrot.lane.b32.xlu0 %v6244, 94
      %v6263 = vpop.permute.xlu0 %6262
      %6264 = vrot.lane.b32.xlu0 %v6245, 94
      %v6265 = vpop.permute.xlu0 %6264
      %6266 = vrot.lane.b32.xlu0 %v6246, 94
      %v6267 = vpop.permute.xlu0 %6266
      %6268 = vrot.lane.b32.xlu0 %v6247, 94
      %v6269 = vpop.permute.xlu0 %6268
      %6270 = vrot.lane.b32.xlu0 %v6248, 94
      %v6271 = vpop.permute.xlu0 %6270
      %6272 = vrot.lane.b32.xlu0 %v6249, 94
      %v6273 = vpop.permute.xlu0 %6272
      %6274 = vrot.lane.b32.xlu0 %v6250, 94
      %v6275 = vpop.permute.xlu0 %6274
      %6276 = vrot.lane.b32.xlu0 %v6251, 94
      %v6277 = vpop.permute.xlu0 %6276
      %6278 = vrot.lane.b32.xlu0 %v6252, 94
      %v6279 = vpop.permute.xlu0 %6278
      %v6280 = vsel %vm2217, %v6263, %v6265
      %v6281 = vsel %vm2217, %v6265, %v6267
      %v6282 = vsel %vm2217, %v6267, %v6269
      %v6283 = vsel %vm2217, %v6269, %v6271
      %v6284 = vsel %vm2217, %v6271, %v6273
      %v6285 = vsel %vm2217, %v6273, %v6275
      %v6286 = vsel %vm2217, %v6275, %v6277
      %v6287 = vsel %vm2217, %v6277, %v6279
      %6296 = vst [vmem:[#allocation4 + $0x500] sm:$0xff] %v6280
      %6297 = vst [vmem:[#allocation4 + $0x508] sm:$0xff] %v6281
      %6298 = vst [vmem:[#allocation4 + $0x510] sm:$0xff] %v6282
      %6299 = vst [vmem:[#allocation4 + $0x518] sm:$0xff] %v6283
      %6300 = vst [vmem:[#allocation4 + $0x520] sm:$0xff] %v6284
      %6301 = vst [vmem:[#allocation4 + $0x528] sm:$0xff] %v6285
      %6302 = vst [vmem:[#allocation4 + $0x530] sm:$0xff] %v6286
      %6303 = vst [vmem:[#allocation4 + $0x538] sm:$0xff] %v6287
      %v6304 = vld [vmem:[#allocation2 + $0x10] sm:$0xff]
      %v6305 = vld [vmem:[#allocation2 + $0x18] sm:$0xff]
      %v6306 = vld [vmem:[#allocation2 + $0x20] sm:$0xff]
      %v6307 = vld [vmem:[#allocation2 + $0x28] sm:$0xff]
      %v6308 = vld [vmem:[#allocation2 + $0x30] sm:$0xff]
      %v6309 = vld [vmem:[#allocation2 + $0x38] sm:$0xff]
      %v6310 = vld [vmem:[#allocation2 + $0x40] sm:$0xff]
      %v6311 = vld [vmem:[#allocation2 + $0x48] sm:$0xff]
      %v6312 = vld [vmem:[#allocation2 + $0x50] sm:$0xff]
      %6322 = vrot.lane.b32.xlu0 %v6304, 84
      %v6323 = vpop.permute.xlu0 %6322
      %6324 = vrot.lane.b32.xlu0 %v6305, 84
      %v6325 = vpop.permute.xlu0 %6324
      %6326 = vrot.lane.b32.xlu0 %v6306, 84
      %v6327 = vpop.permute.xlu0 %6326
      %6328 = vrot.lane.b32.xlu0 %v6307, 84
      %v6329 = vpop.permute.xlu0 %6328
      %6330 = vrot.lane.b32.xlu0 %v6308, 84
      %v6331 = vpop.permute.xlu0 %6330
      %6332 = vrot.lane.b32.xlu0 %v6309, 84
      %v6333 = vpop.permute.xlu0 %6332
      %6334 = vrot.lane.b32.xlu0 %v6310, 84
      %v6335 = vpop.permute.xlu0 %6334
      %6336 = vrot.lane.b32.xlu0 %v6311, 84
      %v6337 = vpop.permute.xlu0 %6336
      %6338 = vrot.lane.b32.xlu0 %v6312, 84
      %v6339 = vpop.permute.xlu0 %6338
      %vm6340 = vcmask 687104
      %v6341 = vsel %vm6340, %v6323, %v6325
      %v6342 = vsel %vm6340, %v6325, %v6327
      %v6343 = vsel %vm6340, %v6327, %v6329
      %v6344 = vsel %vm6340, %v6329, %v6331
      %v6345 = vsel %vm6340, %v6331, %v6333
      %v6346 = vsel %vm6340, %v6333, %v6335
      %v6347 = vsel %vm6340, %v6335, %v6337
      %v6348 = vsel %vm6340, %v6337, %v6339
      %6357 = vst [vmem:[#allocation4 + $0x540] sm:$0xff] %v6341
      %6358 = vst [vmem:[#allocation4 + $0x548] sm:$0xff] %v6342
      %6359 = vst [vmem:[#allocation4 + $0x550] sm:$0xff] %v6343
      %6360 = vst [vmem:[#allocation4 + $0x558] sm:$0xff] %v6344
      %6361 = vst [vmem:[#allocation4 + $0x560] sm:$0xff] %v6345
      %6362 = vst [vmem:[#allocation4 + $0x568] sm:$0xff] %v6346
      %6363 = vst [vmem:[#allocation4 + $0x570] sm:$0xff] %v6347
      %6364 = vst [vmem:[#allocation4 + $0x578] sm:$0xff] %v6348
      %v6365 = vld [vmem:[#allocation2 + $0x10] sm:$0xff]
      %v6366 = vld [vmem:[#allocation2 + $0x18] sm:$0xff]
      %v6367 = vld [vmem:[#allocation2 + $0x20] sm:$0xff]
      %v6368 = vld [vmem:[#allocation2 + $0x28] sm:$0xff]
      %v6369 = vld [vmem:[#allocation2 + $0x30] sm:$0xff]
      %v6370 = vld [vmem:[#allocation2 + $0x38] sm:$0xff]
      %v6371 = vld [vmem:[#allocation2 + $0x40] sm:$0xff]
      %v6372 = vld [vmem:[#allocation2 + $0x48] sm:$0xff]
      %v6373 = vld [vmem:[#allocation2 + $0x50] sm:$0xff]
      %6383 = vrot.lane.b32.xlu0 %v6365, 83
      %v6384 = vpop.permute.xlu0 %6383
      %6385 = vrot.lane.b32.xlu0 %v6366, 83
      %v6386 = vpop.permute.xlu0 %6385
      %6387 = vrot.lane.b32.xlu0 %v6367, 83
      %v6388 = vpop.permute.xlu0 %6387
      %6389 = vrot.lane.b32.xlu0 %v6368, 83
      %v6390 = vpop.permute.xlu0 %6389
      %6391 = vrot.lane.b32.xlu0 %v6369, 83
      %v6392 = vpop.permute.xlu0 %6391
      %6393 = vrot.lane.b32.xlu0 %v6370, 83
      %v6394 = vpop.permute.xlu0 %6393
      %6395 = vrot.lane.b32.xlu0 %v6371, 83
      %v6396 = vpop.permute.xlu0 %6395
      %6397 = vrot.lane.b32.xlu0 %v6372, 83
      %v6398 = vpop.permute.xlu0 %6397
      %6399 = vrot.lane.b32.xlu0 %v6373, 83
      %v6400 = vpop.permute.xlu0 %6399
      %vm6401 = vcmask 678912
      %v6402 = vsel %vm6401, %v6384, %v6386
      %v6403 = vsel %vm6401, %v6386, %v6388
      %v6404 = vsel %vm6401, %v6388, %v6390
      %v6405 = vsel %vm6401, %v6390, %v6392
      %v6406 = vsel %vm6401, %v6392, %v6394
      %v6407 = vsel %vm6401, %v6394, %v6396
      %v6408 = vsel %vm6401, %v6396, %v6398
      %v6409 = vsel %vm6401, %v6398, %v6400
      %6418 = vst [vmem:[#allocation4 + $0x580] sm:$0xff] %v6402
      %6419 = vst [vmem:[#allocation4 + $0x588] sm:$0xff] %v6403
      %6420 = vst [vmem:[#allocation4 + $0x590] sm:$0xff] %v6404
      %6421 = vst [vmem:[#allocation4 + $0x598] sm:$0xff] %v6405
      %6422 = vst [vmem:[#allocation4 + $0x5a0] sm:$0xff] %v6406
      %6423 = vst [vmem:[#allocation4 + $0x5a8] sm:$0xff] %v6407
      %6424 = vst [vmem:[#allocation4 + $0x5b0] sm:$0xff] %v6408
      %6425 = vst [vmem:[#allocation4 + $0x5b8] sm:$0xff] %v6409
      %v6426 = vld [vmem:[#allocation2 + $0x10] sm:$0xff]
      %v6427 = vld [vmem:[#allocation2 + $0x18] sm:$0xff]
      %v6428 = vld [vmem:[#allocation2 + $0x20] sm:$0xff]
      %v6429 = vld [vmem:[#allocation2 + $0x28] sm:$0xff]
      %v6430 = vld [vmem:[#allocation2 + $0x30] sm:$0xff]
      %v6431 = vld [vmem:[#allocation2 + $0x38] sm:$0xff]
      %v6432 = vld [vmem:[#allocation2 + $0x40] sm:$0xff]
      %v6433 = vld [vmem:[#allocation2 + $0x48] sm:$0xff]
      %v6434 = vld [vmem:[#allocation2 + $0x50] sm:$0xff]
      %6444 = vrot.lane.b32.xlu0 %v6426, 82
      %v6445 = vpop.permute.xlu0 %6444
      %6446 = vrot.lane.b32.xlu0 %v6427, 82
      %v6447 = vpop.permute.xlu0 %6446
      %6448 = vrot.lane.b32.xlu0 %v6428, 82
      %v6449 = vpop.permute.xlu0 %6448
      %6450 = vrot.lane.b32.xlu0 %v6429, 82
      %v6451 = vpop.permute.xlu0 %6450
      %6452 = vrot.lane.b32.xlu0 %v6430, 82
      %v6453 = vpop.permute.xlu0 %6452
      %6454 = vrot.lane.b32.xlu0 %v6431, 82
      %v6455 = vpop.permute.xlu0 %6454
      %6456 = vrot.lane.b32.xlu0 %v6432, 82
      %v6457 = vpop.permute.xlu0 %6456
      %6458 = vrot.lane.b32.xlu0 %v6433, 82
      %v6459 = vpop.permute.xlu0 %6458
      %6460 = vrot.lane.b32.xlu0 %v6434, 82
      %v6461 = vpop.permute.xlu0 %6460
      %v6462 = vsel %vm2487, %v6445, %v6447
      %v6463 = vsel %vm2487, %v6447, %v6449
      %v6464 = vsel %vm2487, %v6449, %v6451
      %v6465 = vsel %vm2487, %v6451, %v6453
      %v6466 = vsel %vm2487, %v6453, %v6455
      %v6467 = vsel %vm2487, %v6455, %v6457
      %v6468 = vsel %vm2487, %v6457, %v6459
      %v6469 = vsel %vm2487, %v6459, %v6461
      %6478 = vst [vmem:[#allocation4 + $0x5c0] sm:$0xff] %v6462
      %6479 = vst [vmem:[#allocation4 + $0x5c8] sm:$0xff] %v6463
      %6480 = vst [vmem:[#allocation4 + $0x5d0] sm:$0xff] %v6464
      %6481 = vst [vmem:[#allocation4 + $0x5d8] sm:$0xff] %v6465
      %6482 = vst [vmem:[#allocation4 + $0x5e0] sm:$0xff] %v6466
      %6483 = vst [vmem:[#allocation4 + $0x5e8] sm:$0xff] %v6467
      %6484 = vst [vmem:[#allocation4 + $0x5f0] sm:$0xff] %v6468
      %6485 = vst [vmem:[#allocation4 + $0x5f8] sm:$0xff] %v6469
      %v6486 = vld [vmem:[#allocation2 + $0x10] sm:$0xff]
      %v6487 = vld [vmem:[#allocation2 + $0x18] sm:$0xff]
      %v6488 = vld [vmem:[#allocation2 + $0x20] sm:$0xff]
      %v6489 = vld [vmem:[#allocation2 + $0x28] sm:$0xff]
      %v6490 = vld [vmem:[#allocation2 + $0x30] sm:$0xff]
      %v6491 = vld [vmem:[#allocation2 + $0x38] sm:$0xff]
      %v6492 = vld [vmem:[#allocation2 + $0x40] sm:$0xff]
      %v6493 = vld [vmem:[#allocation2 + $0x48] sm:$0xff]
      %v6494 = vld [vmem:[#allocation2 + $0x50] sm:$0xff]
      %6504 = vrot.lane.b32.xlu0 %v6486, 72
      %v6505 = vpop.permute.xlu0 %6504
      %6506 = vrot.lane.b32.xlu0 %v6487, 72
      %v6507 = vpop.permute.xlu0 %6506
      %6508 = vrot.lane.b32.xlu0 %v6488, 72
      %v6509 = vpop.permute.xlu0 %6508
      %6510 = vrot.lane.b32.xlu0 %v6489, 72
      %v6511 = vpop.permute.xlu0 %6510
      %6512 = vrot.lane.b32.xlu0 %v6490, 72
      %v6513 = vpop.permute.xlu0 %6512
      %6514 = vrot.lane.b32.xlu0 %v6491, 72
      %v6515 = vpop.permute.xlu0 %6514
      %6516 = vrot.lane.b32.xlu0 %v6492, 72
      %v6517 = vpop.permute.xlu0 %6516
      %6518 = vrot.lane.b32.xlu0 %v6493, 72
      %v6519 = vpop.permute.xlu0 %6518
      %6520 = vrot.lane.b32.xlu0 %v6494, 72
      %v6521 = vpop.permute.xlu0 %6520
      %vm6522 = vcmask 588800
      %v6523 = vsel %vm6522, %v6505, %v6507
      %v6524 = vsel %vm6522, %v6507, %v6509
      %v6525 = vsel %vm6522, %v6509, %v6511
      %v6526 = vsel %vm6522, %v6511, %v6513
      %v6527 = vsel %vm6522, %v6513, %v6515
      %v6528 = vsel %vm6522, %v6515, %v6517
      %v6529 = vsel %vm6522, %v6517, %v6519
      %v6530 = vsel %vm6522, %v6519, %v6521
      %6539 = vst [vmem:[#allocation4 + $0x600] sm:$0xff] %v6523
      %6540 = vst [vmem:[#allocation4 + $0x608] sm:$0xff] %v6524
      %6541 = vst [vmem:[#allocation4 + $0x610] sm:$0xff] %v6525
      %6542 = vst [vmem:[#allocation4 + $0x618] sm:$0xff] %v6526
      %6543 = vst [vmem:[#allocation4 + $0x620] sm:$0xff] %v6527
      %6544 = vst [vmem:[#allocation4 + $0x628] sm:$0xff] %v6528
      %6545 = vst [vmem:[#allocation4 + $0x630] sm:$0xff] %v6529
      %6546 = vst [vmem:[#allocation4 + $0x638] sm:$0xff] %v6530
      %v6547 = vld [vmem:[#allocation2 + $0x10] sm:$0xff]
      %v6548 = vld [vmem:[#allocation2 + $0x18] sm:$0xff]
      %v6549 = vld [vmem:[#allocation2 + $0x20] sm:$0xff]
      %v6550 = vld [vmem:[#allocation2 + $0x28] sm:$0xff]
      %v6551 = vld [vmem:[#allocation2 + $0x30] sm:$0xff]
      %v6552 = vld [vmem:[#allocation2 + $0x38] sm:$0xff]
      %v6553 = vld [vmem:[#allocation2 + $0x40] sm:$0xff]
      %v6554 = vld [vmem:[#allocation2 + $0x48] sm:$0xff]
      %v6555 = vld [vmem:[#allocation2 + $0x50] sm:$0xff]
      %6565 = vrot.lane.b32.xlu0 %v6547, 71
      %v6566 = vpop.permute.xlu0 %6565
      %6567 = vrot.lane.b32.xlu0 %v6548, 71
      %v6568 = vpop.permute.xlu0 %6567
      %6569 = vrot.lane.b32.xlu0 %v6549, 71
      %v6570 = vpop.permute.xlu0 %6569
      %6571 = vrot.lane.b32.xlu0 %v6550, 71
      %v6572 = vpop.permute.xlu0 %6571
      %6573 = vrot.lane.b32.xlu0 %v6551, 71
      %v6574 = vpop.permute.xlu0 %6573
      %6575 = vrot.lane.b32.xlu0 %v6552, 71
      %v6576 = vpop.permute.xlu0 %6575
      %6577 = vrot.lane.b32.xlu0 %v6553, 71
      %v6578 = vpop.permute.xlu0 %6577
      %6579 = vrot.lane.b32.xlu0 %v6554, 71
      %v6580 = vpop.permute.xlu0 %6579
      %6581 = vrot.lane.b32.xlu0 %v6555, 71
      %v6582 = vpop.permute.xlu0 %6581
      %vm6583 = vcmask 580608
      %v6584 = vsel %vm6583, %v6566, %v6568
      %v6585 = vsel %vm6583, %v6568, %v6570
      %v6586 = vsel %vm6583, %v6570, %v6572
      %v6587 = vsel %vm6583, %v6572, %v6574
      %v6588 = vsel %vm6583, %v6574, %v6576
      %v6589 = vsel %vm6583, %v6576, %v6578
      %v6590 = vsel %vm6583, %v6578, %v6580
      %v6591 = vsel %vm6583, %v6580, %v6582
      %6600 = vst [vmem:[#allocation4 + $0x640] sm:$0xff] %v6584
      %6601 = vst [vmem:[#allocation4 + $0x648] sm:$0xff] %v6585
      %6602 = vst [vmem:[#allocation4 + $0x650] sm:$0xff] %v6586
      %6603 = vst [vmem:[#allocation4 + $0x658] sm:$0xff] %v6587
      %6604 = vst [vmem:[#allocation4 + $0x660] sm:$0xff] %v6588
      %6605 = vst [vmem:[#allocation4 + $0x668] sm:$0xff] %v6589
      %6606 = vst [vmem:[#allocation4 + $0x670] sm:$0xff] %v6590
      %6607 = vst [vmem:[#allocation4 + $0x678] sm:$0xff] %v6591
      %v6608 = vld [vmem:[#allocation2 + $0x10] sm:$0xff]
      %v6609 = vld [vmem:[#allocation2 + $0x18] sm:$0xff]
      %v6610 = vld [vmem:[#allocation2 + $0x20] sm:$0xff]
      %v6611 = vld [vmem:[#allocation2 + $0x28] sm:$0xff]
      %v6612 = vld [vmem:[#allocation2 + $0x30] sm:$0xff]
      %v6613 = vld [vmem:[#allocation2 + $0x38] sm:$0xff]
      %v6614 = vld [vmem:[#allocation2 + $0x40] sm:$0xff]
      %v6615 = vld [vmem:[#allocation2 + $0x48] sm:$0xff]
      %v6616 = vld [vmem:[#allocation2 + $0x50] sm:$0xff]
      %6626 = vrot.lane.b32.xlu0 %v6608, 70
      %v6627 = vpop.permute.xlu0 %6626
      %6628 = vrot.lane.b32.xlu0 %v6609, 70
      %v6629 = vpop.permute.xlu0 %6628
      %6630 = vrot.lane.b32.xlu0 %v6610, 70
      %v6631 = vpop.permute.xlu0 %6630
      %6632 = vrot.lane.b32.xlu0 %v6611, 70
      %v6633 = vpop.permute.xlu0 %6632
      %6634 = vrot.lane.b32.xlu0 %v6612, 70
      %v6635 = vpop.permute.xlu0 %6634
      %6636 = vrot.lane.b32.xlu0 %v6613, 70
      %v6637 = vpop.permute.xlu0 %6636
      %6638 = vrot.lane.b32.xlu0 %v6614, 70
      %v6639 = vpop.permute.xlu0 %6638
      %6640 = vrot.lane.b32.xlu0 %v6615, 70
      %v6641 = vpop.permute.xlu0 %6640
      %6642 = vrot.lane.b32.xlu0 %v6616, 70
      %v6643 = vpop.permute.xlu0 %6642
      %vm6644 = vcmask 572416
      %v6645 = vsel %vm6644, %v6627, %v6629
      %v6646 = vsel %vm6644, %v6629, %v6631
      %v6647 = vsel %vm6644, %v6631, %v6633
      %v6648 = vsel %vm6644, %v6633, %v6635
      %v6649 = vsel %vm6644, %v6635, %v6637
      %v6650 = vsel %vm6644, %v6637, %v6639
      %v6651 = vsel %vm6644, %v6639, %v6641
      %v6652 = vsel %vm6644, %v6641, %v6643
      %6661 = vst [vmem:[#allocation4 + $0x680] sm:$0xff] %v6645
      %6662 = vst [vmem:[#allocation4 + $0x688] sm:$0xff] %v6646
      %6663 = vst [vmem:[#allocation4 + $0x690] sm:$0xff] %v6647
      %6664 = vst [vmem:[#allocation4 + $0x698] sm:$0xff] %v6648
      %6665 = vst [vmem:[#allocation4 + $0x6a0] sm:$0xff] %v6649
      %6666 = vst [vmem:[#allocation4 + $0x6a8] sm:$0xff] %v6650
      %6667 = vst [vmem:[#allocation4 + $0x6b0] sm:$0xff] %v6651
      %6668 = vst [vmem:[#allocation4 + $0x6b8] sm:$0xff] %v6652
      %v6669 = vld [vmem:[%s246 + $0xc] sm:$0xff]
      %v6670 = vld [vmem:[%s246 + $0x14] sm:$0xff]
      %v6671 = vld [vmem:[%s246 + $0x1c] sm:$0xff]
      %v6672 = vld [vmem:[%s246 + $0x24] sm:$0xff]
      %v6673 = vld [vmem:[%s246 + $0x2c] sm:$0xf]
      %v6674 = vld [vmem:[%s246 + $0x4c] sm:$0xff]
      %v6675 = vld [vmem:[%s246 + $0x54] sm:$0xff]
      %v6676 = vld [vmem:[%s246 + $0x5c] sm:$0xff]
      %v6677 = vld [vmem:[%s246 + $0x64] sm:$0xff]
      %v6678 = vld [vmem:[%s246 + $0x6c] sm:$0xf]
      %v6689 = vunpack.c.l.b16 %v6669
      %v6690 = vunpack.c.h.b16 %v6669
      %v6691 = vunpack.c.l.b16 %v6670
      %v6692 = vunpack.c.h.b16 %v6670
      %v6693 = vunpack.c.l.b16 %v6671
      %v6694 = vunpack.c.h.b16 %v6671
      %v6695 = vunpack.c.l.b16 %v6672
      %v6696 = vunpack.c.h.b16 %v6672
      %v6697 = vunpack.c.l.b16 %v6673
      %v6698 = vunpack.c.l.b16 %v6674
      %v6699 = vunpack.c.h.b16 %v6674
      %v6700 = vunpack.c.l.b16 %v6675
      %v6701 = vunpack.c.h.b16 %v6675
      %v6702 = vunpack.c.l.b16 %v6676
      %v6703 = vunpack.c.h.b16 %v6676
      %v6704 = vunpack.c.l.b16 %v6677
      %v6705 = vunpack.c.h.b16 %v6677
      %v6706 = vunpack.c.l.b16 %v6678
      %v6707 = vpack.c.b16 %v6698, %v6689
      %v6708 = vpack.c.b16 %v6699, %v6690
      %v6709 = vpack.c.b16 %v6700, %v6691
      %v6710 = vpack.c.b16 %v6701, %v6692
      %v6711 = vpack.c.b16 %v6702, %v6693
      %v6712 = vpack.c.b16 %v6703, %v6694
      %v6713 = vpack.c.b16 %v6704, %v6695
      %v6714 = vpack.c.b16 %v6705, %v6696
      %v6715 = vpack.c.b16 %v6706, %v6697
      %6716 = vrot.lane.b32.xlu0 %v6707, 80
      %v6717 = vpop.permute.xlu0 %6716
      %6718 = vrot.lane.b32.xlu0 %v6708, 80
      %v6719 = vpop.permute.xlu0 %6718
      %6720 = vrot.lane.b32.xlu0 %v6709, 80
      %v6721 = vpop.permute.xlu0 %6720
      %6722 = vrot.lane.b32.xlu0 %v6710, 80
      %v6723 = vpop.permute.xlu0 %6722
      %6724 = vrot.lane.b32.xlu0 %v6711, 80
      %v6725 = vpop.permute.xlu0 %6724
      %6726 = vrot.lane.b32.xlu0 %v6712, 80
      %v6727 = vpop.permute.xlu0 %6726
      %6728 = vrot.lane.b32.xlu0 %v6713, 80
      %v6729 = vpop.permute.xlu0 %6728
      %6730 = vrot.lane.b32.xlu0 %v6714, 80
      %v6731 = vpop.permute.xlu0 %6730
      %6732 = vrot.lane.b32.xlu0 %v6715, 80
      %v6733 = vpop.permute.xlu0 %6732
      %v6734 = vsel %vm2667, %v6717, %v6719
      %v6735 = vsel %vm2667, %v6719, %v6721
      %v6736 = vsel %vm2667, %v6721, %v6723
      %v6737 = vsel %vm2667, %v6723, %v6725
      %v6738 = vsel %vm2667, %v6725, %v6727
      %v6739 = vsel %vm2667, %v6727, %v6729
      %v6740 = vsel %vm2667, %v6729, %v6731
      %v6741 = vsel %vm2667, %v6731, %v6733
      %6750 = vst [vmem:[#allocation4 + $0x6c0] sm:$0xff] %v6734
      %6751 = vst [vmem:[#allocation4 + $0x6c8] sm:$0xff] %v6735
      %6752 = vst [vmem:[#allocation4 + $0x6d0] sm:$0xff] %v6736
      %6753 = vst [vmem:[#allocation4 + $0x6d8] sm:$0xff] %v6737
      %6754 = vst [vmem:[#allocation4 + $0x6e0] sm:$0xff] %v6738
      %6755 = vst [vmem:[#allocation4 + $0x6e8] sm:$0xff] %v6739
      %6756 = vst [vmem:[#allocation4 + $0x6f0] sm:$0xff] %v6740
      %6757 = vst [vmem:[#allocation4 + $0x6f8] sm:$0xff] %v6741
      %v6758 = vld [vmem:[#allocation4] sm:$0xff]
      %v6759 = vld [vmem:[#allocation4 + $0x8] sm:$0xff]
      %v6760 = vld [vmem:[#allocation4 + $0x10] sm:$0xff]
      %v6761 = vld [vmem:[#allocation4 + $0x18] sm:$0xff]
      %v6762 = vld [vmem:[#allocation4 + $0x20] sm:$0xff]
      %v6763 = vld [vmem:[#allocation4 + $0x28] sm:$0xff]
      %v6764 = vld [vmem:[#allocation4 + $0x30] sm:$0xff]
      %v6765 = vld [vmem:[#allocation4 + $0x38] sm:$0xff]
      %v6766 = vld [vmem:[#allocation4 + $0x40] sm:$0xff]
      %v6767 = vld [vmem:[#allocation4 + $0x48] sm:$0xff]
      %v6768 = vld [vmem:[#allocation4 + $0x50] sm:$0xff]
      %v6769 = vld [vmem:[#allocation4 + $0x58] sm:$0xff]
      %v6770 = vld [vmem:[#allocation4 + $0x60] sm:$0xff]
      %v6771 = vld [vmem:[#allocation4 + $0x68] sm:$0xff]
      %v6772 = vld [vmem:[#allocation4 + $0x70] sm:$0xff]
      %v6773 = vld [vmem:[#allocation4 + $0x78] sm:$0xff]
      %v6774 = vld [vmem:[#allocation4 + $0x80] sm:$0xff]
      %v6775 = vld [vmem:[#allocation4 + $0x88] sm:$0xff]
      %v6776 = vld [vmem:[#allocation4 + $0x90] sm:$0xff]
      %v6777 = vld [vmem:[#allocation4 + $0x98] sm:$0xff]
      %v6778 = vld [vmem:[#allocation4 + $0xa0] sm:$0xff]
      %v6779 = vld [vmem:[#allocation4 + $0xa8] sm:$0xff]
      %v6780 = vld [vmem:[#allocation4 + $0xb0] sm:$0xff]
      %v6781 = vld [vmem:[#allocation4 + $0xb8] sm:$0xff]
      %v6782 = vld [vmem:[#allocation4 + $0xc0] sm:$0xff]
      %v6783 = vld [vmem:[#allocation4 + $0xc8] sm:$0xff]
      %v6784 = vld [vmem:[#allocation4 + $0xd0] sm:$0xff]
      %v6785 = vld [vmem:[#allocation4 + $0xd8] sm:$0xff]
      %v6786 = vld [vmem:[#allocation4 + $0xe0] sm:$0xff]
      %v6787 = vld [vmem:[#allocation4 + $0xe8] sm:$0xff]
      %v6788 = vld [vmem:[#allocation4 + $0xf0] sm:$0xff]
      %v6789 = vld [vmem:[#allocation4 + $0xf8] sm:$0xff]
      %v6790 = vld [vmem:[#allocation4 + $0x100] sm:$0xff]
      %v6791 = vld [vmem:[#allocation4 + $0x108] sm:$0xff]
      %v6792 = vld [vmem:[#allocation4 + $0x110] sm:$0xff]
      %v6793 = vld [vmem:[#allocation4 + $0x118] sm:$0xff]
      %v6794 = vld [vmem:[#allocation4 + $0x120] sm:$0xff]
      %v6795 = vld [vmem:[#allocation4 + $0x128] sm:$0xff]
      %v6796 = vld [vmem:[#allocation4 + $0x130] sm:$0xff]
      %v6797 = vld [vmem:[#allocation4 + $0x138] sm:$0xff]
      %v6798 = vld [vmem:[#allocation4 + $0x140] sm:$0xff]
      %v6799 = vld [vmem:[#allocation4 + $0x148] sm:$0xff]
      %v6800 = vld [vmem:[#allocation4 + $0x150] sm:$0xff]
      %v6801 = vld [vmem:[#allocation4 + $0x158] sm:$0xff]
      %v6802 = vld [vmem:[#allocation4 + $0x160] sm:$0xff]
      %v6803 = vld [vmem:[#allocation4 + $0x168] sm:$0xff]
      %v6804 = vld [vmem:[#allocation4 + $0x170] sm:$0xff]
      %v6805 = vld [vmem:[#allocation4 + $0x178] sm:$0xff]
      %v6806 = vld [vmem:[#allocation4 + $0x180] sm:$0xff]
      %v6807 = vld [vmem:[#allocation4 + $0x188] sm:$0xff]
      %v6808 = vld [vmem:[#allocation4 + $0x190] sm:$0xff]
      %v6809 = vld [vmem:[#allocation4 + $0x198] sm:$0xff]
      %v6810 = vld [vmem:[#allocation4 + $0x1a0] sm:$0xff]
      %v6811 = vld [vmem:[#allocation4 + $0x1a8] sm:$0xff]
      %v6812 = vld [vmem:[#allocation4 + $0x1b0] sm:$0xff]
      %v6813 = vld [vmem:[#allocation4 + $0x1b8] sm:$0xff]
      %v6814 = vld [vmem:[#allocation4 + $0x1c0] sm:$0xff]
      %v6815 = vld [vmem:[#allocation4 + $0x1c8] sm:$0xff]
      %v6816 = vld [vmem:[#allocation4 + $0x1d0] sm:$0xff]
      %v6817 = vld [vmem:[#allocation4 + $0x1d8] sm:$0xff]
      %v6818 = vld [vmem:[#allocation4 + $0x1e0] sm:$0xff]
      %v6819 = vld [vmem:[#allocation4 + $0x1e8] sm:$0xff]
      %v6820 = vld [vmem:[#allocation4 + $0x1f0] sm:$0xff]
      %v6821 = vld [vmem:[#allocation4 + $0x1f8] sm:$0xff]
      %v6822 = vld [vmem:[#allocation4 + $0x200] sm:$0xff]
      %v6823 = vld [vmem:[#allocation4 + $0x208] sm:$0xff]
      %v6824 = vld [vmem:[#allocation4 + $0x210] sm:$0xff]
      %v6825 = vld [vmem:[#allocation4 + $0x218] sm:$0xff]
      %v6826 = vld [vmem:[#allocation4 + $0x220] sm:$0xff]
      %v6827 = vld [vmem:[#allocation4 + $0x228] sm:$0xff]
      %v6828 = vld [vmem:[#allocation4 + $0x230] sm:$0xff]
      %v6829 = vld [vmem:[#allocation4 + $0x238] sm:$0xff]
      %v6830 = vld [vmem:[#allocation4 + $0x240] sm:$0xff]
      %v6831 = vld [vmem:[#allocation4 + $0x248] sm:$0xff]
      %v6832 = vld [vmem:[#allocation4 + $0x250] sm:$0xff]
      %v6833 = vld [vmem:[#allocation4 + $0x258] sm:$0xff]
      %v6834 = vld [vmem:[#allocation4 + $0x260] sm:$0xff]
      %v6835 = vld [vmem:[#allocation4 + $0x268] sm:$0xff]
      %v6836 = vld [vmem:[#allocation4 + $0x270] sm:$0xff]
      %v6837 = vld [vmem:[#allocation4 + $0x278] sm:$0xff]
      %v6838 = vld [vmem:[#allocation4 + $0x280] sm:$0xff]
      %v6839 = vld [vmem:[#allocation4 + $0x288] sm:$0xff]
      %v6840 = vld [vmem:[#allocation4 + $0x290] sm:$0xff]
      %v6841 = vld [vmem:[#allocation4 + $0x298] sm:$0xff]
      %v6842 = vld [vmem:[#allocation4 + $0x2a0] sm:$0xff]
      %v6843 = vld [vmem:[#allocation4 + $0x2a8] sm:$0xff]
      %v6844 = vld [vmem:[#allocation4 + $0x2b0] sm:$0xff]
      %v6845 = vld [vmem:[#allocation4 + $0x2b8] sm:$0xff]
      %v6846 = vld [vmem:[#allocation4 + $0x2c0] sm:$0xff]
      %v6847 = vld [vmem:[#allocation4 + $0x2c8] sm:$0xff]
      %v6848 = vld [vmem:[#allocation4 + $0x2d0] sm:$0xff]
      %v6849 = vld [vmem:[#allocation4 + $0x2d8] sm:$0xff]
      %v6850 = vld [vmem:[#allocation4 + $0x2e0] sm:$0xff]
      %v6851 = vld [vmem:[#allocation4 + $0x2e8] sm:$0xff]
      %v6852 = vld [vmem:[#allocation4 + $0x2f0] sm:$0xff]
      %v6853 = vld [vmem:[#allocation4 + $0x2f8] sm:$0xff]
      %v6854 = vld [vmem:[#allocation4 + $0x300] sm:$0xff]
      %v6855 = vld [vmem:[#allocation4 + $0x308] sm:$0xff]
      %v6856 = vld [vmem:[#allocation4 + $0x310] sm:$0xff]
      %v6857 = vld [vmem:[#allocation4 + $0x318] sm:$0xff]
      %v6858 = vld [vmem:[#allocation4 + $0x320] sm:$0xff]
      %v6859 = vld [vmem:[#allocation4 + $0x328] sm:$0xff]
      %v6860 = vld [vmem:[#allocation4 + $0x330] sm:$0xff]
      %v6861 = vld [vmem:[#allocation4 + $0x338] sm:$0xff]
      %v6862 = vld [vmem:[#allocation4 + $0x340] sm:$0xff]
      %v6863 = vld [vmem:[#allocation4 + $0x348] sm:$0xff]
      %v6864 = vld [vmem:[#allocation4 + $0x350] sm:$0xff]
      %v6865 = vld [vmem:[#allocation4 + $0x358] sm:$0xff]
      %v6866 = vld [vmem:[#allocation4 + $0x360] sm:$0xff]
      %v6867 = vld [vmem:[#allocation4 + $0x368] sm:$0xff]
      %v6868 = vld [vmem:[#allocation4 + $0x370] sm:$0xff]
      %v6869 = vld [vmem:[#allocation4 + $0x378] sm:$0xff]
      %v6870 = vld [vmem:[#allocation4 + $0x380] sm:$0xff]
      %v6871 = vld [vmem:[#allocation4 + $0x388] sm:$0xff]
      %v6872 = vld [vmem:[#allocation4 + $0x390] sm:$0xff]
      %v6873 = vld [vmem:[#allocation4 + $0x398] sm:$0xff]
      %v6874 = vld [vmem:[#allocation4 + $0x3a0] sm:$0xff]
      %v6875 = vld [vmem:[#allocation4 + $0x3a8] sm:$0xff]
      %v6876 = vld [vmem:[#allocation4 + $0x3b0] sm:$0xff]
      %v6877 = vld [vmem:[#allocation4 + $0x3b8] sm:$0xff]
      %v6878 = vld [vmem:[#allocation4 + $0x3c0] sm:$0xff]
      %v6879 = vld [vmem:[#allocation4 + $0x3c8] sm:$0xff]
      %v6880 = vld [vmem:[#allocation4 + $0x3d0] sm:$0xff]
      %v6881 = vld [vmem:[#allocation4 + $0x3d8] sm:$0xff]
      %v6882 = vld [vmem:[#allocation4 + $0x3e0] sm:$0xff]
      %v6883 = vld [vmem:[#allocation4 + $0x3e8] sm:$0xff]
      %v6884 = vld [vmem:[#allocation4 + $0x3f0] sm:$0xff]
      %v6885 = vld [vmem:[#allocation4 + $0x3f8] sm:$0xff]
      %v6886 = vld [vmem:[#allocation4 + $0x400] sm:$0xff]
      %v6887 = vld [vmem:[#allocation4 + $0x408] sm:$0xff]
      %v6888 = vld [vmem:[#allocation4 + $0x410] sm:$0xff]
      %v6889 = vld [vmem:[#allocation4 + $0x418] sm:$0xff]
      %v6890 = vld [vmem:[#allocation4 + $0x420] sm:$0xff]
      %v6891 = vld [vmem:[#allocation4 + $0x428] sm:$0xff]
      %v6892 = vld [vmem:[#allocation4 + $0x430] sm:$0xff]
      %v6893 = vld [vmem:[#allocation4 + $0x438] sm:$0xff]
      %v6894 = vld [vmem:[#allocation4 + $0x440] sm:$0xff]
      %v6895 = vld [vmem:[#allocation4 + $0x448] sm:$0xff]
      %v6896 = vld [vmem:[#allocation4 + $0x450] sm:$0xff]
      %v6897 = vld [vmem:[#allocation4 + $0x458] sm:$0xff]
      %v6898 = vld [vmem:[#allocation4 + $0x460] sm:$0xff]
      %v6899 = vld [vmem:[#allocation4 + $0x468] sm:$0xff]
      %v6900 = vld [vmem:[#allocation4 + $0x470] sm:$0xff]
      %v6901 = vld [vmem:[#allocation4 + $0x478] sm:$0xff]
      %v6902 = vld [vmem:[#allocation4 + $0x480] sm:$0xff]
      %v6903 = vld [vmem:[#allocation4 + $0x488] sm:$0xff]
      %v6904 = vld [vmem:[#allocation4 + $0x490] sm:$0xff]
      %v6905 = vld [vmem:[#allocation4 + $0x498] sm:$0xff]
      %v6906 = vld [vmem:[#allocation4 + $0x4a0] sm:$0xff]
      %v6907 = vld [vmem:[#allocation4 + $0x4a8] sm:$0xff]
      %v6908 = vld [vmem:[#allocation4 + $0x4b0] sm:$0xff]
      %v6909 = vld [vmem:[#allocation4 + $0x4b8] sm:$0xff]
      %v6910 = vld [vmem:[#allocation4 + $0x4c0] sm:$0xff]
      %v6911 = vld [vmem:[#allocation4 + $0x4c8] sm:$0xff]
      %v6912 = vld [vmem:[#allocation4 + $0x4d0] sm:$0xff]
      %v6913 = vld [vmem:[#allocation4 + $0x4d8] sm:$0xff]
      %v6914 = vld [vmem:[#allocation4 + $0x4e0] sm:$0xff]
      %v6915 = vld [vmem:[#allocation4 + $0x4e8] sm:$0xff]
      %v6916 = vld [vmem:[#allocation4 + $0x4f0] sm:$0xff]
      %v6917 = vld [vmem:[#allocation4 + $0x4f8] sm:$0xff]
      %v6918 = vld [vmem:[#allocation4 + $0x500] sm:$0xff]
      %v6919 = vld [vmem:[#allocation4 + $0x508] sm:$0xff]
      %v6920 = vld [vmem:[#allocation4 + $0x510] sm:$0xff]
      %v6921 = vld [vmem:[#allocation4 + $0x518] sm:$0xff]
      %v6922 = vld [vmem:[#allocation4 + $0x520] sm:$0xff]
      %v6923 = vld [vmem:[#allocation4 + $0x528] sm:$0xff]
      %v6924 = vld [vmem:[#allocation4 + $0x530] sm:$0xff]
      %v6925 = vld [vmem:[#allocation4 + $0x538] sm:$0xff]
      %v6926 = vld [vmem:[#allocation4 + $0x540] sm:$0xff]
      %v6927 = vld [vmem:[#allocation4 + $0x548] sm:$0xff]
      %v6928 = vld [vmem:[#allocation4 + $0x550] sm:$0xff]
      %v6929 = vld [vmem:[#allocation4 + $0x558] sm:$0xff]
      %v6930 = vld [vmem:[#allocation4 + $0x560] sm:$0xff]
      %v6931 = vld [vmem:[#allocation4 + $0x568] sm:$0xff]
      %v6932 = vld [vmem:[#allocation4 + $0x570] sm:$0xff]
      %v6933 = vld [vmem:[#allocation4 + $0x578] sm:$0xff]
      %v6934 = vld [vmem:[#allocation4 + $0x580] sm:$0xff]
      %v6935 = vld [vmem:[#allocation4 + $0x588] sm:$0xff]
      %v6936 = vld [vmem:[#allocation4 + $0x590] sm:$0xff]
      %v6937 = vld [vmem:[#allocation4 + $0x598] sm:$0xff]
      %v6938 = vld [vmem:[#allocation4 + $0x5a0] sm:$0xff]
      %v6939 = vld [vmem:[#allocation4 + $0x5a8] sm:$0xff]
      %v6940 = vld [vmem:[#allocation4 + $0x5b0] sm:$0xff]
      %v6941 = vld [vmem:[#allocation4 + $0x5b8] sm:$0xff]
      %v6942 = vld [vmem:[#allocation4 + $0x5c0] sm:$0xff]
      %v6943 = vld [vmem:[#allocation4 + $0x5c8] sm:$0xff]
      %v6944 = vld [vmem:[#allocation4 + $0x5d0] sm:$0xff]
      %v6945 = vld [vmem:[#allocation4 + $0x5d8] sm:$0xff]
      %v6946 = vld [vmem:[#allocation4 + $0x5e0] sm:$0xff]
      %v6947 = vld [vmem:[#allocation4 + $0x5e8] sm:$0xff]
      %v6948 = vld [vmem:[#allocation4 + $0x5f0] sm:$0xff]
      %v6949 = vld [vmem:[#allocation4 + $0x5f8] sm:$0xff]
      %v6950 = vld [vmem:[#allocation4 + $0x600] sm:$0xff]
      %v6951 = vld [vmem:[#allocation4 + $0x608] sm:$0xff]
      %v6952 = vld [vmem:[#allocation4 + $0x610] sm:$0xff]
      %v6953 = vld [vmem:[#allocation4 + $0x618] sm:$0xff]
      %v6954 = vld [vmem:[#allocation4 + $0x620] sm:$0xff]
      %v6955 = vld [vmem:[#allocation4 + $0x628] sm:$0xff]
      %v6956 = vld [vmem:[#allocation4 + $0x630] sm:$0xff]
      %v6957 = vld [vmem:[#allocation4 + $0x638] sm:$0xff]
      %v6958 = vld [vmem:[#allocation4 + $0x640] sm:$0xff]
      %v6959 = vld [vmem:[#allocation4 + $0x648] sm:$0xff]
      %v6960 = vld [vmem:[#allocation4 + $0x650] sm:$0xff]
      %v6961 = vld [vmem:[#allocation4 + $0x658] sm:$0xff]
      %v6962 = vld [vmem:[#allocation4 + $0x660] sm:$0xff]
      %v6963 = vld [vmem:[#allocation4 + $0x668] sm:$0xff]
      %v6964 = vld [vmem:[#allocation4 + $0x670] sm:$0xff]
      %v6965 = vld [vmem:[#allocation4 + $0x678] sm:$0xff]
      %v6966 = vld [vmem:[#allocation4 + $0x680] sm:$0xff]
      %v6967 = vld [vmem:[#allocation4 + $0x688] sm:$0xff]
      %v6968 = vld [vmem:[#allocation4 + $0x690] sm:$0xff]
      %v6969 = vld [vmem:[#allocation4 + $0x698] sm:$0xff]
      %v6970 = vld [vmem:[#allocation4 + $0x6a0] sm:$0xff]
      %v6971 = vld [vmem:[#allocation4 + $0x6a8] sm:$0xff]
      %v6972 = vld [vmem:[#allocation4 + $0x6b0] sm:$0xff]
      %v6973 = vld [vmem:[#allocation4 + $0x6b8] sm:$0xff]
      %v6974 = vld [vmem:[#allocation4 + $0x6c0] sm:$0xff]
      %v6975 = vld [vmem:[#allocation4 + $0x6c8] sm:$0xff]
      %v6976 = vld [vmem:[#allocation4 + $0x6d0] sm:$0xff]
      %v6977 = vld [vmem:[#allocation4 + $0x6d8] sm:$0xff]
      %v6978 = vld [vmem:[#allocation4 + $0x6e0] sm:$0xff]
      %v6979 = vld [vmem:[#allocation4 + $0x6e8] sm:$0xff]
      %v6980 = vld [vmem:[#allocation4 + $0x6f0] sm:$0xff]
      %v6981 = vld [vmem:[#allocation4 + $0x6f8] sm:$0xff]
      %6983 = vset.pattern.permute.xlu0 0
      %6984 = vperm.xlu0 %6983, %v261
      %v6985 = vpop.permute.xlu0 %6984
      %v6989 = vunpack.c.l.b16 %v257
      %v6990 = vunpack.c.h.b16 %v257
      %v6991 = vunpack.c.l.b16 %v258
      %v6992 = vunpack.c.h.b16 %v258
      %v6993 = vpack.c.b16 %v6989, %v6989
      %v6994 = vpack.c.b16 %v6990, %v6990
      %v6995 = vpack.c.b16 %v6991, %v6991
      %v6996 = vpack.c.b16 %v6992, %v6992
      %vm7000 = vcmask 523264
      %v7002 = vsel %vm7000, %v6996, 0
      %7004 = vmatprep.subr.bf16.mxu0 %v6759
      %7005 = vmatpush1.bf16.msra.mxu0 %v6758
      %7006 = vmatprep.subr.bf16.mxu0 %v6767
      %7007 = vmatpush1.bf16.msra.mxu0 %v6766
      %7008 = vmatprep.subr.bf16.mxu0 %v6775
      %7009 = vmatpush1.bf16.msra.mxu0 %v6774
      %7010 = vmatprep.subr.bf16.mxu0 %v6783
      %7011 = vmatpush1.bf16.msra.mxu0 %v6782
      %7012 = vmatprep.subr.bf16.mxu0 %v6791
      %7013 = vmatpush1.bf16.msra.mxu0 %v6790
      %7014 = vmatprep.subr.bf16.mxu0 %v6799
      %7015 = vmatpush1.bf16.msra.mxu0 %v6798
      %7016 = vmatprep.subr.bf16.mxu0 %v6807
      %7017 = vmatpush1.bf16.msra.mxu0 %v6806
      %7018 = vmatprep.subr.bf16.mxu0 %v6815
      %7019 = vmatpush1.bf16.msra.mxu0 %v6814
      %7020 = vmatprep.subr.bf16.mxu0 %v6823
      %7021 = vmatpush1.bf16.msra.mxu0 %v6822
      %7022 = vmatprep.subr.bf16.mxu0 %v6831
      %7023 = vmatpush1.bf16.msra.mxu0 %v6830
      %7024 = vmatprep.subr.bf16.mxu0 %v6839
      %7025 = vmatpush1.bf16.msra.mxu0 %v6838
      %7026 = vmatprep.subr.bf16.mxu0 %v6847
      %7027 = vmatpush1.bf16.msra.mxu0 %v6846
      %7028 = vmatprep.subr.bf16.mxu0 %v6855
      %7029 = vmatpush1.bf16.msra.mxu0 %v6854
      %7030 = vmatprep.subr.bf16.mxu0 %v6863
      %7031 = vmatpush1.bf16.msra.mxu0 %v6862
      %7032 = vmatprep.subr.bf16.mxu0 %v6871
      %7033 = vmatpush1.bf16.msra.mxu0 %v6870
      %7034 = vmatprep.subr.bf16.mxu0 %v6879
      %7035 = vmatpush1.bf16.msra.mxu0 %v6878
      %7036 = vmatprep.mubr.bf16.mxu0 %v6994
      %7037 = vmatmul.mubr.bf16.gmra.mrb[0].mxu0 %v6993
      %v7038 = vpop.f32.mrb[0].mxu0
      %v7039 = vadd.f32 %v6985, %v7038
      %v7040 = vpop.f32.mrb[0].mxu0
      %v7041 = vadd.f32 %v6985, %v7040
      %v7042 = vpop.f32.mrb[0].mxu0
      %v7043 = vpop.f32.mrb[0].mxu0
      %7044 = vdwg.mxu0
      %7045 = vmatprep.subr.bf16.mxu0 %v6887
      %7046 = vmatpush1.bf16.msra.mxu0 %v6886
      %7047 = vmatprep.subr.bf16.mxu0 %v6895
      %7048 = vmatpush1.bf16.msra.mxu0 %v6894
      %7049 = vmatprep.subr.bf16.mxu0 %v6903
      %7050 = vmatpush1.bf16.msra.mxu0 %v6902
      %7051 = vmatprep.subr.bf16.mxu0 %v6911
      %7052 = vmatpush1.bf16.msra.mxu0 %v6910
      %7053 = vmatprep.subr.bf16.mxu0 %v6919
      %7054 = vmatpush1.bf16.msra.mxu0 %v6918
      %7055 = vmatprep.subr.bf16.mxu0 %v6927
      %7056 = vmatpush1.bf16.msra.mxu0 %v6926
      %7057 = vmatprep.subr.bf16.mxu0 %v6935
      %7058 = vmatpush1.bf16.msra.mxu0 %v6934
      %7059 = vmatprep.subr.bf16.mxu0 %v6943
      %7060 = vmatpush1.bf16.msra.mxu0 %v6942
      %7061 = vmatprep.subr.bf16.mxu0 %v6951
      %7062 = vmatpush1.bf16.msra.mxu0 %v6950
      %7063 = vmatprep.subr.bf16.mxu0 %v6959
      %7064 = vmatpush1.bf16.msra.mxu0 %v6958
      %7065 = vmatprep.subr.bf16.mxu0 %v6967
      %7066 = vmatpush1.bf16.msra.mxu0 %v6966
      %7067 = vmatprep.subr.bf16.mxu0 %v6975
      %7068 = vmatpush1.bf16.msra.mxu0 %v6974
      %7069 = vmatprep.subr.bf16.mxu0 0
      %7070 = vmatpush1.bf16.msra.mxu0 0
      %7071 = vmatprep.subr.bf16.mxu0 0
      %7072 = vmatpush1.bf16.msra.mxu0 0
      %7073 = vmatprep.subr.bf16.mxu0 0
      %7074 = vmatpush1.bf16.msra.mxu0 0
      %7075 = vmatprep.subr.bf16.mxu0 0
      %7076 = vmatpush1.bf16.msra.mxu0 0
      %7077 = vmatprep.mubr.bf16.mxu0 %v7002
      %7078 = vmatmul.mubr.bf16.gmra.mrb[0].mxu0 %v6995
      %v7079 = vpop.f32.mrb[0].mxu0
      %v7080 = vadd.f32 %v7039, %v7079
      %v7081 = vpop.f32.mrb[0].mxu0
      %v7082 = vadd.f32 %v7041, %v7081
      %v7083 = vpop.f32.mrb[0].mxu0
      %v7084 = vpop.f32.mrb[0].mxu0
      %7085 = vdwg.mxu0
      %7086 = vmatprep.subr.bf16.mxu0 %v6761
      %7087 = vmatpush1.bf16.msra.mxu0 %v6760
      %7088 = vmatprep.subr.bf16.mxu0 %v6769
      %7089 = vmatpush1.bf16.msra.mxu0 %v6768
      %7090 = vmatprep.subr.bf16.mxu0 %v6777
      %7091 = vmatpush1.bf16.msra.mxu0 %v6776
      %7092 = vmatprep.subr.bf16.mxu0 %v6785
      %7093 = vmatpush1.bf16.msra.mxu0 %v6784
      %7094 = vmatprep.subr.bf16.mxu0 %v6793
      %7095 = vmatpush1.bf16.msra.mxu0 %v6792
      %7096 = vmatprep.subr.bf16.mxu0 %v6801
      %7097 = vmatpush1.bf16.msra.mxu0 %v6800
      %7098 = vmatprep.subr.bf16.mxu0 %v6809
      %7099 = vmatpush1.bf16.msra.mxu0 %v6808
      %7100 = vmatprep.subr.bf16.mxu0 %v6817
      %7101 = vmatpush1.bf16.msra.mxu0 %v6816
      %7102 = vmatprep.subr.bf16.mxu0 %v6825
      %7103 = vmatpush1.bf16.msra.mxu0 %v6824
      %7104 = vmatprep.subr.bf16.mxu0 %v6833
      %7105 = vmatpush1.bf16.msra.mxu0 %v6832
      %7106 = vmatprep.subr.bf16.mxu0 %v6841
      %7107 = vmatpush1.bf16.msra.mxu0 %v6840
      %7108 = vmatprep.subr.bf16.mxu0 %v6849
      %7109 = vmatpush1.bf16.msra.mxu0 %v6848
      %7110 = vmatprep.subr.bf16.mxu0 %v6857
      %7111 = vmatpush1.bf16.msra.mxu0 %v6856
      %7112 = vmatprep.subr.bf16.mxu0 %v6865
      %7113 = vmatpush1.bf16.msra.mxu0 %v6864
      %7114 = vmatprep.subr.bf16.mxu0 %v6873
      %7115 = vmatpush1.bf16.msra.mxu0 %v6872
      %7116 = vmatprep.subr.bf16.mxu0 %v6881
      %7117 = vmatpush1.bf16.msra.mxu0 %v6880
      %7118 = vmatprep.mubr.bf16.mxu0 %v6994
      %7119 = vmatmul.mubr.bf16.gmra.mrb[0].mxu0 %v6993
      %v7120 = vpop.f32.mrb[0].mxu0
      %v7121 = vadd.f32 %v6985, %v7120
      %v7122 = vpop.f32.mrb[0].mxu0
      %v7123 = vadd.f32 %v6985, %v7122
      %v7124 = vpop.f32.mrb[0].mxu0
      %v7125 = vpop.f32.mrb[0].mxu0
      %7126 = vdwg.mxu0
      %7127 = vmatprep.subr.bf16.mxu0 %v6889
      %7128 = vmatpush1.bf16.msra.mxu0 %v6888
      %7129 = vmatprep.subr.bf16.mxu0 %v6897
      %7130 = vmatpush1.bf16.msra.mxu0 %v6896
      %7131 = vmatprep.subr.bf16.mxu0 %v6905
      %7132 = vmatpush1.bf16.msra.mxu0 %v6904
      %7133 = vmatprep.subr.bf16.mxu0 %v6913
      %7134 = vmatpush1.bf16.msra.mxu0 %v6912
      %7135 = vmatprep.subr.bf16.mxu0 %v6921
      %7136 = vmatpush1.bf16.msra.mxu0 %v6920
      %7137 = vmatprep.subr.bf16.mxu0 %v6929
      %7138 = vmatpush1.bf16.msra.mxu0 %v6928
      %7139 = vmatprep.subr.bf16.mxu0 %v6937
      %7140 = vmatpush1.bf16.msra.mxu0 %v6936
      %7141 = vmatprep.subr.bf16.mxu0 %v6945
      %7142 = vmatpush1.bf16.msra.mxu0 %v6944
      %7143 = vmatprep.subr.bf16.mxu0 %v6953
      %7144 = vmatpush1.bf16.msra.mxu0 %v6952
      %7145 = vmatprep.subr.bf16.mxu0 %v6961
      %7146 = vmatpush1.bf16.msra.mxu0 %v6960
      %7147 = vmatprep.subr.bf16.mxu0 %v6969
      %7148 = vmatpush1.bf16.msra.mxu0 %v6968
      %7149 = vmatprep.subr.bf16.mxu0 %v6977
      %7150 = vmatpush1.bf16.msra.mxu0 %v6976
      %7151 = vmatprep.subr.bf16.mxu0 0
      %7152 = vmatpush1.bf16.msra.mxu0 0
      %7153 = vmatprep.subr.bf16.mxu0 0
      %7154 = vmatpush1.bf16.msra.mxu0 0
      %7155 = vmatprep.subr.bf16.mxu0 0
      %7156 = vmatpush1.bf16.msra.mxu0 0
      %7157 = vmatprep.subr.bf16.mxu0 0
      %7158 = vmatpush1.bf16.msra.mxu0 0
      %7159 = vmatprep.mubr.bf16.mxu0 %v7002
      %7160 = vmatmul.mubr.bf16.gmra.mrb[0].mxu0 %v6995
      %v7161 = vpop.f32.mrb[0].mxu0
      %v7162 = vadd.f32 %v7121, %v7161
      %v7163 = vpop.f32.mrb[0].mxu0
      %v7164 = vadd.f32 %v7123, %v7163
      %v7165 = vpop.f32.mrb[0].mxu0
      %v7166 = vpop.f32.mrb[0].mxu0
      %7167 = vdwg.mxu0
      %7168 = vmatprep.subr.bf16.mxu0 %v6763
      %7169 = vmatpush1.bf16.msra.mxu0 %v6762
      %7170 = vmatprep.subr.bf16.mxu0 %v6771
      %7171 = vmatpush1.bf16.msra.mxu0 %v6770
      %7172 = vmatprep.subr.bf16.mxu0 %v6779
      %7173 = vmatpush1.bf16.msra.mxu0 %v6778
      %7174 = vmatprep.subr.bf16.mxu0 %v6787
      %7175 = vmatpush1.bf16.msra.mxu0 %v6786
      %7176 = vmatprep.subr.bf16.mxu0 %v6795
      %7177 = vmatpush1.bf16.msra.mxu0 %v6794
      %7178 = vmatprep.subr.bf16.mxu0 %v6803
      %7179 = vmatpush1.bf16.msra.mxu0 %v6802
      %7180 = vmatprep.subr.bf16.mxu0 %v6811
      %7181 = vmatpush1.bf16.msra.mxu0 %v6810
      %7182 = vmatprep.subr.bf16.mxu0 %v6819
      %7183 = vmatpush1.bf16.msra.mxu0 %v6818
      %7184 = vmatprep.subr.bf16.mxu0 %v6827
      %7185 = vmatpush1.bf16.msra.mxu0 %v6826
      %7186 = vmatprep.subr.bf16.mxu0 %v6835
      %7187 = vmatpush1.bf16.msra.mxu0 %v6834
      %7188 = vmatprep.subr.bf16.mxu0 %v6843
      %7189 = vmatpush1.bf16.msra.mxu0 %v6842
      %7190 = vmatprep.subr.bf16.mxu0 %v6851
      %7191 = vmatpush1.bf16.msra.mxu0 %v6850
      %7192 = vmatprep.subr.bf16.mxu0 %v6859
      %7193 = vmatpush1.bf16.msra.mxu0 %v6858
      %7194 = vmatprep.subr.bf16.mxu0 %v6867
      %7195 = vmatpush1.bf16.msra.mxu0 %v6866
      %7196 = vmatprep.subr.bf16.mxu0 %v6875
      %7197 = vmatpush1.bf16.msra.mxu0 %v6874
      %7198 = vmatprep.subr.bf16.mxu0 %v6883
      %7199 = vmatpush1.bf16.msra.mxu0 %v6882
      %7200 = vmatprep.mubr.bf16.mxu0 %v6994
      %7201 = vmatmul.mubr.bf16.gmra.mrb[0].mxu0 %v6993
      %v7202 = vpop.f32.mrb[0].mxu0
      %v7203 = vadd.f32 %v6985, %v7202
      %v7204 = vpop.f32.mrb[0].mxu0
      %v7205 = vadd.f32 %v6985, %v7204
      %v7206 = vpop.f32.mrb[0].mxu0
      %v7207 = vpop.f32.mrb[0].mxu0
      %7208 = vdwg.mxu0
      %7209 = vmatprep.subr.bf16.mxu0 %v6891
      %7210 = vmatpush1.bf16.msra.mxu0 %v6890
      %7211 = vmatprep.subr.bf16.mxu0 %v6899
      %7212 = vmatpush1.bf16.msra.mxu0 %v6898
      %7213 = vmatprep.subr.bf16.mxu0 %v6907
      %7214 = vmatpush1.bf16.msra.mxu0 %v6906
      %7215 = vmatprep.subr.bf16.mxu0 %v6915
      %7216 = vmatpush1.bf16.msra.mxu0 %v6914
      %7217 = vmatprep.subr.bf16.mxu0 %v6923
      %7218 = vmatpush1.bf16.msra.mxu0 %v6922
      %7219 = vmatprep.subr.bf16.mxu0 %v6931
      %7220 = vmatpush1.bf16.msra.mxu0 %v6930
      %7221 = vmatprep.subr.bf16.mxu0 %v6939
      %7222 = vmatpush1.bf16.msra.mxu0 %v6938
      %7223 = vmatprep.subr.bf16.mxu0 %v6947
      %7224 = vmatpush1.bf16.msra.mxu0 %v6946
      %7225 = vmatprep.subr.bf16.mxu0 %v6955
      %7226 = vmatpush1.bf16.msra.mxu0 %v6954
      %7227 = vmatprep.subr.bf16.mxu0 %v6963
      %7228 = vmatpush1.bf16.msra.mxu0 %v6962
      %7229 = vmatprep.subr.bf16.mxu0 %v6971
      %7230 = vmatpush1.bf16.msra.mxu0 %v6970
      %7231 = vmatprep.subr.bf16.mxu0 %v6979
      %7232 = vmatpush1.bf16.msra.mxu0 %v6978
      %7233 = vmatprep.subr.bf16.mxu0 0
      %7234 = vmatpush1.bf16.msra.mxu0 0
      %7235 = vmatprep.subr.bf16.mxu0 0
      %7236 = vmatpush1.bf16.msra.mxu0 0
      %7237 = vmatprep.subr.bf16.mxu0 0
      %7238 = vmatpush1.bf16.msra.mxu0 0
      %7239 = vmatprep.subr.bf16.mxu0 0
      %7240 = vmatpush1.bf16.msra.mxu0 0
      %7241 = vmatprep.mubr.bf16.mxu0 %v7002
      %7242 = vmatmul.mubr.bf16.gmra.mrb[0].mxu0 %v6995
      %v7243 = vpop.f32.mrb[0].mxu0
      %v7244 = vadd.f32 %v7203, %v7243
      %v7245 = vpop.f32.mrb[0].mxu0
      %v7246 = vadd.f32 %v7205, %v7245
      %v7247 = vpop.f32.mrb[0].mxu0
      %v7248 = vpop.f32.mrb[0].mxu0
      %7249 = vdwg.mxu0
      %7250 = vmatprep.subr.bf16.mxu0 %v6765
      %7251 = vmatpush1.bf16.msra.mxu0 %v6764
      %7252 = vmatprep.subr.bf16.mxu0 %v6773
      %7253 = vmatpush1.bf16.msra.mxu0 %v6772
      %7254 = vmatprep.subr.bf16.mxu0 %v6781
      %7255 = vmatpush1.bf16.msra.mxu0 %v6780
      %7256 = vmatprep.subr.bf16.mxu0 %v6789
      %7257 = vmatpush1.bf16.msra.mxu0 %v6788
      %7258 = vmatprep.subr.bf16.mxu0 %v6797
      %7259 = vmatpush1.bf16.msra.mxu0 %v6796
      %7260 = vmatprep.subr.bf16.mxu0 %v6805
      %7261 = vmatpush1.bf16.msra.mxu0 %v6804
      %7262 = vmatprep.subr.bf16.mxu0 %v6813
      %7263 = vmatpush1.bf16.msra.mxu0 %v6812
      %7264 = vmatprep.subr.bf16.mxu0 %v6821
      %7265 = vmatpush1.bf16.msra.mxu0 %v6820
      %7266 = vmatprep.subr.bf16.mxu0 %v6829
      %7267 = vmatpush1.bf16.msra.mxu0 %v6828
      %7268 = vmatprep.subr.bf16.mxu0 %v6837
      %7269 = vmatpush1.bf16.msra.mxu0 %v6836
      %7270 = vmatprep.subr.bf16.mxu0 %v6845
      %7271 = vmatpush1.bf16.msra.mxu0 %v6844
      %7272 = vmatprep.subr.bf16.mxu0 %v6853
      %7273 = vmatpush1.bf16.msra.mxu0 %v6852
      %7274 = vmatprep.subr.bf16.mxu0 %v6861
      %7275 = vmatpush1.bf16.msra.mxu0 %v6860
      %7276 = vmatprep.subr.bf16.mxu0 %v6869
      %7277 = vmatpush1.bf16.msra.mxu0 %v6868
      %7278 = vmatprep.subr.bf16.mxu0 %v6877
      %7279 = vmatpush1.bf16.msra.mxu0 %v6876
      %7280 = vmatprep.subr.bf16.mxu0 %v6885
      %7281 = vmatpush1.bf16.msra.mxu0 %v6884
      %7282 = vmatprep.mubr.bf16.mxu0 %v6994
      %7283 = vmatmul.mubr.bf16.gmra.mrb[0].mxu0 %v6993
      %v7284 = vpop.f32.mrb[0].mxu0
      %v7285 = vadd.f32 %v6985, %v7284
      %v7286 = vpop.f32.mrb[0].mxu0
      %v7287 = vadd.f32 %v6985, %v7286
      %v7288 = vpop.f32.mrb[0].mxu0
      %v7289 = vpop.f32.mrb[0].mxu0
      %7290 = vdwg.mxu0
      %7291 = vmatprep.subr.bf16.mxu0 %v6893
      %7292 = vmatpush1.bf16.msra.mxu0 %v6892
      %7293 = vmatprep.subr.bf16.mxu0 %v6901
      %7294 = vmatpush1.bf16.msra.mxu0 %v6900
      %7295 = vmatprep.subr.bf16.mxu0 %v6909
      %7296 = vmatpush1.bf16.msra.mxu0 %v6908
      %7297 = vmatprep.subr.bf16.mxu0 %v6917
      %7298 = vmatpush1.bf16.msra.mxu0 %v6916
      %7299 = vmatprep.subr.bf16.mxu0 %v6925
      %7300 = vmatpush1.bf16.msra.mxu0 %v6924
      %7301 = vmatprep.subr.bf16.mxu0 %v6933
      %7302 = vmatpush1.bf16.msra.mxu0 %v6932
      %7303 = vmatprep.subr.bf16.mxu0 %v6941
      %7304 = vmatpush1.bf16.msra.mxu0 %v6940
      %7305 = vmatprep.subr.bf16.mxu0 %v6949
      %7306 = vmatpush1.bf16.msra.mxu0 %v6948
      %7307 = vmatprep.subr.bf16.mxu0 %v6957
      %7308 = vmatpush1.bf16.msra.mxu0 %v6956
      %7309 = vmatprep.subr.bf16.mxu0 %v6965
      %7310 = vmatpush1.bf16.msra.mxu0 %v6964
      %7311 = vmatprep.subr.bf16.mxu0 %v6973
      %7312 = vmatpush1.bf16.msra.mxu0 %v6972
      %7313 = vmatprep.subr.bf16.mxu0 %v6981
      %7314 = vmatpush1.bf16.msra.mxu0 %v6980
      %7315 = vmatprep.subr.bf16.mxu0 0
      %7316 = vmatpush1.bf16.msra.mxu0 0
      %7317 = vmatprep.subr.bf16.mxu0 0
      %7318 = vmatpush1.bf16.msra.mxu0 0
      %7319 = vmatprep.subr.bf16.mxu0 0
      %7320 = vmatpush1.bf16.msra.mxu0 0
      %7321 = vmatprep.subr.bf16.mxu0 0
      %7322 = vmatpush1.bf16.msra.mxu0 0
      %7323 = vmatprep.mubr.bf16.mxu0 %v7002
      %7324 = vmatmul.mubr.bf16.gmra.mrb[0].mxu0 %v6995
      %v7325 = vpop.f32.mrb[0].mxu0
      %v7326 = vadd.f32 %v7285, %v7325
      %v7327 = vpop.f32.mrb[0].mxu0
      %v7328 = vadd.f32 %v7287, %v7327
      %v7329 = vpop.f32.mrb[0].mxu0
      %v7330 = vpop.f32.mrb[0].mxu0
      %7331 = vdwg.mxu0
      %7332 = vst [vmem:[%s251] sm:$0xff] %v7080
      %7333 = vst [vmem:[%s251 + $0x8] sm:$0xff] %v7082
      %7334 = vst [vmem:[%s251 + $0x10] sm:$0xff] %v7162
      %7335 = vst [vmem:[%s251 + $0x18] sm:$0xff] %v7164
      %7336 = vst [vmem:[%s251 + $0x20] sm:$0xff] %v7244
      %7337 = vst [vmem:[%s251 + $0x28] sm:$0xff] %v7246
      %7338 = vst [vmem:[%s251 + $0x30] sm:$0xff] %v7326
      %7339 = vst [vmem:[%s251 + $0x38] sm:$0xff] %v7328
      %v7340 = vld [vmem:[#allocation2 + $0x40] sm:$0xff]
      %7341 = vst [vmem:[#allocation4] sm:$0xff] %v7340
      %v7342 = vld [vmem:[#allocation2 + $0x40] sm:$0xff]
      %v7343 = vld [vmem:[#allocation2 + $0x48] sm:$0xff]
      %7346 = vrot.lane.b32.xlu0 %v7342, 127
      %v7347 = vpop.permute.xlu0 %7346
      %7348 = vrot.lane.b32.xlu0 %v7343, 127
      %v7349 = vpop.permute.xlu0 %7348
      %v7350 = vsel %vm5128, %v7347, %v7349
      %7352 = vst [vmem:[#allocation4 + $0x40] sm:$0xff] %v7350
      %v7353 = vld [vmem:[#allocation2 + $0x40] sm:$0xff]
      %v7354 = vld [vmem:[#allocation2 + $0x48] sm:$0xff]
      %7357 = vrot.lane.b32.xlu0 %v7353, 126
      %v7358 = vpop.permute.xlu0 %7357
      %7359 = vrot.lane.b32.xlu0 %v7354, 126
      %v7360 = vpop.permute.xlu0 %7359
      %v7361 = vsel %vm597, %v7358, %v7360
      %7363 = vst [vmem:[#allocation4 + $0x80] sm:$0xff] %v7361
      %v7364 = vld [vmem:[#allocation2 + $0x40] sm:$0xff]
      %v7365 = vld [vmem:[#allocation2 + $0x48] sm:$0xff]
      %7368 = vrot.lane.b32.xlu0 %v7364, 116
      %v7369 = vpop.permute.xlu0 %7368
      %7370 = vrot.lane.b32.xlu0 %v7365, 116
      %v7371 = vpop.permute.xlu0 %7370
      %v7372 = vsel %vm5249, %v7369, %v7371
      %7374 = vst [vmem:[#allocation4 + $0xc0] sm:$0xff] %v7372
      %v7375 = vld [vmem:[#allocation2 + $0x40] sm:$0xff]
      %v7376 = vld [vmem:[#allocation2 + $0x48] sm:$0xff]
      %7379 = vrot.lane.b32.xlu0 %v7375, 115
      %v7380 = vpop.permute.xlu0 %7379
      %7381 = vrot.lane.b32.xlu0 %v7376, 115
      %v7382 = vpop.permute.xlu0 %7381
      %v7383 = vsel %vm5310, %v7380, %v7382
      %7385 = vst [vmem:[#allocation4 + $0x100] sm:$0xff] %v7383
      %v7386 = vld [vmem:[#allocation2 + $0x40] sm:$0xff]
      %v7387 = vld [vmem:[#allocation2 + $0x48] sm:$0xff]
      %7390 = vrot.lane.b32.xlu0 %v7386, 114
      %v7391 = vpop.permute.xlu0 %7390
      %7392 = vrot.lane.b32.xlu0 %v7387, 114
      %v7393 = vpop.permute.xlu0 %7392
      %v7394 = vsel %vm867, %v7391, %v7393
      %7396 = vst [vmem:[#allocation4 + $0x140] sm:$0xff] %v7394
      %v7397 = vld [vmem:[#allocation2 + $0x40] sm:$0xff]
      %v7398 = vld [vmem:[#allocation2 + $0x48] sm:$0xff]
      %7401 = vrot.lane.b32.xlu0 %v7397, 104
      %v7402 = vpop.permute.xlu0 %7401
      %7403 = vrot.lane.b32.xlu0 %v7398, 104
      %v7404 = vpop.permute.xlu0 %7403
      %v7405 = vsel %vm2127, %v7402, %v7404
      %7407 = vst [vmem:[#allocation4 + $0x180] sm:$0xff] %v7405
      %v7408 = vld [vmem:[#allocation2 + $0x40] sm:$0xff]
      %v7409 = vld [vmem:[#allocation2 + $0x48] sm:$0xff]
      %7412 = vrot.lane.b32.xlu0 %v7408, 103
      %v7413 = vpop.permute.xlu0 %7412
      %7414 = vrot.lane.b32.xlu0 %v7409, 103
      %v7415 = vpop.permute.xlu0 %7414
      %v7416 = vsel %vm5491, %v7413, %v7415
      %7418 = vst [vmem:[#allocation4 + $0x1c0] sm:$0xff] %v7416
      %v7419 = vld [vmem:[#allocation2 + $0x40] sm:$0xff]
      %v7420 = vld [vmem:[#allocation2 + $0x48] sm:$0xff]
      %7423 = vrot.lane.b32.xlu0 %v7419, 102
      %v7424 = vpop.permute.xlu0 %7423
      %7425 = vrot.lane.b32.xlu0 %v7420, 102
      %v7426 = vpop.permute.xlu0 %7425
      %v7427 = vsel %vm5552, %v7424, %v7426
      %7429 = vst [vmem:[#allocation4 + $0x200] sm:$0xff] %v7427
      %v7430 = vld [vmem:[#allocation2 + $0x48] sm:$0xff]
      %v7431 = vld [vmem:[#allocation2 + $0x50] sm:$0xff]
      %7434 = vrot.lane.b32.xlu0 %v7430, 112
      %v7435 = vpop.permute.xlu0 %7434
      %7436 = vrot.lane.b32.xlu0 %v7431, 112
      %v7437 = vpop.permute.xlu0 %7436
      %v7438 = vsel %vm1047, %v7435, %v7437
      %7440 = vst [vmem:[#allocation4 + $0x240] sm:$0xff] %v7438
      %v7441 = vld [vmem:[#allocation2 + $0x48] sm:$0xff]
      %v7442 = vld [vmem:[#allocation2 + $0x50] sm:$0xff]
      %7445 = vrot.lane.b32.xlu0 %v7441, 111
      %v7446 = vpop.permute.xlu0 %7445
      %7447 = vrot.lane.b32.xlu0 %v7442, 111
      %v7448 = vpop.permute.xlu0 %7447
      %v7449 = vsel %vm5673, %v7446, %v7448
      %7451 = vst [vmem:[#allocation4 + $0x280] sm:$0xff] %v7449
      %v7452 = vld [vmem:[#allocation2 + $0x48] sm:$0xff]
      %v7453 = vld [vmem:[#allocation2 + $0x50] sm:$0xff]
      %7456 = vrot.lane.b32.xlu0 %v7452, 110
      %v7457 = vpop.permute.xlu0 %7456
      %7458 = vrot.lane.b32.xlu0 %v7453, 110
      %v7459 = vpop.permute.xlu0 %7458
      %v7460 = vsel %vm1407, %v7457, %v7459
      %7462 = vst [vmem:[#allocation4 + $0x2c0] sm:$0xff] %v7460
      %v7463 = vld [vmem:[#allocation2 + $0x48] sm:$0xff]
      %v7464 = vld [vmem:[#allocation2 + $0x50] sm:$0xff]
      %7467 = vrot.lane.b32.xlu0 %v7463, 100
      %v7468 = vpop.permute.xlu0 %7467
      %7469 = vrot.lane.b32.xlu0 %v7464, 100
      %v7470 = vpop.permute.xlu0 %7469
      %v7471 = vsel %vm5794, %v7468, %v7470
      %7473 = vst [vmem:[#allocation4 + $0x300] sm:$0xff] %v7471
      %v7474 = vld [vmem:[#allocation2 + $0x48] sm:$0xff]
      %v7475 = vld [vmem:[#allocation2 + $0x50] sm:$0xff]
      %7478 = vrot.lane.b32.xlu0 %v7474, 99
      %v7479 = vpop.permute.xlu0 %7478
      %7480 = vrot.lane.b32.xlu0 %v7475, 99
      %v7481 = vpop.permute.xlu0 %7480
      %v7482 = vsel %vm5855, %v7479, %v7481
      %7484 = vst [vmem:[#allocation4 + $0x340] sm:$0xff] %v7482
      %v7485 = vld [vmem:[#allocation2 + $0x48] sm:$0xff]
      %v7486 = vld [vmem:[#allocation2 + $0x50] sm:$0xff]
      %7489 = vrot.lane.b32.xlu0 %v7485, 98
      %v7490 = vpop.permute.xlu0 %7489
      %7491 = vrot.lane.b32.xlu0 %v7486, 98
      %v7492 = vpop.permute.xlu0 %7491
      %v7493 = vsel %vm1677, %v7490, %v7492
      %7495 = vst [vmem:[#allocation4 + $0x380] sm:$0xff] %v7493
      %v7496 = vld [vmem:[#allocation2 + $0x48] sm:$0xff]
      %v7497 = vld [vmem:[#allocation2 + $0x50] sm:$0xff]
      %7500 = vrot.lane.b32.xlu0 %v7496, 88
      %v7501 = vpop.permute.xlu0 %7500
      %7502 = vrot.lane.b32.xlu0 %v7497, 88
      %v7503 = vpop.permute.xlu0 %7502
      %v7504 = vsel %vm5976, %v7501, %v7503
      %7506 = vst [vmem:[#allocation4 + $0x3c0] sm:$0xff] %v7504
      %v7507 = vld [vmem:[#allocation2 + $0x48] sm:$0xff]
      %v7508 = vld [vmem:[#allocation2 + $0x50] sm:$0xff]
      %7511 = vrot.lane.b32.xlu0 %v7507, 87
      %v7512 = vpop.permute.xlu0 %7511
      %7513 = vrot.lane.b32.xlu0 %v7508, 87
      %v7514 = vpop.permute.xlu0 %7513
      %v7515 = vsel %vm6037, %v7512, %v7514
      %7517 = vst [vmem:[#allocation4 + $0x400] sm:$0xff] %v7515
      %v7518 = vld [vmem:[#allocation2 + $0x48] sm:$0xff]
      %v7519 = vld [vmem:[#allocation2 + $0x50] sm:$0xff]
      %7522 = vrot.lane.b32.xlu0 %v7518, 86
      %v7523 = vpop.permute.xlu0 %7522
      %7524 = vrot.lane.b32.xlu0 %v7519, 86
      %v7525 = vpop.permute.xlu0 %7524
      %v7526 = vsel %vm6098, %v7523, %v7525
      %7528 = vst [vmem:[#allocation4 + $0x440] sm:$0xff] %v7526
      %v7529 = vld [vmem:[#allocation2 + $0x50] sm:$0xff]
      %v7530 = vld [vmem:[#allocation2 + $0x58] sm:$0xff]
      %7533 = vrot.lane.b32.xlu0 %v7529, 96
      %v7534 = vpop.permute.xlu0 %7533
      %7535 = vrot.lane.b32.xlu0 %v7530, 96
      %v7536 = vpop.permute.xlu0 %7535
      %v7537 = vsel %vm1857, %v7534, %v7536
      %7539 = vst [vmem:[#allocation4 + $0x480] sm:$0xff] %v7537
      %v7540 = vld [vmem:[#allocation2 + $0x50] sm:$0xff]
      %v7541 = vld [vmem:[#allocation2 + $0x58] sm:$0xff]
      %7544 = vrot.lane.b32.xlu0 %v7540, 95
      %v7545 = vpop.permute.xlu0 %7544
      %7546 = vrot.lane.b32.xlu0 %v7541, 95
      %v7547 = vpop.permute.xlu0 %7546
      %v7548 = vsel %vm6219, %v7545, %v7547
      %7550 = vst [vmem:[#allocation4 + $0x4c0] sm:$0xff] %v7548
      %v7551 = vld [vmem:[#allocation2 + $0x50] sm:$0xff]
      %v7552 = vld [vmem:[#allocation2 + $0x58] sm:$0xff]
      %7555 = vrot.lane.b32.xlu0 %v7551, 94
      %v7556 = vpop.permute.xlu0 %7555
      %7557 = vrot.lane.b32.xlu0 %v7552, 94
      %v7558 = vpop.permute.xlu0 %7557
      %v7559 = vsel %vm2217, %v7556, %v7558
      %7561 = vst [vmem:[#allocation4 + $0x500] sm:$0xff] %v7559
      %v7562 = vld [vmem:[#allocation2 + $0x50] sm:$0xff]
      %v7563 = vld [vmem:[#allocation2 + $0x58] sm:$0xff]
      %7566 = vrot.lane.b32.xlu0 %v7562, 84
      %v7567 = vpop.permute.xlu0 %7566
      %7568 = vrot.lane.b32.xlu0 %v7563, 84
      %v7569 = vpop.permute.xlu0 %7568
      %v7570 = vsel %vm6340, %v7567, %v7569
      %7572 = vst [vmem:[#allocation4 + $0x540] sm:$0xff] %v7570
      %v7573 = vld [vmem:[#allocation2 + $0x50] sm:$0xff]
      %v7574 = vld [vmem:[#allocation2 + $0x58] sm:$0xff]
      %7577 = vrot.lane.b32.xlu0 %v7573, 83
      %v7578 = vpop.permute.xlu0 %7577
      %7579 = vrot.lane.b32.xlu0 %v7574, 83
      %v7580 = vpop.permute.xlu0 %7579
      %v7581 = vsel %vm6401, %v7578, %v7580
      %7583 = vst [vmem:[#allocation4 + $0x580] sm:$0xff] %v7581
      %v7584 = vld [vmem:[#allocation2 + $0x50] sm:$0xff]
      %v7585 = vld [vmem:[#allocation2 + $0x58] sm:$0xff]
      %7588 = vrot.lane.b32.xlu0 %v7584, 82
      %v7589 = vpop.permute.xlu0 %7588
      %7590 = vrot.lane.b32.xlu0 %v7585, 82
      %v7591 = vpop.permute.xlu0 %7590
      %v7592 = vsel %vm2487, %v7589, %v7591
      %7594 = vst [vmem:[#allocation4 + $0x5c0] sm:$0xff] %v7592
      %v7595 = vld [vmem:[#allocation2 + $0x50] sm:$0xff]
      %v7596 = vld [vmem:[#allocation2 + $0x58] sm:$0xff]
      %7599 = vrot.lane.b32.xlu0 %v7595, 72
      %v7600 = vpop.permute.xlu0 %7599
      %7601 = vrot.lane.b32.xlu0 %v7596, 72
      %v7602 = vpop.permute.xlu0 %7601
      %v7603 = vsel %vm6522, %v7600, %v7602
      %7605 = vst [vmem:[#allocation4 + $0x600] sm:$0xff] %v7603
      %v7606 = vld [vmem:[#allocation2 + $0x50] sm:$0xff]
      %v7607 = vld [vmem:[#allocation2 + $0x58] sm:$0xff]
      %7610 = vrot.lane.b32.xlu0 %v7606, 71
      %v7611 = vpop.permute.xlu0 %7610
      %7612 = vrot.lane.b32.xlu0 %v7607, 71
      %v7613 = vpop.permute.xlu0 %7612
      %v7614 = vsel %vm6583, %v7611, %v7613
      %7616 = vst [vmem:[#allocation4 + $0x640] sm:$0xff] %v7614
      %v7617 = vld [vmem:[#allocation2 + $0x50] sm:$0xff]
      %v7618 = vld [vmem:[#allocation2 + $0x58] sm:$0xff]
      %7621 = vrot.lane.b32.xlu0 %v7617, 70
      %v7622 = vpop.permute.xlu0 %7621
      %7623 = vrot.lane.b32.xlu0 %v7618, 70
      %v7624 = vpop.permute.xlu0 %7623
      %v7625 = vsel %vm6644, %v7622, %v7624
      %7627 = vst [vmem:[#allocation4 + $0x680] sm:$0xff] %v7625
      %v7628 = vld [vmem:[%s246 + $0x2c] sm:$0xff]
      %v7629 = vld [vmem:[%s246 + $0x6c] sm:$0xff]
      %v7632 = vunpack.c.l.b16 %v7628
      %v7633 = vunpack.c.h.b16 %v7628
      %v7634 = vunpack.c.l.b16 %v7629
      %v7635 = vunpack.c.h.b16 %v7629
      %v7636 = vpack.c.b16 %v7634, %v7632
      %v7637 = vpack.c.b16 %v7635, %v7633
      %7638 = vrot.lane.b32.xlu0 %v7636, 80
      %v7639 = vpop.permute.xlu0 %7638
      %7640 = vrot.lane.b32.xlu0 %v7637, 80
      %v7641 = vpop.permute.xlu0 %7640
      %v7642 = vsel %vm2667, %v7639, %v7641
      %7644 = vst [vmem:[#allocation4 + $0x6c0] sm:$0xff] %v7642
      %v7645 = vld [vmem:[#allocation4] sm:$0xff]
      %v7646 = vld [vmem:[#allocation4 + $0x40] sm:$0xff]
      %v7647 = vld [vmem:[#allocation4 + $0x80] sm:$0xff]
      %v7648 = vld [vmem:[#allocation4 + $0xc0] sm:$0xff]
      %v7649 = vld [vmem:[#allocation4 + $0x100] sm:$0xff]
      %v7650 = vld [vmem:[#allocation4 + $0x140] sm:$0xff]
      %v7651 = vld [vmem:[#allocation4 + $0x180] sm:$0xff]
      %v7652 = vld [vmem:[#allocation4 + $0x1c0] sm:$0xff]
      %v7653 = vld [vmem:[#allocation4 + $0x200] sm:$0xff]
      %v7654 = vld [vmem:[#allocation4 + $0x240] sm:$0xff]
      %v7655 = vld [vmem:[#allocation4 + $0x280] sm:$0xff]
      %v7656 = vld [vmem:[#allocation4 + $0x2c0] sm:$0xff]
      %v7657 = vld [vmem:[#allocation4 + $0x300] sm:$0xff]
      %v7658 = vld [vmem:[#allocation4 + $0x340] sm:$0xff]
      %v7659 = vld [vmem:[#allocation4 + $0x380] sm:$0xff]
      %v7660 = vld [vmem:[#allocation4 + $0x3c0] sm:$0xff]
      %v7661 = vld [vmem:[#allocation4 + $0x400] sm:$0xff]
      %v7662 = vld [vmem:[#allocation4 + $0x440] sm:$0xff]
      %v7663 = vld [vmem:[#allocation4 + $0x480] sm:$0xff]
      %v7664 = vld [vmem:[#allocation4 + $0x4c0] sm:$0xff]
      %v7665 = vld [vmem:[#allocation4 + $0x500] sm:$0xff]
      %v7666 = vld [vmem:[#allocation4 + $0x540] sm:$0xff]
      %v7667 = vld [vmem:[#allocation4 + $0x580] sm:$0xff]
      %v7668 = vld [vmem:[#allocation4 + $0x5c0] sm:$0xff]
      %v7669 = vld [vmem:[#allocation4 + $0x600] sm:$0xff]
      %v7670 = vld [vmem:[#allocation4 + $0x640] sm:$0xff]
      %v7671 = vld [vmem:[#allocation4 + $0x680] sm:$0xff]
      %v7672 = vld [vmem:[#allocation4 + $0x6c0] sm:$0xff]
      %7673 = vmatprep.subr.bf16.mxu0 0
      %7674 = vmatpush1.bf16.msra.mxu0 %v7645
      %7675 = vmatprep.subr.bf16.mxu0 0
      %7676 = vmatpush1.bf16.msra.mxu0 %v7646
      %7677 = vmatprep.subr.bf16.mxu0 0
      %7678 = vmatpush1.bf16.msra.mxu0 %v7647
      %7679 = vmatprep.subr.bf16.mxu0 0
      %7680 = vmatpush1.bf16.msra.mxu0 %v7648
      %7681 = vmatprep.subr.bf16.mxu0 0
      %7682 = vmatpush1.bf16.msra.mxu0 %v7649
      %7683 = vmatprep.subr.bf16.mxu0 0
      %7684 = vmatpush1.bf16.msra.mxu0 %v7650
      %7685 = vmatprep.subr.bf16.mxu0 0
      %7686 = vmatpush1.bf16.msra.mxu0 %v7651
      %7687 = vmatprep.subr.bf16.mxu0 0
      %7688 = vmatpush1.bf16.msra.mxu0 %v7652
      %7689 = vmatprep.subr.bf16.mxu0 0
      %7690 = vmatpush1.bf16.msra.mxu0 %v7653
      %7691 = vmatprep.subr.bf16.mxu0 0
      %7692 = vmatpush1.bf16.msra.mxu0 %v7654
      %7693 = vmatprep.subr.bf16.mxu0 0
      %7694 = vmatpush1.bf16.msra.mxu0 %v7655
      %7695 = vmatprep.subr.bf16.mxu0 0
      %7696 = vmatpush1.bf16.msra.mxu0 %v7656
      %7697 = vmatprep.subr.bf16.mxu0 0
      %7698 = vmatpush1.bf16.msra.mxu0 %v7657
      %7699 = vmatprep.subr.bf16.mxu0 0
      %7700 = vmatpush1.bf16.msra.mxu0 %v7658
      %7701 = vmatprep.subr.bf16.mxu0 0
      %7702 = vmatpush1.bf16.msra.mxu0 %v7659
      %7703 = vmatprep.subr.bf16.mxu0 0
      %7704 = vmatpush1.bf16.msra.mxu0 %v7660
      %7705 = vmatprep.mubr.bf16.mxu0 %v6994
      %7706 = vmatmul.mubr.bf16.gmra.mrb[0].mxu0 %v6993
      %v7707 = vpop.f32.mrb[0].mxu0
      %v7708 = vadd.f32 %v6985, %v7707
      %v7709 = vpop.f32.mrb[0].mxu0
      %v7710 = vpop.f32.mrb[0].mxu0
      %v7711 = vpop.f32.mrb[0].mxu0
      %7712 = vdwg.mxu0
      %7713 = vmatprep.subr.bf16.mxu0 0
      %7714 = vmatpush1.bf16.msra.mxu0 %v7661
      %7715 = vmatprep.subr.bf16.mxu0 0
      %7716 = vmatpush1.bf16.msra.mxu0 %v7662
      %7717 = vmatprep.subr.bf16.mxu0 0
      %7718 = vmatpush1.bf16.msra.mxu0 %v7663
      %7719 = vmatprep.subr.bf16.mxu0 0
      %7720 = vmatpush1.bf16.msra.mxu0 %v7664
      %7721 = vmatprep.subr.bf16.mxu0 0
      %7722 = vmatpush1.bf16.msra.mxu0 %v7665
      %7723 = vmatprep.subr.bf16.mxu0 0
      %7724 = vmatpush1.bf16.msra.mxu0 %v7666
      %7725 = vmatprep.subr.bf16.mxu0 0
      %7726 = vmatpush1.bf16.msra.mxu0 %v7667
      %7727 = vmatprep.subr.bf16.mxu0 0
      %7728 = vmatpush1.bf16.msra.mxu0 %v7668
      %7729 = vmatprep.subr.bf16.mxu0 0
      %7730 = vmatpush1.bf16.msra.mxu0 %v7669
      %7731 = vmatprep.subr.bf16.mxu0 0
      %7732 = vmatpush1.bf16.msra.mxu0 %v7670
      %7733 = vmatprep.subr.bf16.mxu0 0
      %7734 = vmatpush1.bf16.msra.mxu0 %v7671
      %7735 = vmatprep.subr.bf16.mxu0 0
      %7736 = vmatpush1.bf16.msra.mxu0 %v7672
      %7737 = vmatprep.subr.bf16.mxu0 0
      %7738 = vmatpush1.bf16.msra.mxu0 0
      %7739 = vmatprep.subr.bf16.mxu0 0
      %7740 = vmatpush1.bf16.msra.mxu0 0
      %7741 = vmatprep.subr.bf16.mxu0 0
      %7742 = vmatpush1.bf16.msra.mxu0 0
      %7743 = vmatprep.subr.bf16.mxu0 0
      %7744 = vmatpush1.bf16.msra.mxu0 0
      %7745 = vmatprep.mubr.bf16.mxu0 %v7002
      %7746 = vmatmul.mubr.bf16.gmra.mrb[0].mxu0 %v6995
      %v7747 = vpop.f32.mrb[0].mxu0
      %v7748 = vadd.f32 %v7708, %v7747
      %v7749 = vpop.f32.mrb[0].mxu0
      %v7750 = vpop.f32.mrb[0].mxu0
      %v7751 = vpop.f32.mrb[0].mxu0
      %7752 = vdwg.mxu0
      %7753 = vst [vmem:[%s251 + $0x40] sm:$0xff] %v7748
      %p7754 = scmp.lt.s32.totalorder %s17, 1
      %s7755 = scalar_select %p7754, %s17, 1
      %s7756 = smul.addr %s7755, 9
      %s7757 = smul.addr %s7756, 8
      %s7758 = scalar_lea.vmem %s6, %s7757
      // Predicated region
      $region45: #{dblock_forward.1} parent=43 // pred_check
        %p7759 = pneg %p166
      $region46: #{dblock_forward.1} parent=43 // pred_check_branch
        %7761 = sbr.rel (%p7759) target = $region48
      $region47: #{dblock_forward.1} parent=43 // pred_region
        _
      $region48: #{dblock_forward.1} parent=43 // pred_fallthru
        _
    $region44: #{dblock_forward.1} parent=5 // pred_fallthru
      _
    %p7762 = scmp.le.s32.totalorder 2, %s12
    // Predicated region
    $region49: #{dblock_forward.1} parent=5 // pred_check
      %p7763 = pneg %p7762
    $region50: #{dblock_forward.1} parent=5 // pred_check_branch
      %7765 = sbr.rel (%p7763) target = $region52
    $region51: #{dblock_forward.1} parent=5 // pred_region
      %s7766 = ssub.s32 %s12, 2
      // Predicated region
      $region53: #{dblock_forward.1} parent=51 // pred_check
        %p7767 = pneg %p172
      $region54: #{dblock_forward.1} parent=51 // pred_check_branch
        %7769 = sbr.rel (%p7767) target = $region56
      $region55: #{dblock_forward.1} parent=51 // pred_region
        %p7770 = scmp.lt.s32.totalorder %s18, 1
        %s7771 = scalar_select %p7770, %s18, 1
        %s7772 = smul.addr %s7771, 9
        %s7773 = smul.addr %s7772, 8
        %s7774 = scalar_lea.vmem %s6, %s7773
      $region56: #{dblock_forward.1} parent=51 // pred_fallthru
        _
    $region52: #{dblock_forward.1} parent=5 // pred_fallthru
      _
  $region6: #{dblock_forward.1} parent=0 // loop_footer
    %s16 = sadd.s32 1, %s12
  $region7: #{dblock_forward.1} parent=0 // loop_footer_branch
    %11 = sbr.rel target = $region3
  $region8: #{dblock_forward.1} parent=0 // loop_exit
    _

</llo_original>
